<compile_context>
chip_gen: v7x
topology: tpu7x:2x2x1
jax: 0.10.0
libtpu: 0.0.40
codegen_flags: <defaults>
</compile_context>

<pallas_src>
import functools

import numpy as np
import jax
import jax.numpy as jnp
from jax import lax
from jax.experimental import pallas as pl
from jax.experimental.pallas import tpu as pltpu

BN_EPS = 1e-5
LANE = 128


def _round_up(a, m):
    return -(-a // m) * m


def _cdiv(a, b):
    return -(-a // b)


@functools.lru_cache(maxsize=None)
def _vmem_limit_bytes():
    """~75% of physical VMEM, capped at 96 MiB (v7x ~48 MiB, v5e/v6e 96 MiB)."""
    try:
        cap = int(pltpu.get_tpu_info().vmem_capacity_bytes)
        return int(min(cap * 3 // 4, 96 * 1024 * 1024))
    except Exception:
        return 32 * 1024 * 1024


# --------------------------------------------------------------------------
# Pallas kernel 1: fused 1x1 conv (matmul, BN folded into weights)
#                  + bias + optional residual + ReLU, bf16 I/O
# --------------------------------------------------------------------------
def _pointwise_kernel(relu, has_res, multi_k):
    def _epilogue(acc, b_ref, r_ref, o_ref):
        y = acc + b_ref[...]                       # f32 bias (scale already in w)
        if has_res:
            y = y + r_ref[...].astype(jnp.float32)
        if relu:
            y = jnp.maximum(y, 0.0)
        o_ref[...] = y.astype(o_ref.dtype)

    if not multi_k:
        def kernel(*refs):
            if has_res:
                x_ref, w_ref, b_ref, r_ref, o_ref = refs
            else:
                x_ref, w_ref, b_ref, o_ref = refs
                r_ref = None
            acc = jnp.dot(x_ref[...], w_ref[...],
                          preferred_element_type=jnp.float32)
            _epilogue(acc, b_ref, r_ref, o_ref)
        return kernel

    def kernel(*refs):
        if has_res:
            x_ref, w_ref, b_ref, r_ref, o_ref, acc_ref = refs
        else:
            x_ref, w_ref, b_ref, o_ref, acc_ref = refs
            r_ref = None
        k = pl.program_id(2)

        @pl.when(k == 0)
        def _init():
            acc_ref[...] = jnp.zeros_like(acc_ref)

        acc_ref[...] += jnp.dot(x_ref[...], w_ref[...],
                                preferred_element_type=jnp.float32)

        @pl.when(k == pl.num_programs(2) - 1)
        def _finalize():
            _epilogue(acc_ref[...], b_ref, r_ref, o_ref)
    return kernel


def pointwise_conv_bn(x2, w, bias, residual=None, relu=True,
                      tm_max=1024, tc_max=256, tk_max=1024):
    """[M, K] @ [K, C] (BN folded into w) + bias (+residual) (+ReLU), bf16 I/O."""
    M, K = x2.shape
    Kw, C = w.shape
    assert K == Kw and K % LANE == 0 and C % LANE == 0

    tm = min(tm_max, _round_up(M, 8))
    tc = min(tc_max, C)
    # v7x megacore: prefer >= 2 parallel output tiles when the problem allows.
    if _cdiv(M, tm) * _cdiv(C, tc) < 2:
        if C >= 2 * LANE:
            tc = _round_up(_cdiv(C, 2), LANE)
        elif M > 8:
            tm = max(8, _round_up(_cdiv(M, 2), 8))

    tk = K
    if K > tk_max:                      # K is a multiple of 128, so one divides
        for cand in (1024, 512, 256, LANE):
            if K % cand == 0:
                tk = cand
                break
    nk = K // tk
    multi_k = nk > 1
    has_res = residual is not None

    if not multi_k:
        grid = (_cdiv(M, tm), _cdiv(C, tc))
        in_specs = [
            pl.BlockSpec((tm, K), lambda i, j: (i, 0)),
            pl.BlockSpec((K, tc), lambda i, j: (0, j)),
            pl.BlockSpec((1, tc), lambda i, j: (0, j)),
        ]
        if has_res:
            in_specs.append(pl.BlockSpec((tm, tc), lambda i, j: (i, j)))
        out_specs = pl.BlockSpec((tm, tc), lambda i, j: (i, j))
        scratch_shapes = []
        semantics = ("parallel", "parallel")
    else:
        grid = (_cdiv(M, tm), _cdiv(C, tc), nk)
        deep = pl.Buffered(buffer_count=3)      # hide DMA on v5e/v6e for big K
        in_specs = [
            pl.BlockSpec((tm, tk), lambda i, j, k: (i, k), pipeline_mode=deep),
            pl.BlockSpec((tk, tc), lambda i, j, k: (k, j), pipeline_mode=deep),
            pl.BlockSpec((1, tc), lambda i, j, k: (0, j)),
        ]
        if has_res:
            in_specs.append(pl.BlockSpec((tm, tc), lambda i, j, k: (i, j)))
        out_specs = pl.BlockSpec((tm, tc), lambda i, j, k: (i, j))
        scratch_shapes = [pltpu.VMEM((tm, tc), jnp.float32)]
        semantics = ("parallel", "parallel", "arbitrary")

    args = [x2, w, bias] + ([residual] if has_res else [])
    return pl.pallas_call(
        _pointwise_kernel(relu, has_res, multi_k),
        out_shape=jax.ShapeDtypeStruct((M, C), jnp.bfloat16),
        grid=grid,
        in_specs=in_specs,
        out_specs=out_specs,
        scratch_shapes=scratch_shapes,
        compiler_params=pltpu.CompilerParams(
            dimension_semantics=semantics,
            vmem_limit_bytes=_vmem_limit_bytes()),
    )(*args)


def conv1x1_bn(x, p, stride=1, relu=True, residual=None):
    """1x1 conv (optionally strided) + folded-BN (+residual) (+ReLU), NHWC bf16."""
    if stride > 1:
        x = x[:, ::stride, ::stride, :]      # 1x1 stride-s == subsample (bf16)
    N, H, W, C = x.shape
    Cout = p['w'].shape[-1]
    M = N * H * W
    r2 = residual.reshape(M, Cout) if residual is not None else None
    y = pointwise_conv_bn(x.reshape(M, C), p['w'], p['bias'],
                          residual=r2, relu=relu)
    return y.reshape(N, H, W, Cout)


# --------------------------------------------------------------------------
# Pallas kernel 2: fused 3x3 conv + folded-BN + ReLU (no HBM im2col / pad)
# --------------------------------------------------------------------------
def _conv3x3_kernel(stride, Ho, Wo):
    def _accumulate(window, w_ref):
        cout = w_ref.shape[-1]
        acc = jnp.zeros((Ho * Wo, cout), jnp.float32)
        # 9 taps accumulated on the MXU entirely inside VMEM (bf16 operands).
        for di in range(3):
            for dj in range(3):
                xt = window(di, dj)                       # (Ho, Wo, Cin) bf16
                xt = xt.reshape(Ho * Wo, xt.shape[-1])
                acc = acc + jnp.dot(xt, w_ref[di, dj, :, :],
                                    preferred_element_type=jnp.float32)
        return acc

    def _store(acc, b_ref, o_ref):
        y = jnp.maximum(acc + b_ref[...], 0.0)
        o_ref[...] = y.reshape(Ho, Wo, y.shape[-1]).astype(o_ref.dtype)

    if stride == 1:
        def kernel(x_ref, w_ref, b_ref, o_ref, xpad_ref):
            H, W, _ = x_ref.shape
            # In-kernel spatial zero-padding: no padded copy ever hits HBM.
            xpad_ref[...] = jnp.zeros_like(xpad_ref)
            xpad_ref[pl.ds(1, H), pl.ds(1, W), :] = x_ref[...]

            def window(di, dj):
                return xpad_ref[pl.ds(di, Ho), pl.ds(dj, Wo), :]

            _store(_accumulate(window, w_ref), b_ref, o_ref)
        return kernel

    s = stride

    def kernel(*refs):
        phases = refs[:s * s]
        w_ref, b_ref, o_ref = refs[s * s:]

        def window(di, dj):
            a, b = di % s, dj % s
            oi, oj = di // s, dj // s
            return phases[a * s + b][pl.ds(oi, Ho), pl.ds(oj, Wo), :]

        _store(_accumulate(window, w_ref), b_ref, o_ref)
    return kernel


def _phase2(x, a, b, Hph, Wph):
    """Phase (a, b) of the 1-padded activation for stride 2, built directly
    from the un-padded x (no full padded tensor materialized in HBM)."""
    N, H, W, C = x.shape

    def sl(off, n, limit):
        lead = 1 if off == 0 else 0      # padded coord off-1 < 0 only for off==0
        first = off - 1 + 2 * lead
        cnt = min((limit - 1 - first) // 2 + 1, n - lead)
        return first, cnt, lead, n - lead - cnt

    fh, ch, lh, th = sl(a, Hph, H)
    fw, cw, lw, tw = sl(b, Wph, W)
    core = x[:, fh:fh + 2 * ch:2, fw:fw + 2 * cw:2, :]
    return jnp.pad(core, ((0, 0), (lh, th), (lw, tw), (0, 0)))


def conv3x3_bn_relu(x, p, stride):
    """3x3 conv (pad=1, stride 1 or 2) + folded-BN + ReLU on NHWC bf16."""
    assert stride in (1, 2)
    N, H, W, C = x.shape
    Cout = p['w'].shape[-1]
    assert C % LANE == 0 and Cout % LANE == 0
    Ho = (H + 2 - 3) // stride + 1
    Wo = (W + 2 - 3) // stride + 1

    tc = min(Cout, 256)
    if N * _cdiv(Cout, tc) < 2 and Cout >= 2 * LANE:
        tc = _round_up(_cdiv(Cout, 2), LANE)       # v7x: keep both cores busy
    grid = (N, _cdiv(Cout, tc))

    w_spec = pl.BlockSpec((3, 3, C, tc), lambda n, j: (0, 0, 0, j))
    b_spec = pl.BlockSpec((1, tc), lambda n, j: (0, j))
    out_spec = pl.BlockSpec((None, Ho, Wo, tc), lambda n, j: (n, 0, 0, j))

    if stride == 1:
        in_specs = [pl.BlockSpec((None, H, W, C), lambda n, j: (n, 0, 0, 0)),
                    w_spec, b_spec]
        args = (x, p['w'], p['bias'])
        scratch = [pltpu.VMEM((H + 2, W + 2, C), jnp.bfloat16)]
    else:
        s = stride
        Hph = _round_up(H + 2, s) // s
        Wph = _round_up(W + 2, s) // s
        phases = [_phase2(x, a, b, Hph, Wph) for a in range(s) for b in range(s)]
        in_specs = ([pl.BlockSpec((None, Hph, Wph, C), lambda n, j: (n, 0, 0, 0))
                     for _ in phases] + [w_spec, b_spec])
        args = (*phases, p['w'], p['bias'])
        scratch = []

    return pl.pallas_call(
        _conv3x3_kernel(stride, Ho, Wo),
        out_shape=jax.ShapeDtypeStruct((N, Ho, Wo, Cout), jnp.bfloat16),
        grid=grid,
        in_specs=in_specs,
        out_specs=out_spec,
        scratch_shapes=scratch,
        compiler_params=pltpu.CompilerParams(
            dimension_semantics=("parallel", "parallel"),
            vmem_limit_bytes=_vmem_limit_bytes()),
    )(*args)


# --------------------------------------------------------------------------
# Parameter construction (deterministic, synthetic)
# --------------------------------------------------------------------------
def _conv_params(key, cin, cout, ksize):
    kw_, kb = jax.random.split(key)
    fan_in = cin * ksize * ksize
    w_hwio = (jax.random.normal(kw_, (ksize, ksize, cin, cout), jnp.float32)
              * np.sqrt(2.0 / fan_in))
    k1, k2, k3, k4 = jax.random.split(kb, 4)
    gamma = 1.0 + 0.1 * jax.random.normal(k1, (cout,), jnp.float32)
    beta = 0.1 * jax.random.normal(k2, (cout,), jnp.float32)
    mean = 0.05 * jax.random.normal(k3, (cout,), jnp.float32)
    var = 1.0 + 0.1 * jnp.abs(jax.random.normal(k4, (cout,), jnp.float32))
    scale = gamma / jnp.sqrt(var + BN_EPS)
    bias = beta - mean * scale

    # Fold inference-BN scale into the conv weights; zero-pad channel dims to
    # multiples of 128 so every kernel sees lane-dense operands.
    cin_p, cout_p = _round_up(cin, LANE), _round_up(cout, LANE)
    w_fold = w_hwio * scale                                   # scale over Cout
    w_pad = jnp.zeros((ksize, ksize, cin_p, cout_p), jnp.float32)
    w_pad = w_pad.at[:, :, :cin, :cout].set(w_fold)
    b_pad = jnp.zeros((cout_p,), jnp.float32).at[:cout].set(bias)
    if ksize == 1:
        w_kern = w_pad.reshape(cin_p, cout_p).astype(jnp.bfloat16)
    else:
        w_kern = w_pad.astype(jnp.bfloat16)
    return {'w': w_kern, 'bias': b_pad.reshape(1, cout_p),
            # un-padded / un-folded copies for the pure-JAX reference
            'w4': w_hwio, 'rscale': scale, 'rbias': bias}


def build_bottleneck(key, in_ch, out_ch, stride):
    k1, k2, k3, k4 = jax.random.split(key, 4)
    has_down = (stride != 1) or (in_ch != out_ch * 4)
    params = {
        'c1': _conv_params(k1, in_ch, out_ch, 1),
        'c2': _conv_params(k2, out_ch, out_ch, 3),
        'c3': _conv_params(k3, out_ch, out_ch * 4, 1),
        'down': _conv_params(k4, in_ch, out_ch * 4, 1) if has_down else None,
    }
    cfg = {'stride': stride, 'has_down': has_down, 'out_channels': out_ch * 4}
    return params, cfg


# --------------------------------------------------------------------------
# Bottleneck forward (Pallas)
# --------------------------------------------------------------------------
def bottleneck_forward(x, blk, cfg):
    s = cfg['stride']
    out = conv1x1_bn(x, blk['c1'], relu=True)                 # conv1+bn1+relu
    out = conv3x3_bn_relu(out, blk['c2'], stride=s)           # conv2+bn2+relu
    if cfg['has_down']:
        residual = conv1x1_bn(x, blk['down'], stride=s, relu=False)
    else:
        residual = x
    # conv3 + bn3 + residual add + relu, all fused in one kernel
    return conv1x1_bn(out, blk['c3'], relu=True, residual=residual)


def model_forward(params, x_nchw, cfgs):
    x = jnp.transpose(x_nchw, (0, 2, 3, 1))                   # NCHW -> NHWC
    cin = x.shape[-1]
    x = jnp.pad(x, ((0, 0),) * 3 + ((0, _round_up(cin, LANE) - cin),))
    x = x.astype(jnp.bfloat16)                                # bf16 activations
    for blk, cfg in zip(params, cfgs):
        x = bottleneck_forward(x, blk, cfg)
    x = x[..., :cfgs[-1]['out_channels']].astype(jnp.float32)
    return jnp.transpose(x, (0, 3, 1, 2))                     # NHWC -> NCHW


# --------------------------------------------------------------------------
# Pure-JAX reference (for correctness check)
# --------------------------------------------------------------------------
def ref_conv_bn(x, p, stride, pad, relu, residual=None):
    y = lax.conv_general_dilated(
        x, p['w4'], (stride, stride), [(pad, pad), (pad, pad)],
        dimension_numbers=('NHWC', 'HWIO', 'NHWC'))
    y = y * p['rscale'].reshape(1, 1, 1, -1) + p['rbias'].reshape(1, 1, 1, -1)
    if residual is not None:
        y = y + residual
    if relu:
        y = jnp.maximum(y, 0.0)
    return y


def ref_forward(params, x_nchw, cfgs):
    x = jnp.transpose(x_nchw, (0, 2, 3, 1))
    for blk, cfg in zip(params, cfgs):
        s = cfg['stride']
        out = ref_conv_bn(x, blk['c1'], 1, 0, relu=True)
        out = ref_conv_bn(out, blk['c2'], s, 1, relu=True)
        residual = (ref_conv_bn(x, blk['down'], s, 0, relu=False)
                    if cfg['has_down'] else x)
        x = ref_conv_bn(out, blk['c3'], 1, 0, relu=True, residual=residual)
    return jnp.transpose(x, (0, 3, 1, 2))


# --------------------------------------------------------------------------
if __name__ == "__main__":
    key = jax.random.PRNGKey(0)
    kp1, kp2, kx = jax.random.split(key, 3)

    # Two Bottleneck blocks exercising both residual branches of the module:
    #   A: stride=1, in == out*4      -> identity residual
    #   B: stride=2, in != out*4      -> downsample (1x1 stride-2 conv + BN)
    blk_a, cfg_a = build_bottleneck(kp1, in_ch=64, out_ch=16, stride=1)
    blk_b, cfg_b = build_bottleneck(kp2, in_ch=64, out_ch=32, stride=2)
    params = (blk_a, blk_b)
    cfgs = (cfg_a, cfg_b)

    # Small NCHW input (batch=2, channels=64, spatial=16x16).
    x = jax.random.normal(kx, (2, 64, 16, 16), jnp.float32)

    fwd = jax.jit(functools.partial(model_forward, cfgs=cfgs))
    out = jax.block_until_ready(fwd(params, x))
    assert out.shape == (2, 128, 8, 8), out.shape

    ref = jax.block_until_ready(
        jax.jit(functools.partial(ref_forward, cfgs=cfgs))(params, x))
    err = float(jnp.max(jnp.abs(out - ref)) / (jnp.max(jnp.abs(ref)) + 1e-6))
    assert err < 0.05, f"mismatch vs reference, rel-to-scale err = {err}"

    print("KERNEL_OK")
</pallas_src>

<mosaic_0001>
module attributes {stable_mosaic.version = 11 : i64} {
  func.func @kernel(%arg0: i32, %arg1: i32, %arg2: memref<256x128xbf16, #tpu.memory_space<vmem>>, %arg3: memref<128x128xbf16, #tpu.memory_space<vmem>>, %arg4: memref<1x128xf32, #tpu.memory_space<vmem>>, %arg5: memref<256x128xbf16, #tpu.memory_space<vmem>>) attributes {dimension_semantics = [#tpu.dimension_semantics<parallel>, #tpu.dimension_semantics<parallel>], iteration_bounds = array<i64: 2, 1>, scalar_prefetch = 0 : i64, scratch_operands = 0 : i64, tpu.core_type = #tpu.core_type<tc>, window_params = [{transform_indices = @transform_0, window_bounds = array<i64: 256, 128>}, {transform_indices = @transform_1, window_bounds = array<i64: 128, 128>}, {transform_indices = @transform_2, window_bounds = array<i64: 1, 128>}, {transform_indices = @transform_3, window_bounds = array<i64: 256, 128>}]} {
    %c0 = arith.constant 0 : index
    %c0_0 = arith.constant 0 : index
    %0 = vector.load %arg2[%c0, %c0_0] : memref<256x128xbf16, #tpu.memory_space<vmem>>, vector<256x128xbf16>
    %c0_1 = arith.constant 0 : index
    %c0_2 = arith.constant 0 : index
    %1 = vector.load %arg3[%c0_1, %c0_2] : memref<128x128xbf16, #tpu.memory_space<vmem>>, vector<128x128xbf16>
    %cst = arith.constant dense<0.000000e+00> : vector<256x128xf32>
    %2 = tpu.matmul %0, %1, %cst {dimension_numbers = #tpu.dot_dimension_numbers<[1], [0], [0], [1], [0, 0, 1, 1], [], []>} : vector<256x128xbf16>, vector<128x128xbf16>, vector<256x128xf32> -> vector<256x128xf32>
    %c0_3 = arith.constant 0 : index
    %c0_4 = arith.constant 0 : index
    %3 = vector.load %arg4[%c0_3, %c0_4] : memref<1x128xf32, #tpu.memory_space<vmem>>, vector<1x128xf32>
    %4 = vector.broadcast %3 : vector<1x128xf32> to vector<256x128xf32>
    %5 = arith.addf %2, %4 : vector<256x128xf32>
    %cst_5 = arith.constant 0.000000e+00 : f32
    %6 = vector.broadcast %cst_5 : f32 to vector<256x128xf32>
    %7 = arith.maximumf %5, %6 : vector<256x128xf32>
    %8 = arith.truncf %7 : vector<256x128xf32> to vector<256x128xbf16>
    %c0_6 = arith.constant 0 : index
    %c0_7 = arith.constant 0 : index
    %9 = vector.load %arg5[%c0_6, %c0_7] : memref<256x128xbf16, #tpu.memory_space<vmem>>, vector<256x128xbf16>
    tpu.vector_store %arg5[%c0_6, %c0_7], %8 {strides = array<i32>} : memref<256x128xbf16, #tpu.memory_space<vmem>>, vector<256x128xbf16>,
    return
  }
  func.func @transform_0(%arg0: i32, %arg1: i32) -> (i32, i32) {
    %c0_i32 = arith.constant 0 : i32
    %c0_i32_0 = arith.constant 0 : i32
    return %arg0, %c0_i32 : i32, i32
  }
  func.func @transform_1(%arg0: i32, %arg1: i32) -> (i32, i32) {
    %c0_i32 = arith.constant 0 : i32
    %c0_i32_0 = arith.constant 0 : i32
    return %c0_i32, %arg1 : i32, i32
  }
  func.func @transform_2(%arg0: i32, %arg1: i32) -> (i32, i32) {
    %c0_i32 = arith.constant 0 : i32
    %c0_i32_0 = arith.constant 0 : i32
    return %c0_i32, %arg1 : i32, i32
  }
  func.func @transform_3(%arg0: i32, %arg1: i32) -> (i32, i32) {
    %c0_i32 = arith.constant 0 : i32
    return %arg0, %arg1 : i32, i32
  }
}

module attributes {stable_mosaic.version = 11 : i64} {
  func.func @kernel(%arg0: i32, %arg1: i32, %arg2: memref<1x16x16x128xbf16, #tpu.memory_space<vmem>>, %arg3: memref<3x3x128x128xbf16, #tpu.memory_space<vmem>>, %arg4: memref<1x128xf32, #tpu.memory_space<vmem>>, %arg5: memref<1x16x16x128xbf16, #tpu.memory_space<vmem>>, %arg6: memref<18x18x128xbf16, #tpu.memory_space<vmem>>) attributes {dimension_semantics = [#tpu.dimension_semantics<parallel>, #tpu.dimension_semantics<parallel>], iteration_bounds = array<i64: 2, 1>, scalar_prefetch = 0 : i64, scratch_operands = 1 : i64, tpu.core_type = #tpu.core_type<tc>, window_params = [{transform_indices = @transform_0, window_bounds = array<i64: 1, 16, 16, 128>}, {transform_indices = @transform_1, window_bounds = array<i64: 3, 3, 128, 128>}, {transform_indices = @transform_2, window_bounds = array<i64: 1, 128>}, {transform_indices = @transform_3, window_bounds = array<i64: 1, 16, 16, 128>}]} {
    %cst = arith.constant 0.000000e+00 : bf16
    %0 = vector.broadcast %cst : bf16 to vector<18x18x128xbf16>
    %c0 = arith.constant 0 : index
    %c0_0 = arith.constant 0 : index
    %c0_1 = arith.constant 0 : index
    %1 = vector.load %arg6[%c0, %c0_0, %c0_1] : memref<18x18x128xbf16, #tpu.memory_space<vmem>>, vector<18x18x128xbf16>
    tpu.vector_store %arg6[%c0, %c0_0, %c0_1], %0 {strides = array<i32>} : memref<18x18x128xbf16, #tpu.memory_space<vmem>>, vector<18x18x128xbf16>,
    %c0_2 = arith.constant 0 : index
    %c0_3 = arith.constant 0 : index
    %c0_4 = arith.constant 0 : index
    %c0_5 = arith.constant 0 : index
    %2 = vector.load %arg2[%c0_2, %c0_3, %c0_4, %c0_5] : memref<1x16x16x128xbf16, #tpu.memory_space<vmem>>, vector<1x16x16x128xbf16>
    %3 = vector.shape_cast %2 : vector<1x16x16x128xbf16> to vector<16x16x128xbf16>
    %c1 = arith.constant 1 : index
    %c1_6 = arith.constant 1 : index
    %c0_7 = arith.constant 0 : index
    %4 = vector.load %arg6[%c1, %c1_6, %c0_7] : memref<18x18x128xbf16, #tpu.memory_space<vmem>>, vector<16x16x128xbf16>
    tpu.vector_store %arg6[%c1, %c1_6, %c0_7], %3 {strides = array<i32>} : memref<18x18x128xbf16, #tpu.memory_space<vmem>>, vector<16x16x128xbf16>,
    %cst_8 = arith.constant 0.000000e+00 : f32
    %5 = vector.broadcast %cst_8 : f32 to vector<256x128xf32>
    %c0_9 = arith.constant 0 : index
    %c0_10 = arith.constant 0 : index
    %c0_11 = arith.constant 0 : index
    %6 = vector.load %arg6[%c0_9, %c0_10, %c0_11] : memref<18x18x128xbf16, #tpu.memory_space<vmem>>, vector<16x16x128xbf16>
    %7 = vector.shape_cast %6 : vector<16x16x128xbf16> to vector<256x128xbf16>
    %c0_12 = arith.constant 0 : index
    %c0_13 = arith.constant 0 : index
    %c0_14 = arith.constant 0 : index
    %c0_15 = arith.constant 0 : index
    %8 = vector.load %arg3[%c0_12, %c0_13, %c0_14, %c0_15] : memref<3x3x128x128xbf16, #tpu.memory_space<vmem>>, vector<1x1x128x128xbf16>
    %9 = vector.shape_cast %8 : vector<1x1x128x128xbf16> to vector<128x128xbf16>
    %cst_16 = arith.constant dense<0.000000e+00> : vector<256x128xf32>
    %10 = tpu.matmul %7, %9, %cst_16 {dimension_numbers = #tpu.dot_dimension_numbers<[1], [0], [0], [1], [0, 0, 1, 1], [], []>} : vector<256x128xbf16>, vector<128x128xbf16>, vector<256x128xf32> -> vector<256x128xf32>
    %11 = arith.addf %5, %10 : vector<256x128xf32>
    %c0_17 = arith.constant 0 : index
    %c1_18 = arith.constant 1 : index
    %c0_19 = arith.constant 0 : index
    %12 = vector.load %arg6[%c0_17, %c1_18, %c0_19] : memref<18x18x128xbf16, #tpu.memory_space<vmem>>, vector<16x16x128xbf16>
    %13 = vector.shape_cast %12 : vector<16x16x128xbf16> to vector<256x128xbf16>
    %c0_20 = arith.constant 0 : index
    %c1_21 = arith.constant 1 : index
    %c0_22 = arith.constant 0 : index
    %c0_23 = arith.constant 0 : index
    %14 = vector.load %arg3[%c0_20, %c1_21, %c0_22, %c0_23] : memref<3x3x128x128xbf16, #tpu.memory_space<vmem>>, vector<1x1x128x128xbf16>
    %15 = vector.shape_cast %14 : vector<1x1x128x128xbf16> to vector<128x128xbf16>
    %cst_24 = arith.constant dense<0.000000e+00> : vector<256x128xf32>
    %16 = tpu.matmul %13, %15, %cst_24 {dimension_numbers = #tpu.dot_dimension_numbers<[1], [0], [0], [1], [0, 0, 1, 1], [], []>} : vector<256x128xbf16>, vector<128x128xbf16>, vector<256x128xf32> -> vector<256x128xf32>
    %17 = arith.addf %11, %16 : vector<256x128xf32>
    %c0_25 = arith.constant 0 : index
    %c2 = arith.constant 2 : index
    %c0_26 = arith.constant 0 : index
    %18 = vector.load %arg6[%c0_25, %c2, %c0_26] : memref<18x18x128xbf16, #tpu.memory_space<vmem>>, vector<16x16x128xbf16>
    %19 = vector.shape_cast %18 : vector<16x16x128xbf16> to vector<256x128xbf16>
    %c0_27 = arith.constant 0 : index
    %c2_28 = arith.constant 2 : index
    %c0_29 = arith.constant 0 : index
    %c0_30 = arith.constant 0 : index
    %20 = vector.load %arg3[%c0_27, %c2_28, %c0_29, %c0_30] : memref<3x3x128x128xbf16, #tpu.memory_space<vmem>>, vector<1x1x128x128xbf16>
    %21 = vector.shape_cast %20 : vector<1x1x128x128xbf16> to vector<128x128xbf16>
    %cst_31 = arith.constant dense<0.000000e+00> : vector<256x128xf32>
    %22 = tpu.matmul %19, %21, %cst_31 {dimension_numbers = #tpu.dot_dimension_numbers<[1], [0], [0], [1], [0, 0, 1, 1], [], []>} : vector<256x128xbf16>, vector<128x128xbf16>, vector<256x128xf32> -> vector<256x128xf32>
    %23 = arith.addf %17, %22 : vector<256x128xf32>
    %c1_32 = arith.constant 1 : index
    %c0_33 = arith.constant 0 : index
    %c0_34 = arith.constant 0 : index
    %24 = vector.load %arg6[%c1_32, %c0_33, %c0_34] : memref<18x18x128xbf16, #tpu.memory_space<vmem>>, vector<16x16x128xbf16>
    %25 = vector.shape_cast %24 : vector<16x16x128xbf16> to vector<256x128xbf16>
    %c1_35 = arith.constant 1 : index
    %c0_36 = arith.constant 0 : index
    %c0_37 = arith.constant 0 : index
    %c0_38 = arith.constant 0 : index
    %26 = vector.load %arg3[%c1_35, %c0_36, %c0_37, %c0_38] : memref<3x3x128x128xbf16, #tpu.memory_space<vmem>>, vector<1x1x128x128xbf16>
    %27 = vector.shape_cast %26 : vector<1x1x128x128xbf16> to vector<128x128xbf16>
    %cst_39 = arith.constant dense<0.000000e+00> : vector<256x128xf32>
    %28 = tpu.matmul %25, %27, %cst_39 {dimension_numbers = #tpu.dot_dimension_numbers<[1], [0], [0], [1], [0, 0, 1, 1], [], []>} : vector<256x128xbf16>, vector<128x128xbf16>, vector<256x128xf32> -> vector<256x128xf32>
    %29 = arith.addf %23, %28 : vector<256x128xf32>
    %c1_40 = arith.constant 1 : index
    %c1_41 = arith.constant 1 : index
    %c0_42 = arith.constant 0 : index
    %30 = vector.load %arg6[%c1_40, %c1_41, %c0_42] : memref<18x18x128xbf16, #tpu.memory_space<vmem>>, vector<16x16x128xbf16>
    %31 = vector.shape_cast %30 : vector<16x16x128xbf16> to vector<256x128xbf16>
    %c1_43 = arith.constant 1 : index
    %c1_44 = arith.constant 1 : index
    %c0_45 = arith.constant 0 : index
    %c0_46 = arith.constant 0 : index
    %32 = vector.load %arg3[%c1_43, %c1_44, %c0_45, %c0_46] : memref<3x3x128x128xbf16, #tpu.memory_space<vmem>>, vector<1x1x128x128xbf16>
    %33 = vector.shape_cast %32 : vector<1x1x128x128xbf16> to vector<128x128xbf16>
    %cst_47 = arith.constant dense<0.000000e+00> : vector<256x128xf32>
    %34 = tpu.matmul %31, %33, %cst_47 {dimension_numbers = #tpu.dot_dimension_numbers<[1], [0], [0], [1], [0, 0, 1, 1], [], []>} : vector<256x128xbf16>, vector<128x128xbf16>, vector<256x128xf32> -> vector<256x128xf32>
    %35 = arith.addf %29, %34 : vector<256x128xf32>
    %c1_48 = arith.constant 1 : index
    %c2_49 = arith.constant 2 : index
    %c0_50 = arith.constant 0 : index
    %36 = vector.load %arg6[%c1_48, %c2_49, %c0_50] : memref<18x18x128xbf16, #tpu.memory_space<vmem>>, vector<16x16x128xbf16>
    %37 = vector.shape_cast %36 : vector<16x16x128xbf16> to vector<256x128xbf16>
    %c1_51 = arith.constant 1 : index
    %c2_52 = arith.constant 2 : index
    %c0_53 = arith.constant 0 : index
    %c0_54 = arith.constant 0 : index
    %38 = vector.load %arg3[%c1_51, %c2_52, %c0_53, %c0_54] : memref<3x3x128x128xbf16, #tpu.memory_space<vmem>>, vector<1x1x128x128xbf16>
    %39 = vector.shape_cast %38 : vector<1x1x128x128xbf16> to vector<128x128xbf16>
    %cst_55 = arith.constant dense<0.000000e+00> : vector<256x128xf32>
    %40 = tpu.matmul %37, %39, %cst_55 {dimension_numbers = #tpu.dot_dimension_numbers<[1], [0], [0], [1], [0, 0, 1, 1], [], []>} : vector<256x128xbf16>, vector<128x128xbf16>, vector<256x128xf32> -> vector<256x128xf32>
    %41 = arith.addf %35, %40 : vector<256x128xf32>
    %c2_56 = arith.constant 2 : index
    %c0_57 = arith.constant 0 : index
    %c0_58 = arith.constant 0 : index
    %42 = vector.load %arg6[%c2_56, %c0_57, %c0_58] : memref<18x18x128xbf16, #tpu.memory_space<vmem>>, vector<16x16x128xbf16>
    %43 = vector.shape_cast %42 : vector<16x16x128xbf16> to vector<256x128xbf16>
    %c2_59 = arith.constant 2 : index
    %c0_60 = arith.constant 0 : index
    %c0_61 = arith.constant 0 : index
    %c0_62 = arith.constant 0 : index
    %44 = vector.load %arg3[%c2_59, %c0_60, %c0_61, %c0_62] : memref<3x3x128x128xbf16, #tpu.memory_space<vmem>>, vector<1x1x128x128xbf16>
    %45 = vector.shape_cast %44 : vector<1x1x128x128xbf16> to vector<128x128xbf16>
    %cst_63 = arith.constant dense<0.000000e+00> : vector<256x128xf32>
    %46 = tpu.matmul %43, %45, %cst_63 {dimension_numbers = #tpu.dot_dimension_numbers<[1], [0], [0], [1], [0, 0, 1, 1], [], []>} : vector<256x128xbf16>, vector<128x128xbf16>, vector<256x128xf32> -> vector<256x128xf32>
    %47 = arith.addf %41, %46 : vector<256x128xf32>
    %c2_64 = arith.constant 2 : index
    %c1_65 = arith.constant 1 : index
    %c0_66 = arith.constant 0 : index
    %48 = vector.load %arg6[%c2_64, %c1_65, %c0_66] : memref<18x18x128xbf16, #tpu.memory_space<vmem>>, vector<16x16x128xbf16>
    %49 = vector.shape_cast %48 : vector<16x16x128xbf16> to vector<256x128xbf16>
    %c2_67 = arith.constant 2 : index
    %c1_68 = arith.constant 1 : index
    %c0_69 = arith.constant 0 : index
    %c0_70 = arith.constant 0 : index
    %50 = vector.load %arg3[%c2_67, %c1_68, %c0_69, %c0_70] : memref<3x3x128x128xbf16, #tpu.memory_space<vmem>>, vector<1x1x128x128xbf16>
    %51 = vector.shape_cast %50 : vector<1x1x128x128xbf16> to vector<128x128xbf16>
    %cst_71 = arith.constant dense<0.000000e+00> : vector<256x128xf32>
    %52 = tpu.matmul %49, %51, %cst_71 {dimension_numbers = #tpu.dot_dimension_numbers<[1], [0], [0], [1], [0, 0, 1, 1], [], []>} : vector<256x128xbf16>, vector<128x128xbf16>, vector<256x128xf32> -> vector<256x128xf32>
    %53 = arith.addf %47, %52 : vector<256x128xf32>
    %c2_72 = arith.constant 2 : index
    %c2_73 = arith.constant 2 : index
    %c0_74 = arith.constant 0 : index
    %54 = vector.load %arg6[%c2_72, %c2_73, %c0_74] : memref<18x18x128xbf16, #tpu.memory_space<vmem>>, vector<16x16x128xbf16>
    %55 = vector.shape_cast %54 : vector<16x16x128xbf16> to vector<256x128xbf16>
    %c2_75 = arith.constant 2 : index
    %c2_76 = arith.constant 2 : index
    %c0_77 = arith.constant 0 : index
    %c0_78 = arith.constant 0 : index
    %56 = vector.load %arg3[%c2_75, %c2_76, %c0_77, %c0_78] : memref<3x3x128x128xbf16, #tpu.memory_space<vmem>>, vector<1x1x128x128xbf16>
    %57 = vector.shape_cast %56 : vector<1x1x128x128xbf16> to vector<128x128xbf16>
    %cst_79 = arith.constant dense<0.000000e+00> : vector<256x128xf32>
    %58 = tpu.matmul %55, %57, %cst_79 {dimension_numbers = #tpu.dot_dimension_numbers<[1], [0], [0], [1], [0, 0, 1, 1], [], []>} : vector<256x128xbf16>, vector<128x128xbf16>, vector<256x128xf32> -> vector<256x128xf32>
    %59 = arith.addf %53, %58 : vector<256x128xf32>
    %c0_80 = arith.constant 0 : index
    %c0_81 = arith.constant 0 : index
    %60 = vector.load %arg4[%c0_80, %c0_81] : memref<1x128xf32, #tpu.memory_space<vmem>>, vector<1x128xf32>
    %61 = vector.broadcast %60 : vector<1x128xf32> to vector<256x128xf32>
    %62 = arith.addf %59, %61 : vector<256x128xf32>
    %cst_82 = arith.constant 0.000000e+00 : f32
    %63 = vector.broadcast %cst_82 : f32 to vector<256x128xf32>
    %64 = arith.maximumf %62, %63 : vector<256x128xf32>
    %65 = vector.shape_cast %64 : vector<256x128xf32> to vector<16x16x128xf32>
    %66 = arith.truncf %65 : vector<16x16x128xf32> to vector<16x16x128xbf16>
    %c0_83 = arith.constant 0 : index
    %c0_84 = arith.constant 0 : index
    %c0_85 = arith.constant 0 : index
    %c0_86 = arith.constant 0 : index
    %67 = vector.load %arg5[%c0_83, %c0_84, %c0_85, %c0_86] : memref<1x16x16x128xbf16, #tpu.memory_space<vmem>>, vector<1x16x16x128xbf16>
    %68 = vector.shape_cast %67 : vector<1x16x16x128xbf16> to vector<16x16x128xbf16>
    %69 = vector.shape_cast %66 : vector<16x16x128xbf16> to vector<1x16x16x128xbf16>
    tpu.vector_store %arg5[%c0_83, %c0_84, %c0_85, %c0_86], %69 {strides = array<i32>} : memref<1x16x16x128xbf16, #tpu.memory_space<vmem>>, vector<1x16x16x128xbf16>,
    return
  }
  func.func @transform_0(%arg0: i32, %arg1: i32) -> (i32, i32, i32, i32) {
    %c0_i32 = arith.constant 0 : i32
    %c0_i32_0 = arith.constant 0 : i32
    %c0_i32_1 = arith.constant 0 : i32
    %c0_i32_2 = arith.constant 0 : i32
    return %arg0, %c0_i32, %c0_i32_0, %c0_i32_1 : i32, i32, i32, i32
  }
  func.func @transform_1(%arg0: i32, %arg1: i32) -> (i32, i32, i32, i32) {
    %c0_i32 = arith.constant 0 : i32
    %c0_i32_0 = arith.constant 0 : i32
    %c0_i32_1 = arith.constant 0 : i32
    %c0_i32_2 = arith.constant 0 : i32
    return %c0_i32, %c0_i32_0, %c0_i32_1, %arg1 : i32, i32, i32, i32
  }
  func.func @transform_2(%arg0: i32, %arg1: i32) -> (i32, i32) {
    %c0_i32 = arith.constant 0 : i32
    %c0_i32_0 = arith.constant 0 : i32
    return %c0_i32, %arg1 : i32, i32
  }
  func.func @transform_3(%arg0: i32, %arg1: i32) -> (i32, i32, i32, i32) {
    %c0_i32 = arith.constant 0 : i32
    %c0_i32_0 = arith.constant 0 : i32
    %c0_i32_1 = arith.constant 0 : i32
    return %arg0, %c0_i32, %c0_i32_0, %arg1 : i32, i32, i32, i32
  }
}

module attributes {stable_mosaic.version = 11 : i64} {
  func.func @kernel(%arg0: i32, %arg1: i32, %arg2: memref<256x128xbf16, #tpu.memory_space<vmem>>, %arg3: memref<128x128xbf16, #tpu.memory_space<vmem>>, %arg4: memref<1x128xf32, #tpu.memory_space<vmem>>, %arg5: memref<256x128xbf16, #tpu.memory_space<vmem>>, %arg6: memref<256x128xbf16, #tpu.memory_space<vmem>>) attributes {dimension_semantics = [#tpu.dimension_semantics<parallel>, #tpu.dimension_semantics<parallel>], iteration_bounds = array<i64: 2, 1>, scalar_prefetch = 0 : i64, scratch_operands = 0 : i64, tpu.core_type = #tpu.core_type<tc>, window_params = [{transform_indices = @transform_0, window_bounds = array<i64: 256, 128>}, {transform_indices = @transform_1, window_bounds = array<i64: 128, 128>}, {transform_indices = @transform_2, window_bounds = array<i64: 1, 128>}, {transform_indices = @transform_3, window_bounds = array<i64: 256, 128>}, {transform_indices = @transform_4, window_bounds = array<i64: 256, 128>}]} {
    %c0 = arith.constant 0 : index
    %c0_0 = arith.constant 0 : index
    %0 = vector.load %arg2[%c0, %c0_0] : memref<256x128xbf16, #tpu.memory_space<vmem>>, vector<256x128xbf16>
    %c0_1 = arith.constant 0 : index
    %c0_2 = arith.constant 0 : index
    %1 = vector.load %arg3[%c0_1, %c0_2] : memref<128x128xbf16, #tpu.memory_space<vmem>>, vector<128x128xbf16>
    %cst = arith.constant dense<0.000000e+00> : vector<256x128xf32>
    %2 = tpu.matmul %0, %1, %cst {dimension_numbers = #tpu.dot_dimension_numbers<[1], [0], [0], [1], [0, 0, 1, 1], [], []>} : vector<256x128xbf16>, vector<128x128xbf16>, vector<256x128xf32> -> vector<256x128xf32>
    %c0_3 = arith.constant 0 : index
    %c0_4 = arith.constant 0 : index
    %3 = vector.load %arg4[%c0_3, %c0_4] : memref<1x128xf32, #tpu.memory_space<vmem>>, vector<1x128xf32>
    %4 = vector.broadcast %3 : vector<1x128xf32> to vector<256x128xf32>
    %5 = arith.addf %2, %4 : vector<256x128xf32>
    %c0_5 = arith.constant 0 : index
    %c0_6 = arith.constant 0 : index
    %6 = vector.load %arg5[%c0_5, %c0_6] : memref<256x128xbf16, #tpu.memory_space<vmem>>, vector<256x128xbf16>
    %7 = arith.extf %6 : vector<256x128xbf16> to vector<256x128xf32>
    %8 = arith.addf %5, %7 : vector<256x128xf32>
    %cst_7 = arith.constant 0.000000e+00 : f32
    %9 = vector.broadcast %cst_7 : f32 to vector<256x128xf32>
    %10 = arith.maximumf %8, %9 : vector<256x128xf32>
    %11 = arith.truncf %10 : vector<256x128xf32> to vector<256x128xbf16>
    %c0_8 = arith.constant 0 : index
    %c0_9 = arith.constant 0 : index
    %12 = vector.load %arg6[%c0_8, %c0_9] : memref<256x128xbf16, #tpu.memory_space<vmem>>, vector<256x128xbf16>
    tpu.vector_store %arg6[%c0_8, %c0_9], %11 {strides = array<i32>} : memref<256x128xbf16, #tpu.memory_space<vmem>>, vector<256x128xbf16>,
    return
  }
  func.func @transform_0(%arg0: i32, %arg1: i32) -> (i32, i32) {
    %c0_i32 = arith.constant 0 : i32
    %c0_i32_0 = arith.constant 0 : i32
    return %arg0, %c0_i32 : i32, i32
  }
  func.func @transform_1(%arg0: i32, %arg1: i32) -> (i32, i32) {
    %c0_i32 = arith.constant 0 : i32
    %c0_i32_0 = arith.constant 0 : i32
    return %c0_i32, %arg1 : i32, i32
  }
  func.func @transform_2(%arg0: i32, %arg1: i32) -> (i32, i32) {
    %c0_i32 = arith.constant 0 : i32
    %c0_i32_0 = arith.constant 0 : i32
    return %c0_i32, %arg1 : i32, i32
  }
  func.func @transform_3(%arg0: i32, %arg1: i32) -> (i32, i32) {
    %c0_i32 = arith.constant 0 : i32
    return %arg0, %arg1 : i32, i32
  }
  func.func @transform_4(%arg0: i32, %arg1: i32) -> (i32, i32) {
    %c0_i32 = arith.constant 0 : i32
    return %arg0, %arg1 : i32, i32
  }
}

module attributes {stable_mosaic.version = 11 : i64} {
  func.func @kernel(%arg0: i32, %arg1: i32, %arg2: memref<64x128xbf16, #tpu.memory_space<vmem>>, %arg3: memref<128x128xbf16, #tpu.memory_space<vmem>>, %arg4: memref<1x128xf32, #tpu.memory_space<vmem>>, %arg5: memref<64x128xbf16, #tpu.memory_space<vmem>>) attributes {dimension_semantics = [#tpu.dimension_semantics<parallel>, #tpu.dimension_semantics<parallel>], iteration_bounds = array<i64: 2, 1>, scalar_prefetch = 0 : i64, scratch_operands = 0 : i64, tpu.core_type = #tpu.core_type<tc>, window_params = [{transform_indices = @transform_0, window_bounds = array<i64: 64, 128>}, {transform_indices = @transform_1, window_bounds = array<i64: 128, 128>}, {transform_indices = @transform_2, window_bounds = array<i64: 1, 128>}, {transform_indices = @transform_3, window_bounds = array<i64: 64, 128>}]} {
    %c0 = arith.constant 0 : index
    %c0_0 = arith.constant 0 : index
    %0 = vector.load %arg2[%c0, %c0_0] : memref<64x128xbf16, #tpu.memory_space<vmem>>, vector<64x128xbf16>
    %c0_1 = arith.constant 0 : index
    %c0_2 = arith.constant 0 : index
    %1 = vector.load %arg3[%c0_1, %c0_2] : memref<128x128xbf16, #tpu.memory_space<vmem>>, vector<128x128xbf16>
    %cst = arith.constant dense<0.000000e+00> : vector<64x128xf32>
    %2 = tpu.matmul %0, %1, %cst {dimension_numbers = #tpu.dot_dimension_numbers<[1], [0], [0], [1], [0, 0, 1, 1], [], []>} : vector<64x128xbf16>, vector<128x128xbf16>, vector<64x128xf32> -> vector<64x128xf32>
    %c0_3 = arith.constant 0 : index
    %c0_4 = arith.constant 0 : index
    %3 = vector.load %arg4[%c0_3, %c0_4] : memref<1x128xf32, #tpu.memory_space<vmem>>, vector<1x128xf32>
    %4 = vector.broadcast %3 : vector<1x128xf32> to vector<64x128xf32>
    %5 = arith.addf %2, %4 : vector<64x128xf32>
    %6 = arith.truncf %5 : vector<64x128xf32> to vector<64x128xbf16>
    %c0_5 = arith.constant 0 : index
    %c0_6 = arith.constant 0 : index
    %7 = vector.load %arg5[%c0_5, %c0_6] : memref<64x128xbf16, #tpu.memory_space<vmem>>, vector<64x128xbf16>
    tpu.vector_store %arg5[%c0_5, %c0_6], %6 {strides = array<i32>} : memref<64x128xbf16, #tpu.memory_space<vmem>>, vector<64x128xbf16>,
    return
  }
  func.func @transform_0(%arg0: i32, %arg1: i32) -> (i32, i32) {
    %c0_i32 = arith.constant 0 : i32
    %c0_i32_0 = arith.constant 0 : i32
    return %arg0, %c0_i32 : i32, i32
  }
  func.func @transform_1(%arg0: i32, %arg1: i32) -> (i32, i32) {
    %c0_i32 = arith.constant 0 : i32
    %c0_i32_0 = arith.constant 0 : i32
    return %c0_i32, %arg1 : i32, i32
  }
  func.func @transform_2(%arg0: i32, %arg1: i32) -> (i32, i32) {
    %c0_i32 = arith.constant 0 : i32
    %c0_i32_0 = arith.constant 0 : i32
    return %c0_i32, %arg1 : i32, i32
  }
  func.func @transform_3(%arg0: i32, %arg1: i32) -> (i32, i32) {
    %c0_i32 = arith.constant 0 : i32
    return %arg0, %arg1 : i32, i32
  }
}

module attributes {stable_mosaic.version = 11 : i64} {
  func.func @kernel(%arg0: i32, %arg1: i32, %arg2: memref<1x9x9x128xbf16, #tpu.memory_space<vmem>>, %arg3: memref<1x9x9x128xbf16, #tpu.memory_space<vmem>>, %arg4: memref<1x9x9x128xbf16, #tpu.memory_space<vmem>>, %arg5: memref<1x9x9x128xbf16, #tpu.memory_space<vmem>>, %arg6: memref<3x3x128x128xbf16, #tpu.memory_space<vmem>>, %arg7: memref<1x128xf32, #tpu.memory_space<vmem>>, %arg8: memref<1x8x8x128xbf16, #tpu.memory_space<vmem>>) attributes {dimension_semantics = [#tpu.dimension_semantics<parallel>, #tpu.dimension_semantics<parallel>], iteration_bounds = array<i64: 2, 1>, scalar_prefetch = 0 : i64, scratch_operands = 0 : i64, tpu.core_type = #tpu.core_type<tc>, window_params = [{transform_indices = @transform_0, window_bounds = array<i64: 1, 9, 9, 128>}, {transform_indices = @transform_1, window_bounds = array<i64: 1, 9, 9, 128>}, {transform_indices = @transform_2, window_bounds = array<i64: 1, 9, 9, 128>}, {transform_indices = @transform_3, window_bounds = array<i64: 1, 9, 9, 128>}, {transform_indices = @transform_4, window_bounds = array<i64: 3, 3, 128, 128>}, {transform_indices = @transform_5, window_bounds = array<i64: 1, 128>}, {transform_indices = @transform_6, window_bounds = array<i64: 1, 8, 8, 128>}]} {
    %cst = arith.constant 0.000000e+00 : f32
    %0 = vector.broadcast %cst : f32 to vector<64x128xf32>
    %c0 = arith.constant 0 : index
    %c0_0 = arith.constant 0 : index
    %c0_1 = arith.constant 0 : index
    %c0_2 = arith.constant 0 : index
    %1 = vector.load %arg2[%c0, %c0_0, %c0_1, %c0_2] : memref<1x9x9x128xbf16, #tpu.memory_space<vmem>>, vector<1x8x8x128xbf16>
    %2 = vector.shape_cast %1 : vector<1x8x8x128xbf16> to vector<8x8x128xbf16>
    %3 = vector.shape_cast %2 : vector<8x8x128xbf16> to vector<64x128xbf16>
    %c0_3 = arith.constant 0 : index
    %c0_4 = arith.constant 0 : index
    %c0_5 = arith.constant 0 : index
    %c0_6 = arith.constant 0 : index
    %4 = vector.load %arg6[%c0_3, %c0_4, %c0_5, %c0_6] : memref<3x3x128x128xbf16, #tpu.memory_space<vmem>>, vector<1x1x128x128xbf16>
    %5 = vector.shape_cast %4 : vector<1x1x128x128xbf16> to vector<128x128xbf16>
    %cst_7 = arith.constant dense<0.000000e+00> : vector<64x128xf32>
    %6 = tpu.matmul %3, %5, %cst_7 {dimension_numbers = #tpu.dot_dimension_numbers<[1], [0], [0], [1], [0, 0, 1, 1], [], []>} : vector<64x128xbf16>, vector<128x128xbf16>, vector<64x128xf32> -> vector<64x128xf32>
    %7 = arith.addf %0, %6 : vector<64x128xf32>
    %c0_8 = arith.constant 0 : index
    %c0_9 = arith.constant 0 : index
    %c0_10 = arith.constant 0 : index
    %c0_11 = arith.constant 0 : index
    %8 = vector.load %arg3[%c0_8, %c0_9, %c0_10, %c0_11] : memref<1x9x9x128xbf16, #tpu.memory_space<vmem>>, vector<1x8x8x128xbf16>
    %9 = vector.shape_cast %8 : vector<1x8x8x128xbf16> to vector<8x8x128xbf16>
    %10 = vector.shape_cast %9 : vector<8x8x128xbf16> to vector<64x128xbf16>
    %c0_12 = arith.constant 0 : index
    %c1 = arith.constant 1 : index
    %c0_13 = arith.constant 0 : index
    %c0_14 = arith.constant 0 : index
    %11 = vector.load %arg6[%c0_12, %c1, %c0_13, %c0_14] : memref<3x3x128x128xbf16, #tpu.memory_space<vmem>>, vector<1x1x128x128xbf16>
    %12 = vector.shape_cast %11 : vector<1x1x128x128xbf16> to vector<128x128xbf16>
    %cst_15 = arith.constant dense<0.000000e+00> : vector<64x128xf32>
    %13 = tpu.matmul %10, %12, %cst_15 {dimension_numbers = #tpu.dot_dimension_numbers<[1], [0], [0], [1], [0, 0, 1, 1], [], []>} : vector<64x128xbf16>, vector<128x128xbf16>, vector<64x128xf32> -> vector<64x128xf32>
    %14 = arith.addf %7, %13 : vector<64x128xf32>
    %c0_16 = arith.constant 0 : index
    %c0_17 = arith.constant 0 : index
    %c1_18 = arith.constant 1 : index
    %c0_19 = arith.constant 0 : index
    %15 = vector.load %arg2[%c0_16, %c0_17, %c1_18, %c0_19] : memref<1x9x9x128xbf16, #tpu.memory_space<vmem>>, vector<1x8x8x128xbf16>
    %16 = vector.shape_cast %15 : vector<1x8x8x128xbf16> to vector<8x8x128xbf16>
    %17 = vector.shape_cast %16 : vector<8x8x128xbf16> to vector<64x128xbf16>
    %c0_20 = arith.constant 0 : index
    %c2 = arith.constant 2 : index
    %c0_21 = arith.constant 0 : index
    %c0_22 = arith.constant 0 : index
    %18 = vector.load %arg6[%c0_20, %c2, %c0_21, %c0_22] : memref<3x3x128x128xbf16, #tpu.memory_space<vmem>>, vector<1x1x128x128xbf16>
    %19 = vector.shape_cast %18 : vector<1x1x128x128xbf16> to vector<128x128xbf16>
    %cst_23 = arith.constant dense<0.000000e+00> : vector<64x128xf32>
    %20 = tpu.matmul %17, %19, %cst_23 {dimension_numbers = #tpu.dot_dimension_numbers<[1], [0], [0], [1], [0, 0, 1, 1], [], []>} : vector<64x128xbf16>, vector<128x128xbf16>, vector<64x128xf32> -> vector<64x128xf32>
    %21 = arith.addf %14, %20 : vector<64x128xf32>
    %c0_24 = arith.constant 0 : index
    %c0_25 = arith.constant 0 : index
    %c0_26 = arith.constant 0 : index
    %c0_27 = arith.constant 0 : index
    %22 = vector.load %arg4[%c0_24, %c0_25, %c0_26, %c0_27] : memref<1x9x9x128xbf16, #tpu.memory_space<vmem>>, vector<1x8x8x128xbf16>
    %23 = vector.shape_cast %22 : vector<1x8x8x128xbf16> to vector<8x8x128xbf16>
    %24 = vector.shape_cast %23 : vector<8x8x128xbf16> to vector<64x128xbf16>
    %c1_28 = arith.constant 1 : index
    %c0_29 = arith.constant 0 : index
    %c0_30 = arith.constant 0 : index
    %c0_31 = arith.constant 0 : index
    %25 = vector.load %arg6[%c1_28, %c0_29, %c0_30, %c0_31] : memref<3x3x128x128xbf16, #tpu.memory_space<vmem>>, vector<1x1x128x128xbf16>
    %26 = vector.shape_cast %25 : vector<1x1x128x128xbf16> to vector<128x128xbf16>
    %cst_32 = arith.constant dense<0.000000e+00> : vector<64x128xf32>
    %27 = tpu.matmul %24, %26, %cst_32 {dimension_numbers = #tpu.dot_dimension_numbers<[1], [0], [0], [1], [0, 0, 1, 1], [], []>} : vector<64x128xbf16>, vector<128x128xbf16>, vector<64x128xf32> -> vector<64x128xf32>
    %28 = arith.addf %21, %27 : vector<64x128xf32>
    %c0_33 = arith.constant 0 : index
    %c0_34 = arith.constant 0 : index
    %c0_35 = arith.constant 0 : index
    %c0_36 = arith.constant 0 : index
    %29 = vector.load %arg5[%c0_33, %c0_34, %c0_35, %c0_36] : memref<1x9x9x128xbf16, #tpu.memory_space<vmem>>, vector<1x8x8x128xbf16>
    %30 = vector.shape_cast %29 : vector<1x8x8x128xbf16> to vector<8x8x128xbf16>
    %31 = vector.shape_cast %30 : vector<8x8x128xbf16> to vector<64x128xbf16>
    %c1_37 = arith.constant 1 : index
    %c1_38 = arith.constant 1 : index
    %c0_39 = arith.constant 0 : index
    %c0_40 = arith.constant 0 : index
    %32 = vector.load %arg6[%c1_37, %c1_38, %c0_39, %c0_40] : memref<3x3x128x128xbf16, #tpu.memory_space<vmem>>, vector<1x1x128x128xbf16>
    %33 = vector.shape_cast %32 : vector<1x1x128x128xbf16> to vector<128x128xbf16>
    %cst_41 = arith.constant dense<0.000000e+00> : vector<64x128xf32>
    %34 = tpu.matmul %31, %33, %cst_41 {dimension_numbers = #tpu.dot_dimension_numbers<[1], [0], [0], [1], [0, 0, 1, 1], [], []>} : vector<64x128xbf16>, vector<128x128xbf16>, vector<64x128xf32> -> vector<64x128xf32>
    %35 = arith.addf %28, %34 : vector<64x128xf32>
    %c0_42 = arith.constant 0 : index
    %c0_43 = arith.constant 0 : index
    %c1_44 = arith.constant 1 : index
    %c0_45 = arith.constant 0 : index
    %36 = vector.load %arg4[%c0_42, %c0_43, %c1_44, %c0_45] : memref<1x9x9x128xbf16, #tpu.memory_space<vmem>>, vector<1x8x8x128xbf16>
    %37 = vector.shape_cast %36 : vector<1x8x8x128xbf16> to vector<8x8x128xbf16>
    %38 = vector.shape_cast %37 : vector<8x8x128xbf16> to vector<64x128xbf16>
    %c1_46 = arith.constant 1 : index
    %c2_47 = arith.constant 2 : index
    %c0_48 = arith.constant 0 : index
    %c0_49 = arith.constant 0 : index
    %39 = vector.load %arg6[%c1_46, %c2_47, %c0_48, %c0_49] : memref<3x3x128x128xbf16, #tpu.memory_space<vmem>>, vector<1x1x128x128xbf16>
    %40 = vector.shape_cast %39 : vector<1x1x128x128xbf16> to vector<128x128xbf16>
    %cst_50 = arith.constant dense<0.000000e+00> : vector<64x128xf32>
    %41 = tpu.matmul %38, %40, %cst_50 {dimension_numbers = #tpu.dot_dimension_numbers<[1], [0], [0], [1], [0, 0, 1, 1], [], []>} : vector<64x128xbf16>, vector<128x128xbf16>, vector<64x128xf32> -> vector<64x128xf32>
    %42 = arith.addf %35, %41 : vector<64x128xf32>
    %c0_51 = arith.constant 0 : index
    %c1_52 = arith.constant 1 : index
    %c0_53 = arith.constant 0 : index
    %c0_54 = arith.constant 0 : index
    %43 = vector.load %arg2[%c0_51, %c1_52, %c0_53, %c0_54] : memref<1x9x9x128xbf16, #tpu.memory_space<vmem>>, vector<1x8x8x128xbf16>
    %44 = vector.shape_cast %43 : vector<1x8x8x128xbf16> to vector<8x8x128xbf16>
    %45 = vector.shape_cast %44 : vector<8x8x128xbf16> to vector<64x128xbf16>
    %c2_55 = arith.constant 2 : index
    %c0_56 = arith.constant 0 : index
    %c0_57 = arith.constant 0 : index
    %c0_58 = arith.constant 0 : index
    %46 = vector.load %arg6[%c2_55, %c0_56, %c0_57, %c0_58] : memref<3x3x128x128xbf16, #tpu.memory_space<vmem>>, vector<1x1x128x128xbf16>
    %47 = vector.shape_cast %46 : vector<1x1x128x128xbf16> to vector<128x128xbf16>
    %cst_59 = arith.constant dense<0.000000e+00> : vector<64x128xf32>
    %48 = tpu.matmul %45, %47, %cst_59 {dimension_numbers = #tpu.dot_dimension_numbers<[1], [0], [0], [1], [0, 0, 1, 1], [], []>} : vector<64x128xbf16>, vector<128x128xbf16>, vector<64x128xf32> -> vector<64x128xf32>
    %49 = arith.addf %42, %48 : vector<64x128xf32>
    %c0_60 = arith.constant 0 : index
    %c1_61 = arith.constant 1 : index
    %c0_62 = arith.constant 0 : index
    %c0_63 = arith.constant 0 : index
    %50 = vector.load %arg3[%c0_60, %c1_61, %c0_62, %c0_63] : memref<1x9x9x128xbf16, #tpu.memory_space<vmem>>, vector<1x8x8x128xbf16>
    %51 = vector.shape_cast %50 : vector<1x8x8x128xbf16> to vector<8x8x128xbf16>
    %52 = vector.shape_cast %51 : vector<8x8x128xbf16> to vector<64x128xbf16>
    %c2_64 = arith.constant 2 : index
    %c1_65 = arith.constant 1 : index
    %c0_66 = arith.constant 0 : index
    %c0_67 = arith.constant 0 : index
    %53 = vector.load %arg6[%c2_64, %c1_65, %c0_66, %c0_67] : memref<3x3x128x128xbf16, #tpu.memory_space<vmem>>, vector<1x1x128x128xbf16>
    %54 = vector.shape_cast %53 : vector<1x1x128x128xbf16> to vector<128x128xbf16>
    %cst_68 = arith.constant dense<0.000000e+00> : vector<64x128xf32>
    %55 = tpu.matmul %52, %54, %cst_68 {dimension_numbers = #tpu.dot_dimension_numbers<[1], [0], [0], [1], [0, 0, 1, 1], [], []>} : vector<64x128xbf16>, vector<128x128xbf16>, vector<64x128xf32> -> vector<64x128xf32>
    %56 = arith.addf %49, %55 : vector<64x128xf32>
    %c0_69 = arith.constant 0 : index
    %c1_70 = arith.constant 1 : index
    %c1_71 = arith.constant 1 : index
    %c0_72 = arith.constant 0 : index
    %57 = vector.load %arg2[%c0_69, %c1_70, %c1_71, %c0_72] : memref<1x9x9x128xbf16, #tpu.memory_space<vmem>>, vector<1x8x8x128xbf16>
    %58 = vector.shape_cast %57 : vector<1x8x8x128xbf16> to vector<8x8x128xbf16>
    %59 = vector.shape_cast %58 : vector<8x8x128xbf16> to vector<64x128xbf16>
    %c2_73 = arith.constant 2 : index
    %c2_74 = arith.constant 2 : index
    %c0_75 = arith.constant 0 : index
    %c0_76 = arith.constant 0 : index
    %60 = vector.load %arg6[%c2_73, %c2_74, %c0_75, %c0_76] : memref<3x3x128x128xbf16, #tpu.memory_space<vmem>>, vector<1x1x128x128xbf16>
    %61 = vector.shape_cast %60 : vector<1x1x128x128xbf16> to vector<128x128xbf16>
    %cst_77 = arith.constant dense<0.000000e+00> : vector<64x128xf32>
    %62 = tpu.matmul %59, %61, %cst_77 {dimension_numbers = #tpu.dot_dimension_numbers<[1], [0], [0], [1], [0, 0, 1, 1], [], []>} : vector<64x128xbf16>, vector<128x128xbf16>, vector<64x128xf32> -> vector<64x128xf32>
    %63 = arith.addf %56, %62 : vector<64x128xf32>
    %c0_78 = arith.constant 0 : index
    %c0_79 = arith.constant 0 : index
    %64 = vector.load %arg7[%c0_78, %c0_79] : memref<1x128xf32, #tpu.memory_space<vmem>>, vector<1x128xf32>
    %65 = vector.broadcast %64 : vector<1x128xf32> to vector<64x128xf32>
    %66 = arith.addf %63, %65 : vector<64x128xf32>
    %cst_80 = arith.constant 0.000000e+00 : f32
    %67 = vector.broadcast %cst_80 : f32 to vector<64x128xf32>
    %68 = arith.maximumf %66, %67 : vector<64x128xf32>
    %69 = vector.shape_cast %68 : vector<64x128xf32> to vector<8x8x128xf32>
    %70 = arith.truncf %69 : vector<8x8x128xf32> to vector<8x8x128xbf16>
    %c0_81 = arith.constant 0 : index
    %c0_82 = arith.constant 0 : index
    %c0_83 = arith.constant 0 : index
    %c0_84 = arith.constant 0 : index
    %71 = vector.load %arg8[%c0_81, %c0_82, %c0_83, %c0_84] : memref<1x8x8x128xbf16, #tpu.memory_space<vmem>>, vector<1x8x8x128xbf16>
    %72 = vector.shape_cast %71 : vector<1x8x8x128xbf16> to vector<8x8x128xbf16>
    %73 = vector.shape_cast %70 : vector<8x8x128xbf16> to vector<1x8x8x128xbf16>
    tpu.vector_store %arg8[%c0_81, %c0_82, %c0_83, %c0_84], %73 {strides = array<i32>} : memref<1x8x8x128xbf16, #tpu.memory_space<vmem>>, vector<1x8x8x128xbf16>,
    return
  }
  func.func @transform_0(%arg0: i32, %arg1: i32) -> (i32, i32, i32, i32) {
    %c0_i32 = arith.constant 0 : i32
    %c0_i32_0 = arith.constant 0 : i32
    %c0_i32_1 = arith.constant 0 : i32
    %c0_i32_2 = arith.constant 0 : i32
    return %arg0, %c0_i32, %c0_i32_0, %c0_i32_1 : i32, i32, i32, i32
  }
  func.func @transform_1(%arg0: i32, %arg1: i32) -> (i32, i32, i32, i32) {
    %c0_i32 = arith.constant 0 : i32
    %c0_i32_0 = arith.constant 0 : i32
    %c0_i32_1 = arith.constant 0 : i32
    %c0_i32_2 = arith.constant 0 : i32
    return %arg0, %c0_i32, %c0_i32_0, %c0_i32_1 : i32, i32, i32, i32
  }
  func.func @transform_2(%arg0: i32, %arg1: i32) -> (i32, i32, i32, i32) {
    %c0_i32 = arith.constant 0 : i32
    %c0_i32_0 = arith.constant 0 : i32
    %c0_i32_1 = arith.constant 0 : i32
    %c0_i32_2 = arith.constant 0 : i32
    return %arg0, %c0_i32, %c0_i32_0, %c0_i32_1 : i32, i32, i32, i32
  }
  func.func @transform_3(%arg0: i32, %arg1: i32) -> (i32, i32, i32, i32) {
    %c0_i32 = arith.constant 0 : i32
    %c0_i32_0 = arith.constant 0 : i32
    %c0_i32_1 = arith.constant 0 : i32
    %c0_i32_2 = arith.constant 0 : i32
    return %arg0, %c0_i32, %c0_i32_0, %c0_i32_1 : i32, i32, i32, i32
  }
  func.func @transform_4(%arg0: i32, %arg1: i32) -> (i32, i32, i32, i32) {
    %c0_i32 = arith.constant 0 : i32
    %c0_i32_0 = arith.constant 0 : i32
    %c0_i32_1 = arith.constant 0 : i32
    %c0_i32_2 = arith.constant 0 : i32
    return %c0_i32, %c0_i32_0, %c0_i32_1, %arg1 : i32, i32, i32, i32
  }
  func.func @transform_5(%arg0: i32, %arg1: i32) -> (i32, i32) {
    %c0_i32 = arith.constant 0 : i32
    %c0_i32_0 = arith.constant 0 : i32
    return %c0_i32, %arg1 : i32, i32
  }
  func.func @transform_6(%arg0: i32, %arg1: i32) -> (i32, i32, i32, i32) {
    %c0_i32 = arith.constant 0 : i32
    %c0_i32_0 = arith.constant 0 : i32
    %c0_i32_1 = arith.constant 0 : i32
    return %arg0, %c0_i32, %c0_i32_0, %arg1 : i32, i32, i32, i32
  }
}

module attributes {stable_mosaic.version = 11 : i64} {
  func.func @kernel(%arg0: i32, %arg1: i32, %arg2: memref<64x128xbf16, #tpu.memory_space<vmem>>, %arg3: memref<128x128xbf16, #tpu.memory_space<vmem>>, %arg4: memref<1x128xf32, #tpu.memory_space<vmem>>, %arg5: memref<64x128xbf16, #tpu.memory_space<vmem>>, %arg6: memref<64x128xbf16, #tpu.memory_space<vmem>>) attributes {dimension_semantics = [#tpu.dimension_semantics<parallel>, #tpu.dimension_semantics<parallel>], iteration_bounds = array<i64: 2, 1>, scalar_prefetch = 0 : i64, scratch_operands = 0 : i64, tpu.core_type = #tpu.core_type<tc>, window_params = [{transform_indices = @transform_0, window_bounds = array<i64: 64, 128>}, {transform_indices = @transform_1, window_bounds = array<i64: 128, 128>}, {transform_indices = @transform_2, window_bounds = array<i64: 1, 128>}, {transform_indices = @transform_3, window_bounds = array<i64: 64, 128>}, {transform_indices = @transform_4, window_bounds = array<i64: 64, 128>}]} {
    %c0 = arith.constant 0 : index
    %c0_0 = arith.constant 0 : index
    %0 = vector.load %arg2[%c0, %c0_0] : memref<64x128xbf16, #tpu.memory_space<vmem>>, vector<64x128xbf16>
    %c0_1 = arith.constant 0 : index
    %c0_2 = arith.constant 0 : index
    %1 = vector.load %arg3[%c0_1, %c0_2] : memref<128x128xbf16, #tpu.memory_space<vmem>>, vector<128x128xbf16>
    %cst = arith.constant dense<0.000000e+00> : vector<64x128xf32>
    %2 = tpu.matmul %0, %1, %cst {dimension_numbers = #tpu.dot_dimension_numbers<[1], [0], [0], [1], [0, 0, 1, 1], [], []>} : vector<64x128xbf16>, vector<128x128xbf16>, vector<64x128xf32> -> vector<64x128xf32>
    %c0_3 = arith.constant 0 : index
    %c0_4 = arith.constant 0 : index
    %3 = vector.load %arg4[%c0_3, %c0_4] : memref<1x128xf32, #tpu.memory_space<vmem>>, vector<1x128xf32>
    %4 = vector.broadcast %3 : vector<1x128xf32> to vector<64x128xf32>
    %5 = arith.addf %2, %4 : vector<64x128xf32>
    %c0_5 = arith.constant 0 : index
    %c0_6 = arith.constant 0 : index
    %6 = vector.load %arg5[%c0_5, %c0_6] : memref<64x128xbf16, #tpu.memory_space<vmem>>, vector<64x128xbf16>
    %7 = arith.extf %6 : vector<64x128xbf16> to vector<64x128xf32>
    %8 = arith.addf %5, %7 : vector<64x128xf32>
    %cst_7 = arith.constant 0.000000e+00 : f32
    %9 = vector.broadcast %cst_7 : f32 to vector<64x128xf32>
    %10 = arith.maximumf %8, %9 : vector<64x128xf32>
    %11 = arith.truncf %10 : vector<64x128xf32> to vector<64x128xbf16>
    %c0_8 = arith.constant 0 : index
    %c0_9 = arith.constant 0 : index
    %12 = vector.load %arg6[%c0_8, %c0_9] : memref<64x128xbf16, #tpu.memory_space<vmem>>, vector<64x128xbf16>
    tpu.vector_store %arg6[%c0_8, %c0_9], %11 {strides = array<i32>} : memref<64x128xbf16, #tpu.memory_space<vmem>>, vector<64x128xbf16>,
    return
  }
  func.func @transform_0(%arg0: i32, %arg1: i32) -> (i32, i32) {
    %c0_i32 = arith.constant 0 : i32
    %c0_i32_0 = arith.constant 0 : i32
    return %arg0, %c0_i32 : i32, i32
  }
  func.func @transform_1(%arg0: i32, %arg1: i32) -> (i32, i32) {
    %c0_i32 = arith.constant 0 : i32
    %c0_i32_0 = arith.constant 0 : i32
    return %c0_i32, %arg1 : i32, i32
  }
  func.func @transform_2(%arg0: i32, %arg1: i32) -> (i32, i32) {
    %c0_i32 = arith.constant 0 : i32
    %c0_i32_0 = arith.constant 0 : i32
    return %c0_i32, %arg1 : i32, i32
  }
  func.func @transform_3(%arg0: i32, %arg1: i32) -> (i32, i32) {
    %c0_i32 = arith.constant 0 : i32
    return %arg0, %arg1 : i32, i32
  }
  func.func @transform_4(%arg0: i32, %arg1: i32) -> (i32, i32) {
    %c0_i32 = arith.constant 0 : i32
    return %arg0, %arg1 : i32, i32
  }
}

</mosaic_0001>

<llo_original>
// kernel: model_forward.7
$region0: #{model_forward.7}
  #allocation0 [shape = 'u32[]', space=smem, size = 0x4, offset = 0x4, fixed_abs, tag = 'smem constant byte address 0x4 - core index']
  #allocation1 [shape = 'u32[144,128]{1,0:T(1,128)}', space=vmem, size = 0x12000, scoped, tag = 'internal scratch']
  %s0 = inlined_call_operand.vmem [shape: bf16[512,128], index: 0, kind: input, shape index: {}]
  %s1 = inlined_call_operand.vmem [shape: bf16[128,128], index: 1, kind: input, shape index: {}]
  %s2 = inlined_call_operand.vmem [shape: f32[1,128], index: 2, kind: input, shape index: {}]
  %s3 = inlined_call_operand.vmem [shape: bf16[512,128], index: 3, kind: output, shape index: {}]
  %s4 = sld [smem:[#allocation0]]
  $region45: #{model_forward.7} parent=0
    _
  %s6 = ssub.s32 1, %s4
  %s7 = scalar_select 0, %s6, %s4
  loop: start=0, step=1, limit=4
  $region2: #{model_forward.7} parent=0 // loop_pre_header
    _
  $region3: #{model_forward.7} parent=0 // loop_header
    %s9 = sphi 0, %s13
    %p10 = scmp.ge.s32.totalorder %s9, 4
    %s16 = sphi 0, %s28
    %s17 = sphi 0, %s24
    %s18 = sphi 0, %s16
    %s19 = sphi 0, %s17
    %s20 = sphi 0, %s18
    %s21 = sphi 0, %s19
    %s31 = sphi 0, %s33
    %s34 = sphi 0, %s31
    %s35 = sphi 0, %s34
    %s51 = sphi 0, %s35
    %s57 = sphi 0, %s59
    %s60 = sphi 0, %s57
    %s61 = sphi 0, %s60
    %s77 = sphi 0, %s61
    %s83 = sphi 0, %s85
    %s86 = sphi 0, %s83
    %s87 = sphi 0, %s86
    %s103 = sphi 0, %s87
    %s111 = sphi 0, %s113
    %s114 = sphi 0, %s111
    %s115 = sphi 0, %s114
    %s131 = sphi 0, %s115
  $region4: #{model_forward.7} parent=0 // loop_header_branch
    %12 = sbr.rel (%p10) target = $region8
  $region5: #{model_forward.7} parent=0 // loop_body
    %s14 = ssub.s32 %s9, 1
    %s15 = ssub.s32 %s9, 2
    %s22 = sadd.s32 1, %s17
    %p23 = scmp.ge.s32.totalorder %s22, 1
    %s24 = scalar_select %p23, 0, %s22
    %s25 = sadd.s32 1, %s16
    %s26 = scalar_select %p23, %s25, %s16
    %p27 = scmp.ge.s32.totalorder %s26, 2
    %s28 = scalar_select %p27, 0, %s26
    %s29 = ssub.s32 %s16, %s28
    %p30 = scmp.eq.s32.totalorder %s29, 0
    %s32 = sadd.s32 %s31, 1
    %s33 = scalar_select %p30, %s31, %s32
    %p36 = pneg %p30
    %p37 = scmp.eq.s32.totalorder %s9, 1
    %p38 = por %p36, %p37
    %p39 = scmp.ne.s32.totalorder %s31, %s34
    %p40 = scmp.eq.s32.totalorder %s9, 0
    %p41 = por %p39, %p40
    %p42 = scmp.ne.s32.totalorder %s31, %s34
    %p43 = scmp.eq.s32.totalorder %s14, 1
    %p44 = por %p42, %p43
    %p45 = scmp.ne.s32.totalorder %s34, %s35
    %p46 = scmp.eq.s32.totalorder %s14, 0
    %p47 = por %p45, %p46
    %p48 = scmp.ne.s32.totalorder %s34, %s35
    %p49 = scmp.eq.s32.totalorder %s15, 1
    %p50 = por %p48, %p49
    %p52 = scmp.ne.s32.totalorder %s35, %s51
    %p53 = scmp.eq.s32.totalorder %s15, 0
    %p54 = por %p52, %p53
    %s55 = ssub.s32 %s17, %s24
    %p56 = scmp.eq.s32.totalorder %s55, 0
    %s58 = sadd.s32 %s57, 1
    %s59 = scalar_select %p56, %s57, %s58
    %p62 = pneg %p56
    %p63 = scmp.eq.s32.totalorder %s9, 1
    %p64 = por %p62, %p63
    %p65 = scmp.ne.s32.totalorder %s57, %s60
    %p66 = scmp.eq.s32.totalorder %s9, 0
    %p67 = por %p65, %p66
    %p68 = scmp.ne.s32.totalorder %s57, %s60
    %p69 = scmp.eq.s32.totalorder %s14, 1
    %p70 = por %p68, %p69
    %p71 = scmp.ne.s32.totalorder %s60, %s61
    %p72 = scmp.eq.s32.totalorder %s14, 0
    %p73 = por %p71, %p72
    %p74 = scmp.ne.s32.totalorder %s60, %s61
    %p75 = scmp.eq.s32.totalorder %s15, 1
    %p76 = por %p74, %p75
    %p78 = scmp.ne.s32.totalorder %s61, %s77
    %p79 = scmp.eq.s32.totalorder %s15, 0
    %p80 = por %p78, %p79
    %s81 = ssub.s32 %s17, %s24
    %p82 = scmp.eq.s32.totalorder %s81, 0
    %s84 = sadd.s32 %s83, 1
    %s85 = scalar_select %p82, %s83, %s84
    %p88 = pneg %p82
    %p89 = scmp.eq.s32.totalorder %s9, 1
    %p90 = por %p88, %p89
    %p91 = scmp.ne.s32.totalorder %s83, %s86
    %p92 = scmp.eq.s32.totalorder %s9, 0
    %p93 = por %p91, %p92
    %p94 = scmp.ne.s32.totalorder %s83, %s86
    %p95 = scmp.eq.s32.totalorder %s14, 1
    %p96 = por %p94, %p95
    %p97 = scmp.ne.s32.totalorder %s86, %s87
    %p98 = scmp.eq.s32.totalorder %s14, 0
    %p99 = por %p97, %p98
    %p100 = scmp.ne.s32.totalorder %s86, %s87
    %p101 = scmp.eq.s32.totalorder %s15, 1
    %p102 = por %p100, %p101
    %p104 = scmp.ne.s32.totalorder %s87, %s103
    %p105 = scmp.eq.s32.totalorder %s15, 0
    %p106 = por %p104, %p105
    %s107 = ssub.s32 %s16, %s28
    %s108 = ssub.s32 %s17, %s24
    %s109 = sor.u32 %s107, %s108
    %p110 = scmp.eq.s32.totalorder %s109, 0
    %s112 = sadd.s32 %s111, 1
    %s113 = scalar_select %p110, %s111, %s112
    %p116 = pneg %p110
    %p117 = scmp.eq.s32.totalorder %s9, 1
    %p118 = por %p116, %p117
    %p119 = scmp.ne.s32.totalorder %s111, %s114
    %p120 = scmp.eq.s32.totalorder %s9, 0
    %p121 = por %p119, %p120
    %p122 = scmp.ne.s32.totalorder %s111, %s114
    %p123 = scmp.eq.s32.totalorder %s14, 1
    %p124 = por %p122, %p123
    %p125 = scmp.ne.s32.totalorder %s114, %s115
    %p126 = scmp.eq.s32.totalorder %s14, 0
    %p127 = por %p125, %p126
    %p128 = scmp.ne.s32.totalorder %s114, %s115
    %p129 = scmp.eq.s32.totalorder %s15, 1
    %p130 = por %p128, %p129
    %p132 = scmp.ne.s32.totalorder %s115, %s131
    %p133 = scmp.eq.s32.totalorder %s15, 0
    %p134 = por %p132, %p133
    %p135 = scmp.le.s32.totalorder 1, %s9
    %p136 = scmp.lt.s32.totalorder %s9, 3
    %p137 = pnand %p135, %p136
    %p138 = pneg %p137
    // Predicated region
    $region9: #{model_forward.7} parent=5 // pred_check
      _
    $region10: #{model_forward.7} parent=5 // pred_check_branch
      %140 = sbr.rel (%p137) target = $region12
    $region11: #{model_forward.7} parent=5 // pred_region
      %s141 = ssub.s32 %s9, 1
      // Predicated region
      $region13: #{model_forward.7} parent=11 // pred_check
        %p142 = pneg %p73
      $region14: #{model_forward.7} parent=11 // pred_check_branch
        %144 = sbr.rel (%p142) target = $region16
      $region15: #{model_forward.7} parent=11 // pred_region
        %p145 = scmp.lt.s32.totalorder %s19, 0
        %s146 = scalar_select %p145, %s19, 0
        %s147 = smul.addr %s146, 4
        %s148 = scalar_lea.vmem %s1, %s147
      $region16: #{model_forward.7} parent=11 // pred_fallthru
        _
      // Predicated region
      $region17: #{model_forward.7} parent=11 // pred_check
        %p149 = pneg %p99
      $region18: #{model_forward.7} parent=11 // pred_check_branch
        %151 = sbr.rel (%p149) target = $region20
      $region19: #{model_forward.7} parent=11 // pred_region
        %p152 = scmp.lt.s32.totalorder %s19, 0
        %s153 = scalar_select %p152, %s19, 0
        %s154 = scalar_lea.vmem %s2, %s153
      $region20: #{model_forward.7} parent=11 // pred_fallthru
        _
    $region12: #{model_forward.7} parent=5 // pred_fallthru
      _
    %p155 = scmp.lt.s32.totalorder %s9, 2
    // Predicated region
    $region21: #{model_forward.7} parent=5 // pred_check
      %p156 = pneg %p155
    $region22: #{model_forward.7} parent=5 // pred_check_branch
      %158 = sbr.rel (%p156) target = $region24
    $region23: #{model_forward.7} parent=5 // pred_region
      // Predicated region
      $region25: #{model_forward.7} parent=23 // pred_check
        %p159 = pneg %p41
      $region26: #{model_forward.7} parent=23 // pred_check_branch
        %161 = sbr.rel (%p159) target = $region28
      $region27: #{model_forward.7} parent=23 // pred_region
        %s162 = smul.u32 32, %s16
        %p163 = scmp.lt.s32.totalorder %s162, 63
        %s164 = scalar_select %p163, %s162, 63
        %s165 = smul.addr %s164, 4
        %s166 = scalar_lea.vmem %s0, %s165
        %s167 = smul.u32 32, %s16
      $region28: #{model_forward.7} parent=23 // pred_fallthru
        _
    $region24: #{model_forward.7} parent=5 // pred_fallthru
      _
    %p168 = scmp.le.s32.totalorder 1, %s9
    %p169 = scmp.lt.s32.totalorder %s9, 3
    %p170 = pnand %p168, %p169
    %p171 = pneg %p170
    // Predicated region
    $region29: #{model_forward.7} parent=5 // pred_check
      _
    $region30: #{model_forward.7} parent=5 // pred_check_branch
      %173 = sbr.rel (%p170) target = $region32
    $region31: #{model_forward.7} parent=5 // pred_region
      %s174 = ssub.s32 %s9, 1
      %s175 = smul.u32 32, %s18
      %p176 = scmp.lt.s32.totalorder %s175, 63
      %s177 = scalar_select %p176, %s175, 63
      %s178 = smul.addr %s177, 4
      %s179 = scalar_lea.vmem %s0, %s178
      %p180 = pneg %p47
      %p181 = pneg %p44
      %p182 = scmp.lt.s32.totalorder %s19, 0
      %s183 = scalar_select %p182, %s19, 0
      %s184 = smul.addr %s183, 4
      %s185 = scalar_lea.vmem %s1, %s184
      %p186 = pneg %p73
      %p187 = pneg %p70
      %p188 = scmp.lt.s32.totalorder %s19, 0
      %s189 = scalar_select %p188, %s19, 0
      %s190 = scalar_lea.vmem %s2, %s189
      %p191 = pneg %p99
      %p192 = pneg %p96
      %p193 = pneg %p127
      %p194 = pneg %p124
      %s195 = smul.u32 32, %s18
      %p196 = scmp.lt.s32.totalorder %s195, 63
      %s197 = scalar_select %p196, %s195, 63
      %p198 = scmp.lt.s32.totalorder %s19, 0
      %s199 = scalar_select %p198, %s19, 0
      %s200 = sadd.s32 %s199, %s197
      %s201 = smul.addr %s200, 4
      %s202 = scalar_lea.vmem %s3, %s201
      %s203 = smul.u32 32, %s18
      %p204 = scmp.lt.s32.totalorder %s203, 63
      %s205 = scalar_select %p204, %s203, 63
      %s206 = smul.addr %s205, 4
      %s207 = scalar_lea.vmem %s0, %s206
      %s208 = smul.u32 32, %s18
      %p209 = scmp.lt.s32.totalorder %s19, 0
      %s210 = scalar_select %p209, %s19, 0
      %s211 = smul.addr %s210, 4
      %s212 = scalar_lea.vmem %s1, %s211
      %p213 = scmp.lt.s32.totalorder %s19, 0
      %s214 = scalar_select %p213, %s19, 0
      %s215 = scalar_lea.vmem %s2, %s214
      %s216 = smul.u32 32, %s18
      %p217 = scmp.lt.s32.totalorder %s216, 63
      %s218 = scalar_select %p217, %s216, 63
      %p219 = scmp.lt.s32.totalorder %s19, 0
      %s220 = scalar_select %p219, %s19, 0
      %s221 = sadd.s32 %s220, %s218
      %s222 = smul.addr %s221, 4
      %s223 = scalar_lea.vmem %s3, %s222
      %s224 = smul.u32 32, %s18
      %v226 = vld [vmem:[%s207] sm:$0xf]
      %v227 = vld [vmem:[%s207 + $0x4] sm:$0xf]
      %v228 = vld [vmem:[%s207 + $0x8] sm:$0xf]
      %v229 = vld [vmem:[%s207 + $0xc] sm:$0xf]
      %v230 = vld [vmem:[%s207 + $0x10] sm:$0xf]
      %v231 = vld [vmem:[%s207 + $0x14] sm:$0xf]
      %v232 = vld [vmem:[%s207 + $0x18] sm:$0xf]
      %v233 = vld [vmem:[%s207 + $0x1c] sm:$0xf]
      %v234 = vld [vmem:[%s207 + $0x20] sm:$0xf]
      %v235 = vld [vmem:[%s207 + $0x24] sm:$0xf]
      %v236 = vld [vmem:[%s207 + $0x28] sm:$0xf]
      %v237 = vld [vmem:[%s207 + $0x2c] sm:$0xf]
      %v238 = vld [vmem:[%s207 + $0x30] sm:$0xf]
      %v239 = vld [vmem:[%s207 + $0x34] sm:$0xf]
      %v240 = vld [vmem:[%s207 + $0x38] sm:$0xf]
      %v241 = vld [vmem:[%s207 + $0x3c] sm:$0xf]
      %v242 = vld [vmem:[%s207 + $0x40] sm:$0xf]
      %v243 = vld [vmem:[%s207 + $0x44] sm:$0xf]
      %v244 = vld [vmem:[%s207 + $0x48] sm:$0xf]
      %v245 = vld [vmem:[%s207 + $0x4c] sm:$0xf]
      %v246 = vld [vmem:[%s207 + $0x50] sm:$0xf]
      %v247 = vld [vmem:[%s207 + $0x54] sm:$0xf]
      %v248 = vld [vmem:[%s207 + $0x58] sm:$0xf]
      %v249 = vld [vmem:[%s207 + $0x5c] sm:$0xf]
      %v250 = vld [vmem:[%s207 + $0x60] sm:$0xf]
      %v251 = vld [vmem:[%s207 + $0x64] sm:$0xf]
      %v252 = vld [vmem:[%s207 + $0x68] sm:$0xf]
      %v253 = vld [vmem:[%s207 + $0x6c] sm:$0xf]
      %v254 = vld [vmem:[%s207 + $0x70] sm:$0xf]
      %v255 = vld [vmem:[%s207 + $0x74] sm:$0xf]
      %v256 = vld [vmem:[%s207 + $0x78] sm:$0xf]
      %v257 = vld [vmem:[%s207 + $0x7c] sm:$0xf]
      %v258 = vld [vmem:[%s212] sm:$0xf]
      %v259 = vld [vmem:[%s212 + $0x4] sm:$0xf]
      %v260 = vld [vmem:[%s212 + $0x8] sm:$0xf]
      %v261 = vld [vmem:[%s212 + $0xc] sm:$0xf]
      %v262 = vld [vmem:[%s212 + $0x10] sm:$0xf]
      %v263 = vld [vmem:[%s212 + $0x14] sm:$0xf]
      %v264 = vld [vmem:[%s212 + $0x18] sm:$0xf]
      %v265 = vld [vmem:[%s212 + $0x1c] sm:$0xf]
      %v266 = vld [vmem:[%s212 + $0x20] sm:$0xf]
      %v267 = vld [vmem:[%s212 + $0x24] sm:$0xf]
      %v268 = vld [vmem:[%s212 + $0x28] sm:$0xf]
      %v269 = vld [vmem:[%s212 + $0x2c] sm:$0xf]
      %v270 = vld [vmem:[%s212 + $0x30] sm:$0xf]
      %v271 = vld [vmem:[%s212 + $0x34] sm:$0xf]
      %v272 = vld [vmem:[%s212 + $0x38] sm:$0xf]
      %v273 = vld [vmem:[%s212 + $0x3c] sm:$0xf]
      %v274 = vld [vmem:[%s215] sm:$0x1]
      %v276 = vlaneseq
      %v277 = vshrl.u32 %v276, 7
      %v278 = vsub.s32 0, %v277
      %v279 = vrot.slane %v274, %v278
      %v313 = vunpack.c.l.b16 %v226
      %v314 = vunpack.c.l.b16 %v227
      %v315 = vunpack.c.l.b16 %v228
      %v316 = vunpack.c.l.b16 %v229
      %v317 = vunpack.c.l.b16 %v230
      %v318 = vunpack.c.l.b16 %v231
      %v319 = vunpack.c.l.b16 %v232
      %v320 = vunpack.c.l.b16 %v233
      %v321 = vunpack.c.l.b16 %v234
      %v322 = vunpack.c.l.b16 %v235
      %v323 = vunpack.c.l.b16 %v236
      %v324 = vunpack.c.l.b16 %v237
      %v325 = vunpack.c.l.b16 %v238
      %v326 = vunpack.c.l.b16 %v239
      %v327 = vunpack.c.l.b16 %v240
      %v328 = vunpack.c.l.b16 %v241
      %v329 = vunpack.c.l.b16 %v242
      %v330 = vunpack.c.l.b16 %v243
      %v331 = vunpack.c.l.b16 %v244
      %v332 = vunpack.c.l.b16 %v245
      %v333 = vunpack.c.l.b16 %v246
      %v334 = vunpack.c.l.b16 %v247
      %v335 = vunpack.c.l.b16 %v248
      %v336 = vunpack.c.l.b16 %v249
      %v337 = vunpack.c.l.b16 %v250
      %v338 = vunpack.c.l.b16 %v251
      %v339 = vunpack.c.l.b16 %v252
      %v340 = vunpack.c.l.b16 %v253
      %v341 = vunpack.c.l.b16 %v254
      %v342 = vunpack.c.l.b16 %v255
      %v343 = vunpack.c.l.b16 %v256
      %v344 = vunpack.c.l.b16 %v257
      %v345 = vpack.c.b16 %v314, %v313
      %v346 = vpack.c.b16 %v316, %v315
      %v347 = vpack.c.b16 %v318, %v317
      %v348 = vpack.c.b16 %v320, %v319
      %v349 = vpack.c.b16 %v322, %v321
      %v350 = vpack.c.b16 %v324, %v323
      %v351 = vpack.c.b16 %v326, %v325
      %v352 = vpack.c.b16 %v328, %v327
      %v353 = vpack.c.b16 %v330, %v329
      %v354 = vpack.c.b16 %v332, %v331
      %v355 = vpack.c.b16 %v334, %v333
      %v356 = vpack.c.b16 %v336, %v335
      %v357 = vpack.c.b16 %v338, %v337
      %v358 = vpack.c.b16 %v340, %v339
      %v359 = vpack.c.b16 %v342, %v341
      %v360 = vpack.c.b16 %v344, %v343
      %v393 = vunpack.c.l.b16 %v258
      %v394 = vunpack.c.l.b16 %v259
      %v395 = vunpack.c.l.b16 %v260
      %v396 = vunpack.c.l.b16 %v261
      %v397 = vunpack.c.l.b16 %v262
      %v398 = vunpack.c.l.b16 %v263
      %v399 = vunpack.c.l.b16 %v264
      %v400 = vunpack.c.l.b16 %v265
      %v401 = vunpack.c.l.b16 %v266
      %v402 = vunpack.c.l.b16 %v267
      %v403 = vunpack.c.l.b16 %v268
      %v404 = vunpack.c.l.b16 %v269
      %v405 = vunpack.c.l.b16 %v270
      %v406 = vunpack.c.l.b16 %v271
      %v407 = vunpack.c.l.b16 %v272
      %v408 = vunpack.c.l.b16 %v273
      %v409 = vpack.c.b16 %v394, %v393
      %v410 = vpack.c.b16 %v396, %v395
      %v411 = vpack.c.b16 %v398, %v397
      %v412 = vpack.c.b16 %v400, %v399
      %v413 = vpack.c.b16 %v402, %v401
      %v414 = vpack.c.b16 %v404, %v403
      %v415 = vpack.c.b16 %v406, %v405
      %v416 = vpack.c.b16 %v408, %v407
      %425 = vmatprep.subr.bf16.mxu0 0
      %426 = vmatpush1.bf16.msra.mxu0 %v409
      %427 = vmatprep.subr.bf16.mxu0 0
      %428 = vmatpush1.bf16.msra.mxu0 %v410
      %429 = vmatprep.subr.bf16.mxu0 0
      %430 = vmatpush1.bf16.msra.mxu0 %v411
      %431 = vmatprep.subr.bf16.mxu0 0
      %432 = vmatpush1.bf16.msra.mxu0 %v412
      %433 = vmatprep.subr.bf16.mxu0 0
      %434 = vmatpush1.bf16.msra.mxu0 %v413
      %435 = vmatprep.subr.bf16.mxu0 0
      %436 = vmatpush1.bf16.msra.mxu0 %v414
      %437 = vmatprep.subr.bf16.mxu0 0
      %438 = vmatpush1.bf16.msra.mxu0 %v415
      %439 = vmatprep.subr.bf16.mxu0 0
      %440 = vmatpush1.bf16.msra.mxu0 %v416
      %441 = vmatprep.subr.bf16.mxu0 0
      %442 = vmatpush1.bf16.msra.mxu0 0
      %443 = vmatprep.subr.bf16.mxu0 0
      %444 = vmatpush1.bf16.msra.mxu0 0
      %445 = vmatprep.subr.bf16.mxu0 0
      %446 = vmatpush1.bf16.msra.mxu0 0
      %447 = vmatprep.subr.bf16.mxu0 0
      %448 = vmatpush1.bf16.msra.mxu0 0
      %449 = vmatprep.subr.bf16.mxu0 0
      %450 = vmatpush1.bf16.msra.mxu0 0
      %451 = vmatprep.subr.bf16.mxu0 0
      %452 = vmatpush1.bf16.msra.mxu0 0
      %453 = vmatprep.subr.bf16.mxu0 0
      %454 = vmatpush1.bf16.msra.mxu0 0
      %455 = vmatprep.subr.bf16.mxu0 0
      %456 = vmatpush1.bf16.msra.mxu0 0
      %457 = vmatprep.mubr.bf16.mxu0 0
      %458 = vmatmul.mubr.bf16.gmra.mrb[0].mxu0 %v345
      %v459 = vpop.f32.mrb[0].mxu0
      %v460 = vadd.f32 %v279, %v459
      %v461 = vpop.f32.mrb[0].mxu0
      %v462 = vpop.f32.mrb[0].mxu0
      %v463 = vadd.f32 %v279, %v462
      %v464 = vpop.f32.mrb[0].mxu0
      %465 = vmatprep.mubr.bf16.mxu0 0
      %466 = vmatmul.mubr.bf16.gmra.mrb[0].mxu0 %v346
      %v467 = vpop.f32.mrb[0].mxu0
      %v468 = vadd.f32 %v279, %v467
      %v469 = vpop.f32.mrb[0].mxu0
      %v470 = vpop.f32.mrb[0].mxu0
      %v471 = vadd.f32 %v279, %v470
      %v472 = vpop.f32.mrb[0].mxu0
      %473 = vmatprep.mubr.bf16.mxu0 0
      %474 = vmatmul.mubr.bf16.gmra.mrb[0].mxu0 %v347
      %v475 = vpop.f32.mrb[0].mxu0
      %v476 = vadd.f32 %v279, %v475
      %v477 = vpop.f32.mrb[0].mxu0
      %v478 = vpop.f32.mrb[0].mxu0
      %v479 = vadd.f32 %v279, %v478
      %v480 = vpop.f32.mrb[0].mxu0
      %481 = vmatprep.mubr.bf16.mxu0 0
      %482 = vmatmul.mubr.bf16.gmra.mrb[0].mxu0 %v348
      %v483 = vpop.f32.mrb[0].mxu0
      %v484 = vadd.f32 %v279, %v483
      %v485 = vpop.f32.mrb[0].mxu0
      %v486 = vpop.f32.mrb[0].mxu0
      %v487 = vadd.f32 %v279, %v486
      %v488 = vpop.f32.mrb[0].mxu0
      %489 = vmatprep.mubr.bf16.mxu0 0
      %490 = vmatmul.mubr.bf16.gmra.mrb[0].mxu0 %v349
      %v491 = vpop.f32.mrb[0].mxu0
      %v492 = vadd.f32 %v279, %v491
      %v493 = vpop.f32.mrb[0].mxu0
      %v494 = vpop.f32.mrb[0].mxu0
      %v495 = vadd.f32 %v279, %v494
      %v496 = vpop.f32.mrb[0].mxu0
      %497 = vmatprep.mubr.bf16.mxu0 0
      %498 = vmatmul.mubr.bf16.gmra.mrb[0].mxu0 %v350
      %v499 = vpop.f32.mrb[0].mxu0
      %v500 = vadd.f32 %v279, %v499
      %v501 = vpop.f32.mrb[0].mxu0
      %v502 = vpop.f32.mrb[0].mxu0
      %v503 = vadd.f32 %v279, %v502
      %v504 = vpop.f32.mrb[0].mxu0
      %505 = vmatprep.mubr.bf16.mxu0 0
      %506 = vmatmul.mubr.bf16.gmra.mrb[0].mxu0 %v351
      %v507 = vpop.f32.mrb[0].mxu0
      %v508 = vadd.f32 %v279, %v507
      %v509 = vpop.f32.mrb[0].mxu0
      %v510 = vpop.f32.mrb[0].mxu0
      %v511 = vadd.f32 %v279, %v510
      %v512 = vpop.f32.mrb[0].mxu0
      %513 = vmatprep.mubr.bf16.mxu0 0
      %514 = vmatmul.mubr.bf16.gmra.mrb[0].mxu0 %v352
      %v515 = vpop.f32.mrb[0].mxu0
      %v516 = vadd.f32 %v279, %v515
      %v517 = vpop.f32.mrb[0].mxu0
      %v518 = vpop.f32.mrb[0].mxu0
      %v519 = vadd.f32 %v279, %v518
      %v520 = vpop.f32.mrb[0].mxu0
      %521 = vmatprep.mubr.bf16.mxu0 0
      %522 = vmatmul.mubr.bf16.gmra.mrb[0].mxu0 %v353
      %v523 = vpop.f32.mrb[0].mxu0
      %v524 = vadd.f32 %v279, %v523
      %v525 = vpop.f32.mrb[0].mxu0
      %v526 = vpop.f32.mrb[0].mxu0
      %v527 = vadd.f32 %v279, %v526
      %v528 = vpop.f32.mrb[0].mxu0
      %529 = vmatprep.mubr.bf16.mxu0 0
      %530 = vmatmul.mubr.bf16.gmra.mrb[0].mxu0 %v354
      %v531 = vpop.f32.mrb[0].mxu0
      %v532 = vadd.f32 %v279, %v531
      %v533 = vpop.f32.mrb[0].mxu0
      %v534 = vpop.f32.mrb[0].mxu0
      %v535 = vadd.f32 %v279, %v534
      %v536 = vpop.f32.mrb[0].mxu0
      %537 = vmatprep.mubr.bf16.mxu0 0
      %538 = vmatmul.mubr.bf16.gmra.mrb[0].mxu0 %v355
      %v539 = vpop.f32.mrb[0].mxu0
      %v540 = vadd.f32 %v279, %v539
      %v541 = vpop.f32.mrb[0].mxu0
      %v542 = vpop.f32.mrb[0].mxu0
      %v543 = vadd.f32 %v279, %v542
      %v544 = vpop.f32.mrb[0].mxu0
      %545 = vmatprep.mubr.bf16.mxu0 0
      %546 = vmatmul.mubr.bf16.gmra.mrb[0].mxu0 %v356
      %v547 = vpop.f32.mrb[0].mxu0
      %v548 = vadd.f32 %v279, %v547
      %v549 = vpop.f32.mrb[0].mxu0
      %v550 = vpop.f32.mrb[0].mxu0
      %v551 = vadd.f32 %v279, %v550
      %v552 = vpop.f32.mrb[0].mxu0
      %553 = vmatprep.mubr.bf16.mxu0 0
      %554 = vmatmul.mubr.bf16.gmra.mrb[0].mxu0 %v357
      %v555 = vpop.f32.mrb[0].mxu0
      %v556 = vadd.f32 %v279, %v555
      %v557 = vpop.f32.mrb[0].mxu0
      %v558 = vpop.f32.mrb[0].mxu0
      %v559 = vadd.f32 %v279, %v558
      %v560 = vpop.f32.mrb[0].mxu0
      %561 = vmatprep.mubr.bf16.mxu0 0
      %562 = vmatmul.mubr.bf16.gmra.mrb[0].mxu0 %v358
      %v563 = vpop.f32.mrb[0].mxu0
      %v564 = vadd.f32 %v279, %v563
      %v565 = vpop.f32.mrb[0].mxu0
      %v566 = vpop.f32.mrb[0].mxu0
      %v567 = vadd.f32 %v279, %v566
      %v568 = vpop.f32.mrb[0].mxu0
      %569 = vmatprep.mubr.bf16.mxu0 0
      %570 = vmatmul.mubr.bf16.gmra.mrb[0].mxu0 %v359
      %v571 = vpop.f32.mrb[0].mxu0
      %v572 = vadd.f32 %v279, %v571
      %v573 = vpop.f32.mrb[0].mxu0
      %v574 = vpop.f32.mrb[0].mxu0
      %v575 = vadd.f32 %v279, %v574
      %v576 = vpop.f32.mrb[0].mxu0
      %577 = vmatprep.mubr.bf16.mxu0 0
      %578 = vmatmul.mubr.bf16.gmra.mrb[0].mxu0 %v360
      %v579 = vpop.f32.mrb[0].mxu0
      %v580 = vadd.f32 %v279, %v579
      %v581 = vpop.f32.mrb[0].mxu0
      %v582 = vpop.f32.mrb[0].mxu0
      %v583 = vadd.f32 %v279, %v582
      %v584 = vpop.f32.mrb[0].mxu0
      %585 = vdwg.mxu0
      %v586 = vmax.f32 %v460, 0.0
      %v587 = vmax.f32 %v463, 0.0
      %v588 = vmax.f32 %v468, 0.0
      %v589 = vmax.f32 %v471, 0.0
      %v590 = vmax.f32 %v476, 0.0
      %v591 = vmax.f32 %v479, 0.0
      %v592 = vmax.f32 %v484, 0.0
      %v593 = vmax.f32 %v487, 0.0
      %v594 = vmax.f32 %v492, 0.0
      %v595 = vmax.f32 %v495, 0.0
      %v596 = vmax.f32 %v500, 0.0
      %v597 = vmax.f32 %v503, 0.0
      %v598 = vmax.f32 %v508, 0.0
      %v599 = vmax.f32 %v511, 0.0
      %v600 = vmax.f32 %v516, 0.0
      %v601 = vmax.f32 %v519, 0.0
      %v602 = vmax.f32 %v524, 0.0
      %v603 = vmax.f32 %v527, 0.0
      %v604 = vmax.f32 %v532, 0.0
      %v605 = vmax.f32 %v535, 0.0
      %v606 = vmax.f32 %v540, 0.0
      %v607 = vmax.f32 %v543, 0.0
      %v608 = vmax.f32 %v548, 0.0
      %v609 = vmax.f32 %v551, 0.0
      %v610 = vmax.f32 %v556, 0.0
      %v611 = vmax.f32 %v559, 0.0
      %v612 = vmax.f32 %v564, 0.0
      %v613 = vmax.f32 %v567, 0.0
      %v614 = vmax.f32 %v572, 0.0
      %v615 = vmax.f32 %v575, 0.0
      %v616 = vmax.f32 %v580, 0.0
      %v617 = vmax.f32 %v583, 0.0
      %v618 = vpack.c.bf16 %v587, %v586
      %v619 = vpack.c.bf16 %v589, %v588
      %v620 = vpack.c.bf16 %v591, %v590
      %v621 = vpack.c.bf16 %v593, %v592
      %v622 = vpack.c.bf16 %v595, %v594
      %v623 = vpack.c.bf16 %v597, %v596
      %v624 = vpack.c.bf16 %v599, %v598
      %v625 = vpack.c.bf16 %v601, %v600
      %v626 = vpack.c.bf16 %v603, %v602
      %v627 = vpack.c.bf16 %v605, %v604
      %v628 = vpack.c.bf16 %v607, %v606
      %v629 = vpack.c.bf16 %v609, %v608
      %v630 = vpack.c.bf16 %v611, %v610
      %v631 = vpack.c.bf16 %v613, %v612
      %v632 = vpack.c.bf16 %v615, %v614
      %v633 = vpack.c.bf16 %v617, %v616
      %v650 = vunpack.c.l.b16 %v618
      %v651 = vunpack.c.h.b16 %v618
      %v652 = vunpack.c.l.b16 %v619
      %v653 = vunpack.c.h.b16 %v619
      %v654 = vunpack.c.l.b16 %v620
      %v655 = vunpack.c.h.b16 %v620
      %v656 = vunpack.c.l.b16 %v621
      %v657 = vunpack.c.h.b16 %v621
      %v658 = vunpack.c.l.b16 %v622
      %v659 = vunpack.c.h.b16 %v622
      %v660 = vunpack.c.l.b16 %v623
      %v661 = vunpack.c.h.b16 %v623
      %v662 = vunpack.c.l.b16 %v624
      %v663 = vunpack.c.h.b16 %v624
      %v664 = vunpack.c.l.b16 %v625
      %v665 = vunpack.c.h.b16 %v625
      %v666 = vunpack.c.l.b16 %v626
      %v667 = vunpack.c.h.b16 %v626
      %v668 = vunpack.c.l.b16 %v627
      %v669 = vunpack.c.h.b16 %v627
      %v670 = vunpack.c.l.b16 %v628
      %v671 = vunpack.c.h.b16 %v628
      %v672 = vunpack.c.l.b16 %v629
      %v673 = vunpack.c.h.b16 %v629
      %v674 = vunpack.c.l.b16 %v630
      %v675 = vunpack.c.h.b16 %v630
      %v676 = vunpack.c.l.b16 %v631
      %v677 = vunpack.c.h.b16 %v631
      %v678 = vunpack.c.l.b16 %v632
      %v679 = vunpack.c.h.b16 %v632
      %v680 = vunpack.c.l.b16 %v633
      %v681 = vunpack.c.h.b16 %v633
      %v682 = vpack.c.b16 %v650, %v650
      %v683 = vpack.c.b16 %v651, %v651
      %v684 = vpack.c.b16 %v652, %v652
      %v685 = vpack.c.b16 %v653, %v653
      %v686 = vpack.c.b16 %v654, %v654
      %v687 = vpack.c.b16 %v655, %v655
      %v688 = vpack.c.b16 %v656, %v656
      %v689 = vpack.c.b16 %v657, %v657
      %v690 = vpack.c.b16 %v658, %v658
      %v691 = vpack.c.b16 %v659, %v659
      %v692 = vpack.c.b16 %v660, %v660
      %v693 = vpack.c.b16 %v661, %v661
      %v694 = vpack.c.b16 %v662, %v662
      %v695 = vpack.c.b16 %v663, %v663
      %v696 = vpack.c.b16 %v664, %v664
      %v697 = vpack.c.b16 %v665, %v665
      %v698 = vpack.c.b16 %v666, %v666
      %v699 = vpack.c.b16 %v667, %v667
      %v700 = vpack.c.b16 %v668, %v668
      %v701 = vpack.c.b16 %v669, %v669
      %v702 = vpack.c.b16 %v670, %v670
      %v703 = vpack.c.b16 %v671, %v671
      %v704 = vpack.c.b16 %v672, %v672
      %v705 = vpack.c.b16 %v673, %v673
      %v706 = vpack.c.b16 %v674, %v674
      %v707 = vpack.c.b16 %v675, %v675
      %v708 = vpack.c.b16 %v676, %v676
      %v709 = vpack.c.b16 %v677, %v677
      %v710 = vpack.c.b16 %v678, %v678
      %v711 = vpack.c.b16 %v679, %v679
      %v712 = vpack.c.b16 %v680, %v680
      %v713 = vpack.c.b16 %v681, %v681
      %746 = vst [vmem:[%s223] sm:$0xf] %v682
      %747 = vst [vmem:[%s223 + $0x4] sm:$0xf] %v683
      %748 = vst [vmem:[%s223 + $0x8] sm:$0xf] %v684
      %749 = vst [vmem:[%s223 + $0xc] sm:$0xf] %v685
      %750 = vst [vmem:[%s223 + $0x10] sm:$0xf] %v686
      %751 = vst [vmem:[%s223 + $0x14] sm:$0xf] %v687
      %752 = vst [vmem:[%s223 + $0x18] sm:$0xf] %v688
      %753 = vst [vmem:[%s223 + $0x1c] sm:$0xf] %v689
      %754 = vst [vmem:[%s223 + $0x20] sm:$0xf] %v690
      %755 = vst [vmem:[%s223 + $0x24] sm:$0xf] %v691
      %756 = vst [vmem:[%s223 + $0x28] sm:$0xf] %v692
      %757 = vst [vmem:[%s223 + $0x2c] sm:$0xf] %v693
      %758 = vst [vmem:[%s223 + $0x30] sm:$0xf] %v694
      %759 = vst [vmem:[%s223 + $0x34] sm:$0xf] %v695
      %760 = vst [vmem:[%s223 + $0x38] sm:$0xf] %v696
      %761 = vst [vmem:[%s223 + $0x3c] sm:$0xf] %v697
      %762 = vst [vmem:[%s223 + $0x40] sm:$0xf] %v698
      %763 = vst [vmem:[%s223 + $0x44] sm:$0xf] %v699
      %764 = vst [vmem:[%s223 + $0x48] sm:$0xf] %v700
      %765 = vst [vmem:[%s223 + $0x4c] sm:$0xf] %v701
      %766 = vst [vmem:[%s223 + $0x50] sm:$0xf] %v702
      %767 = vst [vmem:[%s223 + $0x54] sm:$0xf] %v703
      %768 = vst [vmem:[%s223 + $0x58] sm:$0xf] %v704
      %769 = vst [vmem:[%s223 + $0x5c] sm:$0xf] %v705
      %770 = vst [vmem:[%s223 + $0x60] sm:$0xf] %v706
      %771 = vst [vmem:[%s223 + $0x64] sm:$0xf] %v707
      %772 = vst [vmem:[%s223 + $0x68] sm:$0xf] %v708
      %773 = vst [vmem:[%s223 + $0x6c] sm:$0xf] %v709
      %774 = vst [vmem:[%s223 + $0x70] sm:$0xf] %v710
      %775 = vst [vmem:[%s223 + $0x74] sm:$0xf] %v711
      %776 = vst [vmem:[%s223 + $0x78] sm:$0xf] %v712
      %777 = vst [vmem:[%s223 + $0x7c] sm:$0xf] %v713
      %s778 = smul.u32 32, %s18
      %p779 = scmp.lt.s32.totalorder %s778, 63
      %s780 = scalar_select %p779, %s778, 63
      %p781 = scmp.lt.s32.totalorder %s19, 0
      %s782 = scalar_select %p781, %s19, 0
      %s783 = sadd.s32 %s782, %s780
      %s784 = smul.addr %s783, 4
      %s785 = scalar_lea.vmem %s3, %s784
      // Predicated region
      $region33: #{model_forward.7} parent=31 // pred_check
        %p786 = pneg %p124
      $region34: #{model_forward.7} parent=31 // pred_check_branch
        %788 = sbr.rel (%p786) target = $region36
      $region35: #{model_forward.7} parent=31 // pred_region
        %s789 = smul.u32 32, %s18
      $region36: #{model_forward.7} parent=31 // pred_fallthru
        _
    $region32: #{model_forward.7} parent=5 // pred_fallthru
      _
    %p790 = scmp.le.s32.totalorder 2, %s9
    // Predicated region
    $region37: #{model_forward.7} parent=5 // pred_check
      %p791 = pneg %p790
    $region38: #{model_forward.7} parent=5 // pred_check_branch
      %793 = sbr.rel (%p791) target = $region40
    $region39: #{model_forward.7} parent=5 // pred_region
      %s794 = ssub.s32 %s9, 2
      // Predicated region
      $region41: #{model_forward.7} parent=39 // pred_check
        %p795 = pneg %p130
      $region42: #{model_forward.7} parent=39 // pred_check_branch
        %797 = sbr.rel (%p795) target = $region44
      $region43: #{model_forward.7} parent=39 // pred_region
        %s798 = smul.u32 32, %s20
        %p799 = scmp.lt.s32.totalorder %s798, 63
        %s800 = scalar_select %p799, %s798, 63
        %p801 = scmp.lt.s32.totalorder %s21, 0
        %s802 = scalar_select %p801, %s21, 0
        %s803 = sadd.s32 %s802, %s800
        %s804 = smul.addr %s803, 4
        %s805 = scalar_lea.vmem %s3, %s804
      $region44: #{model_forward.7} parent=39 // pred_fallthru
        _
    $region40: #{model_forward.7} parent=5 // pred_fallthru
      _
  $region6: #{model_forward.7} parent=0 // loop_footer
    %s13 = sadd.s32 1, %s9
  $region7: #{model_forward.7} parent=0 // loop_footer_branch
    %8 = sbr.rel target = $region3
  $region8: #{model_forward.7} parent=0 // loop_exit
    _

// kernel: model_forward.12
$region0: #{model_forward.12}
  #allocation0 [shape = 'u32[]', space=smem, size = 0x4, offset = 0x4, fixed_abs, tag = 'smem constant byte address 0x4 - core index']
  #allocation1 [shape = 'u32[144,128]{1,0:T(1,128)}', space=vmem, size = 0x12000, scoped, tag = 'internal scratch']
  %s0 = inlined_call_operand.vmem [shape: bf16[128,128], index: 0, kind: input, shape index: {}]
  %s1 = inlined_call_operand.vmem [shape: bf16[128,128], index: 1, kind: input, shape index: {}]
  %s2 = inlined_call_operand.vmem [shape: f32[1,128], index: 2, kind: input, shape index: {}]
  %s3 = inlined_call_operand.vmem [shape: bf16[128,128], index: 3, kind: output, shape index: {}]
  %s4 = sld [smem:[#allocation0]]
  $region45: #{model_forward.12} parent=0
    _
  %s6 = ssub.s32 1, %s4
  %s7 = scalar_select 0, %s6, %s4
  loop: start=0, step=1, limit=4
  $region2: #{model_forward.12} parent=0 // loop_pre_header
    _
  $region3: #{model_forward.12} parent=0 // loop_header
    %s9 = sphi 0, %s13
    %p10 = scmp.ge.s32.totalorder %s9, 4
    %s16 = sphi 0, %s28
    %s17 = sphi 0, %s24
    %s18 = sphi 0, %s16
    %s19 = sphi 0, %s17
    %s20 = sphi 0, %s18
    %s21 = sphi 0, %s19
    %s31 = sphi 0, %s33
    %s34 = sphi 0, %s31
    %s35 = sphi 0, %s34
    %s51 = sphi 0, %s35
    %s57 = sphi 0, %s59
    %s60 = sphi 0, %s57
    %s61 = sphi 0, %s60
    %s77 = sphi 0, %s61
    %s83 = sphi 0, %s85
    %s86 = sphi 0, %s83
    %s87 = sphi 0, %s86
    %s103 = sphi 0, %s87
    %s111 = sphi 0, %s113
    %s114 = sphi 0, %s111
    %s115 = sphi 0, %s114
    %s131 = sphi 0, %s115
  $region4: #{model_forward.12} parent=0 // loop_header_branch
    %12 = sbr.rel (%p10) target = $region8
  $region5: #{model_forward.12} parent=0 // loop_body
    %s14 = ssub.s32 %s9, 1
    %s15 = ssub.s32 %s9, 2
    %s22 = sadd.s32 1, %s17
    %p23 = scmp.ge.s32.totalorder %s22, 1
    %s24 = scalar_select %p23, 0, %s22
    %s25 = sadd.s32 1, %s16
    %s26 = scalar_select %p23, %s25, %s16
    %p27 = scmp.ge.s32.totalorder %s26, 2
    %s28 = scalar_select %p27, 0, %s26
    %s29 = ssub.s32 %s16, %s28
    %p30 = scmp.eq.s32.totalorder %s29, 0
    %s32 = sadd.s32 %s31, 1
    %s33 = scalar_select %p30, %s31, %s32
    %p36 = pneg %p30
    %p37 = scmp.eq.s32.totalorder %s9, 1
    %p38 = por %p36, %p37
    %p39 = scmp.ne.s32.totalorder %s31, %s34
    %p40 = scmp.eq.s32.totalorder %s9, 0
    %p41 = por %p39, %p40
    %p42 = scmp.ne.s32.totalorder %s31, %s34
    %p43 = scmp.eq.s32.totalorder %s14, 1
    %p44 = por %p42, %p43
    %p45 = scmp.ne.s32.totalorder %s34, %s35
    %p46 = scmp.eq.s32.totalorder %s14, 0
    %p47 = por %p45, %p46
    %p48 = scmp.ne.s32.totalorder %s34, %s35
    %p49 = scmp.eq.s32.totalorder %s15, 1
    %p50 = por %p48, %p49
    %p52 = scmp.ne.s32.totalorder %s35, %s51
    %p53 = scmp.eq.s32.totalorder %s15, 0
    %p54 = por %p52, %p53
    %s55 = ssub.s32 %s17, %s24
    %p56 = scmp.eq.s32.totalorder %s55, 0
    %s58 = sadd.s32 %s57, 1
    %s59 = scalar_select %p56, %s57, %s58
    %p62 = pneg %p56
    %p63 = scmp.eq.s32.totalorder %s9, 1
    %p64 = por %p62, %p63
    %p65 = scmp.ne.s32.totalorder %s57, %s60
    %p66 = scmp.eq.s32.totalorder %s9, 0
    %p67 = por %p65, %p66
    %p68 = scmp.ne.s32.totalorder %s57, %s60
    %p69 = scmp.eq.s32.totalorder %s14, 1
    %p70 = por %p68, %p69
    %p71 = scmp.ne.s32.totalorder %s60, %s61
    %p72 = scmp.eq.s32.totalorder %s14, 0
    %p73 = por %p71, %p72
    %p74 = scmp.ne.s32.totalorder %s60, %s61
    %p75 = scmp.eq.s32.totalorder %s15, 1
    %p76 = por %p74, %p75
    %p78 = scmp.ne.s32.totalorder %s61, %s77
    %p79 = scmp.eq.s32.totalorder %s15, 0
    %p80 = por %p78, %p79
    %s81 = ssub.s32 %s17, %s24
    %p82 = scmp.eq.s32.totalorder %s81, 0
    %s84 = sadd.s32 %s83, 1
    %s85 = scalar_select %p82, %s83, %s84
    %p88 = pneg %p82
    %p89 = scmp.eq.s32.totalorder %s9, 1
    %p90 = por %p88, %p89
    %p91 = scmp.ne.s32.totalorder %s83, %s86
    %p92 = scmp.eq.s32.totalorder %s9, 0
    %p93 = por %p91, %p92
    %p94 = scmp.ne.s32.totalorder %s83, %s86
    %p95 = scmp.eq.s32.totalorder %s14, 1
    %p96 = por %p94, %p95
    %p97 = scmp.ne.s32.totalorder %s86, %s87
    %p98 = scmp.eq.s32.totalorder %s14, 0
    %p99 = por %p97, %p98
    %p100 = scmp.ne.s32.totalorder %s86, %s87
    %p101 = scmp.eq.s32.totalorder %s15, 1
    %p102 = por %p100, %p101
    %p104 = scmp.ne.s32.totalorder %s87, %s103
    %p105 = scmp.eq.s32.totalorder %s15, 0
    %p106 = por %p104, %p105
    %s107 = ssub.s32 %s16, %s28
    %s108 = ssub.s32 %s17, %s24
    %s109 = sor.u32 %s107, %s108
    %p110 = scmp.eq.s32.totalorder %s109, 0
    %s112 = sadd.s32 %s111, 1
    %s113 = scalar_select %p110, %s111, %s112
    %p116 = pneg %p110
    %p117 = scmp.eq.s32.totalorder %s9, 1
    %p118 = por %p116, %p117
    %p119 = scmp.ne.s32.totalorder %s111, %s114
    %p120 = scmp.eq.s32.totalorder %s9, 0
    %p121 = por %p119, %p120
    %p122 = scmp.ne.s32.totalorder %s111, %s114
    %p123 = scmp.eq.s32.totalorder %s14, 1
    %p124 = por %p122, %p123
    %p125 = scmp.ne.s32.totalorder %s114, %s115
    %p126 = scmp.eq.s32.totalorder %s14, 0
    %p127 = por %p125, %p126
    %p128 = scmp.ne.s32.totalorder %s114, %s115
    %p129 = scmp.eq.s32.totalorder %s15, 1
    %p130 = por %p128, %p129
    %p132 = scmp.ne.s32.totalorder %s115, %s131
    %p133 = scmp.eq.s32.totalorder %s15, 0
    %p134 = por %p132, %p133
    %p135 = scmp.le.s32.totalorder 1, %s9
    %p136 = scmp.lt.s32.totalorder %s9, 3
    %p137 = pnand %p135, %p136
    %p138 = pneg %p137
    // Predicated region
    $region9: #{model_forward.12} parent=5 // pred_check
      _
    $region10: #{model_forward.12} parent=5 // pred_check_branch
      %140 = sbr.rel (%p137) target = $region12
    $region11: #{model_forward.12} parent=5 // pred_region
      %s141 = ssub.s32 %s9, 1
      // Predicated region
      $region13: #{model_forward.12} parent=11 // pred_check
        %p142 = pneg %p73
      $region14: #{model_forward.12} parent=11 // pred_check_branch
        %144 = sbr.rel (%p142) target = $region16
      $region15: #{model_forward.12} parent=11 // pred_region
        %p145 = scmp.lt.s32.totalorder %s19, 0
        %s146 = scalar_select %p145, %s19, 0
        %s147 = smul.addr %s146, 4
        %s148 = scalar_lea.vmem %s1, %s147
      $region16: #{model_forward.12} parent=11 // pred_fallthru
        _
      // Predicated region
      $region17: #{model_forward.12} parent=11 // pred_check
        %p149 = pneg %p99
      $region18: #{model_forward.12} parent=11 // pred_check_branch
        %151 = sbr.rel (%p149) target = $region20
      $region19: #{model_forward.12} parent=11 // pred_region
        %p152 = scmp.lt.s32.totalorder %s19, 0
        %s153 = scalar_select %p152, %s19, 0
        %s154 = scalar_lea.vmem %s2, %s153
      $region20: #{model_forward.12} parent=11 // pred_fallthru
        _
    $region12: #{model_forward.12} parent=5 // pred_fallthru
      _
    %p155 = scmp.lt.s32.totalorder %s9, 2
    // Predicated region
    $region21: #{model_forward.12} parent=5 // pred_check
      %p156 = pneg %p155
    $region22: #{model_forward.12} parent=5 // pred_check_branch
      %158 = sbr.rel (%p156) target = $region24
    $region23: #{model_forward.12} parent=5 // pred_region
      // Predicated region
      $region25: #{model_forward.12} parent=23 // pred_check
        %p159 = pneg %p41
      $region26: #{model_forward.12} parent=23 // pred_check_branch
        %161 = sbr.rel (%p159) target = $region28
      $region27: #{model_forward.12} parent=23 // pred_region
        %s162 = smul.u32 8, %s16
        %p163 = scmp.lt.s32.totalorder %s162, 15
        %s164 = scalar_select %p163, %s162, 15
        %s165 = smul.addr %s164, 4
        %s166 = scalar_lea.vmem %s0, %s165
        %s167 = smul.u32 8, %s16
      $region28: #{model_forward.12} parent=23 // pred_fallthru
        _
    $region24: #{model_forward.12} parent=5 // pred_fallthru
      _
    %p168 = scmp.le.s32.totalorder 1, %s9
    %p169 = scmp.lt.s32.totalorder %s9, 3
    %p170 = pnand %p168, %p169
    %p171 = pneg %p170
    // Predicated region
    $region29: #{model_forward.12} parent=5 // pred_check
      _
    $region30: #{model_forward.12} parent=5 // pred_check_branch
      %173 = sbr.rel (%p170) target = $region32
    $region31: #{model_forward.12} parent=5 // pred_region
      %s174 = ssub.s32 %s9, 1
      %s175 = smul.u32 8, %s18
      %p176 = scmp.lt.s32.totalorder %s175, 15
      %s177 = scalar_select %p176, %s175, 15
      %s178 = smul.addr %s177, 4
      %s179 = scalar_lea.vmem %s0, %s178
      %p180 = pneg %p47
      %p181 = pneg %p44
      %p182 = scmp.lt.s32.totalorder %s19, 0
      %s183 = scalar_select %p182, %s19, 0
      %s184 = smul.addr %s183, 4
      %s185 = scalar_lea.vmem %s1, %s184
      %p186 = pneg %p73
      %p187 = pneg %p70
      %p188 = scmp.lt.s32.totalorder %s19, 0
      %s189 = scalar_select %p188, %s19, 0
      %s190 = scalar_lea.vmem %s2, %s189
      %p191 = pneg %p99
      %p192 = pneg %p96
      %p193 = pneg %p127
      %p194 = pneg %p124
      %s195 = smul.u32 8, %s18
      %p196 = scmp.lt.s32.totalorder %s195, 15
      %s197 = scalar_select %p196, %s195, 15
      %p198 = scmp.lt.s32.totalorder %s19, 0
      %s199 = scalar_select %p198, %s19, 0
      %s200 = sadd.s32 %s199, %s197
      %s201 = smul.addr %s200, 4
      %s202 = scalar_lea.vmem %s3, %s201
      %s203 = smul.u32 8, %s18
      %p204 = scmp.lt.s32.totalorder %s203, 15
      %s205 = scalar_select %p204, %s203, 15
      %s206 = smul.addr %s205, 4
      %s207 = scalar_lea.vmem %s0, %s206
      %s208 = smul.u32 8, %s18
      %p209 = scmp.lt.s32.totalorder %s19, 0
      %s210 = scalar_select %p209, %s19, 0
      %s211 = smul.addr %s210, 4
      %s212 = scalar_lea.vmem %s1, %s211
      %p213 = scmp.lt.s32.totalorder %s19, 0
      %s214 = scalar_select %p213, %s19, 0
      %s215 = scalar_lea.vmem %s2, %s214
      %s216 = smul.u32 8, %s18
      %p217 = scmp.lt.s32.totalorder %s216, 15
      %s218 = scalar_select %p217, %s216, 15
      %p219 = scmp.lt.s32.totalorder %s19, 0
      %s220 = scalar_select %p219, %s19, 0
      %s221 = sadd.s32 %s220, %s218
      %s222 = smul.addr %s221, 4
      %s223 = scalar_lea.vmem %s3, %s222
      %s224 = smul.u32 8, %s18
      %v226 = vld [vmem:[%s207] sm:$0xf]
      %v227 = vld [vmem:[%s207 + $0x4] sm:$0xf]
      %v228 = vld [vmem:[%s207 + $0x8] sm:$0xf]
      %v229 = vld [vmem:[%s207 + $0xc] sm:$0xf]
      %v230 = vld [vmem:[%s207 + $0x10] sm:$0xf]
      %v231 = vld [vmem:[%s207 + $0x14] sm:$0xf]
      %v232 = vld [vmem:[%s207 + $0x18] sm:$0xf]
      %v233 = vld [vmem:[%s207 + $0x1c] sm:$0xf]
      %v234 = vld [vmem:[%s212] sm:$0xf]
      %v235 = vld [vmem:[%s212 + $0x4] sm:$0xf]
      %v236 = vld [vmem:[%s212 + $0x8] sm:$0xf]
      %v237 = vld [vmem:[%s212 + $0xc] sm:$0xf]
      %v238 = vld [vmem:[%s212 + $0x10] sm:$0xf]
      %v239 = vld [vmem:[%s212 + $0x14] sm:$0xf]
      %v240 = vld [vmem:[%s212 + $0x18] sm:$0xf]
      %v241 = vld [vmem:[%s212 + $0x1c] sm:$0xf]
      %v242 = vld [vmem:[%s212 + $0x20] sm:$0xf]
      %v243 = vld [vmem:[%s212 + $0x24] sm:$0xf]
      %v244 = vld [vmem:[%s212 + $0x28] sm:$0xf]
      %v245 = vld [vmem:[%s212 + $0x2c] sm:$0xf]
      %v246 = vld [vmem:[%s212 + $0x30] sm:$0xf]
      %v247 = vld [vmem:[%s212 + $0x34] sm:$0xf]
      %v248 = vld [vmem:[%s212 + $0x38] sm:$0xf]
      %v249 = vld [vmem:[%s212 + $0x3c] sm:$0xf]
      %v250 = vld [vmem:[%s215] sm:$0x1]
      %v252 = vlaneseq
      %v253 = vshrl.u32 %v252, 7
      %v254 = vsub.s32 0, %v253
      %v255 = vrot.slane %v250, %v254
      %v265 = vunpack.c.l.b16 %v226
      %v266 = vunpack.c.l.b16 %v227
      %v267 = vunpack.c.l.b16 %v228
      %v268 = vunpack.c.l.b16 %v229
      %v269 = vunpack.c.l.b16 %v230
      %v270 = vunpack.c.l.b16 %v231
      %v271 = vunpack.c.l.b16 %v232
      %v272 = vunpack.c.l.b16 %v233
      %v273 = vpack.c.b16 %v266, %v265
      %v274 = vpack.c.b16 %v268, %v267
      %v275 = vpack.c.b16 %v270, %v269
      %v276 = vpack.c.b16 %v272, %v271
      %v297 = vunpack.c.l.b16 %v234
      %v298 = vunpack.c.l.b16 %v235
      %v299 = vunpack.c.l.b16 %v236
      %v300 = vunpack.c.l.b16 %v237
      %v301 = vunpack.c.l.b16 %v238
      %v302 = vunpack.c.l.b16 %v239
      %v303 = vunpack.c.l.b16 %v240
      %v304 = vunpack.c.l.b16 %v241
      %v305 = vunpack.c.l.b16 %v242
      %v306 = vunpack.c.l.b16 %v243
      %v307 = vunpack.c.l.b16 %v244
      %v308 = vunpack.c.l.b16 %v245
      %v309 = vunpack.c.l.b16 %v246
      %v310 = vunpack.c.l.b16 %v247
      %v311 = vunpack.c.l.b16 %v248
      %v312 = vunpack.c.l.b16 %v249
      %v313 = vpack.c.b16 %v298, %v297
      %v314 = vpack.c.b16 %v300, %v299
      %v315 = vpack.c.b16 %v302, %v301
      %v316 = vpack.c.b16 %v304, %v303
      %v317 = vpack.c.b16 %v306, %v305
      %v318 = vpack.c.b16 %v308, %v307
      %v319 = vpack.c.b16 %v310, %v309
      %v320 = vpack.c.b16 %v312, %v311
      %329 = vmatprep.subr.bf16.mxu0 0
      %330 = vmatpush1.bf16.msra.mxu0 %v313
      %331 = vmatprep.subr.bf16.mxu0 0
      %332 = vmatpush1.bf16.msra.mxu0 %v314
      %333 = vmatprep.subr.bf16.mxu0 0
      %334 = vmatpush1.bf16.msra.mxu0 %v315
      %335 = vmatprep.subr.bf16.mxu0 0
      %336 = vmatpush1.bf16.msra.mxu0 %v316
      %337 = vmatprep.subr.bf16.mxu0 0
      %338 = vmatpush1.bf16.msra.mxu0 %v317
      %339 = vmatprep.subr.bf16.mxu0 0
      %340 = vmatpush1.bf16.msra.mxu0 %v318
      %341 = vmatprep.subr.bf16.mxu0 0
      %342 = vmatpush1.bf16.msra.mxu0 %v319
      %343 = vmatprep.subr.bf16.mxu0 0
      %344 = vmatpush1.bf16.msra.mxu0 %v320
      %345 = vmatprep.subr.bf16.mxu0 0
      %346 = vmatpush1.bf16.msra.mxu0 0
      %347 = vmatprep.subr.bf16.mxu0 0
      %348 = vmatpush1.bf16.msra.mxu0 0
      %349 = vmatprep.subr.bf16.mxu0 0
      %350 = vmatpush1.bf16.msra.mxu0 0
      %351 = vmatprep.subr.bf16.mxu0 0
      %352 = vmatpush1.bf16.msra.mxu0 0
      %353 = vmatprep.subr.bf16.mxu0 0
      %354 = vmatpush1.bf16.msra.mxu0 0
      %355 = vmatprep.subr.bf16.mxu0 0
      %356 = vmatpush1.bf16.msra.mxu0 0
      %357 = vmatprep.subr.bf16.mxu0 0
      %358 = vmatpush1.bf16.msra.mxu0 0
      %359 = vmatprep.subr.bf16.mxu0 0
      %360 = vmatpush1.bf16.msra.mxu0 0
      %361 = vmatprep.mubr.bf16.mxu0 0
      %362 = vmatmul.mubr.bf16.gmra.mrb[0].mxu0 %v273
      %v363 = vpop.f32.mrb[0].mxu0
      %v364 = vadd.f32 %v255, %v363
      %v365 = vpop.f32.mrb[0].mxu0
      %v366 = vpop.f32.mrb[0].mxu0
      %v367 = vadd.f32 %v255, %v366
      %v368 = vpop.f32.mrb[0].mxu0
      %369 = vmatprep.mubr.bf16.mxu0 0
      %370 = vmatmul.mubr.bf16.gmra.mrb[0].mxu0 %v274
      %v371 = vpop.f32.mrb[0].mxu0
      %v372 = vadd.f32 %v255, %v371
      %v373 = vpop.f32.mrb[0].mxu0
      %v374 = vpop.f32.mrb[0].mxu0
      %v375 = vadd.f32 %v255, %v374
      %v376 = vpop.f32.mrb[0].mxu0
      %377 = vmatprep.mubr.bf16.mxu0 0
      %378 = vmatmul.mubr.bf16.gmra.mrb[0].mxu0 %v275
      %v379 = vpop.f32.mrb[0].mxu0
      %v380 = vadd.f32 %v255, %v379
      %v381 = vpop.f32.mrb[0].mxu0
      %v382 = vpop.f32.mrb[0].mxu0
      %v383 = vadd.f32 %v255, %v382
      %v384 = vpop.f32.mrb[0].mxu0
      %385 = vmatprep.mubr.bf16.mxu0 0
      %386 = vmatmul.mubr.bf16.gmra.mrb[0].mxu0 %v276
      %v387 = vpop.f32.mrb[0].mxu0
      %v388 = vadd.f32 %v255, %v387
      %v389 = vpop.f32.mrb[0].mxu0
      %v390 = vpop.f32.mrb[0].mxu0
      %v391 = vadd.f32 %v255, %v390
      %v392 = vpop.f32.mrb[0].mxu0
      %393 = vdwg.mxu0
      %v394 = vpack.c.bf16 %v367, %v364
      %v395 = vpack.c.bf16 %v375, %v372
      %v396 = vpack.c.bf16 %v383, %v380
      %v397 = vpack.c.bf16 %v391, %v388
      %v402 = vunpack.c.l.b16 %v394
      %v403 = vunpack.c.h.b16 %v394
      %v404 = vunpack.c.l.b16 %v395
      %v405 = vunpack.c.h.b16 %v395
      %v406 = vunpack.c.l.b16 %v396
      %v407 = vunpack.c.h.b16 %v396
      %v408 = vunpack.c.l.b16 %v397
      %v409 = vunpack.c.h.b16 %v397
      %v410 = vpack.c.b16 %v402, %v402
      %v411 = vpack.c.b16 %v403, %v403
      %v412 = vpack.c.b16 %v404, %v404
      %v413 = vpack.c.b16 %v405, %v405
      %v414 = vpack.c.b16 %v406, %v406
      %v415 = vpack.c.b16 %v407, %v407
      %v416 = vpack.c.b16 %v408, %v408
      %v417 = vpack.c.b16 %v409, %v409
      %426 = vst [vmem:[%s223] sm:$0xf] %v410
      %427 = vst [vmem:[%s223 + $0x4] sm:$0xf] %v411
      %428 = vst [vmem:[%s223 + $0x8] sm:$0xf] %v412
      %429 = vst [vmem:[%s223 + $0xc] sm:$0xf] %v413
      %430 = vst [vmem:[%s223 + $0x10] sm:$0xf] %v414
      %431 = vst [vmem:[%s223 + $0x14] sm:$0xf] %v415
      %432 = vst [vmem:[%s223 + $0x18] sm:$0xf] %v416
      %433 = vst [vmem:[%s223 + $0x1c] sm:$0xf] %v417
      %s434 = smul.u32 8, %s18
      %p435 = scmp.lt.s32.totalorder %s434, 15
      %s436 = scalar_select %p435, %s434, 15
      %p437 = scmp.lt.s32.totalorder %s19, 0
      %s438 = scalar_select %p437, %s19, 0
      %s439 = sadd.s32 %s438, %s436
      %s440 = smul.addr %s439, 4
      %s441 = scalar_lea.vmem %s3, %s440
      // Predicated region
      $region33: #{model_forward.12} parent=31 // pred_check
        %p442 = pneg %p124
      $region34: #{model_forward.12} parent=31 // pred_check_branch
        %444 = sbr.rel (%p442) target = $region36
      $region35: #{model_forward.12} parent=31 // pred_region
        %s445 = smul.u32 8, %s18
      $region36: #{model_forward.12} parent=31 // pred_fallthru
        _
    $region32: #{model_forward.12} parent=5 // pred_fallthru
      _
    %p446 = scmp.le.s32.totalorder 2, %s9
    // Predicated region
    $region37: #{model_forward.12} parent=5 // pred_check
      %p447 = pneg %p446
    $region38: #{model_forward.12} parent=5 // pred_check_branch
      %449 = sbr.rel (%p447) target = $region40
    $region39: #{model_forward.12} parent=5 // pred_region
      %s450 = ssub.s32 %s9, 2
      // Predicated region
      $region41: #{model_forward.12} parent=39 // pred_check
        %p451 = pneg %p130
      $region42: #{model_forward.12} parent=39 // pred_check_branch
        %453 = sbr.rel (%p451) target = $region44
      $region43: #{model_forward.12} parent=39 // pred_region
        %s454 = smul.u32 8, %s20
        %p455 = scmp.lt.s32.totalorder %s454, 15
        %s456 = scalar_select %p455, %s454, 15
        %p457 = scmp.lt.s32.totalorder %s21, 0
        %s458 = scalar_select %p457, %s21, 0
        %s459 = sadd.s32 %s458, %s456
        %s460 = smul.addr %s459, 4
        %s461 = scalar_lea.vmem %s3, %s460
      $region44: #{model_forward.12} parent=39 // pred_fallthru
        _
    $region40: #{model_forward.12} parent=5 // pred_fallthru
      _
  $region6: #{model_forward.12} parent=0 // loop_footer
    %s13 = sadd.s32 1, %s9
  $region7: #{model_forward.12} parent=0 // loop_footer_branch
    %8 = sbr.rel target = $region3
  $region8: #{model_forward.12} parent=0 // loop_exit
    _

// kernel: model_forward.9
$region0: #{model_forward.9}
  #allocation0 [shape = 'u32[]', space=smem, size = 0x4, offset = 0x4, fixed_abs, tag = 'smem constant byte address 0x4 - core index']
  #allocation1 [shape = 'u32[144,128]{1,0:T(1,128)}', space=vmem, size = 0x12000, scoped, tag = 'internal scratch']
  %s0 = inlined_call_operand.vmem [shape: bf16[512,128], index: 0, kind: input, shape index: {}]
  %s1 = inlined_call_operand.vmem [shape: bf16[128,128], index: 1, kind: input, shape index: {}]
  %s2 = inlined_call_operand.vmem [shape: f32[1,128], index: 2, kind: input, shape index: {}]
  %s3 = inlined_call_operand.vmem [shape: bf16[512,128], index: 3, kind: input, shape index: {}]
  %s4 = inlined_call_operand.vmem [shape: bf16[512,128], index: 4, kind: output, shape index: {}]
  %s5 = sld [smem:[#allocation0]]
  $region49: #{model_forward.9} parent=0
    _
  %s7 = ssub.s32 1, %s5
  %s8 = scalar_select 0, %s7, %s5
  loop: start=0, step=1, limit=4
  $region2: #{model_forward.9} parent=0 // loop_pre_header
    _
  $region3: #{model_forward.9} parent=0 // loop_header
    %s10 = sphi 0, %s14
    %p11 = scmp.ge.s32.totalorder %s10, 4
    %s17 = sphi 0, %s29
    %s18 = sphi 0, %s25
    %s19 = sphi 0, %s17
    %s20 = sphi 0, %s18
    %s21 = sphi 0, %s19
    %s22 = sphi 0, %s20
    %s32 = sphi 0, %s34
    %s35 = sphi 0, %s32
    %s36 = sphi 0, %s35
    %s52 = sphi 0, %s36
    %s58 = sphi 0, %s60
    %s61 = sphi 0, %s58
    %s62 = sphi 0, %s61
    %s78 = sphi 0, %s62
    %s84 = sphi 0, %s86
    %s87 = sphi 0, %s84
    %s88 = sphi 0, %s87
    %s104 = sphi 0, %s88
    %s112 = sphi 0, %s114
    %s115 = sphi 0, %s112
    %s116 = sphi 0, %s115
    %s132 = sphi 0, %s116
    %s140 = sphi 0, %s142
    %s143 = sphi 0, %s140
    %s144 = sphi 0, %s143
    %s160 = sphi 0, %s144
  $region4: #{model_forward.9} parent=0 // loop_header_branch
    %13 = sbr.rel (%p11) target = $region8
  $region5: #{model_forward.9} parent=0 // loop_body
    %s15 = ssub.s32 %s10, 1
    %s16 = ssub.s32 %s10, 2
    %s23 = sadd.s32 1, %s18
    %p24 = scmp.ge.s32.totalorder %s23, 1
    %s25 = scalar_select %p24, 0, %s23
    %s26 = sadd.s32 1, %s17
    %s27 = scalar_select %p24, %s26, %s17
    %p28 = scmp.ge.s32.totalorder %s27, 2
    %s29 = scalar_select %p28, 0, %s27
    %s30 = ssub.s32 %s17, %s29
    %p31 = scmp.eq.s32.totalorder %s30, 0
    %s33 = sadd.s32 %s32, 1
    %s34 = scalar_select %p31, %s32, %s33
    %p37 = pneg %p31
    %p38 = scmp.eq.s32.totalorder %s10, 1
    %p39 = por %p37, %p38
    %p40 = scmp.ne.s32.totalorder %s32, %s35
    %p41 = scmp.eq.s32.totalorder %s10, 0
    %p42 = por %p40, %p41
    %p43 = scmp.ne.s32.totalorder %s32, %s35
    %p44 = scmp.eq.s32.totalorder %s15, 1
    %p45 = por %p43, %p44
    %p46 = scmp.ne.s32.totalorder %s35, %s36
    %p47 = scmp.eq.s32.totalorder %s15, 0
    %p48 = por %p46, %p47
    %p49 = scmp.ne.s32.totalorder %s35, %s36
    %p50 = scmp.eq.s32.totalorder %s16, 1
    %p51 = por %p49, %p50
    %p53 = scmp.ne.s32.totalorder %s36, %s52
    %p54 = scmp.eq.s32.totalorder %s16, 0
    %p55 = por %p53, %p54
    %s56 = ssub.s32 %s18, %s25
    %p57 = scmp.eq.s32.totalorder %s56, 0
    %s59 = sadd.s32 %s58, 1
    %s60 = scalar_select %p57, %s58, %s59
    %p63 = pneg %p57
    %p64 = scmp.eq.s32.totalorder %s10, 1
    %p65 = por %p63, %p64
    %p66 = scmp.ne.s32.totalorder %s58, %s61
    %p67 = scmp.eq.s32.totalorder %s10, 0
    %p68 = por %p66, %p67
    %p69 = scmp.ne.s32.totalorder %s58, %s61
    %p70 = scmp.eq.s32.totalorder %s15, 1
    %p71 = por %p69, %p70
    %p72 = scmp.ne.s32.totalorder %s61, %s62
    %p73 = scmp.eq.s32.totalorder %s15, 0
    %p74 = por %p72, %p73
    %p75 = scmp.ne.s32.totalorder %s61, %s62
    %p76 = scmp.eq.s32.totalorder %s16, 1
    %p77 = por %p75, %p76
    %p79 = scmp.ne.s32.totalorder %s62, %s78
    %p80 = scmp.eq.s32.totalorder %s16, 0
    %p81 = por %p79, %p80
    %s82 = ssub.s32 %s18, %s25
    %p83 = scmp.eq.s32.totalorder %s82, 0
    %s85 = sadd.s32 %s84, 1
    %s86 = scalar_select %p83, %s84, %s85
    %p89 = pneg %p83
    %p90 = scmp.eq.s32.totalorder %s10, 1
    %p91 = por %p89, %p90
    %p92 = scmp.ne.s32.totalorder %s84, %s87
    %p93 = scmp.eq.s32.totalorder %s10, 0
    %p94 = por %p92, %p93
    %p95 = scmp.ne.s32.totalorder %s84, %s87
    %p96 = scmp.eq.s32.totalorder %s15, 1
    %p97 = por %p95, %p96
    %p98 = scmp.ne.s32.totalorder %s87, %s88
    %p99 = scmp.eq.s32.totalorder %s15, 0
    %p100 = por %p98, %p99
    %p101 = scmp.ne.s32.totalorder %s87, %s88
    %p102 = scmp.eq.s32.totalorder %s16, 1
    %p103 = por %p101, %p102
    %p105 = scmp.ne.s32.totalorder %s88, %s104
    %p106 = scmp.eq.s32.totalorder %s16, 0
    %p107 = por %p105, %p106
    %s108 = ssub.s32 %s17, %s29
    %s109 = ssub.s32 %s18, %s25
    %s110 = sor.u32 %s108, %s109
    %p111 = scmp.eq.s32.totalorder %s110, 0
    %s113 = sadd.s32 %s112, 1
    %s114 = scalar_select %p111, %s112, %s113
    %p117 = pneg %p111
    %p118 = scmp.eq.s32.totalorder %s10, 1
    %p119 = por %p117, %p118
    %p120 = scmp.ne.s32.totalorder %s112, %s115
    %p121 = scmp.eq.s32.totalorder %s10, 0
    %p122 = por %p120, %p121
    %p123 = scmp.ne.s32.totalorder %s112, %s115
    %p124 = scmp.eq.s32.totalorder %s15, 1
    %p125 = por %p123, %p124
    %p126 = scmp.ne.s32.totalorder %s115, %s116
    %p127 = scmp.eq.s32.totalorder %s15, 0
    %p128 = por %p126, %p127
    %p129 = scmp.ne.s32.totalorder %s115, %s116
    %p130 = scmp.eq.s32.totalorder %s16, 1
    %p131 = por %p129, %p130
    %p133 = scmp.ne.s32.totalorder %s116, %s132
    %p134 = scmp.eq.s32.totalorder %s16, 0
    %p135 = por %p133, %p134
    %s136 = ssub.s32 %s17, %s29
    %s137 = ssub.s32 %s18, %s25
    %s138 = sor.u32 %s136, %s137
    %p139 = scmp.eq.s32.totalorder %s138, 0
    %s141 = sadd.s32 %s140, 1
    %s142 = scalar_select %p139, %s140, %s141
    %p145 = pneg %p139
    %p146 = scmp.eq.s32.totalorder %s10, 1
    %p147 = por %p145, %p146
    %p148 = scmp.ne.s32.totalorder %s140, %s143
    %p149 = scmp.eq.s32.totalorder %s10, 0
    %p150 = por %p148, %p149
    %p151 = scmp.ne.s32.totalorder %s140, %s143
    %p152 = scmp.eq.s32.totalorder %s15, 1
    %p153 = por %p151, %p152
    %p154 = scmp.ne.s32.totalorder %s143, %s144
    %p155 = scmp.eq.s32.totalorder %s15, 0
    %p156 = por %p154, %p155
    %p157 = scmp.ne.s32.totalorder %s143, %s144
    %p158 = scmp.eq.s32.totalorder %s16, 1
    %p159 = por %p157, %p158
    %p161 = scmp.ne.s32.totalorder %s144, %s160
    %p162 = scmp.eq.s32.totalorder %s16, 0
    %p163 = por %p161, %p162
    %p164 = scmp.le.s32.totalorder 1, %s10
    %p165 = scmp.lt.s32.totalorder %s10, 3
    %p166 = pnand %p164, %p165
    %p167 = pneg %p166
    // Predicated region
    $region9: #{model_forward.9} parent=5 // pred_check
      _
    $region10: #{model_forward.9} parent=5 // pred_check_branch
      %169 = sbr.rel (%p166) target = $region12
    $region11: #{model_forward.9} parent=5 // pred_region
      %s170 = ssub.s32 %s10, 1
      // Predicated region
      $region13: #{model_forward.9} parent=11 // pred_check
        %p171 = pneg %p74
      $region14: #{model_forward.9} parent=11 // pred_check_branch
        %173 = sbr.rel (%p171) target = $region16
      $region15: #{model_forward.9} parent=11 // pred_region
        %p174 = scmp.lt.s32.totalorder %s20, 0
        %s175 = scalar_select %p174, %s20, 0
        %s176 = smul.addr %s175, 4
        %s177 = scalar_lea.vmem %s1, %s176
      $region16: #{model_forward.9} parent=11 // pred_fallthru
        _
      // Predicated region
      $region17: #{model_forward.9} parent=11 // pred_check
        %p178 = pneg %p100
      $region18: #{model_forward.9} parent=11 // pred_check_branch
        %180 = sbr.rel (%p178) target = $region20
      $region19: #{model_forward.9} parent=11 // pred_region
        %p181 = scmp.lt.s32.totalorder %s20, 0
        %s182 = scalar_select %p181, %s20, 0
        %s183 = scalar_lea.vmem %s2, %s182
      $region20: #{model_forward.9} parent=11 // pred_fallthru
        _
    $region12: #{model_forward.9} parent=5 // pred_fallthru
      _
    %p184 = scmp.lt.s32.totalorder %s10, 2
    // Predicated region
    $region21: #{model_forward.9} parent=5 // pred_check
      %p185 = pneg %p184
    $region22: #{model_forward.9} parent=5 // pred_check_branch
      %187 = sbr.rel (%p185) target = $region24
    $region23: #{model_forward.9} parent=5 // pred_region
      // Predicated region
      $region25: #{model_forward.9} parent=23 // pred_check
        %p188 = pneg %p42
      $region26: #{model_forward.9} parent=23 // pred_check_branch
        %190 = sbr.rel (%p188) target = $region28
      $region27: #{model_forward.9} parent=23 // pred_region
        %s191 = smul.u32 32, %s17
        %p192 = scmp.lt.s32.totalorder %s191, 63
        %s193 = scalar_select %p192, %s191, 63
        %s194 = smul.addr %s193, 4
        %s195 = scalar_lea.vmem %s0, %s194
        %s196 = smul.u32 32, %s17
      $region28: #{model_forward.9} parent=23 // pred_fallthru
        _
      // Predicated region
      $region29: #{model_forward.9} parent=23 // pred_check
        %p197 = pneg %p122
      $region30: #{model_forward.9} parent=23 // pred_check_branch
        %199 = sbr.rel (%p197) target = $region32
      $region31: #{model_forward.9} parent=23 // pred_region
        %s200 = smul.u32 32, %s17
        %p201 = scmp.lt.s32.totalorder %s200, 63
        %s202 = scalar_select %p201, %s200, 63
        %p203 = scmp.lt.s32.totalorder %s18, 0
        %s204 = scalar_select %p203, %s18, 0
        %s205 = sadd.s32 %s204, %s202
        %s206 = smul.addr %s205, 4
        %s207 = scalar_lea.vmem %s3, %s206
        %s208 = smul.u32 32, %s17
      $region32: #{model_forward.9} parent=23 // pred_fallthru
        _
    $region24: #{model_forward.9} parent=5 // pred_fallthru
      _
    %p209 = scmp.le.s32.totalorder 1, %s10
    %p210 = scmp.lt.s32.totalorder %s10, 3
    %p211 = pnand %p209, %p210
    %p212 = pneg %p211
    // Predicated region
    $region33: #{model_forward.9} parent=5 // pred_check
      _
    $region34: #{model_forward.9} parent=5 // pred_check_branch
      %214 = sbr.rel (%p211) target = $region36
    $region35: #{model_forward.9} parent=5 // pred_region
      %s215 = ssub.s32 %s10, 1
      %s216 = smul.u32 32, %s19
      %p217 = scmp.lt.s32.totalorder %s216, 63
      %s218 = scalar_select %p217, %s216, 63
      %s219 = smul.addr %s218, 4
      %s220 = scalar_lea.vmem %s0, %s219
      %p221 = pneg %p48
      %p222 = pneg %p45
      %p223 = scmp.lt.s32.totalorder %s20, 0
      %s224 = scalar_select %p223, %s20, 0
      %s225 = smul.addr %s224, 4
      %s226 = scalar_lea.vmem %s1, %s225
      %p227 = pneg %p74
      %p228 = pneg %p71
      %p229 = scmp.lt.s32.totalorder %s20, 0
      %s230 = scalar_select %p229, %s20, 0
      %s231 = scalar_lea.vmem %s2, %s230
      %p232 = pneg %p100
      %p233 = pneg %p97
      %s234 = smul.u32 32, %s19
      %p235 = scmp.lt.s32.totalorder %s234, 63
      %s236 = scalar_select %p235, %s234, 63
      %p237 = scmp.lt.s32.totalorder %s20, 0
      %s238 = scalar_select %p237, %s20, 0
      %s239 = sadd.s32 %s238, %s236
      %s240 = smul.addr %s239, 4
      %s241 = scalar_lea.vmem %s3, %s240
      %p242 = pneg %p128
      %p243 = pneg %p125
      %p244 = pneg %p156
      %p245 = pneg %p153
      %s246 = smul.u32 32, %s19
      %p247 = scmp.lt.s32.totalorder %s246, 63
      %s248 = scalar_select %p247, %s246, 63
      %p249 = scmp.lt.s32.totalorder %s20, 0
      %s250 = scalar_select %p249, %s20, 0
      %s251 = sadd.s32 %s250, %s248
      %s252 = smul.addr %s251, 4
      %s253 = scalar_lea.vmem %s4, %s252
      %s254 = smul.u32 32, %s19
      %p255 = scmp.lt.s32.totalorder %s254, 63
      %s256 = scalar_select %p255, %s254, 63
      %s257 = smul.addr %s256, 4
      %s258 = scalar_lea.vmem %s0, %s257
      %s259 = smul.u32 32, %s19
      %p260 = scmp.lt.s32.totalorder %s20, 0
      %s261 = scalar_select %p260, %s20, 0
      %s262 = smul.addr %s261, 4
      %s263 = scalar_lea.vmem %s1, %s262
      %p264 = scmp.lt.s32.totalorder %s20, 0
      %s265 = scalar_select %p264, %s20, 0
      %s266 = scalar_lea.vmem %s2, %s265
      %s267 = smul.u32 32, %s19
      %p268 = scmp.lt.s32.totalorder %s267, 63
      %s269 = scalar_select %p268, %s267, 63
      %p270 = scmp.lt.s32.totalorder %s20, 0
      %s271 = scalar_select %p270, %s20, 0
      %s272 = sadd.s32 %s271, %s269
      %s273 = smul.addr %s272, 4
      %s274 = scalar_lea.vmem %s3, %s273
      %s275 = smul.u32 32, %s19
      %s276 = smul.u32 32, %s19
      %p277 = scmp.lt.s32.totalorder %s276, 63
      %s278 = scalar_select %p277, %s276, 63
      %p279 = scmp.lt.s32.totalorder %s20, 0
      %s280 = scalar_select %p279, %s20, 0
      %s281 = sadd.s32 %s280, %s278
      %s282 = smul.addr %s281, 4
      %s283 = scalar_lea.vmem %s4, %s282
      %s284 = smul.u32 32, %s19
      %v286 = vld [vmem:[%s258] sm:$0xf]
      %v287 = vld [vmem:[%s258 + $0x4] sm:$0xf]
      %v288 = vld [vmem:[%s258 + $0x8] sm:$0xf]
      %v289 = vld [vmem:[%s258 + $0xc] sm:$0xf]
      %v290 = vld [vmem:[%s258 + $0x10] sm:$0xf]
      %v291 = vld [vmem:[%s258 + $0x14] sm:$0xf]
      %v292 = vld [vmem:[%s258 + $0x18] sm:$0xf]
      %v293 = vld [vmem:[%s258 + $0x1c] sm:$0xf]
      %v294 = vld [vmem:[%s258 + $0x20] sm:$0xf]
      %v295 = vld [vmem:[%s258 + $0x24] sm:$0xf]
      %v296 = vld [vmem:[%s258 + $0x28] sm:$0xf]
      %v297 = vld [vmem:[%s258 + $0x2c] sm:$0xf]
      %v298 = vld [vmem:[%s258 + $0x30] sm:$0xf]
      %v299 = vld [vmem:[%s258 + $0x34] sm:$0xf]
      %v300 = vld [vmem:[%s258 + $0x38] sm:$0xf]
      %v301 = vld [vmem:[%s258 + $0x3c] sm:$0xf]
      %v302 = vld [vmem:[%s258 + $0x40] sm:$0xf]
      %v303 = vld [vmem:[%s258 + $0x44] sm:$0xf]
      %v304 = vld [vmem:[%s258 + $0x48] sm:$0xf]
      %v305 = vld [vmem:[%s258 + $0x4c] sm:$0xf]
      %v306 = vld [vmem:[%s258 + $0x50] sm:$0xf]
      %v307 = vld [vmem:[%s258 + $0x54] sm:$0xf]
      %v308 = vld [vmem:[%s258 + $0x58] sm:$0xf]
      %v309 = vld [vmem:[%s258 + $0x5c] sm:$0xf]
      %v310 = vld [vmem:[%s258 + $0x60] sm:$0xf]
      %v311 = vld [vmem:[%s258 + $0x64] sm:$0xf]
      %v312 = vld [vmem:[%s258 + $0x68] sm:$0xf]
      %v313 = vld [vmem:[%s258 + $0x6c] sm:$0xf]
      %v314 = vld [vmem:[%s258 + $0x70] sm:$0xf]
      %v315 = vld [vmem:[%s258 + $0x74] sm:$0xf]
      %v316 = vld [vmem:[%s258 + $0x78] sm:$0xf]
      %v317 = vld [vmem:[%s258 + $0x7c] sm:$0xf]
      %v318 = vld [vmem:[%s263] sm:$0xf]
      %v319 = vld [vmem:[%s263 + $0x4] sm:$0xf]
      %v320 = vld [vmem:[%s263 + $0x8] sm:$0xf]
      %v321 = vld [vmem:[%s263 + $0xc] sm:$0xf]
      %v322 = vld [vmem:[%s263 + $0x10] sm:$0xf]
      %v323 = vld [vmem:[%s263 + $0x14] sm:$0xf]
      %v324 = vld [vmem:[%s263 + $0x18] sm:$0xf]
      %v325 = vld [vmem:[%s263 + $0x1c] sm:$0xf]
      %v326 = vld [vmem:[%s263 + $0x20] sm:$0xf]
      %v327 = vld [vmem:[%s263 + $0x24] sm:$0xf]
      %v328 = vld [vmem:[%s263 + $0x28] sm:$0xf]
      %v329 = vld [vmem:[%s263 + $0x2c] sm:$0xf]
      %v330 = vld [vmem:[%s263 + $0x30] sm:$0xf]
      %v331 = vld [vmem:[%s263 + $0x34] sm:$0xf]
      %v332 = vld [vmem:[%s263 + $0x38] sm:$0xf]
      %v333 = vld [vmem:[%s263 + $0x3c] sm:$0xf]
      %v334 = vld [vmem:[%s266] sm:$0x1]
      %v336 = vlaneseq
      %v337 = vshrl.u32 %v336, 7
      %v338 = vsub.s32 0, %v337
      %v339 = vrot.slane %v334, %v338
      %v373 = vunpack.c.l.b16 %v286
      %v374 = vunpack.c.l.b16 %v287
      %v375 = vunpack.c.l.b16 %v288
      %v376 = vunpack.c.l.b16 %v289
      %v377 = vunpack.c.l.b16 %v290
      %v378 = vunpack.c.l.b16 %v291
      %v379 = vunpack.c.l.b16 %v292
      %v380 = vunpack.c.l.b16 %v293
      %v381 = vunpack.c.l.b16 %v294
      %v382 = vunpack.c.l.b16 %v295
      %v383 = vunpack.c.l.b16 %v296
      %v384 = vunpack.c.l.b16 %v297
      %v385 = vunpack.c.l.b16 %v298
      %v386 = vunpack.c.l.b16 %v299
      %v387 = vunpack.c.l.b16 %v300
      %v388 = vunpack.c.l.b16 %v301
      %v389 = vunpack.c.l.b16 %v302
      %v390 = vunpack.c.l.b16 %v303
      %v391 = vunpack.c.l.b16 %v304
      %v392 = vunpack.c.l.b16 %v305
      %v393 = vunpack.c.l.b16 %v306
      %v394 = vunpack.c.l.b16 %v307
      %v395 = vunpack.c.l.b16 %v308
      %v396 = vunpack.c.l.b16 %v309
      %v397 = vunpack.c.l.b16 %v310
      %v398 = vunpack.c.l.b16 %v311
      %v399 = vunpack.c.l.b16 %v312
      %v400 = vunpack.c.l.b16 %v313
      %v401 = vunpack.c.l.b16 %v314
      %v402 = vunpack.c.l.b16 %v315
      %v403 = vunpack.c.l.b16 %v316
      %v404 = vunpack.c.l.b16 %v317
      %v405 = vpack.c.b16 %v374, %v373
      %v406 = vpack.c.b16 %v376, %v375
      %v407 = vpack.c.b16 %v378, %v377
      %v408 = vpack.c.b16 %v380, %v379
      %v409 = vpack.c.b16 %v382, %v381
      %v410 = vpack.c.b16 %v384, %v383
      %v411 = vpack.c.b16 %v386, %v385
      %v412 = vpack.c.b16 %v388, %v387
      %v413 = vpack.c.b16 %v390, %v389
      %v414 = vpack.c.b16 %v392, %v391
      %v415 = vpack.c.b16 %v394, %v393
      %v416 = vpack.c.b16 %v396, %v395
      %v417 = vpack.c.b16 %v398, %v397
      %v418 = vpack.c.b16 %v400, %v399
      %v419 = vpack.c.b16 %v402, %v401
      %v420 = vpack.c.b16 %v404, %v403
      %v453 = vunpack.c.l.b16 %v318
      %v454 = vunpack.c.l.b16 %v319
      %v455 = vunpack.c.l.b16 %v320
      %v456 = vunpack.c.l.b16 %v321
      %v457 = vunpack.c.l.b16 %v322
      %v458 = vunpack.c.l.b16 %v323
      %v459 = vunpack.c.l.b16 %v324
      %v460 = vunpack.c.l.b16 %v325
      %v461 = vunpack.c.l.b16 %v326
      %v462 = vunpack.c.l.b16 %v327
      %v463 = vunpack.c.l.b16 %v328
      %v464 = vunpack.c.l.b16 %v329
      %v465 = vunpack.c.l.b16 %v330
      %v466 = vunpack.c.l.b16 %v331
      %v467 = vunpack.c.l.b16 %v332
      %v468 = vunpack.c.l.b16 %v333
      %v469 = vpack.c.b16 %v454, %v453
      %v470 = vpack.c.b16 %v456, %v455
      %v471 = vpack.c.b16 %v458, %v457
      %v472 = vpack.c.b16 %v460, %v459
      %v473 = vpack.c.b16 %v462, %v461
      %v474 = vpack.c.b16 %v464, %v463
      %v475 = vpack.c.b16 %v466, %v465
      %v476 = vpack.c.b16 %v468, %v467
      %485 = vmatprep.subr.bf16.mxu0 0
      %486 = vmatpush1.bf16.msra.mxu0 %v469
      %487 = vmatprep.subr.bf16.mxu0 0
      %488 = vmatpush1.bf16.msra.mxu0 %v470
      %489 = vmatprep.subr.bf16.mxu0 0
      %490 = vmatpush1.bf16.msra.mxu0 %v471
      %491 = vmatprep.subr.bf16.mxu0 0
      %492 = vmatpush1.bf16.msra.mxu0 %v472
      %493 = vmatprep.subr.bf16.mxu0 0
      %494 = vmatpush1.bf16.msra.mxu0 %v473
      %495 = vmatprep.subr.bf16.mxu0 0
      %496 = vmatpush1.bf16.msra.mxu0 %v474
      %497 = vmatprep.subr.bf16.mxu0 0
      %498 = vmatpush1.bf16.msra.mxu0 %v475
      %499 = vmatprep.subr.bf16.mxu0 0
      %500 = vmatpush1.bf16.msra.mxu0 %v476
      %501 = vmatprep.subr.bf16.mxu0 0
      %502 = vmatpush1.bf16.msra.mxu0 0
      %503 = vmatprep.subr.bf16.mxu0 0
      %504 = vmatpush1.bf16.msra.mxu0 0
      %505 = vmatprep.subr.bf16.mxu0 0
      %506 = vmatpush1.bf16.msra.mxu0 0
      %507 = vmatprep.subr.bf16.mxu0 0
      %508 = vmatpush1.bf16.msra.mxu0 0
      %509 = vmatprep.subr.bf16.mxu0 0
      %510 = vmatpush1.bf16.msra.mxu0 0
      %511 = vmatprep.subr.bf16.mxu0 0
      %512 = vmatpush1.bf16.msra.mxu0 0
      %513 = vmatprep.subr.bf16.mxu0 0
      %514 = vmatpush1.bf16.msra.mxu0 0
      %515 = vmatprep.subr.bf16.mxu0 0
      %516 = vmatpush1.bf16.msra.mxu0 0
      %517 = vmatprep.mubr.bf16.mxu0 0
      %518 = vmatmul.mubr.bf16.gmra.mrb[0].mxu0 %v405
      %v519 = vpop.f32.mrb[0].mxu0
      %v520 = vadd.f32 %v339, %v519
      %v521 = vpop.f32.mrb[0].mxu0
      %v522 = vpop.f32.mrb[0].mxu0
      %v523 = vadd.f32 %v339, %v522
      %v524 = vpop.f32.mrb[0].mxu0
      %525 = vmatprep.mubr.bf16.mxu0 0
      %526 = vmatmul.mubr.bf16.gmra.mrb[0].mxu0 %v406
      %v527 = vpop.f32.mrb[0].mxu0
      %v528 = vadd.f32 %v339, %v527
      %v529 = vpop.f32.mrb[0].mxu0
      %v530 = vpop.f32.mrb[0].mxu0
      %v531 = vadd.f32 %v339, %v530
      %v532 = vpop.f32.mrb[0].mxu0
      %533 = vmatprep.mubr.bf16.mxu0 0
      %534 = vmatmul.mubr.bf16.gmra.mrb[0].mxu0 %v407
      %v535 = vpop.f32.mrb[0].mxu0
      %v536 = vadd.f32 %v339, %v535
      %v537 = vpop.f32.mrb[0].mxu0
      %v538 = vpop.f32.mrb[0].mxu0
      %v539 = vadd.f32 %v339, %v538
      %v540 = vpop.f32.mrb[0].mxu0
      %541 = vmatprep.mubr.bf16.mxu0 0
      %542 = vmatmul.mubr.bf16.gmra.mrb[0].mxu0 %v408
      %v543 = vpop.f32.mrb[0].mxu0
      %v544 = vadd.f32 %v339, %v543
      %v545 = vpop.f32.mrb[0].mxu0
      %v546 = vpop.f32.mrb[0].mxu0
      %v547 = vadd.f32 %v339, %v546
      %v548 = vpop.f32.mrb[0].mxu0
      %549 = vmatprep.mubr.bf16.mxu0 0
      %550 = vmatmul.mubr.bf16.gmra.mrb[0].mxu0 %v409
      %v551 = vpop.f32.mrb[0].mxu0
      %v552 = vadd.f32 %v339, %v551
      %v553 = vpop.f32.mrb[0].mxu0
      %v554 = vpop.f32.mrb[0].mxu0
      %v555 = vadd.f32 %v339, %v554
      %v556 = vpop.f32.mrb[0].mxu0
      %557 = vmatprep.mubr.bf16.mxu0 0
      %558 = vmatmul.mubr.bf16.gmra.mrb[0].mxu0 %v410
      %v559 = vpop.f32.mrb[0].mxu0
      %v560 = vadd.f32 %v339, %v559
      %v561 = vpop.f32.mrb[0].mxu0
      %v562 = vpop.f32.mrb[0].mxu0
      %v563 = vadd.f32 %v339, %v562
      %v564 = vpop.f32.mrb[0].mxu0
      %565 = vmatprep.mubr.bf16.mxu0 0
      %566 = vmatmul.mubr.bf16.gmra.mrb[0].mxu0 %v411
      %v567 = vpop.f32.mrb[0].mxu0
      %v568 = vadd.f32 %v339, %v567
      %v569 = vpop.f32.mrb[0].mxu0
      %v570 = vpop.f32.mrb[0].mxu0
      %v571 = vadd.f32 %v339, %v570
      %v572 = vpop.f32.mrb[0].mxu0
      %573 = vmatprep.mubr.bf16.mxu0 0
      %574 = vmatmul.mubr.bf16.gmra.mrb[0].mxu0 %v412
      %v575 = vpop.f32.mrb[0].mxu0
      %v576 = vadd.f32 %v339, %v575
      %v577 = vpop.f32.mrb[0].mxu0
      %v578 = vpop.f32.mrb[0].mxu0
      %v579 = vadd.f32 %v339, %v578
      %v580 = vpop.f32.mrb[0].mxu0
      %581 = vmatprep.mubr.bf16.mxu0 0
      %582 = vmatmul.mubr.bf16.gmra.mrb[0].mxu0 %v413
      %v583 = vpop.f32.mrb[0].mxu0
      %v584 = vadd.f32 %v339, %v583
      %v585 = vpop.f32.mrb[0].mxu0
      %v586 = vpop.f32.mrb[0].mxu0
      %v587 = vadd.f32 %v339, %v586
      %v588 = vpop.f32.mrb[0].mxu0
      %589 = vmatprep.mubr.bf16.mxu0 0
      %590 = vmatmul.mubr.bf16.gmra.mrb[0].mxu0 %v414
      %v591 = vpop.f32.mrb[0].mxu0
      %v592 = vadd.f32 %v339, %v591
      %v593 = vpop.f32.mrb[0].mxu0
      %v594 = vpop.f32.mrb[0].mxu0
      %v595 = vadd.f32 %v339, %v594
      %v596 = vpop.f32.mrb[0].mxu0
      %597 = vmatprep.mubr.bf16.mxu0 0
      %598 = vmatmul.mubr.bf16.gmra.mrb[0].mxu0 %v415
      %v599 = vpop.f32.mrb[0].mxu0
      %v600 = vadd.f32 %v339, %v599
      %v601 = vpop.f32.mrb[0].mxu0
      %v602 = vpop.f32.mrb[0].mxu0
      %v603 = vadd.f32 %v339, %v602
      %v604 = vpop.f32.mrb[0].mxu0
      %605 = vmatprep.mubr.bf16.mxu0 0
      %606 = vmatmul.mubr.bf16.gmra.mrb[0].mxu0 %v416
      %v607 = vpop.f32.mrb[0].mxu0
      %v608 = vadd.f32 %v339, %v607
      %v609 = vpop.f32.mrb[0].mxu0
      %v610 = vpop.f32.mrb[0].mxu0
      %v611 = vadd.f32 %v339, %v610
      %v612 = vpop.f32.mrb[0].mxu0
      %613 = vmatprep.mubr.bf16.mxu0 0
      %614 = vmatmul.mubr.bf16.gmra.mrb[0].mxu0 %v417
      %v615 = vpop.f32.mrb[0].mxu0
      %v616 = vadd.f32 %v339, %v615
      %v617 = vpop.f32.mrb[0].mxu0
      %v618 = vpop.f32.mrb[0].mxu0
      %v619 = vadd.f32 %v339, %v618
      %v620 = vpop.f32.mrb[0].mxu0
      %621 = vmatprep.mubr.bf16.mxu0 0
      %622 = vmatmul.mubr.bf16.gmra.mrb[0].mxu0 %v418
      %v623 = vpop.f32.mrb[0].mxu0
      %v624 = vadd.f32 %v339, %v623
      %v625 = vpop.f32.mrb[0].mxu0
      %v626 = vpop.f32.mrb[0].mxu0
      %v627 = vadd.f32 %v339, %v626
      %v628 = vpop.f32.mrb[0].mxu0
      %629 = vmatprep.mubr.bf16.mxu0 0
      %630 = vmatmul.mubr.bf16.gmra.mrb[0].mxu0 %v419
      %v631 = vpop.f32.mrb[0].mxu0
      %v632 = vadd.f32 %v339, %v631
      %v633 = vpop.f32.mrb[0].mxu0
      %v634 = vpop.f32.mrb[0].mxu0
      %v635 = vadd.f32 %v339, %v634
      %v636 = vpop.f32.mrb[0].mxu0
      %637 = vmatprep.mubr.bf16.mxu0 0
      %638 = vmatmul.mubr.bf16.gmra.mrb[0].mxu0 %v420
      %v639 = vpop.f32.mrb[0].mxu0
      %v640 = vadd.f32 %v339, %v639
      %v641 = vpop.f32.mrb[0].mxu0
      %v642 = vpop.f32.mrb[0].mxu0
      %v643 = vadd.f32 %v339, %v642
      %v644 = vpop.f32.mrb[0].mxu0
      %645 = vdwg.mxu0
      %v646 = vld [vmem:[%s274] sm:$0xf]
      %v647 = vld [vmem:[%s274 + $0x4] sm:$0xf]
      %v648 = vld [vmem:[%s274 + $0x8] sm:$0xf]
      %v649 = vld [vmem:[%s274 + $0xc] sm:$0xf]
      %v650 = vld [vmem:[%s274 + $0x10] sm:$0xf]
      %v651 = vld [vmem:[%s274 + $0x14] sm:$0xf]
      %v652 = vld [vmem:[%s274 + $0x18] sm:$0xf]
      %v653 = vld [vmem:[%s274 + $0x1c] sm:$0xf]
      %v654 = vld [vmem:[%s274 + $0x20] sm:$0xf]
      %v655 = vld [vmem:[%s274 + $0x24] sm:$0xf]
      %v656 = vld [vmem:[%s274 + $0x28] sm:$0xf]
      %v657 = vld [vmem:[%s274 + $0x2c] sm:$0xf]
      %v658 = vld [vmem:[%s274 + $0x30] sm:$0xf]
      %v659 = vld [vmem:[%s274 + $0x34] sm:$0xf]
      %v660 = vld [vmem:[%s274 + $0x38] sm:$0xf]
      %v661 = vld [vmem:[%s274 + $0x3c] sm:$0xf]
      %v662 = vld [vmem:[%s274 + $0x40] sm:$0xf]
      %v663 = vld [vmem:[%s274 + $0x44] sm:$0xf]
      %v664 = vld [vmem:[%s274 + $0x48] sm:$0xf]
      %v665 = vld [vmem:[%s274 + $0x4c] sm:$0xf]
      %v666 = vld [vmem:[%s274 + $0x50] sm:$0xf]
      %v667 = vld [vmem:[%s274 + $0x54] sm:$0xf]
      %v668 = vld [vmem:[%s274 + $0x58] sm:$0xf]
      %v669 = vld [vmem:[%s274 + $0x5c] sm:$0xf]
      %v670 = vld [vmem:[%s274 + $0x60] sm:$0xf]
      %v671 = vld [vmem:[%s274 + $0x64] sm:$0xf]
      %v672 = vld [vmem:[%s274 + $0x68] sm:$0xf]
      %v673 = vld [vmem:[%s274 + $0x6c] sm:$0xf]
      %v674 = vld [vmem:[%s274 + $0x70] sm:$0xf]
      %v675 = vld [vmem:[%s274 + $0x74] sm:$0xf]
      %v676 = vld [vmem:[%s274 + $0x78] sm:$0xf]
      %v677 = vld [vmem:[%s274 + $0x7c] sm:$0xf]
      %v678 = vunpack.c.l.bf16 %v646
      %v679 = vunpack.c.l.bf16 %v647
      %v680 = vunpack.c.l.bf16 %v648
      %v681 = vunpack.c.l.bf16 %v649
      %v682 = vunpack.c.l.bf16 %v650
      %v683 = vunpack.c.l.bf16 %v651
      %v684 = vunpack.c.l.bf16 %v652
      %v685 = vunpack.c.l.bf16 %v653
      %v686 = vunpack.c.l.bf16 %v654
      %v687 = vunpack.c.l.bf16 %v655
      %v688 = vunpack.c.l.bf16 %v656
      %v689 = vunpack.c.l.bf16 %v657
      %v690 = vunpack.c.l.bf16 %v658
      %v691 = vunpack.c.l.bf16 %v659
      %v692 = vunpack.c.l.bf16 %v660
      %v693 = vunpack.c.l.bf16 %v661
      %v694 = vunpack.c.l.bf16 %v662
      %v695 = vunpack.c.l.bf16 %v663
      %v696 = vunpack.c.l.bf16 %v664
      %v697 = vunpack.c.l.bf16 %v665
      %v698 = vunpack.c.l.bf16 %v666
      %v699 = vunpack.c.l.bf16 %v667
      %v700 = vunpack.c.l.bf16 %v668
      %v701 = vunpack.c.l.bf16 %v669
      %v702 = vunpack.c.l.bf16 %v670
      %v703 = vunpack.c.l.bf16 %v671
      %v704 = vunpack.c.l.bf16 %v672
      %v705 = vunpack.c.l.bf16 %v673
      %v706 = vunpack.c.l.bf16 %v674
      %v707 = vunpack.c.l.bf16 %v675
      %v708 = vunpack.c.l.bf16 %v676
      %v709 = vunpack.c.l.bf16 %v677
      %v710 = vadd.f32 %v520, %v678
      %v711 = vadd.f32 %v523, %v679
      %v712 = vadd.f32 %v528, %v680
      %v713 = vadd.f32 %v531, %v681
      %v714 = vadd.f32 %v536, %v682
      %v715 = vadd.f32 %v539, %v683
      %v716 = vadd.f32 %v544, %v684
      %v717 = vadd.f32 %v547, %v685
      %v718 = vadd.f32 %v552, %v686
      %v719 = vadd.f32 %v555, %v687
      %v720 = vadd.f32 %v560, %v688
      %v721 = vadd.f32 %v563, %v689
      %v722 = vadd.f32 %v568, %v690
      %v723 = vadd.f32 %v571, %v691
      %v724 = vadd.f32 %v576, %v692
      %v725 = vadd.f32 %v579, %v693
      %v726 = vadd.f32 %v584, %v694
      %v727 = vadd.f32 %v587, %v695
      %v728 = vadd.f32 %v592, %v696
      %v729 = vadd.f32 %v595, %v697
      %v730 = vadd.f32 %v600, %v698
      %v731 = vadd.f32 %v603, %v699
      %v732 = vadd.f32 %v608, %v700
      %v733 = vadd.f32 %v611, %v701
      %v734 = vadd.f32 %v616, %v702
      %v735 = vadd.f32 %v619, %v703
      %v736 = vadd.f32 %v624, %v704
      %v737 = vadd.f32 %v627, %v705
      %v738 = vadd.f32 %v632, %v706
      %v739 = vadd.f32 %v635, %v707
      %v740 = vadd.f32 %v640, %v708
      %v741 = vadd.f32 %v643, %v709
      %v742 = vmax.f32 %v710, 0.0
      %v743 = vmax.f32 %v711, 0.0
      %v744 = vmax.f32 %v712, 0.0
      %v745 = vmax.f32 %v713, 0.0
      %v746 = vmax.f32 %v714, 0.0
      %v747 = vmax.f32 %v715, 0.0
      %v748 = vmax.f32 %v716, 0.0
      %v749 = vmax.f32 %v717, 0.0
      %v750 = vmax.f32 %v718, 0.0
      %v751 = vmax.f32 %v719, 0.0
      %v752 = vmax.f32 %v720, 0.0
      %v753 = vmax.f32 %v721, 0.0
      %v754 = vmax.f32 %v722, 0.0
      %v755 = vmax.f32 %v723, 0.0
      %v756 = vmax.f32 %v724, 0.0
      %v757 = vmax.f32 %v725, 0.0
      %v758 = vmax.f32 %v726, 0.0
      %v759 = vmax.f32 %v727, 0.0
      %v760 = vmax.f32 %v728, 0.0
      %v761 = vmax.f32 %v729, 0.0
      %v762 = vmax.f32 %v730, 0.0
      %v763 = vmax.f32 %v731, 0.0
      %v764 = vmax.f32 %v732, 0.0
      %v765 = vmax.f32 %v733, 0.0
      %v766 = vmax.f32 %v734, 0.0
      %v767 = vmax.f32 %v735, 0.0
      %v768 = vmax.f32 %v736, 0.0
      %v769 = vmax.f32 %v737, 0.0
      %v770 = vmax.f32 %v738, 0.0
      %v771 = vmax.f32 %v739, 0.0
      %v772 = vmax.f32 %v740, 0.0
      %v773 = vmax.f32 %v741, 0.0
      %v774 = vpack.c.bf16 %v743, %v742
      %v775 = vpack.c.bf16 %v745, %v744
      %v776 = vpack.c.bf16 %v747, %v746
      %v777 = vpack.c.bf16 %v749, %v748
      %v778 = vpack.c.bf16 %v751, %v750
      %v779 = vpack.c.bf16 %v753, %v752
      %v780 = vpack.c.bf16 %v755, %v754
      %v781 = vpack.c.bf16 %v757, %v756
      %v782 = vpack.c.bf16 %v759, %v758
      %v783 = vpack.c.bf16 %v761, %v760
      %v784 = vpack.c.bf16 %v763, %v762
      %v785 = vpack.c.bf16 %v765, %v764
      %v786 = vpack.c.bf16 %v767, %v766
      %v787 = vpack.c.bf16 %v769, %v768
      %v788 = vpack.c.bf16 %v771, %v770
      %v789 = vpack.c.bf16 %v773, %v772
      %v806 = vunpack.c.l.b16 %v774
      %v807 = vunpack.c.h.b16 %v774
      %v808 = vunpack.c.l.b16 %v775
      %v809 = vunpack.c.h.b16 %v775
      %v810 = vunpack.c.l.b16 %v776
      %v811 = vunpack.c.h.b16 %v776
      %v812 = vunpack.c.l.b16 %v777
      %v813 = vunpack.c.h.b16 %v777
      %v814 = vunpack.c.l.b16 %v778
      %v815 = vunpack.c.h.b16 %v778
      %v816 = vunpack.c.l.b16 %v779
      %v817 = vunpack.c.h.b16 %v779
      %v818 = vunpack.c.l.b16 %v780
      %v819 = vunpack.c.h.b16 %v780
      %v820 = vunpack.c.l.b16 %v781
      %v821 = vunpack.c.h.b16 %v781
      %v822 = vunpack.c.l.b16 %v782
      %v823 = vunpack.c.h.b16 %v782
      %v824 = vunpack.c.l.b16 %v783
      %v825 = vunpack.c.h.b16 %v783
      %v826 = vunpack.c.l.b16 %v784
      %v827 = vunpack.c.h.b16 %v784
      %v828 = vunpack.c.l.b16 %v785
      %v829 = vunpack.c.h.b16 %v785
      %v830 = vunpack.c.l.b16 %v786
      %v831 = vunpack.c.h.b16 %v786
      %v832 = vunpack.c.l.b16 %v787
      %v833 = vunpack.c.h.b16 %v787
      %v834 = vunpack.c.l.b16 %v788
      %v835 = vunpack.c.h.b16 %v788
      %v836 = vunpack.c.l.b16 %v789
      %v837 = vunpack.c.h.b16 %v789
      %v838 = vpack.c.b16 %v806, %v806
      %v839 = vpack.c.b16 %v807, %v807
      %v840 = vpack.c.b16 %v808, %v808
      %v841 = vpack.c.b16 %v809, %v809
      %v842 = vpack.c.b16 %v810, %v810
      %v843 = vpack.c.b16 %v811, %v811
      %v844 = vpack.c.b16 %v812, %v812
      %v845 = vpack.c.b16 %v813, %v813
      %v846 = vpack.c.b16 %v814, %v814
      %v847 = vpack.c.b16 %v815, %v815
      %v848 = vpack.c.b16 %v816, %v816
      %v849 = vpack.c.b16 %v817, %v817
      %v850 = vpack.c.b16 %v818, %v818
      %v851 = vpack.c.b16 %v819, %v819
      %v852 = vpack.c.b16 %v820, %v820
      %v853 = vpack.c.b16 %v821, %v821
      %v854 = vpack.c.b16 %v822, %v822
      %v855 = vpack.c.b16 %v823, %v823
      %v856 = vpack.c.b16 %v824, %v824
      %v857 = vpack.c.b16 %v825, %v825
      %v858 = vpack.c.b16 %v826, %v826
      %v859 = vpack.c.b16 %v827, %v827
      %v860 = vpack.c.b16 %v828, %v828
      %v861 = vpack.c.b16 %v829, %v829
      %v862 = vpack.c.b16 %v830, %v830
      %v863 = vpack.c.b16 %v831, %v831
      %v864 = vpack.c.b16 %v832, %v832
      %v865 = vpack.c.b16 %v833, %v833
      %v866 = vpack.c.b16 %v834, %v834
      %v867 = vpack.c.b16 %v835, %v835
      %v868 = vpack.c.b16 %v836, %v836
      %v869 = vpack.c.b16 %v837, %v837
      %902 = vst [vmem:[%s283] sm:$0xf] %v838
      %903 = vst [vmem:[%s283 + $0x4] sm:$0xf] %v839
      %904 = vst [vmem:[%s283 + $0x8] sm:$0xf] %v840
      %905 = vst [vmem:[%s283 + $0xc] sm:$0xf] %v841
      %906 = vst [vmem:[%s283 + $0x10] sm:$0xf] %v842
      %907 = vst [vmem:[%s283 + $0x14] sm:$0xf] %v843
      %908 = vst [vmem:[%s283 + $0x18] sm:$0xf] %v844
      %909 = vst [vmem:[%s283 + $0x1c] sm:$0xf] %v845
      %910 = vst [vmem:[%s283 + $0x20] sm:$0xf] %v846
      %911 = vst [vmem:[%s283 + $0x24] sm:$0xf] %v847
      %912 = vst [vmem:[%s283 + $0x28] sm:$0xf] %v848
      %913 = vst [vmem:[%s283 + $0x2c] sm:$0xf] %v849
      %914 = vst [vmem:[%s283 + $0x30] sm:$0xf] %v850
      %915 = vst [vmem:[%s283 + $0x34] sm:$0xf] %v851
      %916 = vst [vmem:[%s283 + $0x38] sm:$0xf] %v852
      %917 = vst [vmem:[%s283 + $0x3c] sm:$0xf] %v853
      %918 = vst [vmem:[%s283 + $0x40] sm:$0xf] %v854
      %919 = vst [vmem:[%s283 + $0x44] sm:$0xf] %v855
      %920 = vst [vmem:[%s283 + $0x48] sm:$0xf] %v856
      %921 = vst [vmem:[%s283 + $0x4c] sm:$0xf] %v857
      %922 = vst [vmem:[%s283 + $0x50] sm:$0xf] %v858
      %923 = vst [vmem:[%s283 + $0x54] sm:$0xf] %v859
      %924 = vst [vmem:[%s283 + $0x58] sm:$0xf] %v860
      %925 = vst [vmem:[%s283 + $0x5c] sm:$0xf] %v861
      %926 = vst [vmem:[%s283 + $0x60] sm:$0xf] %v862
      %927 = vst [vmem:[%s283 + $0x64] sm:$0xf] %v863
      %928 = vst [vmem:[%s283 + $0x68] sm:$0xf] %v864
      %929 = vst [vmem:[%s283 + $0x6c] sm:$0xf] %v865
      %930 = vst [vmem:[%s283 + $0x70] sm:$0xf] %v866
      %931 = vst [vmem:[%s283 + $0x74] sm:$0xf] %v867
      %932 = vst [vmem:[%s283 + $0x78] sm:$0xf] %v868
      %933 = vst [vmem:[%s283 + $0x7c] sm:$0xf] %v869
      %s934 = smul.u32 32, %s19
      %p935 = scmp.lt.s32.totalorder %s934, 63
      %s936 = scalar_select %p935, %s934, 63
      %p937 = scmp.lt.s32.totalorder %s20, 0
      %s938 = scalar_select %p937, %s20, 0
      %s939 = sadd.s32 %s938, %s936
      %s940 = smul.addr %s939, 4
      %s941 = scalar_lea.vmem %s4, %s940
      // Predicated region
      $region37: #{model_forward.9} parent=35 // pred_check
        %p942 = pneg %p153
      $region38: #{model_forward.9} parent=35 // pred_check_branch
        %944 = sbr.rel (%p942) target = $region40
      $region39: #{model_forward.9} parent=35 // pred_region
        %s945 = smul.u32 32, %s19
      $region40: #{model_forward.9} parent=35 // pred_fallthru
        _
    $region36: #{model_forward.9} parent=5 // pred_fallthru
      _
    %p946 = scmp.le.s32.totalorder 2, %s10
    // Predicated region
    $region41: #{model_forward.9} parent=5 // pred_check
      %p947 = pneg %p946
    $region42: #{model_forward.9} parent=5 // pred_check_branch
      %949 = sbr.rel (%p947) target = $region44
    $region43: #{model_forward.9} parent=5 // pred_region
      %s950 = ssub.s32 %s10, 2
      // Predicated region
      $region45: #{model_forward.9} parent=43 // pred_check
        %p951 = pneg %p159
      $region46: #{model_forward.9} parent=43 // pred_check_branch
        %953 = sbr.rel (%p951) target = $region48
      $region47: #{model_forward.9} parent=43 // pred_region
        %s954 = smul.u32 32, %s21
        %p955 = scmp.lt.s32.totalorder %s954, 63
        %s956 = scalar_select %p955, %s954, 63
        %p957 = scmp.lt.s32.totalorder %s22, 0
        %s958 = scalar_select %p957, %s22, 0
        %s959 = sadd.s32 %s958, %s956
        %s960 = smul.addr %s959, 4
        %s961 = scalar_lea.vmem %s4, %s960
      $region48: #{model_forward.9} parent=43 // pred_fallthru
        _
    $region44: #{model_forward.9} parent=5 // pred_fallthru
      _
  $region6: #{model_forward.9} parent=0 // loop_footer
    %s14 = sadd.s32 1, %s10
  $region7: #{model_forward.9} parent=0 // loop_footer_branch
    %9 = sbr.rel target = $region3
  $region8: #{model_forward.9} parent=0 // loop_exit
    _

// kernel: model_forward.13
$region0: #{model_forward.13}
  #allocation0 [shape = 'u32[]', space=smem, size = 0x4, offset = 0x4, fixed_abs, tag = 'smem constant byte address 0x4 - core index']
  #allocation1 [shape = 'u32[144,128]{1,0:T(1,128)}', space=vmem, size = 0x12000, scoped, tag = 'internal scratch']
  %s0 = inlined_call_operand.vmem [shape: bf16[128,128], index: 0, kind: input, shape index: {}]
  %s1 = inlined_call_operand.vmem [shape: bf16[128,128], index: 1, kind: input, shape index: {}]
  %s2 = inlined_call_operand.vmem [shape: f32[1,128], index: 2, kind: input, shape index: {}]
  %s3 = inlined_call_operand.vmem [shape: bf16[128,128], index: 3, kind: input, shape index: {}]
  %s4 = inlined_call_operand.vmem [shape: bf16[128,128], index: 4, kind: output, shape index: {}]
  %s5 = sld [smem:[#allocation0]]
  $region49: #{model_forward.13} parent=0
    _
  %s7 = ssub.s32 1, %s5
  %s8 = scalar_select 0, %s7, %s5
  loop: start=0, step=1, limit=4
  $region2: #{model_forward.13} parent=0 // loop_pre_header
    _
  $region3: #{model_forward.13} parent=0 // loop_header
    %s10 = sphi 0, %s14
    %p11 = scmp.ge.s32.totalorder %s10, 4
    %s17 = sphi 0, %s29
    %s18 = sphi 0, %s25
    %s19 = sphi 0, %s17
    %s20 = sphi 0, %s18
    %s21 = sphi 0, %s19
    %s22 = sphi 0, %s20
    %s32 = sphi 0, %s34
    %s35 = sphi 0, %s32
    %s36 = sphi 0, %s35
    %s52 = sphi 0, %s36
    %s58 = sphi 0, %s60
    %s61 = sphi 0, %s58
    %s62 = sphi 0, %s61
    %s78 = sphi 0, %s62
    %s84 = sphi 0, %s86
    %s87 = sphi 0, %s84
    %s88 = sphi 0, %s87
    %s104 = sphi 0, %s88
    %s112 = sphi 0, %s114
    %s115 = sphi 0, %s112
    %s116 = sphi 0, %s115
    %s132 = sphi 0, %s116
    %s140 = sphi 0, %s142
    %s143 = sphi 0, %s140
    %s144 = sphi 0, %s143
    %s160 = sphi 0, %s144
  $region4: #{model_forward.13} parent=0 // loop_header_branch
    %13 = sbr.rel (%p11) target = $region8
  $region5: #{model_forward.13} parent=0 // loop_body
    %s15 = ssub.s32 %s10, 1
    %s16 = ssub.s32 %s10, 2
    %s23 = sadd.s32 1, %s18
    %p24 = scmp.ge.s32.totalorder %s23, 1
    %s25 = scalar_select %p24, 0, %s23
    %s26 = sadd.s32 1, %s17
    %s27 = scalar_select %p24, %s26, %s17
    %p28 = scmp.ge.s32.totalorder %s27, 2
    %s29 = scalar_select %p28, 0, %s27
    %s30 = ssub.s32 %s17, %s29
    %p31 = scmp.eq.s32.totalorder %s30, 0
    %s33 = sadd.s32 %s32, 1
    %s34 = scalar_select %p31, %s32, %s33
    %p37 = pneg %p31
    %p38 = scmp.eq.s32.totalorder %s10, 1
    %p39 = por %p37, %p38
    %p40 = scmp.ne.s32.totalorder %s32, %s35
    %p41 = scmp.eq.s32.totalorder %s10, 0
    %p42 = por %p40, %p41
    %p43 = scmp.ne.s32.totalorder %s32, %s35
    %p44 = scmp.eq.s32.totalorder %s15, 1
    %p45 = por %p43, %p44
    %p46 = scmp.ne.s32.totalorder %s35, %s36
    %p47 = scmp.eq.s32.totalorder %s15, 0
    %p48 = por %p46, %p47
    %p49 = scmp.ne.s32.totalorder %s35, %s36
    %p50 = scmp.eq.s32.totalorder %s16, 1
    %p51 = por %p49, %p50
    %p53 = scmp.ne.s32.totalorder %s36, %s52
    %p54 = scmp.eq.s32.totalorder %s16, 0
    %p55 = por %p53, %p54
    %s56 = ssub.s32 %s18, %s25
    %p57 = scmp.eq.s32.totalorder %s56, 0
    %s59 = sadd.s32 %s58, 1
    %s60 = scalar_select %p57, %s58, %s59
    %p63 = pneg %p57
    %p64 = scmp.eq.s32.totalorder %s10, 1
    %p65 = por %p63, %p64
    %p66 = scmp.ne.s32.totalorder %s58, %s61
    %p67 = scmp.eq.s32.totalorder %s10, 0
    %p68 = por %p66, %p67
    %p69 = scmp.ne.s32.totalorder %s58, %s61
    %p70 = scmp.eq.s32.totalorder %s15, 1
    %p71 = por %p69, %p70
    %p72 = scmp.ne.s32.totalorder %s61, %s62
    %p73 = scmp.eq.s32.totalorder %s15, 0
    %p74 = por %p72, %p73
    %p75 = scmp.ne.s32.totalorder %s61, %s62
    %p76 = scmp.eq.s32.totalorder %s16, 1
    %p77 = por %p75, %p76
    %p79 = scmp.ne.s32.totalorder %s62, %s78
    %p80 = scmp.eq.s32.totalorder %s16, 0
    %p81 = por %p79, %p80
    %s82 = ssub.s32 %s18, %s25
    %p83 = scmp.eq.s32.totalorder %s82, 0
    %s85 = sadd.s32 %s84, 1
    %s86 = scalar_select %p83, %s84, %s85
    %p89 = pneg %p83
    %p90 = scmp.eq.s32.totalorder %s10, 1
    %p91 = por %p89, %p90
    %p92 = scmp.ne.s32.totalorder %s84, %s87
    %p93 = scmp.eq.s32.totalorder %s10, 0
    %p94 = por %p92, %p93
    %p95 = scmp.ne.s32.totalorder %s84, %s87
    %p96 = scmp.eq.s32.totalorder %s15, 1
    %p97 = por %p95, %p96
    %p98 = scmp.ne.s32.totalorder %s87, %s88
    %p99 = scmp.eq.s32.totalorder %s15, 0
    %p100 = por %p98, %p99
    %p101 = scmp.ne.s32.totalorder %s87, %s88
    %p102 = scmp.eq.s32.totalorder %s16, 1
    %p103 = por %p101, %p102
    %p105 = scmp.ne.s32.totalorder %s88, %s104
    %p106 = scmp.eq.s32.totalorder %s16, 0
    %p107 = por %p105, %p106
    %s108 = ssub.s32 %s17, %s29
    %s109 = ssub.s32 %s18, %s25
    %s110 = sor.u32 %s108, %s109
    %p111 = scmp.eq.s32.totalorder %s110, 0
    %s113 = sadd.s32 %s112, 1
    %s114 = scalar_select %p111, %s112, %s113
    %p117 = pneg %p111
    %p118 = scmp.eq.s32.totalorder %s10, 1
    %p119 = por %p117, %p118
    %p120 = scmp.ne.s32.totalorder %s112, %s115
    %p121 = scmp.eq.s32.totalorder %s10, 0
    %p122 = por %p120, %p121
    %p123 = scmp.ne.s32.totalorder %s112, %s115
    %p124 = scmp.eq.s32.totalorder %s15, 1
    %p125 = por %p123, %p124
    %p126 = scmp.ne.s32.totalorder %s115, %s116
    %p127 = scmp.eq.s32.totalorder %s15, 0
    %p128 = por %p126, %p127
    %p129 = scmp.ne.s32.totalorder %s115, %s116
    %p130 = scmp.eq.s32.totalorder %s16, 1
    %p131 = por %p129, %p130
    %p133 = scmp.ne.s32.totalorder %s116, %s132
    %p134 = scmp.eq.s32.totalorder %s16, 0
    %p135 = por %p133, %p134
    %s136 = ssub.s32 %s17, %s29
    %s137 = ssub.s32 %s18, %s25
    %s138 = sor.u32 %s136, %s137
    %p139 = scmp.eq.s32.totalorder %s138, 0
    %s141 = sadd.s32 %s140, 1
    %s142 = scalar_select %p139, %s140, %s141
    %p145 = pneg %p139
    %p146 = scmp.eq.s32.totalorder %s10, 1
    %p147 = por %p145, %p146
    %p148 = scmp.ne.s32.totalorder %s140, %s143
    %p149 = scmp.eq.s32.totalorder %s10, 0
    %p150 = por %p148, %p149
    %p151 = scmp.ne.s32.totalorder %s140, %s143
    %p152 = scmp.eq.s32.totalorder %s15, 1
    %p153 = por %p151, %p152
    %p154 = scmp.ne.s32.totalorder %s143, %s144
    %p155 = scmp.eq.s32.totalorder %s15, 0
    %p156 = por %p154, %p155
    %p157 = scmp.ne.s32.totalorder %s143, %s144
    %p158 = scmp.eq.s32.totalorder %s16, 1
    %p159 = por %p157, %p158
    %p161 = scmp.ne.s32.totalorder %s144, %s160
    %p162 = scmp.eq.s32.totalorder %s16, 0
    %p163 = por %p161, %p162
    %p164 = scmp.le.s32.totalorder 1, %s10
    %p165 = scmp.lt.s32.totalorder %s10, 3
    %p166 = pnand %p164, %p165
    %p167 = pneg %p166
    // Predicated region
    $region9: #{model_forward.13} parent=5 // pred_check
      _
    $region10: #{model_forward.13} parent=5 // pred_check_branch
      %169 = sbr.rel (%p166) target = $region12
    $region11: #{model_forward.13} parent=5 // pred_region
      %s170 = ssub.s32 %s10, 1
      // Predicated region
      $region13: #{model_forward.13} parent=11 // pred_check
        %p171 = pneg %p74
      $region14: #{model_forward.13} parent=11 // pred_check_branch
        %173 = sbr.rel (%p171) target = $region16
      $region15: #{model_forward.13} parent=11 // pred_region
        %p174 = scmp.lt.s32.totalorder %s20, 0
        %s175 = scalar_select %p174, %s20, 0
        %s176 = smul.addr %s175, 4
        %s177 = scalar_lea.vmem %s1, %s176
      $region16: #{model_forward.13} parent=11 // pred_fallthru
        _
      // Predicated region
      $region17: #{model_forward.13} parent=11 // pred_check
        %p178 = pneg %p100
      $region18: #{model_forward.13} parent=11 // pred_check_branch
        %180 = sbr.rel (%p178) target = $region20
      $region19: #{model_forward.13} parent=11 // pred_region
        %p181 = scmp.lt.s32.totalorder %s20, 0
        %s182 = scalar_select %p181, %s20, 0
        %s183 = scalar_lea.vmem %s2, %s182
      $region20: #{model_forward.13} parent=11 // pred_fallthru
        _
    $region12: #{model_forward.13} parent=5 // pred_fallthru
      _
    %p184 = scmp.lt.s32.totalorder %s10, 2
    // Predicated region
    $region21: #{model_forward.13} parent=5 // pred_check
      %p185 = pneg %p184
    $region22: #{model_forward.13} parent=5 // pred_check_branch
      %187 = sbr.rel (%p185) target = $region24
    $region23: #{model_forward.13} parent=5 // pred_region
      // Predicated region
      $region25: #{model_forward.13} parent=23 // pred_check
        %p188 = pneg %p42
      $region26: #{model_forward.13} parent=23 // pred_check_branch
        %190 = sbr.rel (%p188) target = $region28
      $region27: #{model_forward.13} parent=23 // pred_region
        %s191 = smul.u32 8, %s17
        %p192 = scmp.lt.s32.totalorder %s191, 15
        %s193 = scalar_select %p192, %s191, 15
        %s194 = smul.addr %s193, 4
        %s195 = scalar_lea.vmem %s0, %s194
        %s196 = smul.u32 8, %s17
      $region28: #{model_forward.13} parent=23 // pred_fallthru
        _
      // Predicated region
      $region29: #{model_forward.13} parent=23 // pred_check
        %p197 = pneg %p122
      $region30: #{model_forward.13} parent=23 // pred_check_branch
        %199 = sbr.rel (%p197) target = $region32
      $region31: #{model_forward.13} parent=23 // pred_region
        %s200 = smul.u32 8, %s17
        %p201 = scmp.lt.s32.totalorder %s200, 15
        %s202 = scalar_select %p201, %s200, 15
        %p203 = scmp.lt.s32.totalorder %s18, 0
        %s204 = scalar_select %p203, %s18, 0
        %s205 = sadd.s32 %s204, %s202
        %s206 = smul.addr %s205, 4
        %s207 = scalar_lea.vmem %s3, %s206
        %s208 = smul.u32 8, %s17
      $region32: #{model_forward.13} parent=23 // pred_fallthru
        _
    $region24: #{model_forward.13} parent=5 // pred_fallthru
      _
    %p209 = scmp.le.s32.totalorder 1, %s10
    %p210 = scmp.lt.s32.totalorder %s10, 3
    %p211 = pnand %p209, %p210
    %p212 = pneg %p211
    // Predicated region
    $region33: #{model_forward.13} parent=5 // pred_check
      _
    $region34: #{model_forward.13} parent=5 // pred_check_branch
      %214 = sbr.rel (%p211) target = $region36
    $region35: #{model_forward.13} parent=5 // pred_region
      %s215 = ssub.s32 %s10, 1
      %s216 = smul.u32 8, %s19
      %p217 = scmp.lt.s32.totalorder %s216, 15
      %s218 = scalar_select %p217, %s216, 15
      %s219 = smul.addr %s218, 4
      %s220 = scalar_lea.vmem %s0, %s219
      %p221 = pneg %p48
      %p222 = pneg %p45
      %p223 = scmp.lt.s32.totalorder %s20, 0
      %s224 = scalar_select %p223, %s20, 0
      %s225 = smul.addr %s224, 4
      %s226 = scalar_lea.vmem %s1, %s225
      %p227 = pneg %p74
      %p228 = pneg %p71
      %p229 = scmp.lt.s32.totalorder %s20, 0
      %s230 = scalar_select %p229, %s20, 0
      %s231 = scalar_lea.vmem %s2, %s230
      %p232 = pneg %p100
      %p233 = pneg %p97
      %s234 = smul.u32 8, %s19
      %p235 = scmp.lt.s32.totalorder %s234, 15
      %s236 = scalar_select %p235, %s234, 15
      %p237 = scmp.lt.s32.totalorder %s20, 0
      %s238 = scalar_select %p237, %s20, 0
      %s239 = sadd.s32 %s238, %s236
      %s240 = smul.addr %s239, 4
      %s241 = scalar_lea.vmem %s3, %s240
      %p242 = pneg %p128
      %p243 = pneg %p125
      %p244 = pneg %p156
      %p245 = pneg %p153
      %s246 = smul.u32 8, %s19
      %p247 = scmp.lt.s32.totalorder %s246, 15
      %s248 = scalar_select %p247, %s246, 15
      %p249 = scmp.lt.s32.totalorder %s20, 0
      %s250 = scalar_select %p249, %s20, 0
      %s251 = sadd.s32 %s250, %s248
      %s252 = smul.addr %s251, 4
      %s253 = scalar_lea.vmem %s4, %s252
      %s254 = smul.u32 8, %s19
      %p255 = scmp.lt.s32.totalorder %s254, 15
      %s256 = scalar_select %p255, %s254, 15
      %s257 = smul.addr %s256, 4
      %s258 = scalar_lea.vmem %s0, %s257
      %s259 = smul.u32 8, %s19
      %p260 = scmp.lt.s32.totalorder %s20, 0
      %s261 = scalar_select %p260, %s20, 0
      %s262 = smul.addr %s261, 4
      %s263 = scalar_lea.vmem %s1, %s262
      %p264 = scmp.lt.s32.totalorder %s20, 0
      %s265 = scalar_select %p264, %s20, 0
      %s266 = scalar_lea.vmem %s2, %s265
      %s267 = smul.u32 8, %s19
      %p268 = scmp.lt.s32.totalorder %s267, 15
      %s269 = scalar_select %p268, %s267, 15
      %p270 = scmp.lt.s32.totalorder %s20, 0
      %s271 = scalar_select %p270, %s20, 0
      %s272 = sadd.s32 %s271, %s269
      %s273 = smul.addr %s272, 4
      %s274 = scalar_lea.vmem %s3, %s273
      %s275 = smul.u32 8, %s19
      %s276 = smul.u32 8, %s19
      %p277 = scmp.lt.s32.totalorder %s276, 15
      %s278 = scalar_select %p277, %s276, 15
      %p279 = scmp.lt.s32.totalorder %s20, 0
      %s280 = scalar_select %p279, %s20, 0
      %s281 = sadd.s32 %s280, %s278
      %s282 = smul.addr %s281, 4
      %s283 = scalar_lea.vmem %s4, %s282
      %s284 = smul.u32 8, %s19
      %v286 = vld [vmem:[%s258] sm:$0xf]
      %v287 = vld [vmem:[%s258 + $0x4] sm:$0xf]
      %v288 = vld [vmem:[%s258 + $0x8] sm:$0xf]
      %v289 = vld [vmem:[%s258 + $0xc] sm:$0xf]
      %v290 = vld [vmem:[%s258 + $0x10] sm:$0xf]
      %v291 = vld [vmem:[%s258 + $0x14] sm:$0xf]
      %v292 = vld [vmem:[%s258 + $0x18] sm:$0xf]
      %v293 = vld [vmem:[%s258 + $0x1c] sm:$0xf]
      %v294 = vld [vmem:[%s263] sm:$0xf]
      %v295 = vld [vmem:[%s263 + $0x4] sm:$0xf]
      %v296 = vld [vmem:[%s263 + $0x8] sm:$0xf]
      %v297 = vld [vmem:[%s263 + $0xc] sm:$0xf]
      %v298 = vld [vmem:[%s263 + $0x10] sm:$0xf]
      %v299 = vld [vmem:[%s263 + $0x14] sm:$0xf]
      %v300 = vld [vmem:[%s263 + $0x18] sm:$0xf]
      %v301 = vld [vmem:[%s263 + $0x1c] sm:$0xf]
      %v302 = vld [vmem:[%s263 + $0x20] sm:$0xf]
      %v303 = vld [vmem:[%s263 + $0x24] sm:$0xf]
      %v304 = vld [vmem:[%s263 + $0x28] sm:$0xf]
      %v305 = vld [vmem:[%s263 + $0x2c] sm:$0xf]
      %v306 = vld [vmem:[%s263 + $0x30] sm:$0xf]
      %v307 = vld [vmem:[%s263 + $0x34] sm:$0xf]
      %v308 = vld [vmem:[%s263 + $0x38] sm:$0xf]
      %v309 = vld [vmem:[%s263 + $0x3c] sm:$0xf]
      %v310 = vld [vmem:[%s266] sm:$0x1]
      %v312 = vlaneseq
      %v313 = vshrl.u32 %v312, 7
      %v314 = vsub.s32 0, %v313
      %v315 = vrot.slane %v310, %v314
      %v325 = vunpack.c.l.b16 %v286
      %v326 = vunpack.c.l.b16 %v287
      %v327 = vunpack.c.l.b16 %v288
      %v328 = vunpack.c.l.b16 %v289
      %v329 = vunpack.c.l.b16 %v290
      %v330 = vunpack.c.l.b16 %v291
      %v331 = vunpack.c.l.b16 %v292
      %v332 = vunpack.c.l.b16 %v293
      %v333 = vpack.c.b16 %v326, %v325
      %v334 = vpack.c.b16 %v328, %v327
      %v335 = vpack.c.b16 %v330, %v329
      %v336 = vpack.c.b16 %v332, %v331
      %v357 = vunpack.c.l.b16 %v294
      %v358 = vunpack.c.l.b16 %v295
      %v359 = vunpack.c.l.b16 %v296
      %v360 = vunpack.c.l.b16 %v297
      %v361 = vunpack.c.l.b16 %v298
      %v362 = vunpack.c.l.b16 %v299
      %v363 = vunpack.c.l.b16 %v300
      %v364 = vunpack.c.l.b16 %v301
      %v365 = vunpack.c.l.b16 %v302
      %v366 = vunpack.c.l.b16 %v303
      %v367 = vunpack.c.l.b16 %v304
      %v368 = vunpack.c.l.b16 %v305
      %v369 = vunpack.c.l.b16 %v306
      %v370 = vunpack.c.l.b16 %v307
      %v371 = vunpack.c.l.b16 %v308
      %v372 = vunpack.c.l.b16 %v309
      %v373 = vpack.c.b16 %v358, %v357
      %v374 = vpack.c.b16 %v360, %v359
      %v375 = vpack.c.b16 %v362, %v361
      %v376 = vpack.c.b16 %v364, %v363
      %v377 = vpack.c.b16 %v366, %v365
      %v378 = vpack.c.b16 %v368, %v367
      %v379 = vpack.c.b16 %v370, %v369
      %v380 = vpack.c.b16 %v372, %v371
      %389 = vmatprep.subr.bf16.mxu0 0
      %390 = vmatpush1.bf16.msra.mxu0 %v373
      %391 = vmatprep.subr.bf16.mxu0 0
      %392 = vmatpush1.bf16.msra.mxu0 %v374
      %393 = vmatprep.subr.bf16.mxu0 0
      %394 = vmatpush1.bf16.msra.mxu0 %v375
      %395 = vmatprep.subr.bf16.mxu0 0
      %396 = vmatpush1.bf16.msra.mxu0 %v376
      %397 = vmatprep.subr.bf16.mxu0 0
      %398 = vmatpush1.bf16.msra.mxu0 %v377
      %399 = vmatprep.subr.bf16.mxu0 0
      %400 = vmatpush1.bf16.msra.mxu0 %v378
      %401 = vmatprep.subr.bf16.mxu0 0
      %402 = vmatpush1.bf16.msra.mxu0 %v379
      %403 = vmatprep.subr.bf16.mxu0 0
      %404 = vmatpush1.bf16.msra.mxu0 %v380
      %405 = vmatprep.subr.bf16.mxu0 0
      %406 = vmatpush1.bf16.msra.mxu0 0
      %407 = vmatprep.subr.bf16.mxu0 0
      %408 = vmatpush1.bf16.msra.mxu0 0
      %409 = vmatprep.subr.bf16.mxu0 0
      %410 = vmatpush1.bf16.msra.mxu0 0
      %411 = vmatprep.subr.bf16.mxu0 0
      %412 = vmatpush1.bf16.msra.mxu0 0
      %413 = vmatprep.subr.bf16.mxu0 0
      %414 = vmatpush1.bf16.msra.mxu0 0
      %415 = vmatprep.subr.bf16.mxu0 0
      %416 = vmatpush1.bf16.msra.mxu0 0
      %417 = vmatprep.subr.bf16.mxu0 0
      %418 = vmatpush1.bf16.msra.mxu0 0
      %419 = vmatprep.subr.bf16.mxu0 0
      %420 = vmatpush1.bf16.msra.mxu0 0
      %421 = vmatprep.mubr.bf16.mxu0 0
      %422 = vmatmul.mubr.bf16.gmra.mrb[0].mxu0 %v333
      %v423 = vpop.f32.mrb[0].mxu0
      %v424 = vadd.f32 %v315, %v423
      %v425 = vpop.f32.mrb[0].mxu0
      %v426 = vpop.f32.mrb[0].mxu0
      %v427 = vadd.f32 %v315, %v426
      %v428 = vpop.f32.mrb[0].mxu0
      %429 = vmatprep.mubr.bf16.mxu0 0
      %430 = vmatmul.mubr.bf16.gmra.mrb[0].mxu0 %v334
      %v431 = vpop.f32.mrb[0].mxu0
      %v432 = vadd.f32 %v315, %v431
      %v433 = vpop.f32.mrb[0].mxu0
      %v434 = vpop.f32.mrb[0].mxu0
      %v435 = vadd.f32 %v315, %v434
      %v436 = vpop.f32.mrb[0].mxu0
      %437 = vmatprep.mubr.bf16.mxu0 0
      %438 = vmatmul.mubr.bf16.gmra.mrb[0].mxu0 %v335
      %v439 = vpop.f32.mrb[0].mxu0
      %v440 = vadd.f32 %v315, %v439
      %v441 = vpop.f32.mrb[0].mxu0
      %v442 = vpop.f32.mrb[0].mxu0
      %v443 = vadd.f32 %v315, %v442
      %v444 = vpop.f32.mrb[0].mxu0
      %445 = vmatprep.mubr.bf16.mxu0 0
      %446 = vmatmul.mubr.bf16.gmra.mrb[0].mxu0 %v336
      %v447 = vpop.f32.mrb[0].mxu0
      %v448 = vadd.f32 %v315, %v447
      %v449 = vpop.f32.mrb[0].mxu0
      %v450 = vpop.f32.mrb[0].mxu0
      %v451 = vadd.f32 %v315, %v450
      %v452 = vpop.f32.mrb[0].mxu0
      %453 = vdwg.mxu0
      %v454 = vld [vmem:[%s274] sm:$0xf]
      %v455 = vld [vmem:[%s274 + $0x4] sm:$0xf]
      %v456 = vld [vmem:[%s274 + $0x8] sm:$0xf]
      %v457 = vld [vmem:[%s274 + $0xc] sm:$0xf]
      %v458 = vld [vmem:[%s274 + $0x10] sm:$0xf]
      %v459 = vld [vmem:[%s274 + $0x14] sm:$0xf]
      %v460 = vld [vmem:[%s274 + $0x18] sm:$0xf]
      %v461 = vld [vmem:[%s274 + $0x1c] sm:$0xf]
      %v462 = vunpack.c.l.bf16 %v454
      %v463 = vunpack.c.l.bf16 %v455
      %v464 = vunpack.c.l.bf16 %v456
      %v465 = vunpack.c.l.bf16 %v457
      %v466 = vunpack.c.l.bf16 %v458
      %v467 = vunpack.c.l.bf16 %v459
      %v468 = vunpack.c.l.bf16 %v460
      %v469 = vunpack.c.l.bf16 %v461
      %v470 = vadd.f32 %v424, %v462
      %v471 = vadd.f32 %v427, %v463
      %v472 = vadd.f32 %v432, %v464
      %v473 = vadd.f32 %v435, %v465
      %v474 = vadd.f32 %v440, %v466
      %v475 = vadd.f32 %v443, %v467
      %v476 = vadd.f32 %v448, %v468
      %v477 = vadd.f32 %v451, %v469
      %v478 = vmax.f32 %v470, 0.0
      %v479 = vmax.f32 %v471, 0.0
      %v480 = vmax.f32 %v472, 0.0
      %v481 = vmax.f32 %v473, 0.0
      %v482 = vmax.f32 %v474, 0.0
      %v483 = vmax.f32 %v475, 0.0
      %v484 = vmax.f32 %v476, 0.0
      %v485 = vmax.f32 %v477, 0.0
      %v486 = vpack.c.bf16 %v479, %v478
      %v487 = vpack.c.bf16 %v481, %v480
      %v488 = vpack.c.bf16 %v483, %v482
      %v489 = vpack.c.bf16 %v485, %v484
      %v494 = vunpack.c.l.b16 %v486
      %v495 = vunpack.c.h.b16 %v486
      %v496 = vunpack.c.l.b16 %v487
      %v497 = vunpack.c.h.b16 %v487
      %v498 = vunpack.c.l.b16 %v488
      %v499 = vunpack.c.h.b16 %v488
      %v500 = vunpack.c.l.b16 %v489
      %v501 = vunpack.c.h.b16 %v489
      %v502 = vpack.c.b16 %v494, %v494
      %v503 = vpack.c.b16 %v495, %v495
      %v504 = vpack.c.b16 %v496, %v496
      %v505 = vpack.c.b16 %v497, %v497
      %v506 = vpack.c.b16 %v498, %v498
      %v507 = vpack.c.b16 %v499, %v499
      %v508 = vpack.c.b16 %v500, %v500
      %v509 = vpack.c.b16 %v501, %v501
      %518 = vst [vmem:[%s283] sm:$0xf] %v502
      %519 = vst [vmem:[%s283 + $0x4] sm:$0xf] %v503
      %520 = vst [vmem:[%s283 + $0x8] sm:$0xf] %v504
      %521 = vst [vmem:[%s283 + $0xc] sm:$0xf] %v505
      %522 = vst [vmem:[%s283 + $0x10] sm:$0xf] %v506
      %523 = vst [vmem:[%s283 + $0x14] sm:$0xf] %v507
      %524 = vst [vmem:[%s283 + $0x18] sm:$0xf] %v508
      %525 = vst [vmem:[%s283 + $0x1c] sm:$0xf] %v509
      %s526 = smul.u32 8, %s19
      %p527 = scmp.lt.s32.totalorder %s526, 15
      %s528 = scalar_select %p527, %s526, 15
      %p529 = scmp.lt.s32.totalorder %s20, 0
      %s530 = scalar_select %p529, %s20, 0
      %s531 = sadd.s32 %s530, %s528
      %s532 = smul.addr %s531, 4
      %s533 = scalar_lea.vmem %s4, %s532
      // Predicated region
      $region37: #{model_forward.13} parent=35 // pred_check
        %p534 = pneg %p153
      $region38: #{model_forward.13} parent=35 // pred_check_branch
        %536 = sbr.rel (%p534) target = $region40
      $region39: #{model_forward.13} parent=35 // pred_region
        %s537 = smul.u32 8, %s19
      $region40: #{model_forward.13} parent=35 // pred_fallthru
        _
    $region36: #{model_forward.13} parent=5 // pred_fallthru
      _
    %p538 = scmp.le.s32.totalorder 2, %s10
    // Predicated region
    $region41: #{model_forward.13} parent=5 // pred_check
      %p539 = pneg %p538
    $region42: #{model_forward.13} parent=5 // pred_check_branch
      %541 = sbr.rel (%p539) target = $region44
    $region43: #{model_forward.13} parent=5 // pred_region
      %s542 = ssub.s32 %s10, 2
      // Predicated region
      $region45: #{model_forward.13} parent=43 // pred_check
        %p543 = pneg %p159
      $region46: #{model_forward.13} parent=43 // pred_check_branch
        %545 = sbr.rel (%p543) target = $region48
      $region47: #{model_forward.13} parent=43 // pred_region
        %s546 = smul.u32 8, %s21
        %p547 = scmp.lt.s32.totalorder %s546, 15
        %s548 = scalar_select %p547, %s546, 15
        %p549 = scmp.lt.s32.totalorder %s22, 0
        %s550 = scalar_select %p549, %s22, 0
        %s551 = sadd.s32 %s550, %s548
        %s552 = smul.addr %s551, 4
        %s553 = scalar_lea.vmem %s4, %s552
      $region48: #{model_forward.13} parent=43 // pred_fallthru
        _
    $region44: #{model_forward.13} parent=5 // pred_fallthru
      _
  $region6: #{model_forward.13} parent=0 // loop_footer
    %s14 = sadd.s32 1, %s10
  $region7: #{model_forward.13} parent=0 // loop_footer_branch
    %9 = sbr.rel target = $region3
  $region8: #{model_forward.13} parent=0 // loop_exit
    _

// kernel: model_forward.11
$region0: #{model_forward.11}
  #allocation0 [shape = 'u32[]', space=smem, size = 0x4, offset = 0x4, fixed_abs, tag = 'smem constant byte address 0x4 - core index']
  #allocation1 [shape = 'u32[144,128]{1,0:T(1,128)}', space=vmem, size = 0x12000, scoped, tag = 'internal scratch']
  %s0 = inlined_call_operand.vmem [shape: bf16[2,9,9,128], index: 0, kind: input, shape index: {}]
  %s1 = inlined_call_operand.vmem [shape: bf16[2,9,9,128], index: 1, kind: input, shape index: {}]
  %s2 = inlined_call_operand.vmem [shape: bf16[2,9,9,128], index: 2, kind: input, shape index: {}]
  %s3 = inlined_call_operand.vmem [shape: bf16[2,9,9,128], index: 3, kind: input, shape index: {}]
  %s4 = inlined_call_operand.vmem [shape: bf16[3,3,128,128], index: 4, kind: input, shape index: {}]
  %s5 = inlined_call_operand.vmem [shape: f32[1,128], index: 5, kind: input, shape index: {}]
  %s6 = inlined_call_operand.vmem [shape: bf16[2,8,8,128], index: 6, kind: output, shape index: {}]
  %s7 = sld [smem:[#allocation0]]
  $region57: #{model_forward.11} parent=0
    _
  %s9 = ssub.s32 1, %s7
  %s10 = scalar_select 0, %s9, %s7
  loop: start=0, step=1, limit=4
  $region2: #{model_forward.11} parent=0 // loop_pre_header
    _
  $region3: #{model_forward.11} parent=0 // loop_header
    %s12 = sphi 0, %s16
    %p13 = scmp.ge.s32.totalorder %s12, 4
    %s19 = sphi 0, %s31
    %s20 = sphi 0, %s27
    %s21 = sphi 0, %s19
    %s22 = sphi 0, %s20
    %s23 = sphi 0, %s21
    %s24 = sphi 0, %s22
    %s34 = sphi 0, %s36
    %s37 = sphi 0, %s34
    %s38 = sphi 0, %s37
    %s54 = sphi 0, %s38
    %s60 = sphi 0, %s62
    %s63 = sphi 0, %s60
    %s64 = sphi 0, %s63
    %s80 = sphi 0, %s64
    %s86 = sphi 0, %s88
    %s89 = sphi 0, %s86
    %s90 = sphi 0, %s89
    %s106 = sphi 0, %s90
    %s112 = sphi 0, %s114
    %s115 = sphi 0, %s112
    %s116 = sphi 0, %s115
    %s132 = sphi 0, %s116
    %s138 = sphi 0, %s140
    %s141 = sphi 0, %s138
    %s142 = sphi 0, %s141
    %s158 = sphi 0, %s142
    %s164 = sphi 0, %s166
    %s167 = sphi 0, %s164
    %s168 = sphi 0, %s167
    %s184 = sphi 0, %s168
    %s192 = sphi 0, %s194
    %s195 = sphi 0, %s192
    %s196 = sphi 0, %s195
    %s212 = sphi 0, %s196
  $region4: #{model_forward.11} parent=0 // loop_header_branch
    %15 = sbr.rel (%p13) target = $region8
  $region5: #{model_forward.11} parent=0 // loop_body
    %s17 = ssub.s32 %s12, 1
    %s18 = ssub.s32 %s12, 2
    %s25 = sadd.s32 1, %s20
    %p26 = scmp.ge.s32.totalorder %s25, 1
    %s27 = scalar_select %p26, 0, %s25
    %s28 = sadd.s32 1, %s19
    %s29 = scalar_select %p26, %s28, %s19
    %p30 = scmp.ge.s32.totalorder %s29, 2
    %s31 = scalar_select %p30, 0, %s29
    %s32 = ssub.s32 %s19, %s31
    %p33 = scmp.eq.s32.totalorder %s32, 0
    %s35 = sadd.s32 %s34, 1
    %s36 = scalar_select %p33, %s34, %s35
    %p39 = pneg %p33
    %p40 = scmp.eq.s32.totalorder %s12, 1
    %p41 = por %p39, %p40
    %p42 = scmp.ne.s32.totalorder %s34, %s37
    %p43 = scmp.eq.s32.totalorder %s12, 0
    %p44 = por %p42, %p43
    %p45 = scmp.ne.s32.totalorder %s34, %s37
    %p46 = scmp.eq.s32.totalorder %s17, 1
    %p47 = por %p45, %p46
    %p48 = scmp.ne.s32.totalorder %s37, %s38
    %p49 = scmp.eq.s32.totalorder %s17, 0
    %p50 = por %p48, %p49
    %p51 = scmp.ne.s32.totalorder %s37, %s38
    %p52 = scmp.eq.s32.totalorder %s18, 1
    %p53 = por %p51, %p52
    %p55 = scmp.ne.s32.totalorder %s38, %s54
    %p56 = scmp.eq.s32.totalorder %s18, 0
    %p57 = por %p55, %p56
    %s58 = ssub.s32 %s19, %s31
    %p59 = scmp.eq.s32.totalorder %s58, 0
    %s61 = sadd.s32 %s60, 1
    %s62 = scalar_select %p59, %s60, %s61
    %p65 = pneg %p59
    %p66 = scmp.eq.s32.totalorder %s12, 1
    %p67 = por %p65, %p66
    %p68 = scmp.ne.s32.totalorder %s60, %s63
    %p69 = scmp.eq.s32.totalorder %s12, 0
    %p70 = por %p68, %p69
    %p71 = scmp.ne.s32.totalorder %s60, %s63
    %p72 = scmp.eq.s32.totalorder %s17, 1
    %p73 = por %p71, %p72
    %p74 = scmp.ne.s32.totalorder %s63, %s64
    %p75 = scmp.eq.s32.totalorder %s17, 0
    %p76 = por %p74, %p75
    %p77 = scmp.ne.s32.totalorder %s63, %s64
    %p78 = scmp.eq.s32.totalorder %s18, 1
    %p79 = por %p77, %p78
    %p81 = scmp.ne.s32.totalorder %s64, %s80
    %p82 = scmp.eq.s32.totalorder %s18, 0
    %p83 = por %p81, %p82
    %s84 = ssub.s32 %s19, %s31
    %p85 = scmp.eq.s32.totalorder %s84, 0
    %s87 = sadd.s32 %s86, 1
    %s88 = scalar_select %p85, %s86, %s87
    %p91 = pneg %p85
    %p92 = scmp.eq.s32.totalorder %s12, 1
    %p93 = por %p91, %p92
    %p94 = scmp.ne.s32.totalorder %s86, %s89
    %p95 = scmp.eq.s32.totalorder %s12, 0
    %p96 = por %p94, %p95
    %p97 = scmp.ne.s32.totalorder %s86, %s89
    %p98 = scmp.eq.s32.totalorder %s17, 1
    %p99 = por %p97, %p98
    %p100 = scmp.ne.s32.totalorder %s89, %s90
    %p101 = scmp.eq.s32.totalorder %s17, 0
    %p102 = por %p100, %p101
    %p103 = scmp.ne.s32.totalorder %s89, %s90
    %p104 = scmp.eq.s32.totalorder %s18, 1
    %p105 = por %p103, %p104
    %p107 = scmp.ne.s32.totalorder %s90, %s106
    %p108 = scmp.eq.s32.totalorder %s18, 0
    %p109 = por %p107, %p108
    %s110 = ssub.s32 %s19, %s31
    %p111 = scmp.eq.s32.totalorder %s110, 0
    %s113 = sadd.s32 %s112, 1
    %s114 = scalar_select %p111, %s112, %s113
    %p117 = pneg %p111
    %p118 = scmp.eq.s32.totalorder %s12, 1
    %p119 = por %p117, %p118
    %p120 = scmp.ne.s32.totalorder %s112, %s115
    %p121 = scmp.eq.s32.totalorder %s12, 0
    %p122 = por %p120, %p121
    %p123 = scmp.ne.s32.totalorder %s112, %s115
    %p124 = scmp.eq.s32.totalorder %s17, 1
    %p125 = por %p123, %p124
    %p126 = scmp.ne.s32.totalorder %s115, %s116
    %p127 = scmp.eq.s32.totalorder %s17, 0
    %p128 = por %p126, %p127
    %p129 = scmp.ne.s32.totalorder %s115, %s116
    %p130 = scmp.eq.s32.totalorder %s18, 1
    %p131 = por %p129, %p130
    %p133 = scmp.ne.s32.totalorder %s116, %s132
    %p134 = scmp.eq.s32.totalorder %s18, 0
    %p135 = por %p133, %p134
    %s136 = ssub.s32 %s20, %s27
    %p137 = scmp.eq.s32.totalorder %s136, 0
    %s139 = sadd.s32 %s138, 1
    %s140 = scalar_select %p137, %s138, %s139
    %p143 = pneg %p137
    %p144 = scmp.eq.s32.totalorder %s12, 1
    %p145 = por %p143, %p144
    %p146 = scmp.ne.s32.totalorder %s138, %s141
    %p147 = scmp.eq.s32.totalorder %s12, 0
    %p148 = por %p146, %p147
    %p149 = scmp.ne.s32.totalorder %s138, %s141
    %p150 = scmp.eq.s32.totalorder %s17, 1
    %p151 = por %p149, %p150
    %p152 = scmp.ne.s32.totalorder %s141, %s142
    %p153 = scmp.eq.s32.totalorder %s17, 0
    %p154 = por %p152, %p153
    %p155 = scmp.ne.s32.totalorder %s141, %s142
    %p156 = scmp.eq.s32.totalorder %s18, 1
    %p157 = por %p155, %p156
    %p159 = scmp.ne.s32.totalorder %s142, %s158
    %p160 = scmp.eq.s32.totalorder %s18, 0
    %p161 = por %p159, %p160
    %s162 = ssub.s32 %s20, %s27
    %p163 = scmp.eq.s32.totalorder %s162, 0
    %s165 = sadd.s32 %s164, 1
    %s166 = scalar_select %p163, %s164, %s165
    %p169 = pneg %p163
    %p170 = scmp.eq.s32.totalorder %s12, 1
    %p171 = por %p169, %p170
    %p172 = scmp.ne.s32.totalorder %s164, %s167
    %p173 = scmp.eq.s32.totalorder %s12, 0
    %p174 = por %p172, %p173
    %p175 = scmp.ne.s32.totalorder %s164, %s167
    %p176 = scmp.eq.s32.totalorder %s17, 1
    %p177 = por %p175, %p176
    %p178 = scmp.ne.s32.totalorder %s167, %s168
    %p179 = scmp.eq.s32.totalorder %s17, 0
    %p180 = por %p178, %p179
    %p181 = scmp.ne.s32.totalorder %s167, %s168
    %p182 = scmp.eq.s32.totalorder %s18, 1
    %p183 = por %p181, %p182
    %p185 = scmp.ne.s32.totalorder %s168, %s184
    %p186 = scmp.eq.s32.totalorder %s18, 0
    %p187 = por %p185, %p186
    %s188 = ssub.s32 %s19, %s31
    %s189 = ssub.s32 %s20, %s27
    %s190 = sor.u32 %s188, %s189
    %p191 = scmp.eq.s32.totalorder %s190, 0
    %s193 = sadd.s32 %s192, 1
    %s194 = scalar_select %p191, %s192, %s193
    %p197 = pneg %p191
    %p198 = scmp.eq.s32.totalorder %s12, 1
    %p199 = por %p197, %p198
    %p200 = scmp.ne.s32.totalorder %s192, %s195
    %p201 = scmp.eq.s32.totalorder %s12, 0
    %p202 = por %p200, %p201
    %p203 = scmp.ne.s32.totalorder %s192, %s195
    %p204 = scmp.eq.s32.totalorder %s17, 1
    %p205 = por %p203, %p204
    %p206 = scmp.ne.s32.totalorder %s195, %s196
    %p207 = scmp.eq.s32.totalorder %s17, 0
    %p208 = por %p206, %p207
    %p209 = scmp.ne.s32.totalorder %s195, %s196
    %p210 = scmp.eq.s32.totalorder %s18, 1
    %p211 = por %p209, %p210
    %p213 = scmp.ne.s32.totalorder %s196, %s212
    %p214 = scmp.eq.s32.totalorder %s18, 0
    %p215 = por %p213, %p214
    %p216 = scmp.le.s32.totalorder 1, %s12
    %p217 = scmp.lt.s32.totalorder %s12, 3
    %p218 = pnand %p216, %p217
    %p219 = pneg %p218
    // Predicated region
    $region9: #{model_forward.11} parent=5 // pred_check
      _
    $region10: #{model_forward.11} parent=5 // pred_check_branch
      %221 = sbr.rel (%p218) target = $region12
    $region11: #{model_forward.11} parent=5 // pred_region
      %s222 = ssub.s32 %s12, 1
      // Predicated region
      $region13: #{model_forward.11} parent=11 // pred_check
        %p223 = pneg %p154
      $region14: #{model_forward.11} parent=11 // pred_check_branch
        %225 = sbr.rel (%p223) target = $region16
      $region15: #{model_forward.11} parent=11 // pred_region
        %p226 = scmp.lt.s32.totalorder %s22, 0
        %s227 = scalar_select %p226, %s22, 0
        %s228 = smul.addr %s227, 4
        %s229 = scalar_lea.vmem %s4, %s228
      $region16: #{model_forward.11} parent=11 // pred_fallthru
        _
      // Predicated region
      $region17: #{model_forward.11} parent=11 // pred_check
        %p230 = pneg %p180
      $region18: #{model_forward.11} parent=11 // pred_check_branch
        %232 = sbr.rel (%p230) target = $region20
      $region19: #{model_forward.11} parent=11 // pred_region
        %p233 = scmp.lt.s32.totalorder %s22, 0
        %s234 = scalar_select %p233, %s22, 0
        %s235 = scalar_lea.vmem %s5, %s234
      $region20: #{model_forward.11} parent=11 // pred_fallthru
        _
    $region12: #{model_forward.11} parent=5 // pred_fallthru
      _
    %p236 = scmp.lt.s32.totalorder %s12, 2
    // Predicated region
    $region21: #{model_forward.11} parent=5 // pred_check
      %p237 = pneg %p236
    $region22: #{model_forward.11} parent=5 // pred_check_branch
      %239 = sbr.rel (%p237) target = $region24
    $region23: #{model_forward.11} parent=5 // pred_region
      // Predicated region
      $region25: #{model_forward.11} parent=23 // pred_check
        %p240 = pneg %p44
      $region26: #{model_forward.11} parent=23 // pred_check_branch
        %242 = sbr.rel (%p240) target = $region28
      $region27: #{model_forward.11} parent=23 // pred_region
        %p243 = scmp.lt.s32.totalorder %s19, 1
        %s244 = scalar_select %p243, %s19, 1
        %s245 = smul.addr %s244, 18
        %s246 = smul.addr %s245, 4
        %s247 = scalar_lea.vmem %s0, %s246
      $region28: #{model_forward.11} parent=23 // pred_fallthru
        _
      // Predicated region
      $region29: #{model_forward.11} parent=23 // pred_check
        %p248 = pneg %p70
      $region30: #{model_forward.11} parent=23 // pred_check_branch
        %250 = sbr.rel (%p248) target = $region32
      $region31: #{model_forward.11} parent=23 // pred_region
        %p251 = scmp.lt.s32.totalorder %s19, 1
        %s252 = scalar_select %p251, %s19, 1
        %s253 = smul.addr %s252, 18
        %s254 = smul.addr %s253, 4
        %s255 = scalar_lea.vmem %s1, %s254
      $region32: #{model_forward.11} parent=23 // pred_fallthru
        _
      // Predicated region
      $region33: #{model_forward.11} parent=23 // pred_check
        %p256 = pneg %p96
      $region34: #{model_forward.11} parent=23 // pred_check_branch
        %258 = sbr.rel (%p256) target = $region36
      $region35: #{model_forward.11} parent=23 // pred_region
        %p259 = scmp.lt.s32.totalorder %s19, 1
        %s260 = scalar_select %p259, %s19, 1
        %s261 = smul.addr %s260, 18
        %s262 = smul.addr %s261, 4
        %s263 = scalar_lea.vmem %s2, %s262
      $region36: #{model_forward.11} parent=23 // pred_fallthru
        _
      // Predicated region
      $region37: #{model_forward.11} parent=23 // pred_check
        %p264 = pneg %p122
      $region38: #{model_forward.11} parent=23 // pred_check_branch
        %266 = sbr.rel (%p264) target = $region40
      $region39: #{model_forward.11} parent=23 // pred_region
        %p267 = scmp.lt.s32.totalorder %s19, 1
        %s268 = scalar_select %p267, %s19, 1
        %s269 = smul.addr %s268, 18
        %s270 = smul.addr %s269, 4
        %s271 = scalar_lea.vmem %s3, %s270
      $region40: #{model_forward.11} parent=23 // pred_fallthru
        _
    $region24: #{model_forward.11} parent=5 // pred_fallthru
      _
    %p272 = scmp.le.s32.totalorder 1, %s12
    %p273 = scmp.lt.s32.totalorder %s12, 3
    %p274 = pnand %p272, %p273
    %p275 = pneg %p274
    // Predicated region
    $region41: #{model_forward.11} parent=5 // pred_check
      _
    $region42: #{model_forward.11} parent=5 // pred_check_branch
      %277 = sbr.rel (%p274) target = $region44
    $region43: #{model_forward.11} parent=5 // pred_region
      %s278 = ssub.s32 %s12, 1
      %p279 = scmp.lt.s32.totalorder %s21, 1
      %s280 = scalar_select %p279, %s21, 1
      %s281 = smul.addr %s280, 18
      %s282 = smul.addr %s281, 4
      %s283 = scalar_lea.vmem %s0, %s282
      %p284 = pneg %p50
      %p285 = pneg %p47
      %p286 = scmp.lt.s32.totalorder %s21, 1
      %s287 = scalar_select %p286, %s21, 1
      %s288 = smul.addr %s287, 18
      %s289 = smul.addr %s288, 4
      %s290 = scalar_lea.vmem %s1, %s289
      %p291 = pneg %p76
      %p292 = pneg %p73
      %p293 = scmp.lt.s32.totalorder %s21, 1
      %s294 = scalar_select %p293, %s21, 1
      %s295 = smul.addr %s294, 18
      %s296 = smul.addr %s295, 4
      %s297 = scalar_lea.vmem %s2, %s296
      %p298 = pneg %p102
      %p299 = pneg %p99
      %p300 = scmp.lt.s32.totalorder %s21, 1
      %s301 = scalar_select %p300, %s21, 1
      %s302 = smul.addr %s301, 18
      %s303 = smul.addr %s302, 4
      %s304 = scalar_lea.vmem %s3, %s303
      %p305 = pneg %p128
      %p306 = pneg %p125
      %p307 = scmp.lt.s32.totalorder %s22, 0
      %s308 = scalar_select %p307, %s22, 0
      %s309 = smul.addr %s308, 4
      %s310 = scalar_lea.vmem %s4, %s309
      %p311 = pneg %p154
      %p312 = pneg %p151
      %p313 = scmp.lt.s32.totalorder %s22, 0
      %s314 = scalar_select %p313, %s22, 0
      %s315 = scalar_lea.vmem %s5, %s314
      %p316 = pneg %p180
      %p317 = pneg %p177
      %p318 = pneg %p208
      %p319 = pneg %p205
      %p320 = scmp.lt.s32.totalorder %s21, 1
      %s321 = scalar_select %p320, %s21, 1
      %p322 = scmp.lt.s32.totalorder %s22, 0
      %s323 = scalar_select %p322, %s22, 0
      %s324 = smul.addr %s321, 8
      %s325 = sadd.s32 %s323, %s324
      %s326 = smul.addr %s325, 4
      %s327 = scalar_lea.vmem %s6, %s326
      %p328 = scmp.lt.s32.totalorder %s21, 1
      %s329 = scalar_select %p328, %s21, 1
      %s330 = smul.addr %s329, 18
      %s331 = smul.addr %s330, 4
      %s332 = scalar_lea.vmem %s0, %s331
      %p333 = scmp.lt.s32.totalorder %s21, 1
      %s334 = scalar_select %p333, %s21, 1
      %s335 = smul.addr %s334, 18
      %s336 = smul.addr %s335, 4
      %s337 = scalar_lea.vmem %s1, %s336
      %p338 = scmp.lt.s32.totalorder %s21, 1
      %s339 = scalar_select %p338, %s21, 1
      %s340 = smul.addr %s339, 18
      %s341 = smul.addr %s340, 4
      %s342 = scalar_lea.vmem %s2, %s341
      %p343 = scmp.lt.s32.totalorder %s21, 1
      %s344 = scalar_select %p343, %s21, 1
      %s345 = smul.addr %s344, 18
      %s346 = smul.addr %s345, 4
      %s347 = scalar_lea.vmem %s3, %s346
      %p348 = scmp.lt.s32.totalorder %s22, 0
      %s349 = scalar_select %p348, %s22, 0
      %s350 = smul.addr %s349, 4
      %s351 = scalar_lea.vmem %s4, %s350
      %p352 = scmp.lt.s32.totalorder %s22, 0
      %s353 = scalar_select %p352, %s22, 0
      %s354 = scalar_lea.vmem %s5, %s353
      %p355 = scmp.lt.s32.totalorder %s21, 1
      %s356 = scalar_select %p355, %s21, 1
      %p357 = scmp.lt.s32.totalorder %s22, 0
      %s358 = scalar_select %p357, %s22, 0
      %s359 = smul.addr %s356, 8
      %s360 = sadd.s32 %s358, %s359
      %s361 = smul.addr %s360, 4
      %s362 = scalar_lea.vmem %s6, %s361
      %v364 = vld [vmem:[%s332] sm:$0xf]
      %v365 = vld [vmem:[%s332 + $0x8] sm:$0xf]
      %v366 = vld [vmem:[%s332 + $0x10] sm:$0xf]
      %v367 = vld [vmem:[%s332 + $0x18] sm:$0xf]
      %v368 = vld [vmem:[%s332 + $0x20] sm:$0xf]
      %v369 = vld [vmem:[%s332 + $0x28] sm:$0xf]
      %v370 = vld [vmem:[%s332 + $0x30] sm:$0xf]
      %v371 = vld [vmem:[%s332 + $0x38] sm:$0xf]
      %v372 = vld [vmem:[%s351] sm:$0xf]
      %v373 = vld [vmem:[%s351 + $0x4] sm:$0xf]
      %v374 = vld [vmem:[%s351 + $0x8] sm:$0xf]
      %v375 = vld [vmem:[%s351 + $0xc] sm:$0xf]
      %v376 = vld [vmem:[%s351 + $0x10] sm:$0xf]
      %v377 = vld [vmem:[%s351 + $0x14] sm:$0xf]
      %v378 = vld [vmem:[%s351 + $0x18] sm:$0xf]
      %v379 = vld [vmem:[%s351 + $0x1c] sm:$0xf]
      %v380 = vld [vmem:[%s351 + $0x20] sm:$0xf]
      %v381 = vld [vmem:[%s351 + $0x24] sm:$0xf]
      %v382 = vld [vmem:[%s351 + $0x28] sm:$0xf]
      %v383 = vld [vmem:[%s351 + $0x2c] sm:$0xf]
      %v384 = vld [vmem:[%s351 + $0x30] sm:$0xf]
      %v385 = vld [vmem:[%s351 + $0x34] sm:$0xf]
      %v386 = vld [vmem:[%s351 + $0x38] sm:$0xf]
      %v387 = vld [vmem:[%s351 + $0x3c] sm:$0xf]
      %v388 = vld [vmem:[%s337] sm:$0xf]
      %v389 = vld [vmem:[%s337 + $0x8] sm:$0xf]
      %v390 = vld [vmem:[%s337 + $0x10] sm:$0xf]
      %v391 = vld [vmem:[%s337 + $0x18] sm:$0xf]
      %v392 = vld [vmem:[%s337 + $0x20] sm:$0xf]
      %v393 = vld [vmem:[%s337 + $0x28] sm:$0xf]
      %v394 = vld [vmem:[%s337 + $0x30] sm:$0xf]
      %v395 = vld [vmem:[%s337 + $0x38] sm:$0xf]
      %s396 = scalar_lea.vmem %s351, 64
      %v397 = vld [vmem:[%s396] sm:$0xf]
      %v398 = vld [vmem:[%s396 + $0x4] sm:$0xf]
      %v399 = vld [vmem:[%s396 + $0x8] sm:$0xf]
      %v400 = vld [vmem:[%s396 + $0xc] sm:$0xf]
      %v401 = vld [vmem:[%s396 + $0x10] sm:$0xf]
      %v402 = vld [vmem:[%s396 + $0x14] sm:$0xf]
      %v403 = vld [vmem:[%s396 + $0x18] sm:$0xf]
      %v404 = vld [vmem:[%s396 + $0x1c] sm:$0xf]
      %v405 = vld [vmem:[%s396 + $0x20] sm:$0xf]
      %v406 = vld [vmem:[%s396 + $0x24] sm:$0xf]
      %v407 = vld [vmem:[%s396 + $0x28] sm:$0xf]
      %v408 = vld [vmem:[%s396 + $0x2c] sm:$0xf]
      %v409 = vld [vmem:[%s396 + $0x30] sm:$0xf]
      %v410 = vld [vmem:[%s396 + $0x34] sm:$0xf]
      %v411 = vld [vmem:[%s396 + $0x38] sm:$0xf]
      %v412 = vld [vmem:[%s396 + $0x3c] sm:$0xf]
      %v421 = vunpack.c.l.b16 %v388
      %v422 = vunpack.c.l.b16 %v389
      %v423 = vunpack.c.l.b16 %v390
      %v424 = vunpack.c.l.b16 %v391
      %v425 = vunpack.c.l.b16 %v392
      %v426 = vunpack.c.l.b16 %v393
      %v427 = vunpack.c.l.b16 %v394
      %v428 = vunpack.c.l.b16 %v395
      %v429 = vpack.c.b16 %v422, %v421
      %v430 = vpack.c.b16 %v424, %v423
      %v431 = vpack.c.b16 %v426, %v425
      %v432 = vpack.c.b16 %v428, %v427
      %v453 = vunpack.c.l.b16 %v397
      %v454 = vunpack.c.l.b16 %v398
      %v455 = vunpack.c.l.b16 %v399
      %v456 = vunpack.c.l.b16 %v400
      %v457 = vunpack.c.l.b16 %v401
      %v458 = vunpack.c.l.b16 %v402
      %v459 = vunpack.c.l.b16 %v403
      %v460 = vunpack.c.l.b16 %v404
      %v461 = vunpack.c.l.b16 %v405
      %v462 = vunpack.c.l.b16 %v406
      %v463 = vunpack.c.l.b16 %v407
      %v464 = vunpack.c.l.b16 %v408
      %v465 = vunpack.c.l.b16 %v409
      %v466 = vunpack.c.l.b16 %v410
      %v467 = vunpack.c.l.b16 %v411
      %v468 = vunpack.c.l.b16 %v412
      %v469 = vpack.c.b16 %v454, %v453
      %v470 = vpack.c.b16 %v456, %v455
      %v471 = vpack.c.b16 %v458, %v457
      %v472 = vpack.c.b16 %v460, %v459
      %v473 = vpack.c.b16 %v462, %v461
      %v474 = vpack.c.b16 %v464, %v463
      %v475 = vpack.c.b16 %v466, %v465
      %v476 = vpack.c.b16 %v468, %v467
      %485 = vmatprep.subr.bf16.mxu0 0
      %486 = vmatpush1.bf16.msra.mxu0 %v469
      %487 = vmatprep.subr.bf16.mxu0 0
      %488 = vmatpush1.bf16.msra.mxu0 %v470
      %489 = vmatprep.subr.bf16.mxu0 0
      %490 = vmatpush1.bf16.msra.mxu0 %v471
      %491 = vmatprep.subr.bf16.mxu0 0
      %492 = vmatpush1.bf16.msra.mxu0 %v472
      %493 = vmatprep.subr.bf16.mxu0 0
      %494 = vmatpush1.bf16.msra.mxu0 %v473
      %495 = vmatprep.subr.bf16.mxu0 0
      %496 = vmatpush1.bf16.msra.mxu0 %v474
      %497 = vmatprep.subr.bf16.mxu0 0
      %498 = vmatpush1.bf16.msra.mxu0 %v475
      %499 = vmatprep.subr.bf16.mxu0 0
      %500 = vmatpush1.bf16.msra.mxu0 %v476
      %501 = vmatprep.subr.bf16.mxu0 0
      %502 = vmatpush1.bf16.msra.mxu0 0
      %503 = vmatprep.subr.bf16.mxu0 0
      %504 = vmatpush1.bf16.msra.mxu0 0
      %505 = vmatprep.subr.bf16.mxu0 0
      %506 = vmatpush1.bf16.msra.mxu0 0
      %507 = vmatprep.subr.bf16.mxu0 0
      %508 = vmatpush1.bf16.msra.mxu0 0
      %509 = vmatprep.subr.bf16.mxu0 0
      %510 = vmatpush1.bf16.msra.mxu0 0
      %511 = vmatprep.subr.bf16.mxu0 0
      %512 = vmatpush1.bf16.msra.mxu0 0
      %513 = vmatprep.subr.bf16.mxu0 0
      %514 = vmatpush1.bf16.msra.mxu0 0
      %515 = vmatprep.subr.bf16.mxu0 0
      %516 = vmatpush1.bf16.msra.mxu0 0
      %517 = vmatprep.mubr.bf16.mxu0 0
      %518 = vmatmul.mubr.bf16.gmra.mrb[0].mxu0 %v429
      %v519 = vpop.f32.mrb[0].mxu0
      %v520 = vadd.f32 0.0, %v519
      %v521 = vpop.f32.mrb[0].mxu0
      %v522 = vpop.f32.mrb[0].mxu0
      %v523 = vadd.f32 0.0, %v522
      %v524 = vpop.f32.mrb[0].mxu0
      %525 = vmatprep.mubr.bf16.mxu0 0
      %526 = vmatmul.mubr.bf16.gmra.mrb[0].mxu0 %v430
      %v527 = vpop.f32.mrb[0].mxu0
      %v528 = vadd.f32 0.0, %v527
      %v529 = vpop.f32.mrb[0].mxu0
      %v530 = vpop.f32.mrb[0].mxu0
      %v531 = vadd.f32 0.0, %v530
      %v532 = vpop.f32.mrb[0].mxu0
      %533 = vmatprep.mubr.bf16.mxu0 0
      %534 = vmatmul.mubr.bf16.gmra.mrb[0].mxu0 %v431
      %v535 = vpop.f32.mrb[0].mxu0
      %v536 = vadd.f32 0.0, %v535
      %v537 = vpop.f32.mrb[0].mxu0
      %v538 = vpop.f32.mrb[0].mxu0
      %v539 = vadd.f32 0.0, %v538
      %v540 = vpop.f32.mrb[0].mxu0
      %541 = vmatprep.mubr.bf16.mxu0 0
      %542 = vmatmul.mubr.bf16.gmra.mrb[0].mxu0 %v432
      %v543 = vpop.f32.mrb[0].mxu0
      %v544 = vadd.f32 0.0, %v543
      %v545 = vpop.f32.mrb[0].mxu0
      %v546 = vpop.f32.mrb[0].mxu0
      %v547 = vadd.f32 0.0, %v546
      %v548 = vpop.f32.mrb[0].mxu0
      %549 = vdwg.mxu0
      %v558 = vunpack.c.l.b16 %v364
      %v559 = vunpack.c.l.b16 %v365
      %v560 = vunpack.c.l.b16 %v366
      %v561 = vunpack.c.l.b16 %v367
      %v562 = vunpack.c.l.b16 %v368
      %v563 = vunpack.c.l.b16 %v369
      %v564 = vunpack.c.l.b16 %v370
      %v565 = vunpack.c.l.b16 %v371
      %v566 = vpack.c.b16 %v559, %v558
      %v567 = vpack.c.b16 %v561, %v560
      %v568 = vpack.c.b16 %v563, %v562
      %v569 = vpack.c.b16 %v565, %v564
      %v590 = vunpack.c.l.b16 %v372
      %v591 = vunpack.c.l.b16 %v373
      %v592 = vunpack.c.l.b16 %v374
      %v593 = vunpack.c.l.b16 %v375
      %v594 = vunpack.c.l.b16 %v376
      %v595 = vunpack.c.l.b16 %v377
      %v596 = vunpack.c.l.b16 %v378
      %v597 = vunpack.c.l.b16 %v379
      %v598 = vunpack.c.l.b16 %v380
      %v599 = vunpack.c.l.b16 %v381
      %v600 = vunpack.c.l.b16 %v382
      %v601 = vunpack.c.l.b16 %v383
      %v602 = vunpack.c.l.b16 %v384
      %v603 = vunpack.c.l.b16 %v385
      %v604 = vunpack.c.l.b16 %v386
      %v605 = vunpack.c.l.b16 %v387
      %v606 = vpack.c.b16 %v591, %v590
      %v607 = vpack.c.b16 %v593, %v592
      %v608 = vpack.c.b16 %v595, %v594
      %v609 = vpack.c.b16 %v597, %v596
      %v610 = vpack.c.b16 %v599, %v598
      %v611 = vpack.c.b16 %v601, %v600
      %v612 = vpack.c.b16 %v603, %v602
      %v613 = vpack.c.b16 %v605, %v604
      %622 = vmatprep.subr.bf16.mxu0 0
      %623 = vmatpush1.bf16.msra.mxu0 %v606
      %624 = vmatprep.subr.bf16.mxu0 0
      %625 = vmatpush1.bf16.msra.mxu0 %v607
      %626 = vmatprep.subr.bf16.mxu0 0
      %627 = vmatpush1.bf16.msra.mxu0 %v608
      %628 = vmatprep.subr.bf16.mxu0 0
      %629 = vmatpush1.bf16.msra.mxu0 %v609
      %630 = vmatprep.subr.bf16.mxu0 0
      %631 = vmatpush1.bf16.msra.mxu0 %v610
      %632 = vmatprep.subr.bf16.mxu0 0
      %633 = vmatpush1.bf16.msra.mxu0 %v611
      %634 = vmatprep.subr.bf16.mxu0 0
      %635 = vmatpush1.bf16.msra.mxu0 %v612
      %636 = vmatprep.subr.bf16.mxu0 0
      %637 = vmatpush1.bf16.msra.mxu0 %v613
      %638 = vmatprep.subr.bf16.mxu0 0
      %639 = vmatpush1.bf16.msra.mxu0 0
      %640 = vmatprep.subr.bf16.mxu0 0
      %641 = vmatpush1.bf16.msra.mxu0 0
      %642 = vmatprep.subr.bf16.mxu0 0
      %643 = vmatpush1.bf16.msra.mxu0 0
      %644 = vmatprep.subr.bf16.mxu0 0
      %645 = vmatpush1.bf16.msra.mxu0 0
      %646 = vmatprep.subr.bf16.mxu0 0
      %647 = vmatpush1.bf16.msra.mxu0 0
      %648 = vmatprep.subr.bf16.mxu0 0
      %649 = vmatpush1.bf16.msra.mxu0 0
      %650 = vmatprep.subr.bf16.mxu0 0
      %651 = vmatpush1.bf16.msra.mxu0 0
      %652 = vmatprep.subr.bf16.mxu0 0
      %653 = vmatpush1.bf16.msra.mxu0 0
      %654 = vmatprep.mubr.bf16.mxu0 0
      %655 = vmatmul.mubr.bf16.gmra.mrb[0].mxu0 %v566
      %v656 = vpop.f32.mrb[0].mxu0
      %v657 = vadd.f32 %v520, %v656
      %v658 = vpop.f32.mrb[0].mxu0
      %v659 = vpop.f32.mrb[0].mxu0
      %v660 = vadd.f32 %v523, %v659
      %v661 = vpop.f32.mrb[0].mxu0
      %662 = vmatprep.mubr.bf16.mxu0 0
      %663 = vmatmul.mubr.bf16.gmra.mrb[0].mxu0 %v567
      %v664 = vpop.f32.mrb[0].mxu0
      %v665 = vadd.f32 %v528, %v664
      %v666 = vpop.f32.mrb[0].mxu0
      %v667 = vpop.f32.mrb[0].mxu0
      %v668 = vadd.f32 %v531, %v667
      %v669 = vpop.f32.mrb[0].mxu0
      %670 = vmatprep.mubr.bf16.mxu0 0
      %671 = vmatmul.mubr.bf16.gmra.mrb[0].mxu0 %v568
      %v672 = vpop.f32.mrb[0].mxu0
      %v673 = vadd.f32 %v536, %v672
      %v674 = vpop.f32.mrb[0].mxu0
      %v675 = vpop.f32.mrb[0].mxu0
      %v676 = vadd.f32 %v539, %v675
      %v677 = vpop.f32.mrb[0].mxu0
      %678 = vmatprep.mubr.bf16.mxu0 0
      %679 = vmatmul.mubr.bf16.gmra.mrb[0].mxu0 %v569
      %v680 = vpop.f32.mrb[0].mxu0
      %v681 = vadd.f32 %v544, %v680
      %v682 = vpop.f32.mrb[0].mxu0
      %v683 = vpop.f32.mrb[0].mxu0
      %v684 = vadd.f32 %v547, %v683
      %v685 = vpop.f32.mrb[0].mxu0
      %686 = vdwg.mxu0
      %v687 = vld [vmem:[%s332] sm:$0xf]
      %v688 = vld [vmem:[%s332 + $0x4] sm:$0x1]
      %v689 = vld [vmem:[%s332 + $0x8] sm:$0xf]
      %v690 = vld [vmem:[%s332 + $0xc] sm:$0x1]
      %v691 = vld [vmem:[%s332 + $0x10] sm:$0xf]
      %v692 = vld [vmem:[%s332 + $0x14] sm:$0x1]
      %v693 = vld [vmem:[%s332 + $0x18] sm:$0xf]
      %v694 = vld [vmem:[%s332 + $0x1c] sm:$0x1]
      %v695 = vld [vmem:[%s332 + $0x20] sm:$0xf]
      %v696 = vld [vmem:[%s332 + $0x24] sm:$0x1]
      %v697 = vld [vmem:[%s332 + $0x28] sm:$0xf]
      %v698 = vld [vmem:[%s332 + $0x2c] sm:$0x1]
      %v699 = vld [vmem:[%s332 + $0x30] sm:$0xf]
      %v700 = vld [vmem:[%s332 + $0x34] sm:$0x1]
      %v701 = vld [vmem:[%s332 + $0x38] sm:$0xf]
      %v702 = vld [vmem:[%s332 + $0x3c] sm:$0x1]
      %vm703 = vsmask.f32 3328
      %vm704 = vsmask.f32 7440
      %vm705 = vmor %vm703, %vm704
      %v707 = vshrl.u32 %v687, 16
      %v709 = vrot.slane %v707, 4
      %v710 = vshll.u32 %v687, 16
      %v712 = vrot.slane %v710, 5
      %v713 = vor.u32 %v709, %v712
      %v714 = vrot.slane %v713, 4
      %v716 = vshll.u32 %v688, 16
      %v718 = vrot.slane %v716, 5
      %v719 = vsel %vm705, %v714, %v718
      %v721 = vshrl.u32 %v689, 16
      %v723 = vrot.slane %v721, 4
      %v724 = vshll.u32 %v689, 16
      %v726 = vrot.slane %v724, 5
      %v727 = vor.u32 %v723, %v726
      %v728 = vrot.slane %v727, 4
      %v730 = vshll.u32 %v690, 16
      %v732 = vrot.slane %v730, 5
      %v733 = vsel %vm705, %v728, %v732
      %v735 = vshrl.u32 %v691, 16
      %v737 = vrot.slane %v735, 4
      %v738 = vshll.u32 %v691, 16
      %v740 = vrot.slane %v738, 5
      %v741 = vor.u32 %v737, %v740
      %v742 = vrot.slane %v741, 4
      %v744 = vshll.u32 %v692, 16
      %v746 = vrot.slane %v744, 5
      %v747 = vsel %vm705, %v742, %v746
      %v749 = vshrl.u32 %v693, 16
      %v751 = vrot.slane %v749, 4
      %v752 = vshll.u32 %v693, 16
      %v754 = vrot.slane %v752, 5
      %v755 = vor.u32 %v751, %v754
      %v756 = vrot.slane %v755, 4
      %v758 = vshll.u32 %v694, 16
      %v760 = vrot.slane %v758, 5
      %v761 = vsel %vm705, %v756, %v760
      %v763 = vshrl.u32 %v695, 16
      %v765 = vrot.slane %v763, 4
      %v766 = vshll.u32 %v695, 16
      %v768 = vrot.slane %v766, 5
      %v769 = vor.u32 %v765, %v768
      %v770 = vrot.slane %v769, 4
      %v772 = vshll.u32 %v696, 16
      %v774 = vrot.slane %v772, 5
      %v775 = vsel %vm705, %v770, %v774
      %v777 = vshrl.u32 %v697, 16
      %v779 = vrot.slane %v777, 4
      %v780 = vshll.u32 %v697, 16
      %v782 = vrot.slane %v780, 5
      %v783 = vor.u32 %v779, %v782
      %v784 = vrot.slane %v783, 4
      %v786 = vshll.u32 %v698, 16
      %v788 = vrot.slane %v786, 5
      %v789 = vsel %vm705, %v784, %v788
      %v791 = vshrl.u32 %v699, 16
      %v793 = vrot.slane %v791, 4
      %v794 = vshll.u32 %v699, 16
      %v796 = vrot.slane %v794, 5
      %v797 = vor.u32 %v793, %v796
      %v798 = vrot.slane %v797, 4
      %v800 = vshll.u32 %v700, 16
      %v802 = vrot.slane %v800, 5
      %v803 = vsel %vm705, %v798, %v802
      %v805 = vshrl.u32 %v701, 16
      %v807 = vrot.slane %v805, 4
      %v808 = vshll.u32 %v701, 16
      %v810 = vrot.slane %v808, 5
      %v811 = vor.u32 %v807, %v810
      %v812 = vrot.slane %v811, 4
      %v814 = vshll.u32 %v702, 16
      %v816 = vrot.slane %v814, 5
      %v817 = vsel %vm705, %v812, %v816
      %s818 = scalar_lea.vmem %s351, 128
      %v819 = vld [vmem:[%s818] sm:$0xf]
      %v820 = vld [vmem:[%s818 + $0x4] sm:$0xf]
      %v821 = vld [vmem:[%s818 + $0x8] sm:$0xf]
      %v822 = vld [vmem:[%s818 + $0xc] sm:$0xf]
      %v823 = vld [vmem:[%s818 + $0x10] sm:$0xf]
      %v824 = vld [vmem:[%s818 + $0x14] sm:$0xf]
      %v825 = vld [vmem:[%s818 + $0x18] sm:$0xf]
      %v826 = vld [vmem:[%s818 + $0x1c] sm:$0xf]
      %v827 = vld [vmem:[%s818 + $0x20] sm:$0xf]
      %v828 = vld [vmem:[%s818 + $0x24] sm:$0xf]
      %v829 = vld [vmem:[%s818 + $0x28] sm:$0xf]
      %v830 = vld [vmem:[%s818 + $0x2c] sm:$0xf]
      %v831 = vld [vmem:[%s818 + $0x30] sm:$0xf]
      %v832 = vld [vmem:[%s818 + $0x34] sm:$0xf]
      %v833 = vld [vmem:[%s818 + $0x38] sm:$0xf]
      %v834 = vld [vmem:[%s818 + $0x3c] sm:$0xf]
      %v835 = vunpack.c.l.b16 %v719
      %v836 = vunpack.c.l.b16 %v733
      %v837 = vunpack.c.l.b16 %v747
      %v838 = vunpack.c.l.b16 %v761
      %v839 = vunpack.c.l.b16 %v775
      %v840 = vunpack.c.l.b16 %v789
      %v841 = vunpack.c.l.b16 %v803
      %v842 = vunpack.c.l.b16 %v817
      %v843 = vpack.c.b16 %v836, %v835
      %v844 = vpack.c.b16 %v838, %v837
      %v845 = vpack.c.b16 %v840, %v839
      %v846 = vpack.c.b16 %v842, %v841
      %v867 = vunpack.c.l.b16 %v819
      %v868 = vunpack.c.l.b16 %v820
      %v869 = vunpack.c.l.b16 %v821
      %v870 = vunpack.c.l.b16 %v822
      %v871 = vunpack.c.l.b16 %v823
      %v872 = vunpack.c.l.b16 %v824
      %v873 = vunpack.c.l.b16 %v825
      %v874 = vunpack.c.l.b16 %v826
      %v875 = vunpack.c.l.b16 %v827
      %v876 = vunpack.c.l.b16 %v828
      %v877 = vunpack.c.l.b16 %v829
      %v878 = vunpack.c.l.b16 %v830
      %v879 = vunpack.c.l.b16 %v831
      %v880 = vunpack.c.l.b16 %v832
      %v881 = vunpack.c.l.b16 %v833
      %v882 = vunpack.c.l.b16 %v834
      %v883 = vpack.c.b16 %v868, %v867
      %v884 = vpack.c.b16 %v870, %v869
      %v885 = vpack.c.b16 %v872, %v871
      %v886 = vpack.c.b16 %v874, %v873
      %v887 = vpack.c.b16 %v876, %v875
      %v888 = vpack.c.b16 %v878, %v877
      %v889 = vpack.c.b16 %v880, %v879
      %v890 = vpack.c.b16 %v882, %v881
      %899 = vmatprep.subr.bf16.mxu0 0
      %900 = vmatpush1.bf16.msra.mxu0 %v883
      %901 = vmatprep.subr.bf16.mxu0 0
      %902 = vmatpush1.bf16.msra.mxu0 %v884
      %903 = vmatprep.subr.bf16.mxu0 0
      %904 = vmatpush1.bf16.msra.mxu0 %v885
      %905 = vmatprep.subr.bf16.mxu0 0
      %906 = vmatpush1.bf16.msra.mxu0 %v886
      %907 = vmatprep.subr.bf16.mxu0 0
      %908 = vmatpush1.bf16.msra.mxu0 %v887
      %909 = vmatprep.subr.bf16.mxu0 0
      %910 = vmatpush1.bf16.msra.mxu0 %v888
      %911 = vmatprep.subr.bf16.mxu0 0
      %912 = vmatpush1.bf16.msra.mxu0 %v889
      %913 = vmatprep.subr.bf16.mxu0 0
      %914 = vmatpush1.bf16.msra.mxu0 %v890
      %915 = vmatprep.subr.bf16.mxu0 0
      %916 = vmatpush1.bf16.msra.mxu0 0
      %917 = vmatprep.subr.bf16.mxu0 0
      %918 = vmatpush1.bf16.msra.mxu0 0
      %919 = vmatprep.subr.bf16.mxu0 0
      %920 = vmatpush1.bf16.msra.mxu0 0
      %921 = vmatprep.subr.bf16.mxu0 0
      %922 = vmatpush1.bf16.msra.mxu0 0
      %923 = vmatprep.subr.bf16.mxu0 0
      %924 = vmatpush1.bf16.msra.mxu0 0
      %925 = vmatprep.subr.bf16.mxu0 0
      %926 = vmatpush1.bf16.msra.mxu0 0
      %927 = vmatprep.subr.bf16.mxu0 0
      %928 = vmatpush1.bf16.msra.mxu0 0
      %929 = vmatprep.subr.bf16.mxu0 0
      %930 = vmatpush1.bf16.msra.mxu0 0
      %931 = vmatprep.mubr.bf16.mxu0 0
      %932 = vmatmul.mubr.bf16.gmra.mrb[0].mxu0 %v843
      %v933 = vpop.f32.mrb[0].mxu0
      %v934 = vadd.f32 0.0, %v933
      %v935 = vpop.f32.mrb[0].mxu0
      %v936 = vpop.f32.mrb[0].mxu0
      %v937 = vadd.f32 0.0, %v936
      %v938 = vpop.f32.mrb[0].mxu0
      %939 = vmatprep.mubr.bf16.mxu0 0
      %940 = vmatmul.mubr.bf16.gmra.mrb[0].mxu0 %v844
      %v941 = vpop.f32.mrb[0].mxu0
      %v942 = vadd.f32 0.0, %v941
      %v943 = vpop.f32.mrb[0].mxu0
      %v944 = vpop.f32.mrb[0].mxu0
      %v945 = vadd.f32 0.0, %v944
      %v946 = vpop.f32.mrb[0].mxu0
      %947 = vmatprep.mubr.bf16.mxu0 0
      %948 = vmatmul.mubr.bf16.gmra.mrb[0].mxu0 %v845
      %v949 = vpop.f32.mrb[0].mxu0
      %v950 = vadd.f32 0.0, %v949
      %v951 = vpop.f32.mrb[0].mxu0
      %v952 = vpop.f32.mrb[0].mxu0
      %v953 = vadd.f32 0.0, %v952
      %v954 = vpop.f32.mrb[0].mxu0
      %955 = vmatprep.mubr.bf16.mxu0 0
      %956 = vmatmul.mubr.bf16.gmra.mrb[0].mxu0 %v846
      %v957 = vpop.f32.mrb[0].mxu0
      %v958 = vadd.f32 0.0, %v957
      %v959 = vpop.f32.mrb[0].mxu0
      %v960 = vpop.f32.mrb[0].mxu0
      %v961 = vadd.f32 0.0, %v960
      %v962 = vpop.f32.mrb[0].mxu0
      %963 = vdwg.mxu0
      %v964 = vadd.f32 %v657, %v934
      %v965 = vadd.f32 %v660, %v937
      %v966 = vadd.f32 %v665, %v942
      %v967 = vadd.f32 %v668, %v945
      %v968 = vadd.f32 %v673, %v950
      %v969 = vadd.f32 %v676, %v953
      %v970 = vadd.f32 %v681, %v958
      %v971 = vadd.f32 %v684, %v961
      %v972 = vld [vmem:[%s342] sm:$0xf]
      %v973 = vld [vmem:[%s342 + $0x8] sm:$0xf]
      %v974 = vld [vmem:[%s342 + $0x10] sm:$0xf]
      %v975 = vld [vmem:[%s342 + $0x18] sm:$0xf]
      %v976 = vld [vmem:[%s342 + $0x20] sm:$0xf]
      %v977 = vld [vmem:[%s342 + $0x28] sm:$0xf]
      %v978 = vld [vmem:[%s342 + $0x30] sm:$0xf]
      %v979 = vld [vmem:[%s342 + $0x38] sm:$0xf]
      %s980 = scalar_lea.vmem %s351, 192
      %v981 = vld [vmem:[%s980] sm:$0xf]
      %v982 = vld [vmem:[%s980 + $0x4] sm:$0xf]
      %v983 = vld [vmem:[%s980 + $0x8] sm:$0xf]
      %v984 = vld [vmem:[%s980 + $0xc] sm:$0xf]
      %v985 = vld [vmem:[%s980 + $0x10] sm:$0xf]
      %v986 = vld [vmem:[%s980 + $0x14] sm:$0xf]
      %v987 = vld [vmem:[%s980 + $0x18] sm:$0xf]
      %v988 = vld [vmem:[%s980 + $0x1c] sm:$0xf]
      %v989 = vld [vmem:[%s980 + $0x20] sm:$0xf]
      %v990 = vld [vmem:[%s980 + $0x24] sm:$0xf]
      %v991 = vld [vmem:[%s980 + $0x28] sm:$0xf]
      %v992 = vld [vmem:[%s980 + $0x2c] sm:$0xf]
      %v993 = vld [vmem:[%s980 + $0x30] sm:$0xf]
      %v994 = vld [vmem:[%s980 + $0x34] sm:$0xf]
      %v995 = vld [vmem:[%s980 + $0x38] sm:$0xf]
      %v996 = vld [vmem:[%s980 + $0x3c] sm:$0xf]
      %v1005 = vunpack.c.l.b16 %v972
      %v1006 = vunpack.c.l.b16 %v973
      %v1007 = vunpack.c.l.b16 %v974
      %v1008 = vunpack.c.l.b16 %v975
      %v1009 = vunpack.c.l.b16 %v976
      %v1010 = vunpack.c.l.b16 %v977
      %v1011 = vunpack.c.l.b16 %v978
      %v1012 = vunpack.c.l.b16 %v979
      %v1013 = vpack.c.b16 %v1006, %v1005
      %v1014 = vpack.c.b16 %v1008, %v1007
      %v1015 = vpack.c.b16 %v1010, %v1009
      %v1016 = vpack.c.b16 %v1012, %v1011
      %v1037 = vunpack.c.l.b16 %v981
      %v1038 = vunpack.c.l.b16 %v982
      %v1039 = vunpack.c.l.b16 %v983
      %v1040 = vunpack.c.l.b16 %v984
      %v1041 = vunpack.c.l.b16 %v985
      %v1042 = vunpack.c.l.b16 %v986
      %v1043 = vunpack.c.l.b16 %v987
      %v1044 = vunpack.c.l.b16 %v988
      %v1045 = vunpack.c.l.b16 %v989
      %v1046 = vunpack.c.l.b16 %v990
      %v1047 = vunpack.c.l.b16 %v991
      %v1048 = vunpack.c.l.b16 %v992
      %v1049 = vunpack.c.l.b16 %v993
      %v1050 = vunpack.c.l.b16 %v994
      %v1051 = vunpack.c.l.b16 %v995
      %v1052 = vunpack.c.l.b16 %v996
      %v1053 = vpack.c.b16 %v1038, %v1037
      %v1054 = vpack.c.b16 %v1040, %v1039
      %v1055 = vpack.c.b16 %v1042, %v1041
      %v1056 = vpack.c.b16 %v1044, %v1043
      %v1057 = vpack.c.b16 %v1046, %v1045
      %v1058 = vpack.c.b16 %v1048, %v1047
      %v1059 = vpack.c.b16 %v1050, %v1049
      %v1060 = vpack.c.b16 %v1052, %v1051
      %1069 = vmatprep.subr.bf16.mxu0 0
      %1070 = vmatpush1.bf16.msra.mxu0 %v1053
      %1071 = vmatprep.subr.bf16.mxu0 0
      %1072 = vmatpush1.bf16.msra.mxu0 %v1054
      %1073 = vmatprep.subr.bf16.mxu0 0
      %1074 = vmatpush1.bf16.msra.mxu0 %v1055
      %1075 = vmatprep.subr.bf16.mxu0 0
      %1076 = vmatpush1.bf16.msra.mxu0 %v1056
      %1077 = vmatprep.subr.bf16.mxu0 0
      %1078 = vmatpush1.bf16.msra.mxu0 %v1057
      %1079 = vmatprep.subr.bf16.mxu0 0
      %1080 = vmatpush1.bf16.msra.mxu0 %v1058
      %1081 = vmatprep.subr.bf16.mxu0 0
      %1082 = vmatpush1.bf16.msra.mxu0 %v1059
      %1083 = vmatprep.subr.bf16.mxu0 0
      %1084 = vmatpush1.bf16.msra.mxu0 %v1060
      %1085 = vmatprep.subr.bf16.mxu0 0
      %1086 = vmatpush1.bf16.msra.mxu0 0
      %1087 = vmatprep.subr.bf16.mxu0 0
      %1088 = vmatpush1.bf16.msra.mxu0 0
      %1089 = vmatprep.subr.bf16.mxu0 0
      %1090 = vmatpush1.bf16.msra.mxu0 0
      %1091 = vmatprep.subr.bf16.mxu0 0
      %1092 = vmatpush1.bf16.msra.mxu0 0
      %1093 = vmatprep.subr.bf16.mxu0 0
      %1094 = vmatpush1.bf16.msra.mxu0 0
      %1095 = vmatprep.subr.bf16.mxu0 0
      %1096 = vmatpush1.bf16.msra.mxu0 0
      %1097 = vmatprep.subr.bf16.mxu0 0
      %1098 = vmatpush1.bf16.msra.mxu0 0
      %1099 = vmatprep.subr.bf16.mxu0 0
      %1100 = vmatpush1.bf16.msra.mxu0 0
      %1101 = vmatprep.mubr.bf16.mxu0 0
      %1102 = vmatmul.mubr.bf16.gmra.mrb[0].mxu0 %v1013
      %v1103 = vpop.f32.mrb[0].mxu0
      %v1104 = vadd.f32 0.0, %v1103
      %v1105 = vpop.f32.mrb[0].mxu0
      %v1106 = vpop.f32.mrb[0].mxu0
      %v1107 = vadd.f32 0.0, %v1106
      %v1108 = vpop.f32.mrb[0].mxu0
      %1109 = vmatprep.mubr.bf16.mxu0 0
      %1110 = vmatmul.mubr.bf16.gmra.mrb[0].mxu0 %v1014
      %v1111 = vpop.f32.mrb[0].mxu0
      %v1112 = vadd.f32 0.0, %v1111
      %v1113 = vpop.f32.mrb[0].mxu0
      %v1114 = vpop.f32.mrb[0].mxu0
      %v1115 = vadd.f32 0.0, %v1114
      %v1116 = vpop.f32.mrb[0].mxu0
      %1117 = vmatprep.mubr.bf16.mxu0 0
      %1118 = vmatmul.mubr.bf16.gmra.mrb[0].mxu0 %v1015
      %v1119 = vpop.f32.mrb[0].mxu0
      %v1120 = vadd.f32 0.0, %v1119
      %v1121 = vpop.f32.mrb[0].mxu0
      %v1122 = vpop.f32.mrb[0].mxu0
      %v1123 = vadd.f32 0.0, %v1122
      %v1124 = vpop.f32.mrb[0].mxu0
      %1125 = vmatprep.mubr.bf16.mxu0 0
      %1126 = vmatmul.mubr.bf16.gmra.mrb[0].mxu0 %v1016
      %v1127 = vpop.f32.mrb[0].mxu0
      %v1128 = vadd.f32 0.0, %v1127
      %v1129 = vpop.f32.mrb[0].mxu0
      %v1130 = vpop.f32.mrb[0].mxu0
      %v1131 = vadd.f32 0.0, %v1130
      %v1132 = vpop.f32.mrb[0].mxu0
      %1133 = vdwg.mxu0
      %v1134 = vadd.f32 %v964, %v1104
      %v1135 = vadd.f32 %v965, %v1107
      %v1136 = vadd.f32 %v966, %v1112
      %v1137 = vadd.f32 %v967, %v1115
      %v1138 = vadd.f32 %v968, %v1120
      %v1139 = vadd.f32 %v969, %v1123
      %v1140 = vadd.f32 %v970, %v1128
      %v1141 = vadd.f32 %v971, %v1131
      %v1142 = vld [vmem:[%s347] sm:$0xf]
      %v1143 = vld [vmem:[%s347 + $0x8] sm:$0xf]
      %v1144 = vld [vmem:[%s347 + $0x10] sm:$0xf]
      %v1145 = vld [vmem:[%s347 + $0x18] sm:$0xf]
      %v1146 = vld [vmem:[%s347 + $0x20] sm:$0xf]
      %v1147 = vld [vmem:[%s347 + $0x28] sm:$0xf]
      %v1148 = vld [vmem:[%s347 + $0x30] sm:$0xf]
      %v1149 = vld [vmem:[%s347 + $0x38] sm:$0xf]
      %s1150 = scalar_lea.vmem %s351, 256
      %v1151 = vld [vmem:[%s1150] sm:$0xf]
      %v1152 = vld [vmem:[%s1150 + $0x4] sm:$0xf]
      %v1153 = vld [vmem:[%s1150 + $0x8] sm:$0xf]
      %v1154 = vld [vmem:[%s1150 + $0xc] sm:$0xf]
      %v1155 = vld [vmem:[%s1150 + $0x10] sm:$0xf]
      %v1156 = vld [vmem:[%s1150 + $0x14] sm:$0xf]
      %v1157 = vld [vmem:[%s1150 + $0x18] sm:$0xf]
      %v1158 = vld [vmem:[%s1150 + $0x1c] sm:$0xf]
      %v1159 = vld [vmem:[%s1150 + $0x20] sm:$0xf]
      %v1160 = vld [vmem:[%s1150 + $0x24] sm:$0xf]
      %v1161 = vld [vmem:[%s1150 + $0x28] sm:$0xf]
      %v1162 = vld [vmem:[%s1150 + $0x2c] sm:$0xf]
      %v1163 = vld [vmem:[%s1150 + $0x30] sm:$0xf]
      %v1164 = vld [vmem:[%s1150 + $0x34] sm:$0xf]
      %v1165 = vld [vmem:[%s1150 + $0x38] sm:$0xf]
      %v1166 = vld [vmem:[%s1150 + $0x3c] sm:$0xf]
      %v1175 = vunpack.c.l.b16 %v1142
      %v1176 = vunpack.c.l.b16 %v1143
      %v1177 = vunpack.c.l.b16 %v1144
      %v1178 = vunpack.c.l.b16 %v1145
      %v1179 = vunpack.c.l.b16 %v1146
      %v1180 = vunpack.c.l.b16 %v1147
      %v1181 = vunpack.c.l.b16 %v1148
      %v1182 = vunpack.c.l.b16 %v1149
      %v1183 = vpack.c.b16 %v1176, %v1175
      %v1184 = vpack.c.b16 %v1178, %v1177
      %v1185 = vpack.c.b16 %v1180, %v1179
      %v1186 = vpack.c.b16 %v1182, %v1181
      %v1207 = vunpack.c.l.b16 %v1151
      %v1208 = vunpack.c.l.b16 %v1152
      %v1209 = vunpack.c.l.b16 %v1153
      %v1210 = vunpack.c.l.b16 %v1154
      %v1211 = vunpack.c.l.b16 %v1155
      %v1212 = vunpack.c.l.b16 %v1156
      %v1213 = vunpack.c.l.b16 %v1157
      %v1214 = vunpack.c.l.b16 %v1158
      %v1215 = vunpack.c.l.b16 %v1159
      %v1216 = vunpack.c.l.b16 %v1160
      %v1217 = vunpack.c.l.b16 %v1161
      %v1218 = vunpack.c.l.b16 %v1162
      %v1219 = vunpack.c.l.b16 %v1163
      %v1220 = vunpack.c.l.b16 %v1164
      %v1221 = vunpack.c.l.b16 %v1165
      %v1222 = vunpack.c.l.b16 %v1166
      %v1223 = vpack.c.b16 %v1208, %v1207
      %v1224 = vpack.c.b16 %v1210, %v1209
      %v1225 = vpack.c.b16 %v1212, %v1211
      %v1226 = vpack.c.b16 %v1214, %v1213
      %v1227 = vpack.c.b16 %v1216, %v1215
      %v1228 = vpack.c.b16 %v1218, %v1217
      %v1229 = vpack.c.b16 %v1220, %v1219
      %v1230 = vpack.c.b16 %v1222, %v1221
      %1239 = vmatprep.subr.bf16.mxu0 0
      %1240 = vmatpush1.bf16.msra.mxu0 %v1223
      %1241 = vmatprep.subr.bf16.mxu0 0
      %1242 = vmatpush1.bf16.msra.mxu0 %v1224
      %1243 = vmatprep.subr.bf16.mxu0 0
      %1244 = vmatpush1.bf16.msra.mxu0 %v1225
      %1245 = vmatprep.subr.bf16.mxu0 0
      %1246 = vmatpush1.bf16.msra.mxu0 %v1226
      %1247 = vmatprep.subr.bf16.mxu0 0
      %1248 = vmatpush1.bf16.msra.mxu0 %v1227
      %1249 = vmatprep.subr.bf16.mxu0 0
      %1250 = vmatpush1.bf16.msra.mxu0 %v1228
      %1251 = vmatprep.subr.bf16.mxu0 0
      %1252 = vmatpush1.bf16.msra.mxu0 %v1229
      %1253 = vmatprep.subr.bf16.mxu0 0
      %1254 = vmatpush1.bf16.msra.mxu0 %v1230
      %1255 = vmatprep.subr.bf16.mxu0 0
      %1256 = vmatpush1.bf16.msra.mxu0 0
      %1257 = vmatprep.subr.bf16.mxu0 0
      %1258 = vmatpush1.bf16.msra.mxu0 0
      %1259 = vmatprep.subr.bf16.mxu0 0
      %1260 = vmatpush1.bf16.msra.mxu0 0
      %1261 = vmatprep.subr.bf16.mxu0 0
      %1262 = vmatpush1.bf16.msra.mxu0 0
      %1263 = vmatprep.subr.bf16.mxu0 0
      %1264 = vmatpush1.bf16.msra.mxu0 0
      %1265 = vmatprep.subr.bf16.mxu0 0
      %1266 = vmatpush1.bf16.msra.mxu0 0
      %1267 = vmatprep.subr.bf16.mxu0 0
      %1268 = vmatpush1.bf16.msra.mxu0 0
      %1269 = vmatprep.subr.bf16.mxu0 0
      %1270 = vmatpush1.bf16.msra.mxu0 0
      %1271 = vmatprep.mubr.bf16.mxu0 0
      %1272 = vmatmul.mubr.bf16.gmra.mrb[0].mxu0 %v1183
      %v1273 = vpop.f32.mrb[0].mxu0
      %v1274 = vadd.f32 0.0, %v1273
      %v1275 = vpop.f32.mrb[0].mxu0
      %v1276 = vpop.f32.mrb[0].mxu0
      %v1277 = vadd.f32 0.0, %v1276
      %v1278 = vpop.f32.mrb[0].mxu0
      %1279 = vmatprep.mubr.bf16.mxu0 0
      %1280 = vmatmul.mubr.bf16.gmra.mrb[0].mxu0 %v1184
      %v1281 = vpop.f32.mrb[0].mxu0
      %v1282 = vadd.f32 0.0, %v1281
      %v1283 = vpop.f32.mrb[0].mxu0
      %v1284 = vpop.f32.mrb[0].mxu0
      %v1285 = vadd.f32 0.0, %v1284
      %v1286 = vpop.f32.mrb[0].mxu0
      %1287 = vmatprep.mubr.bf16.mxu0 0
      %1288 = vmatmul.mubr.bf16.gmra.mrb[0].mxu0 %v1185
      %v1289 = vpop.f32.mrb[0].mxu0
      %v1290 = vadd.f32 0.0, %v1289
      %v1291 = vpop.f32.mrb[0].mxu0
      %v1292 = vpop.f32.mrb[0].mxu0
      %v1293 = vadd.f32 0.0, %v1292
      %v1294 = vpop.f32.mrb[0].mxu0
      %1295 = vmatprep.mubr.bf16.mxu0 0
      %1296 = vmatmul.mubr.bf16.gmra.mrb[0].mxu0 %v1186
      %v1297 = vpop.f32.mrb[0].mxu0
      %v1298 = vadd.f32 0.0, %v1297
      %v1299 = vpop.f32.mrb[0].mxu0
      %v1300 = vpop.f32.mrb[0].mxu0
      %v1301 = vadd.f32 0.0, %v1300
      %v1302 = vpop.f32.mrb[0].mxu0
      %1303 = vdwg.mxu0
      %v1304 = vadd.f32 %v1134, %v1274
      %v1305 = vadd.f32 %v1135, %v1277
      %v1306 = vadd.f32 %v1136, %v1282
      %v1307 = vadd.f32 %v1137, %v1285
      %v1308 = vadd.f32 %v1138, %v1290
      %v1309 = vadd.f32 %v1139, %v1293
      %v1310 = vadd.f32 %v1140, %v1298
      %v1311 = vadd.f32 %v1141, %v1301
      %v1312 = vld [vmem:[%s342] sm:$0xf]
      %v1313 = vld [vmem:[%s342 + $0x4] sm:$0x1]
      %v1314 = vld [vmem:[%s342 + $0x8] sm:$0xf]
      %v1315 = vld [vmem:[%s342 + $0xc] sm:$0x1]
      %v1316 = vld [vmem:[%s342 + $0x10] sm:$0xf]
      %v1317 = vld [vmem:[%s342 + $0x14] sm:$0x1]
      %v1318 = vld [vmem:[%s342 + $0x18] sm:$0xf]
      %v1319 = vld [vmem:[%s342 + $0x1c] sm:$0x1]
      %v1320 = vld [vmem:[%s342 + $0x20] sm:$0xf]
      %v1321 = vld [vmem:[%s342 + $0x24] sm:$0x1]
      %v1322 = vld [vmem:[%s342 + $0x28] sm:$0xf]
      %v1323 = vld [vmem:[%s342 + $0x2c] sm:$0x1]
      %v1324 = vld [vmem:[%s342 + $0x30] sm:$0xf]
      %v1325 = vld [vmem:[%s342 + $0x34] sm:$0x1]
      %v1326 = vld [vmem:[%s342 + $0x38] sm:$0xf]
      %v1327 = vld [vmem:[%s342 + $0x3c] sm:$0x1]
      %v1329 = vshrl.u32 %v1312, 16
      %v1331 = vrot.slane %v1329, 4
      %v1332 = vshll.u32 %v1312, 16
      %v1334 = vrot.slane %v1332, 5
      %v1335 = vor.u32 %v1331, %v1334
      %v1336 = vrot.slane %v1335, 4
      %v1338 = vshll.u32 %v1313, 16
      %v1340 = vrot.slane %v1338, 5
      %v1341 = vsel %vm705, %v1336, %v1340
      %v1343 = vshrl.u32 %v1314, 16
      %v1345 = vrot.slane %v1343, 4
      %v1346 = vshll.u32 %v1314, 16
      %v1348 = vrot.slane %v1346, 5
      %v1349 = vor.u32 %v1345, %v1348
      %v1350 = vrot.slane %v1349, 4
      %v1352 = vshll.u32 %v1315, 16
      %v1354 = vrot.slane %v1352, 5
      %v1355 = vsel %vm705, %v1350, %v1354
      %v1357 = vshrl.u32 %v1316, 16
      %v1359 = vrot.slane %v1357, 4
      %v1360 = vshll.u32 %v1316, 16
      %v1362 = vrot.slane %v1360, 5
      %v1363 = vor.u32 %v1359, %v1362
      %v1364 = vrot.slane %v1363, 4
      %v1366 = vshll.u32 %v1317, 16
      %v1368 = vrot.slane %v1366, 5
      %v1369 = vsel %vm705, %v1364, %v1368
      %v1371 = vshrl.u32 %v1318, 16
      %v1373 = vrot.slane %v1371, 4
      %v1374 = vshll.u32 %v1318, 16
      %v1376 = vrot.slane %v1374, 5
      %v1377 = vor.u32 %v1373, %v1376
      %v1378 = vrot.slane %v1377, 4
      %v1380 = vshll.u32 %v1319, 16
      %v1382 = vrot.slane %v1380, 5
      %v1383 = vsel %vm705, %v1378, %v1382
      %v1385 = vshrl.u32 %v1320, 16
      %v1387 = vrot.slane %v1385, 4
      %v1388 = vshll.u32 %v1320, 16
      %v1390 = vrot.slane %v1388, 5
      %v1391 = vor.u32 %v1387, %v1390
      %v1392 = vrot.slane %v1391, 4
      %v1394 = vshll.u32 %v1321, 16
      %v1396 = vrot.slane %v1394, 5
      %v1397 = vsel %vm705, %v1392, %v1396
      %v1399 = vshrl.u32 %v1322, 16
      %v1401 = vrot.slane %v1399, 4
      %v1402 = vshll.u32 %v1322, 16
      %v1404 = vrot.slane %v1402, 5
      %v1405 = vor.u32 %v1401, %v1404
      %v1406 = vrot.slane %v1405, 4
      %v1408 = vshll.u32 %v1323, 16
      %v1410 = vrot.slane %v1408, 5
      %v1411 = vsel %vm705, %v1406, %v1410
      %v1413 = vshrl.u32 %v1324, 16
      %v1415 = vrot.slane %v1413, 4
      %v1416 = vshll.u32 %v1324, 16
      %v1418 = vrot.slane %v1416, 5
      %v1419 = vor.u32 %v1415, %v1418
      %v1420 = vrot.slane %v1419, 4
      %v1422 = vshll.u32 %v1325, 16
      %v1424 = vrot.slane %v1422, 5
      %v1425 = vsel %vm705, %v1420, %v1424
      %v1427 = vshrl.u32 %v1326, 16
      %v1429 = vrot.slane %v1427, 4
      %v1430 = vshll.u32 %v1326, 16
      %v1432 = vrot.slane %v1430, 5
      %v1433 = vor.u32 %v1429, %v1432
      %v1434 = vrot.slane %v1433, 4
      %v1436 = vshll.u32 %v1327, 16
      %v1438 = vrot.slane %v1436, 5
      %v1439 = vsel %vm705, %v1434, %v1438
      %s1440 = scalar_lea.vmem %s351, 320
      %v1441 = vld [vmem:[%s1440] sm:$0xf]
      %v1442 = vld [vmem:[%s1440 + $0x4] sm:$0xf]
      %v1443 = vld [vmem:[%s1440 + $0x8] sm:$0xf]
      %v1444 = vld [vmem:[%s1440 + $0xc] sm:$0xf]
      %v1445 = vld [vmem:[%s1440 + $0x10] sm:$0xf]
      %v1446 = vld [vmem:[%s1440 + $0x14] sm:$0xf]
      %v1447 = vld [vmem:[%s1440 + $0x18] sm:$0xf]
      %v1448 = vld [vmem:[%s1440 + $0x1c] sm:$0xf]
      %v1449 = vld [vmem:[%s1440 + $0x20] sm:$0xf]
      %v1450 = vld [vmem:[%s1440 + $0x24] sm:$0xf]
      %v1451 = vld [vmem:[%s1440 + $0x28] sm:$0xf]
      %v1452 = vld [vmem:[%s1440 + $0x2c] sm:$0xf]
      %v1453 = vld [vmem:[%s1440 + $0x30] sm:$0xf]
      %v1454 = vld [vmem:[%s1440 + $0x34] sm:$0xf]
      %v1455 = vld [vmem:[%s1440 + $0x38] sm:$0xf]
      %v1456 = vld [vmem:[%s1440 + $0x3c] sm:$0xf]
      %v1457 = vunpack.c.l.b16 %v1341
      %v1458 = vunpack.c.l.b16 %v1355
      %v1459 = vunpack.c.l.b16 %v1369
      %v1460 = vunpack.c.l.b16 %v1383
      %v1461 = vunpack.c.l.b16 %v1397
      %v1462 = vunpack.c.l.b16 %v1411
      %v1463 = vunpack.c.l.b16 %v1425
      %v1464 = vunpack.c.l.b16 %v1439
      %v1465 = vpack.c.b16 %v1458, %v1457
      %v1466 = vpack.c.b16 %v1460, %v1459
      %v1467 = vpack.c.b16 %v1462, %v1461
      %v1468 = vpack.c.b16 %v1464, %v1463
      %v1489 = vunpack.c.l.b16 %v1441
      %v1490 = vunpack.c.l.b16 %v1442
      %v1491 = vunpack.c.l.b16 %v1443
      %v1492 = vunpack.c.l.b16 %v1444
      %v1493 = vunpack.c.l.b16 %v1445
      %v1494 = vunpack.c.l.b16 %v1446
      %v1495 = vunpack.c.l.b16 %v1447
      %v1496 = vunpack.c.l.b16 %v1448
      %v1497 = vunpack.c.l.b16 %v1449
      %v1498 = vunpack.c.l.b16 %v1450
      %v1499 = vunpack.c.l.b16 %v1451
      %v1500 = vunpack.c.l.b16 %v1452
      %v1501 = vunpack.c.l.b16 %v1453
      %v1502 = vunpack.c.l.b16 %v1454
      %v1503 = vunpack.c.l.b16 %v1455
      %v1504 = vunpack.c.l.b16 %v1456
      %v1505 = vpack.c.b16 %v1490, %v1489
      %v1506 = vpack.c.b16 %v1492, %v1491
      %v1507 = vpack.c.b16 %v1494, %v1493
      %v1508 = vpack.c.b16 %v1496, %v1495
      %v1509 = vpack.c.b16 %v1498, %v1497
      %v1510 = vpack.c.b16 %v1500, %v1499
      %v1511 = vpack.c.b16 %v1502, %v1501
      %v1512 = vpack.c.b16 %v1504, %v1503
      %1521 = vmatprep.subr.bf16.mxu0 0
      %1522 = vmatpush1.bf16.msra.mxu0 %v1505
      %1523 = vmatprep.subr.bf16.mxu0 0
      %1524 = vmatpush1.bf16.msra.mxu0 %v1506
      %1525 = vmatprep.subr.bf16.mxu0 0
      %1526 = vmatpush1.bf16.msra.mxu0 %v1507
      %1527 = vmatprep.subr.bf16.mxu0 0
      %1528 = vmatpush1.bf16.msra.mxu0 %v1508
      %1529 = vmatprep.subr.bf16.mxu0 0
      %1530 = vmatpush1.bf16.msra.mxu0 %v1509
      %1531 = vmatprep.subr.bf16.mxu0 0
      %1532 = vmatpush1.bf16.msra.mxu0 %v1510
      %1533 = vmatprep.subr.bf16.mxu0 0
      %1534 = vmatpush1.bf16.msra.mxu0 %v1511
      %1535 = vmatprep.subr.bf16.mxu0 0
      %1536 = vmatpush1.bf16.msra.mxu0 %v1512
      %1537 = vmatprep.subr.bf16.mxu0 0
      %1538 = vmatpush1.bf16.msra.mxu0 0
      %1539 = vmatprep.subr.bf16.mxu0 0
      %1540 = vmatpush1.bf16.msra.mxu0 0
      %1541 = vmatprep.subr.bf16.mxu0 0
      %1542 = vmatpush1.bf16.msra.mxu0 0
      %1543 = vmatprep.subr.bf16.mxu0 0
      %1544 = vmatpush1.bf16.msra.mxu0 0
      %1545 = vmatprep.subr.bf16.mxu0 0
      %1546 = vmatpush1.bf16.msra.mxu0 0
      %1547 = vmatprep.subr.bf16.mxu0 0
      %1548 = vmatpush1.bf16.msra.mxu0 0
      %1549 = vmatprep.subr.bf16.mxu0 0
      %1550 = vmatpush1.bf16.msra.mxu0 0
      %1551 = vmatprep.subr.bf16.mxu0 0
      %1552 = vmatpush1.bf16.msra.mxu0 0
      %1553 = vmatprep.mubr.bf16.mxu0 0
      %1554 = vmatmul.mubr.bf16.gmra.mrb[0].mxu0 %v1465
      %v1555 = vpop.f32.mrb[0].mxu0
      %v1556 = vadd.f32 0.0, %v1555
      %v1557 = vpop.f32.mrb[0].mxu0
      %v1558 = vpop.f32.mrb[0].mxu0
      %v1559 = vadd.f32 0.0, %v1558
      %v1560 = vpop.f32.mrb[0].mxu0
      %1561 = vmatprep.mubr.bf16.mxu0 0
      %1562 = vmatmul.mubr.bf16.gmra.mrb[0].mxu0 %v1466
      %v1563 = vpop.f32.mrb[0].mxu0
      %v1564 = vadd.f32 0.0, %v1563
      %v1565 = vpop.f32.mrb[0].mxu0
      %v1566 = vpop.f32.mrb[0].mxu0
      %v1567 = vadd.f32 0.0, %v1566
      %v1568 = vpop.f32.mrb[0].mxu0
      %1569 = vmatprep.mubr.bf16.mxu0 0
      %1570 = vmatmul.mubr.bf16.gmra.mrb[0].mxu0 %v1467
      %v1571 = vpop.f32.mrb[0].mxu0
      %v1572 = vadd.f32 0.0, %v1571
      %v1573 = vpop.f32.mrb[0].mxu0
      %v1574 = vpop.f32.mrb[0].mxu0
      %v1575 = vadd.f32 0.0, %v1574
      %v1576 = vpop.f32.mrb[0].mxu0
      %1577 = vmatprep.mubr.bf16.mxu0 0
      %1578 = vmatmul.mubr.bf16.gmra.mrb[0].mxu0 %v1468
      %v1579 = vpop.f32.mrb[0].mxu0
      %v1580 = vadd.f32 0.0, %v1579
      %v1581 = vpop.f32.mrb[0].mxu0
      %v1582 = vpop.f32.mrb[0].mxu0
      %v1583 = vadd.f32 0.0, %v1582
      %v1584 = vpop.f32.mrb[0].mxu0
      %1585 = vdwg.mxu0
      %v1586 = vadd.f32 %v1304, %v1556
      %v1587 = vadd.f32 %v1305, %v1559
      %v1588 = vadd.f32 %v1306, %v1564
      %v1589 = vadd.f32 %v1307, %v1567
      %v1590 = vadd.f32 %v1308, %v1572
      %v1591 = vadd.f32 %v1309, %v1575
      %v1592 = vadd.f32 %v1310, %v1580
      %v1593 = vadd.f32 %v1311, %v1583
      %s1594 = scalar_lea.vmem %s332, 8
      %v1595 = vld [vmem:[%s1594] sm:$0xf]
      %v1596 = vld [vmem:[%s1594 + $0x8] sm:$0xf]
      %v1597 = vld [vmem:[%s1594 + $0x10] sm:$0xf]
      %v1598 = vld [vmem:[%s1594 + $0x18] sm:$0xf]
      %v1599 = vld [vmem:[%s1594 + $0x20] sm:$0xf]
      %v1600 = vld [vmem:[%s1594 + $0x28] sm:$0xf]
      %v1601 = vld [vmem:[%s1594 + $0x30] sm:$0xf]
      %v1602 = vld [vmem:[%s1594 + $0x38] sm:$0xf]
      %s1603 = scalar_lea.vmem %s351, 384
      %v1604 = vld [vmem:[%s1603] sm:$0xf]
      %v1605 = vld [vmem:[%s1603 + $0x4] sm:$0xf]
      %v1606 = vld [vmem:[%s1603 + $0x8] sm:$0xf]
      %v1607 = vld [vmem:[%s1603 + $0xc] sm:$0xf]
      %v1608 = vld [vmem:[%s1603 + $0x10] sm:$0xf]
      %v1609 = vld [vmem:[%s1603 + $0x14] sm:$0xf]
      %v1610 = vld [vmem:[%s1603 + $0x18] sm:$0xf]
      %v1611 = vld [vmem:[%s1603 + $0x1c] sm:$0xf]
      %v1612 = vld [vmem:[%s1603 + $0x20] sm:$0xf]
      %v1613 = vld [vmem:[%s1603 + $0x24] sm:$0xf]
      %v1614 = vld [vmem:[%s1603 + $0x28] sm:$0xf]
      %v1615 = vld [vmem:[%s1603 + $0x2c] sm:$0xf]
      %v1616 = vld [vmem:[%s1603 + $0x30] sm:$0xf]
      %v1617 = vld [vmem:[%s1603 + $0x34] sm:$0xf]
      %v1618 = vld [vmem:[%s1603 + $0x38] sm:$0xf]
      %v1619 = vld [vmem:[%s1603 + $0x3c] sm:$0xf]
      %v1628 = vunpack.c.l.b16 %v1595
      %v1629 = vunpack.c.l.b16 %v1596
      %v1630 = vunpack.c.l.b16 %v1597
      %v1631 = vunpack.c.l.b16 %v1598
      %v1632 = vunpack.c.l.b16 %v1599
      %v1633 = vunpack.c.l.b16 %v1600
      %v1634 = vunpack.c.l.b16 %v1601
      %v1635 = vunpack.c.l.b16 %v1602
      %v1636 = vpack.c.b16 %v1629, %v1628
      %v1637 = vpack.c.b16 %v1631, %v1630
      %v1638 = vpack.c.b16 %v1633, %v1632
      %v1639 = vpack.c.b16 %v1635, %v1634
      %v1660 = vunpack.c.l.b16 %v1604
      %v1661 = vunpack.c.l.b16 %v1605
      %v1662 = vunpack.c.l.b16 %v1606
      %v1663 = vunpack.c.l.b16 %v1607
      %v1664 = vunpack.c.l.b16 %v1608
      %v1665 = vunpack.c.l.b16 %v1609
      %v1666 = vunpack.c.l.b16 %v1610
      %v1667 = vunpack.c.l.b16 %v1611
      %v1668 = vunpack.c.l.b16 %v1612
      %v1669 = vunpack.c.l.b16 %v1613
      %v1670 = vunpack.c.l.b16 %v1614
      %v1671 = vunpack.c.l.b16 %v1615
      %v1672 = vunpack.c.l.b16 %v1616
      %v1673 = vunpack.c.l.b16 %v1617
      %v1674 = vunpack.c.l.b16 %v1618
      %v1675 = vunpack.c.l.b16 %v1619
      %v1676 = vpack.c.b16 %v1661, %v1660
      %v1677 = vpack.c.b16 %v1663, %v1662
      %v1678 = vpack.c.b16 %v1665, %v1664
      %v1679 = vpack.c.b16 %v1667, %v1666
      %v1680 = vpack.c.b16 %v1669, %v1668
      %v1681 = vpack.c.b16 %v1671, %v1670
      %v1682 = vpack.c.b16 %v1673, %v1672
      %v1683 = vpack.c.b16 %v1675, %v1674
      %1692 = vmatprep.subr.bf16.mxu0 0
      %1693 = vmatpush1.bf16.msra.mxu0 %v1676
      %1694 = vmatprep.subr.bf16.mxu0 0
      %1695 = vmatpush1.bf16.msra.mxu0 %v1677
      %1696 = vmatprep.subr.bf16.mxu0 0
      %1697 = vmatpush1.bf16.msra.mxu0 %v1678
      %1698 = vmatprep.subr.bf16.mxu0 0
      %1699 = vmatpush1.bf16.msra.mxu0 %v1679
      %1700 = vmatprep.subr.bf16.mxu0 0
      %1701 = vmatpush1.bf16.msra.mxu0 %v1680
      %1702 = vmatprep.subr.bf16.mxu0 0
      %1703 = vmatpush1.bf16.msra.mxu0 %v1681
      %1704 = vmatprep.subr.bf16.mxu0 0
      %1705 = vmatpush1.bf16.msra.mxu0 %v1682
      %1706 = vmatprep.subr.bf16.mxu0 0
      %1707 = vmatpush1.bf16.msra.mxu0 %v1683
      %1708 = vmatprep.subr.bf16.mxu0 0
      %1709 = vmatpush1.bf16.msra.mxu0 0
      %1710 = vmatprep.subr.bf16.mxu0 0
      %1711 = vmatpush1.bf16.msra.mxu0 0
      %1712 = vmatprep.subr.bf16.mxu0 0
      %1713 = vmatpush1.bf16.msra.mxu0 0
      %1714 = vmatprep.subr.bf16.mxu0 0
      %1715 = vmatpush1.bf16.msra.mxu0 0
      %1716 = vmatprep.subr.bf16.mxu0 0
      %1717 = vmatpush1.bf16.msra.mxu0 0
      %1718 = vmatprep.subr.bf16.mxu0 0
      %1719 = vmatpush1.bf16.msra.mxu0 0
      %1720 = vmatprep.subr.bf16.mxu0 0
      %1721 = vmatpush1.bf16.msra.mxu0 0
      %1722 = vmatprep.subr.bf16.mxu0 0
      %1723 = vmatpush1.bf16.msra.mxu0 0
      %1724 = vmatprep.mubr.bf16.mxu0 0
      %1725 = vmatmul.mubr.bf16.gmra.mrb[0].mxu0 %v1636
      %v1726 = vpop.f32.mrb[0].mxu0
      %v1727 = vadd.f32 0.0, %v1726
      %v1728 = vpop.f32.mrb[0].mxu0
      %v1729 = vpop.f32.mrb[0].mxu0
      %v1730 = vadd.f32 0.0, %v1729
      %v1731 = vpop.f32.mrb[0].mxu0
      %1732 = vmatprep.mubr.bf16.mxu0 0
      %1733 = vmatmul.mubr.bf16.gmra.mrb[0].mxu0 %v1637
      %v1734 = vpop.f32.mrb[0].mxu0
      %v1735 = vadd.f32 0.0, %v1734
      %v1736 = vpop.f32.mrb[0].mxu0
      %v1737 = vpop.f32.mrb[0].mxu0
      %v1738 = vadd.f32 0.0, %v1737
      %v1739 = vpop.f32.mrb[0].mxu0
      %1740 = vmatprep.mubr.bf16.mxu0 0
      %1741 = vmatmul.mubr.bf16.gmra.mrb[0].mxu0 %v1638
      %v1742 = vpop.f32.mrb[0].mxu0
      %v1743 = vadd.f32 0.0, %v1742
      %v1744 = vpop.f32.mrb[0].mxu0
      %v1745 = vpop.f32.mrb[0].mxu0
      %v1746 = vadd.f32 0.0, %v1745
      %v1747 = vpop.f32.mrb[0].mxu0
      %1748 = vmatprep.mubr.bf16.mxu0 0
      %1749 = vmatmul.mubr.bf16.gmra.mrb[0].mxu0 %v1639
      %v1750 = vpop.f32.mrb[0].mxu0
      %v1751 = vadd.f32 0.0, %v1750
      %v1752 = vpop.f32.mrb[0].mxu0
      %v1753 = vpop.f32.mrb[0].mxu0
      %v1754 = vadd.f32 0.0, %v1753
      %v1755 = vpop.f32.mrb[0].mxu0
      %1756 = vdwg.mxu0
      %v1757 = vadd.f32 %v1586, %v1727
      %v1758 = vadd.f32 %v1587, %v1730
      %v1759 = vadd.f32 %v1588, %v1735
      %v1760 = vadd.f32 %v1589, %v1738
      %v1761 = vadd.f32 %v1590, %v1743
      %v1762 = vadd.f32 %v1591, %v1746
      %v1763 = vadd.f32 %v1592, %v1751
      %v1764 = vadd.f32 %v1593, %v1754
      %s1765 = scalar_lea.vmem %s337, 8
      %v1766 = vld [vmem:[%s1765] sm:$0xf]
      %v1767 = vld [vmem:[%s1765 + $0x8] sm:$0xf]
      %v1768 = vld [vmem:[%s1765 + $0x10] sm:$0xf]
      %v1769 = vld [vmem:[%s1765 + $0x18] sm:$0xf]
      %v1770 = vld [vmem:[%s1765 + $0x20] sm:$0xf]
      %v1771 = vld [vmem:[%s1765 + $0x28] sm:$0xf]
      %v1772 = vld [vmem:[%s1765 + $0x30] sm:$0xf]
      %v1773 = vld [vmem:[%s1765 + $0x38] sm:$0xf]
      %s1774 = scalar_lea.vmem %s351, 448
      %v1775 = vld [vmem:[%s1774] sm:$0xf]
      %v1776 = vld [vmem:[%s1774 + $0x4] sm:$0xf]
      %v1777 = vld [vmem:[%s1774 + $0x8] sm:$0xf]
      %v1778 = vld [vmem:[%s1774 + $0xc] sm:$0xf]
      %v1779 = vld [vmem:[%s1774 + $0x10] sm:$0xf]
      %v1780 = vld [vmem:[%s1774 + $0x14] sm:$0xf]
      %v1781 = vld [vmem:[%s1774 + $0x18] sm:$0xf]
      %v1782 = vld [vmem:[%s1774 + $0x1c] sm:$0xf]
      %v1783 = vld [vmem:[%s1774 + $0x20] sm:$0xf]
      %v1784 = vld [vmem:[%s1774 + $0x24] sm:$0xf]
      %v1785 = vld [vmem:[%s1774 + $0x28] sm:$0xf]
      %v1786 = vld [vmem:[%s1774 + $0x2c] sm:$0xf]
      %v1787 = vld [vmem:[%s1774 + $0x30] sm:$0xf]
      %v1788 = vld [vmem:[%s1774 + $0x34] sm:$0xf]
      %v1789 = vld [vmem:[%s1774 + $0x38] sm:$0xf]
      %v1790 = vld [vmem:[%s1774 + $0x3c] sm:$0xf]
      %v1799 = vunpack.c.l.b16 %v1766
      %v1800 = vunpack.c.l.b16 %v1767
      %v1801 = vunpack.c.l.b16 %v1768
      %v1802 = vunpack.c.l.b16 %v1769
      %v1803 = vunpack.c.l.b16 %v1770
      %v1804 = vunpack.c.l.b16 %v1771
      %v1805 = vunpack.c.l.b16 %v1772
      %v1806 = vunpack.c.l.b16 %v1773
      %v1807 = vpack.c.b16 %v1800, %v1799
      %v1808 = vpack.c.b16 %v1802, %v1801
      %v1809 = vpack.c.b16 %v1804, %v1803
      %v1810 = vpack.c.b16 %v1806, %v1805
      %v1831 = vunpack.c.l.b16 %v1775
      %v1832 = vunpack.c.l.b16 %v1776
      %v1833 = vunpack.c.l.b16 %v1777
      %v1834 = vunpack.c.l.b16 %v1778
      %v1835 = vunpack.c.l.b16 %v1779
      %v1836 = vunpack.c.l.b16 %v1780
      %v1837 = vunpack.c.l.b16 %v1781
      %v1838 = vunpack.c.l.b16 %v1782
      %v1839 = vunpack.c.l.b16 %v1783
      %v1840 = vunpack.c.l.b16 %v1784
      %v1841 = vunpack.c.l.b16 %v1785
      %v1842 = vunpack.c.l.b16 %v1786
      %v1843 = vunpack.c.l.b16 %v1787
      %v1844 = vunpack.c.l.b16 %v1788
      %v1845 = vunpack.c.l.b16 %v1789
      %v1846 = vunpack.c.l.b16 %v1790
      %v1847 = vpack.c.b16 %v1832, %v1831
      %v1848 = vpack.c.b16 %v1834, %v1833
      %v1849 = vpack.c.b16 %v1836, %v1835
      %v1850 = vpack.c.b16 %v1838, %v1837
      %v1851 = vpack.c.b16 %v1840, %v1839
      %v1852 = vpack.c.b16 %v1842, %v1841
      %v1853 = vpack.c.b16 %v1844, %v1843
      %v1854 = vpack.c.b16 %v1846, %v1845
      %1863 = vmatprep.subr.bf16.mxu0 0
      %1864 = vmatpush1.bf16.msra.mxu0 %v1847
      %1865 = vmatprep.subr.bf16.mxu0 0
      %1866 = vmatpush1.bf16.msra.mxu0 %v1848
      %1867 = vmatprep.subr.bf16.mxu0 0
      %1868 = vmatpush1.bf16.msra.mxu0 %v1849
      %1869 = vmatprep.subr.bf16.mxu0 0
      %1870 = vmatpush1.bf16.msra.mxu0 %v1850
      %1871 = vmatprep.subr.bf16.mxu0 0
      %1872 = vmatpush1.bf16.msra.mxu0 %v1851
      %1873 = vmatprep.subr.bf16.mxu0 0
      %1874 = vmatpush1.bf16.msra.mxu0 %v1852
      %1875 = vmatprep.subr.bf16.mxu0 0
      %1876 = vmatpush1.bf16.msra.mxu0 %v1853
      %1877 = vmatprep.subr.bf16.mxu0 0
      %1878 = vmatpush1.bf16.msra.mxu0 %v1854
      %1879 = vmatprep.subr.bf16.mxu0 0
      %1880 = vmatpush1.bf16.msra.mxu0 0
      %1881 = vmatprep.subr.bf16.mxu0 0
      %1882 = vmatpush1.bf16.msra.mxu0 0
      %1883 = vmatprep.subr.bf16.mxu0 0
      %1884 = vmatpush1.bf16.msra.mxu0 0
      %1885 = vmatprep.subr.bf16.mxu0 0
      %1886 = vmatpush1.bf16.msra.mxu0 0
      %1887 = vmatprep.subr.bf16.mxu0 0
      %1888 = vmatpush1.bf16.msra.mxu0 0
      %1889 = vmatprep.subr.bf16.mxu0 0
      %1890 = vmatpush1.bf16.msra.mxu0 0
      %1891 = vmatprep.subr.bf16.mxu0 0
      %1892 = vmatpush1.bf16.msra.mxu0 0
      %1893 = vmatprep.subr.bf16.mxu0 0
      %1894 = vmatpush1.bf16.msra.mxu0 0
      %1895 = vmatprep.mubr.bf16.mxu0 0
      %1896 = vmatmul.mubr.bf16.gmra.mrb[0].mxu0 %v1807
      %v1897 = vpop.f32.mrb[0].mxu0
      %v1898 = vadd.f32 0.0, %v1897
      %v1899 = vpop.f32.mrb[0].mxu0
      %v1900 = vpop.f32.mrb[0].mxu0
      %v1901 = vadd.f32 0.0, %v1900
      %v1902 = vpop.f32.mrb[0].mxu0
      %1903 = vmatprep.mubr.bf16.mxu0 0
      %1904 = vmatmul.mubr.bf16.gmra.mrb[0].mxu0 %v1808
      %v1905 = vpop.f32.mrb[0].mxu0
      %v1906 = vadd.f32 0.0, %v1905
      %v1907 = vpop.f32.mrb[0].mxu0
      %v1908 = vpop.f32.mrb[0].mxu0
      %v1909 = vadd.f32 0.0, %v1908
      %v1910 = vpop.f32.mrb[0].mxu0
      %1911 = vmatprep.mubr.bf16.mxu0 0
      %1912 = vmatmul.mubr.bf16.gmra.mrb[0].mxu0 %v1809
      %v1913 = vpop.f32.mrb[0].mxu0
      %v1914 = vadd.f32 0.0, %v1913
      %v1915 = vpop.f32.mrb[0].mxu0
      %v1916 = vpop.f32.mrb[0].mxu0
      %v1917 = vadd.f32 0.0, %v1916
      %v1918 = vpop.f32.mrb[0].mxu0
      %1919 = vmatprep.mubr.bf16.mxu0 0
      %1920 = vmatmul.mubr.bf16.gmra.mrb[0].mxu0 %v1810
      %v1921 = vpop.f32.mrb[0].mxu0
      %v1922 = vadd.f32 0.0, %v1921
      %v1923 = vpop.f32.mrb[0].mxu0
      %v1924 = vpop.f32.mrb[0].mxu0
      %v1925 = vadd.f32 0.0, %v1924
      %v1926 = vpop.f32.mrb[0].mxu0
      %1927 = vdwg.mxu0
      %v1928 = vadd.f32 %v1757, %v1898
      %v1929 = vadd.f32 %v1758, %v1901
      %v1930 = vadd.f32 %v1759, %v1906
      %v1931 = vadd.f32 %v1760, %v1909
      %v1932 = vadd.f32 %v1761, %v1914
      %v1933 = vadd.f32 %v1762, %v1917
      %v1934 = vadd.f32 %v1763, %v1922
      %v1935 = vadd.f32 %v1764, %v1925
      %v1936 = vld [vmem:[%s1594] sm:$0xf]
      %v1937 = vld [vmem:[%s1594 + $0x4] sm:$0x1]
      %v1938 = vld [vmem:[%s1594 + $0x8] sm:$0xf]
      %v1939 = vld [vmem:[%s1594 + $0xc] sm:$0x1]
      %v1940 = vld [vmem:[%s1594 + $0x10] sm:$0xf]
      %v1941 = vld [vmem:[%s1594 + $0x14] sm:$0x1]
      %v1942 = vld [vmem:[%s1594 + $0x18] sm:$0xf]
      %v1943 = vld [vmem:[%s1594 + $0x1c] sm:$0x1]
      %v1944 = vld [vmem:[%s1594 + $0x20] sm:$0xf]
      %v1945 = vld [vmem:[%s1594 + $0x24] sm:$0x1]
      %v1946 = vld [vmem:[%s1594 + $0x28] sm:$0xf]
      %v1947 = vld [vmem:[%s1594 + $0x2c] sm:$0x1]
      %v1948 = vld [vmem:[%s1594 + $0x30] sm:$0xf]
      %v1949 = vld [vmem:[%s1594 + $0x34] sm:$0x1]
      %v1950 = vld [vmem:[%s1594 + $0x38] sm:$0xf]
      %v1951 = vld [vmem:[%s1594 + $0x3c] sm:$0x1]
      %v1953 = vshrl.u32 %v1936, 16
      %v1955 = vrot.slane %v1953, 4
      %v1956 = vshll.u32 %v1936, 16
      %v1958 = vrot.slane %v1956, 5
      %v1959 = vor.u32 %v1955, %v1958
      %v1960 = vrot.slane %v1959, 4
      %v1962 = vshll.u32 %v1937, 16
      %v1964 = vrot.slane %v1962, 5
      %v1965 = vsel %vm705, %v1960, %v1964
      %v1967 = vshrl.u32 %v1938, 16
      %v1969 = vrot.slane %v1967, 4
      %v1970 = vshll.u32 %v1938, 16
      %v1972 = vrot.slane %v1970, 5
      %v1973 = vor.u32 %v1969, %v1972
      %v1974 = vrot.slane %v1973, 4
      %v1976 = vshll.u32 %v1939, 16
      %v1978 = vrot.slane %v1976, 5
      %v1979 = vsel %vm705, %v1974, %v1978
      %v1981 = vshrl.u32 %v1940, 16
      %v1983 = vrot.slane %v1981, 4
      %v1984 = vshll.u32 %v1940, 16
      %v1986 = vrot.slane %v1984, 5
      %v1987 = vor.u32 %v1983, %v1986
      %v1988 = vrot.slane %v1987, 4
      %v1990 = vshll.u32 %v1941, 16
      %v1992 = vrot.slane %v1990, 5
      %v1993 = vsel %vm705, %v1988, %v1992
      %v1995 = vshrl.u32 %v1942, 16
      %v1997 = vrot.slane %v1995, 4
      %v1998 = vshll.u32 %v1942, 16
      %v2000 = vrot.slane %v1998, 5
      %v2001 = vor.u32 %v1997, %v2000
      %v2002 = vrot.slane %v2001, 4
      %v2004 = vshll.u32 %v1943, 16
      %v2006 = vrot.slane %v2004, 5
      %v2007 = vsel %vm705, %v2002, %v2006
      %v2009 = vshrl.u32 %v1944, 16
      %v2011 = vrot.slane %v2009, 4
      %v2012 = vshll.u32 %v1944, 16
      %v2014 = vrot.slane %v2012, 5
      %v2015 = vor.u32 %v2011, %v2014
      %v2016 = vrot.slane %v2015, 4
      %v2018 = vshll.u32 %v1945, 16
      %v2020 = vrot.slane %v2018, 5
      %v2021 = vsel %vm705, %v2016, %v2020
      %v2023 = vshrl.u32 %v1946, 16
      %v2025 = vrot.slane %v2023, 4
      %v2026 = vshll.u32 %v1946, 16
      %v2028 = vrot.slane %v2026, 5
      %v2029 = vor.u32 %v2025, %v2028
      %v2030 = vrot.slane %v2029, 4
      %v2032 = vshll.u32 %v1947, 16
      %v2034 = vrot.slane %v2032, 5
      %v2035 = vsel %vm705, %v2030, %v2034
      %v2037 = vshrl.u32 %v1948, 16
      %v2039 = vrot.slane %v2037, 4
      %v2040 = vshll.u32 %v1948, 16
      %v2042 = vrot.slane %v2040, 5
      %v2043 = vor.u32 %v2039, %v2042
      %v2044 = vrot.slane %v2043, 4
      %v2046 = vshll.u32 %v1949, 16
      %v2048 = vrot.slane %v2046, 5
      %v2049 = vsel %vm705, %v2044, %v2048
      %v2051 = vshrl.u32 %v1950, 16
      %v2053 = vrot.slane %v2051, 4
      %v2054 = vshll.u32 %v1950, 16
      %v2056 = vrot.slane %v2054, 5
      %v2057 = vor.u32 %v2053, %v2056
      %v2058 = vrot.slane %v2057, 4
      %v2060 = vshll.u32 %v1951, 16
      %v2062 = vrot.slane %v2060, 5
      %v2063 = vsel %vm705, %v2058, %v2062
      %s2064 = scalar_lea.vmem %s351, 512
      %v2065 = vld [vmem:[%s2064] sm:$0xf]
      %v2066 = vld [vmem:[%s2064 + $0x4] sm:$0xf]
      %v2067 = vld [vmem:[%s2064 + $0x8] sm:$0xf]
      %v2068 = vld [vmem:[%s2064 + $0xc] sm:$0xf]
      %v2069 = vld [vmem:[%s2064 + $0x10] sm:$0xf]
      %v2070 = vld [vmem:[%s2064 + $0x14] sm:$0xf]
      %v2071 = vld [vmem:[%s2064 + $0x18] sm:$0xf]
      %v2072 = vld [vmem:[%s2064 + $0x1c] sm:$0xf]
      %v2073 = vld [vmem:[%s2064 + $0x20] sm:$0xf]
      %v2074 = vld [vmem:[%s2064 + $0x24] sm:$0xf]
      %v2075 = vld [vmem:[%s2064 + $0x28] sm:$0xf]
      %v2076 = vld [vmem:[%s2064 + $0x2c] sm:$0xf]
      %v2077 = vld [vmem:[%s2064 + $0x30] sm:$0xf]
      %v2078 = vld [vmem:[%s2064 + $0x34] sm:$0xf]
      %v2079 = vld [vmem:[%s2064 + $0x38] sm:$0xf]
      %v2080 = vld [vmem:[%s2064 + $0x3c] sm:$0xf]
      %v2081 = vunpack.c.l.b16 %v1965
      %v2082 = vunpack.c.l.b16 %v1979
      %v2083 = vunpack.c.l.b16 %v1993
      %v2084 = vunpack.c.l.b16 %v2007
      %v2085 = vunpack.c.l.b16 %v2021
      %v2086 = vunpack.c.l.b16 %v2035
      %v2087 = vunpack.c.l.b16 %v2049
      %v2088 = vunpack.c.l.b16 %v2063
      %v2089 = vpack.c.b16 %v2082, %v2081
      %v2090 = vpack.c.b16 %v2084, %v2083
      %v2091 = vpack.c.b16 %v2086, %v2085
      %v2092 = vpack.c.b16 %v2088, %v2087
      %v2113 = vunpack.c.l.b16 %v2065
      %v2114 = vunpack.c.l.b16 %v2066
      %v2115 = vunpack.c.l.b16 %v2067
      %v2116 = vunpack.c.l.b16 %v2068
      %v2117 = vunpack.c.l.b16 %v2069
      %v2118 = vunpack.c.l.b16 %v2070
      %v2119 = vunpack.c.l.b16 %v2071
      %v2120 = vunpack.c.l.b16 %v2072
      %v2121 = vunpack.c.l.b16 %v2073
      %v2122 = vunpack.c.l.b16 %v2074
      %v2123 = vunpack.c.l.b16 %v2075
      %v2124 = vunpack.c.l.b16 %v2076
      %v2125 = vunpack.c.l.b16 %v2077
      %v2126 = vunpack.c.l.b16 %v2078
      %v2127 = vunpack.c.l.b16 %v2079
      %v2128 = vunpack.c.l.b16 %v2080
      %v2129 = vpack.c.b16 %v2114, %v2113
      %v2130 = vpack.c.b16 %v2116, %v2115
      %v2131 = vpack.c.b16 %v2118, %v2117
      %v2132 = vpack.c.b16 %v2120, %v2119
      %v2133 = vpack.c.b16 %v2122, %v2121
      %v2134 = vpack.c.b16 %v2124, %v2123
      %v2135 = vpack.c.b16 %v2126, %v2125
      %v2136 = vpack.c.b16 %v2128, %v2127
      %2145 = vmatprep.subr.bf16.mxu0 0
      %2146 = vmatpush1.bf16.msra.mxu0 %v2129
      %2147 = vmatprep.subr.bf16.mxu0 0
      %2148 = vmatpush1.bf16.msra.mxu0 %v2130
      %2149 = vmatprep.subr.bf16.mxu0 0
      %2150 = vmatpush1.bf16.msra.mxu0 %v2131
      %2151 = vmatprep.subr.bf16.mxu0 0
      %2152 = vmatpush1.bf16.msra.mxu0 %v2132
      %2153 = vmatprep.subr.bf16.mxu0 0
      %2154 = vmatpush1.bf16.msra.mxu0 %v2133
      %2155 = vmatprep.subr.bf16.mxu0 0
      %2156 = vmatpush1.bf16.msra.mxu0 %v2134
      %2157 = vmatprep.subr.bf16.mxu0 0
      %2158 = vmatpush1.bf16.msra.mxu0 %v2135
      %2159 = vmatprep.subr.bf16.mxu0 0
      %2160 = vmatpush1.bf16.msra.mxu0 %v2136
      %2161 = vmatprep.subr.bf16.mxu0 0
      %2162 = vmatpush1.bf16.msra.mxu0 0
      %2163 = vmatprep.subr.bf16.mxu0 0
      %2164 = vmatpush1.bf16.msra.mxu0 0
      %2165 = vmatprep.subr.bf16.mxu0 0
      %2166 = vmatpush1.bf16.msra.mxu0 0
      %2167 = vmatprep.subr.bf16.mxu0 0
      %2168 = vmatpush1.bf16.msra.mxu0 0
      %2169 = vmatprep.subr.bf16.mxu0 0
      %2170 = vmatpush1.bf16.msra.mxu0 0
      %2171 = vmatprep.subr.bf16.mxu0 0
      %2172 = vmatpush1.bf16.msra.mxu0 0
      %2173 = vmatprep.subr.bf16.mxu0 0
      %2174 = vmatpush1.bf16.msra.mxu0 0
      %2175 = vmatprep.subr.bf16.mxu0 0
      %2176 = vmatpush1.bf16.msra.mxu0 0
      %2177 = vmatprep.mubr.bf16.mxu0 0
      %2178 = vmatmul.mubr.bf16.gmra.mrb[0].mxu0 %v2089
      %v2179 = vpop.f32.mrb[0].mxu0
      %v2180 = vadd.f32 0.0, %v2179
      %v2181 = vpop.f32.mrb[0].mxu0
      %v2182 = vpop.f32.mrb[0].mxu0
      %v2183 = vadd.f32 0.0, %v2182
      %v2184 = vpop.f32.mrb[0].mxu0
      %2185 = vmatprep.mubr.bf16.mxu0 0
      %2186 = vmatmul.mubr.bf16.gmra.mrb[0].mxu0 %v2090
      %v2187 = vpop.f32.mrb[0].mxu0
      %v2188 = vadd.f32 0.0, %v2187
      %v2189 = vpop.f32.mrb[0].mxu0
      %v2190 = vpop.f32.mrb[0].mxu0
      %v2191 = vadd.f32 0.0, %v2190
      %v2192 = vpop.f32.mrb[0].mxu0
      %2193 = vmatprep.mubr.bf16.mxu0 0
      %2194 = vmatmul.mubr.bf16.gmra.mrb[0].mxu0 %v2091
      %v2195 = vpop.f32.mrb[0].mxu0
      %v2196 = vadd.f32 0.0, %v2195
      %v2197 = vpop.f32.mrb[0].mxu0
      %v2198 = vpop.f32.mrb[0].mxu0
      %v2199 = vadd.f32 0.0, %v2198
      %v2200 = vpop.f32.mrb[0].mxu0
      %2201 = vmatprep.mubr.bf16.mxu0 0
      %2202 = vmatmul.mubr.bf16.gmra.mrb[0].mxu0 %v2092
      %v2203 = vpop.f32.mrb[0].mxu0
      %v2204 = vadd.f32 0.0, %v2203
      %v2205 = vpop.f32.mrb[0].mxu0
      %v2206 = vpop.f32.mrb[0].mxu0
      %v2207 = vadd.f32 0.0, %v2206
      %v2208 = vpop.f32.mrb[0].mxu0
      %2209 = vdwg.mxu0
      %v2210 = vadd.f32 %v1928, %v2180
      %v2211 = vadd.f32 %v1929, %v2183
      %v2212 = vadd.f32 %v1930, %v2188
      %v2213 = vadd.f32 %v1931, %v2191
      %v2214 = vadd.f32 %v1932, %v2196
      %v2215 = vadd.f32 %v1933, %v2199
      %v2216 = vadd.f32 %v1934, %v2204
      %v2217 = vadd.f32 %v1935, %v2207
      %v2218 = vld [vmem:[%s354] sm:$0x1]
      %v2220 = vlaneseq
      %v2221 = vshrl.u32 %v2220, 7
      %v2222 = vsub.s32 0, %v2221
      %v2223 = vrot.slane %v2218, %v2222
      %v2225 = vadd.f32 %v2210, %v2223
      %v2226 = vadd.f32 %v2211, %v2223
      %v2227 = vadd.f32 %v2212, %v2223
      %v2228 = vadd.f32 %v2213, %v2223
      %v2229 = vadd.f32 %v2214, %v2223
      %v2230 = vadd.f32 %v2215, %v2223
      %v2231 = vadd.f32 %v2216, %v2223
      %v2232 = vadd.f32 %v2217, %v2223
      %v2233 = vmax.f32 %v2225, 0.0
      %v2234 = vmax.f32 %v2226, 0.0
      %v2235 = vmax.f32 %v2227, 0.0
      %v2236 = vmax.f32 %v2228, 0.0
      %v2237 = vmax.f32 %v2229, 0.0
      %v2238 = vmax.f32 %v2230, 0.0
      %v2239 = vmax.f32 %v2231, 0.0
      %v2240 = vmax.f32 %v2232, 0.0
      %v2241 = vpack.c.bf16 %v2233, %v2233
      %v2242 = vpack.c.bf16 %v2234, %v2234
      %v2243 = vpack.c.bf16 %v2235, %v2235
      %v2244 = vpack.c.bf16 %v2236, %v2236
      %v2245 = vpack.c.bf16 %v2237, %v2237
      %v2246 = vpack.c.bf16 %v2238, %v2238
      %v2247 = vpack.c.bf16 %v2239, %v2239
      %v2248 = vpack.c.bf16 %v2240, %v2240
      %2249 = vst [vmem:[%s362] sm:$0xf] %v2241
      %2250 = vst [vmem:[%s362 + $0x4] sm:$0xf] %v2242
      %2251 = vst [vmem:[%s362 + $0x8] sm:$0xf] %v2243
      %2252 = vst [vmem:[%s362 + $0xc] sm:$0xf] %v2244
      %2253 = vst [vmem:[%s362 + $0x10] sm:$0xf] %v2245
      %2254 = vst [vmem:[%s362 + $0x14] sm:$0xf] %v2246
      %2255 = vst [vmem:[%s362 + $0x18] sm:$0xf] %v2247
      %2256 = vst [vmem:[%s362 + $0x1c] sm:$0xf] %v2248
      %p2257 = scmp.lt.s32.totalorder %s21, 1
      %s2258 = scalar_select %p2257, %s21, 1
      %p2259 = scmp.lt.s32.totalorder %s22, 0
      %s2260 = scalar_select %p2259, %s22, 0
      %s2261 = smul.addr %s2258, 8
      %s2262 = sadd.s32 %s2260, %s2261
      %s2263 = smul.addr %s2262, 4
      %s2264 = scalar_lea.vmem %s6, %s2263
      // Predicated region
      $region45: #{model_forward.11} parent=43 // pred_check
        %p2265 = pneg %p205
      $region46: #{model_forward.11} parent=43 // pred_check_branch
        %2267 = sbr.rel (%p2265) target = $region48
      $region47: #{model_forward.11} parent=43 // pred_region
        _
      $region48: #{model_forward.11} parent=43 // pred_fallthru
        _
    $region44: #{model_forward.11} parent=5 // pred_fallthru
      _
    %p2268 = scmp.le.s32.totalorder 2, %s12
    // Predicated region
    $region49: #{model_forward.11} parent=5 // pred_check
      %p2269 = pneg %p2268
    $region50: #{model_forward.11} parent=5 // pred_check_branch
      %2271 = sbr.rel (%p2269) target = $region52
    $region51: #{model_forward.11} parent=5 // pred_region
      %s2272 = ssub.s32 %s12, 2
      // Predicated region
      $region53: #{model_forward.11} parent=51 // pred_check
        %p2273 = pneg %p211
      $region54: #{model_forward.11} parent=51 // pred_check_branch
        %2275 = sbr.rel (%p2273) target = $region56
      $region55: #{model_forward.11} parent=51 // pred_region
        %p2276 = scmp.lt.s32.totalorder %s23, 1
        %s2277 = scalar_select %p2276, %s23, 1
        %p2278 = scmp.lt.s32.totalorder %s24, 0
        %s2279 = scalar_select %p2278, %s24, 0
        %s2280 = smul.addr %s2277, 8
        %s2281 = sadd.s32 %s2279, %s2280
        %s2282 = smul.addr %s2281, 4
        %s2283 = scalar_lea.vmem %s6, %s2282
      $region56: #{model_forward.11} parent=51 // pred_fallthru
        _
    $region52: #{model_forward.11} parent=5 // pred_fallthru
      _
  $region6: #{model_forward.11} parent=0 // loop_footer
    %s16 = sadd.s32 1, %s12
  $region7: #{model_forward.11} parent=0 // loop_footer_branch
    %11 = sbr.rel target = $region3
  $region8: #{model_forward.11} parent=0 // loop_exit
    _

// kernel: model_forward.8
$region0: #{model_forward.8}
  #allocation0 [shape = 'u32[]', space=smem, size = 0x4, offset = 0x4, fixed_abs, tag = 'smem constant byte address 0x4 - core index']
  #allocation1 [shape = 'u32[144,128]{1,0:T(1,128)}', space=vmem, size = 0x12000, scoped, tag = 'internal scratch']
  #allocation2 [shape = 'bf16[18,18,128]{2,1,0:T(8,128)(2,1)}', space=vmem, size = 0x1b000, scoped, tag = 'scratch operand']
  %s0 = inlined_call_operand.vmem [shape: bf16[2,16,16,128], index: 0, kind: input, shape index: {}]
  %s1 = inlined_call_operand.vmem [shape: bf16[3,3,128,128], index: 1, kind: input, shape index: {}]
  %s2 = inlined_call_operand.vmem [shape: f32[1,128], index: 2, kind: input, shape index: {}]
  %s3 = inlined_call_operand.vmem [shape: bf16[2,16,16,128], index: 3, kind: output, shape index: {}]
  %s4 = sld [smem:[#allocation0]]
  $region45: #{model_forward.8} parent=0
    _
  %s6 = ssub.s32 1, %s4
  %s7 = scalar_select 0, %s6, %s4
  loop: start=0, step=1, limit=4
  $region2: #{model_forward.8} parent=0 // loop_pre_header
    _
  $region3: #{model_forward.8} parent=0 // loop_header
    %s9 = sphi 0, %s13
    %p10 = scmp.ge.s32.totalorder %s9, 4
    %s16 = sphi 0, %s28
    %s17 = sphi 0, %s24
    %s18 = sphi 0, %s16
    %s19 = sphi 0, %s17
    %s20 = sphi 0, %s18
    %s21 = sphi 0, %s19
    %s31 = sphi 0, %s33
    %s34 = sphi 0, %s31
    %s35 = sphi 0, %s34
    %s51 = sphi 0, %s35
    %s57 = sphi 0, %s59
    %s60 = sphi 0, %s57
    %s61 = sphi 0, %s60
    %s77 = sphi 0, %s61
    %s83 = sphi 0, %s85
    %s86 = sphi 0, %s83
    %s87 = sphi 0, %s86
    %s103 = sphi 0, %s87
    %s111 = sphi 0, %s113
    %s114 = sphi 0, %s111
    %s115 = sphi 0, %s114
    %s131 = sphi 0, %s115
  $region4: #{model_forward.8} parent=0 // loop_header_branch
    %12 = sbr.rel (%p10) target = $region8
  $region5: #{model_forward.8} parent=0 // loop_body
    %s14 = ssub.s32 %s9, 1
    %s15 = ssub.s32 %s9, 2
    %s22 = sadd.s32 1, %s17
    %p23 = scmp.ge.s32.totalorder %s22, 1
    %s24 = scalar_select %p23, 0, %s22
    %s25 = sadd.s32 1, %s16
    %s26 = scalar_select %p23, %s25, %s16
    %p27 = scmp.ge.s32.totalorder %s26, 2
    %s28 = scalar_select %p27, 0, %s26
    %s29 = ssub.s32 %s16, %s28
    %p30 = scmp.eq.s32.totalorder %s29, 0
    %s32 = sadd.s32 %s31, 1
    %s33 = scalar_select %p30, %s31, %s32
    %p36 = pneg %p30
    %p37 = scmp.eq.s32.totalorder %s9, 1
    %p38 = por %p36, %p37
    %p39 = scmp.ne.s32.totalorder %s31, %s34
    %p40 = scmp.eq.s32.totalorder %s9, 0
    %p41 = por %p39, %p40
    %p42 = scmp.ne.s32.totalorder %s31, %s34
    %p43 = scmp.eq.s32.totalorder %s14, 1
    %p44 = por %p42, %p43
    %p45 = scmp.ne.s32.totalorder %s34, %s35
    %p46 = scmp.eq.s32.totalorder %s14, 0
    %p47 = por %p45, %p46
    %p48 = scmp.ne.s32.totalorder %s34, %s35
    %p49 = scmp.eq.s32.totalorder %s15, 1
    %p50 = por %p48, %p49
    %p52 = scmp.ne.s32.totalorder %s35, %s51
    %p53 = scmp.eq.s32.totalorder %s15, 0
    %p54 = por %p52, %p53
    %s55 = ssub.s32 %s17, %s24
    %p56 = scmp.eq.s32.totalorder %s55, 0
    %s58 = sadd.s32 %s57, 1
    %s59 = scalar_select %p56, %s57, %s58
    %p62 = pneg %p56
    %p63 = scmp.eq.s32.totalorder %s9, 1
    %p64 = por %p62, %p63
    %p65 = scmp.ne.s32.totalorder %s57, %s60
    %p66 = scmp.eq.s32.totalorder %s9, 0
    %p67 = por %p65, %p66
    %p68 = scmp.ne.s32.totalorder %s57, %s60
    %p69 = scmp.eq.s32.totalorder %s14, 1
    %p70 = por %p68, %p69
    %p71 = scmp.ne.s32.totalorder %s60, %s61
    %p72 = scmp.eq.s32.totalorder %s14, 0
    %p73 = por %p71, %p72
    %p74 = scmp.ne.s32.totalorder %s60, %s61
    %p75 = scmp.eq.s32.totalorder %s15, 1
    %p76 = por %p74, %p75
    %p78 = scmp.ne.s32.totalorder %s61, %s77
    %p79 = scmp.eq.s32.totalorder %s15, 0
    %p80 = por %p78, %p79
    %s81 = ssub.s32 %s17, %s24
    %p82 = scmp.eq.s32.totalorder %s81, 0
    %s84 = sadd.s32 %s83, 1
    %s85 = scalar_select %p82, %s83, %s84
    %p88 = pneg %p82
    %p89 = scmp.eq.s32.totalorder %s9, 1
    %p90 = por %p88, %p89
    %p91 = scmp.ne.s32.totalorder %s83, %s86
    %p92 = scmp.eq.s32.totalorder %s9, 0
    %p93 = por %p91, %p92
    %p94 = scmp.ne.s32.totalorder %s83, %s86
    %p95 = scmp.eq.s32.totalorder %s14, 1
    %p96 = por %p94, %p95
    %p97 = scmp.ne.s32.totalorder %s86, %s87
    %p98 = scmp.eq.s32.totalorder %s14, 0
    %p99 = por %p97, %p98
    %p100 = scmp.ne.s32.totalorder %s86, %s87
    %p101 = scmp.eq.s32.totalorder %s15, 1
    %p102 = por %p100, %p101
    %p104 = scmp.ne.s32.totalorder %s87, %s103
    %p105 = scmp.eq.s32.totalorder %s15, 0
    %p106 = por %p104, %p105
    %s107 = ssub.s32 %s16, %s28
    %s108 = ssub.s32 %s17, %s24
    %s109 = sor.u32 %s107, %s108
    %p110 = scmp.eq.s32.totalorder %s109, 0
    %s112 = sadd.s32 %s111, 1
    %s113 = scalar_select %p110, %s111, %s112
    %p116 = pneg %p110
    %p117 = scmp.eq.s32.totalorder %s9, 1
    %p118 = por %p116, %p117
    %p119 = scmp.ne.s32.totalorder %s111, %s114
    %p120 = scmp.eq.s32.totalorder %s9, 0
    %p121 = por %p119, %p120
    %p122 = scmp.ne.s32.totalorder %s111, %s114
    %p123 = scmp.eq.s32.totalorder %s14, 1
    %p124 = por %p122, %p123
    %p125 = scmp.ne.s32.totalorder %s114, %s115
    %p126 = scmp.eq.s32.totalorder %s14, 0
    %p127 = por %p125, %p126
    %p128 = scmp.ne.s32.totalorder %s114, %s115
    %p129 = scmp.eq.s32.totalorder %s15, 1
    %p130 = por %p128, %p129
    %p132 = scmp.ne.s32.totalorder %s115, %s131
    %p133 = scmp.eq.s32.totalorder %s15, 0
    %p134 = por %p132, %p133
    %p135 = scmp.le.s32.totalorder 1, %s9
    %p136 = scmp.lt.s32.totalorder %s9, 3
    %p137 = pnand %p135, %p136
    %p138 = pneg %p137
    // Predicated region
    $region9: #{model_forward.8} parent=5 // pred_check
      _
    $region10: #{model_forward.8} parent=5 // pred_check_branch
      %140 = sbr.rel (%p137) target = $region12
    $region11: #{model_forward.8} parent=5 // pred_region
      %s141 = ssub.s32 %s9, 1
      // Predicated region
      $region13: #{model_forward.8} parent=11 // pred_check
        %p142 = pneg %p73
      $region14: #{model_forward.8} parent=11 // pred_check_branch
        %144 = sbr.rel (%p142) target = $region16
      $region15: #{model_forward.8} parent=11 // pred_region
        %p145 = scmp.lt.s32.totalorder %s19, 0
        %s146 = scalar_select %p145, %s19, 0
        %s147 = smul.addr %s146, 4
        %s148 = scalar_lea.vmem %s1, %s147
      $region16: #{model_forward.8} parent=11 // pred_fallthru
        _
      // Predicated region
      $region17: #{model_forward.8} parent=11 // pred_check
        %p149 = pneg %p99
      $region18: #{model_forward.8} parent=11 // pred_check_branch
        %151 = sbr.rel (%p149) target = $region20
      $region19: #{model_forward.8} parent=11 // pred_region
        %p152 = scmp.lt.s32.totalorder %s19, 0
        %s153 = scalar_select %p152, %s19, 0
        %s154 = scalar_lea.vmem %s2, %s153
      $region20: #{model_forward.8} parent=11 // pred_fallthru
        _
    $region12: #{model_forward.8} parent=5 // pred_fallthru
      _
    %p155 = scmp.lt.s32.totalorder %s9, 2
    // Predicated region
    $region21: #{model_forward.8} parent=5 // pred_check
      %p156 = pneg %p155
    $region22: #{model_forward.8} parent=5 // pred_check_branch
      %158 = sbr.rel (%p156) target = $region24
    $region23: #{model_forward.8} parent=5 // pred_region
      // Predicated region
      $region25: #{model_forward.8} parent=23 // pred_check
        %p159 = pneg %p41
      $region26: #{model_forward.8} parent=23 // pred_check_branch
        %161 = sbr.rel (%p159) target = $region28
      $region27: #{model_forward.8} parent=23 // pred_region
        %p162 = scmp.lt.s32.totalorder %s16, 1
        %s163 = scalar_select %p162, %s16, 1
        %s164 = smul.addr %s163, 32
        %s165 = smul.addr %s164, 4
        %s166 = scalar_lea.vmem %s0, %s165
      $region28: #{model_forward.8} parent=23 // pred_fallthru
        _
    $region24: #{model_forward.8} parent=5 // pred_fallthru
      _
    %p167 = scmp.le.s32.totalorder 1, %s9
    %p168 = scmp.lt.s32.totalorder %s9, 3
    %p169 = pnand %p167, %p168
    %p170 = pneg %p169
    // Predicated region
    $region29: #{model_forward.8} parent=5 // pred_check
      _
    $region30: #{model_forward.8} parent=5 // pred_check_branch
      %172 = sbr.rel (%p169) target = $region32
    $region31: #{model_forward.8} parent=5 // pred_region
      %s173 = ssub.s32 %s9, 1
      %p174 = scmp.lt.s32.totalorder %s18, 1
      %s175 = scalar_select %p174, %s18, 1
      %s176 = smul.addr %s175, 32
      %s177 = smul.addr %s176, 4
      %s178 = scalar_lea.vmem %s0, %s177
      %p179 = pneg %p47
      %p180 = pneg %p44
      %p181 = scmp.lt.s32.totalorder %s19, 0
      %s182 = scalar_select %p181, %s19, 0
      %s183 = smul.addr %s182, 4
      %s184 = scalar_lea.vmem %s1, %s183
      %p185 = pneg %p73
      %p186 = pneg %p70
      %p187 = scmp.lt.s32.totalorder %s19, 0
      %s188 = scalar_select %p187, %s19, 0
      %s189 = scalar_lea.vmem %s2, %s188
      %p190 = pneg %p99
      %p191 = pneg %p96
      %p192 = pneg %p127
      %p193 = pneg %p124
      %p194 = scmp.lt.s32.totalorder %s18, 1
      %s195 = scalar_select %p194, %s18, 1
      %p196 = scmp.lt.s32.totalorder %s19, 0
      %s197 = scalar_select %p196, %s19, 0
      %s198 = smul.addr %s195, 32
      %s199 = sadd.s32 %s197, %s198
      %s200 = smul.addr %s199, 4
      %s201 = scalar_lea.vmem %s3, %s200
      %p202 = scmp.lt.s32.totalorder %s18, 1
      %s203 = scalar_select %p202, %s18, 1
      %s204 = smul.addr %s203, 32
      %s205 = smul.addr %s204, 4
      %s206 = scalar_lea.vmem %s0, %s205
      %p207 = scmp.lt.s32.totalorder %s19, 0
      %s208 = scalar_select %p207, %s19, 0
      %s209 = smul.addr %s208, 4
      %s210 = scalar_lea.vmem %s1, %s209
      %p211 = scmp.lt.s32.totalorder %s19, 0
      %s212 = scalar_select %p211, %s19, 0
      %s213 = scalar_lea.vmem %s2, %s212
      %p214 = scmp.lt.s32.totalorder %s18, 1
      %s215 = scalar_select %p214, %s18, 1
      %p216 = scmp.lt.s32.totalorder %s19, 0
      %s217 = scalar_select %p216, %s19, 0
      %s218 = smul.addr %s215, 32
      %s219 = sadd.s32 %s217, %s218
      %s220 = smul.addr %s219, 4
      %s221 = scalar_lea.vmem %s3, %s220
      %223 = vst [vmem:[#allocation2] sm:$0xf] 0
      %224 = vst [vmem:[#allocation2 + $0x4] sm:$0xf] 0
      %225 = vst [vmem:[#allocation2 + $0x8] sm:$0x1] 0
      %226 = vst [vmem:[#allocation2 + $0xc] sm:$0xf] 0
      %227 = vst [vmem:[#allocation2 + $0x10] sm:$0xf] 0
      %228 = vst [vmem:[#allocation2 + $0x14] sm:$0x1] 0
      %229 = vst [vmem:[#allocation2 + $0x18] sm:$0xf] 0
      %230 = vst [vmem:[#allocation2 + $0x1c] sm:$0xf] 0
      %231 = vst [vmem:[#allocation2 + $0x20] sm:$0x1] 0
      %232 = vst [vmem:[#allocation2 + $0x24] sm:$0xf] 0
      %233 = vst [vmem:[#allocation2 + $0x28] sm:$0xf] 0
      %234 = vst [vmem:[#allocation2 + $0x2c] sm:$0x1] 0
      %235 = vst [vmem:[#allocation2 + $0x30] sm:$0xf] 0
      %236 = vst [vmem:[#allocation2 + $0x34] sm:$0xf] 0
      %237 = vst [vmem:[#allocation2 + $0x38] sm:$0x1] 0
      %238 = vst [vmem:[#allocation2 + $0x3c] sm:$0xf] 0
      %239 = vst [vmem:[#allocation2 + $0x40] sm:$0xf] 0
      %240 = vst [vmem:[#allocation2 + $0x44] sm:$0x1] 0
      %241 = vst [vmem:[#allocation2 + $0x48] sm:$0xf] 0
      %242 = vst [vmem:[#allocation2 + $0x4c] sm:$0xf] 0
      %243 = vst [vmem:[#allocation2 + $0x50] sm:$0x1] 0
      %244 = vst [vmem:[#allocation2 + $0x54] sm:$0xf] 0
      %245 = vst [vmem:[#allocation2 + $0x58] sm:$0xf] 0
      %246 = vst [vmem:[#allocation2 + $0x5c] sm:$0x1] 0
      %247 = vst [vmem:[#allocation2 + $0x60] sm:$0xf] 0
      %248 = vst [vmem:[#allocation2 + $0x64] sm:$0xf] 0
      %249 = vst [vmem:[#allocation2 + $0x68] sm:$0x1] 0
      %250 = vst [vmem:[#allocation2 + $0x6c] sm:$0xf] 0
      %251 = vst [vmem:[#allocation2 + $0x70] sm:$0xf] 0
      %252 = vst [vmem:[#allocation2 + $0x74] sm:$0x1] 0
      %253 = vst [vmem:[#allocation2 + $0x78] sm:$0xf] 0
      %254 = vst [vmem:[#allocation2 + $0x7c] sm:$0xf] 0
      %255 = vst [vmem:[#allocation2 + $0x80] sm:$0x1] 0
      %256 = vst [vmem:[#allocation2 + $0x84] sm:$0xf] 0
      %257 = vst [vmem:[#allocation2 + $0x88] sm:$0xf] 0
      %258 = vst [vmem:[#allocation2 + $0x8c] sm:$0x1] 0
      %259 = vst [vmem:[#allocation2 + $0x90] sm:$0xf] 0
      %260 = vst [vmem:[#allocation2 + $0x94] sm:$0xf] 0
      %261 = vst [vmem:[#allocation2 + $0x98] sm:$0x1] 0
      %262 = vst [vmem:[#allocation2 + $0x9c] sm:$0xf] 0
      %263 = vst [vmem:[#allocation2 + $0xa0] sm:$0xf] 0
      %264 = vst [vmem:[#allocation2 + $0xa4] sm:$0x1] 0
      %265 = vst [vmem:[#allocation2 + $0xa8] sm:$0xf] 0
      %266 = vst [vmem:[#allocation2 + $0xac] sm:$0xf] 0
      %267 = vst [vmem:[#allocation2 + $0xb0] sm:$0x1] 0
      %268 = vst [vmem:[#allocation2 + $0xb4] sm:$0xf] 0
      %269 = vst [vmem:[#allocation2 + $0xb8] sm:$0xf] 0
      %270 = vst [vmem:[#allocation2 + $0xbc] sm:$0x1] 0
      %271 = vst [vmem:[#allocation2 + $0xc0] sm:$0xf] 0
      %272 = vst [vmem:[#allocation2 + $0xc4] sm:$0xf] 0
      %273 = vst [vmem:[#allocation2 + $0xc8] sm:$0x1] 0
      %274 = vst [vmem:[#allocation2 + $0xcc] sm:$0xf] 0
      %275 = vst [vmem:[#allocation2 + $0xd0] sm:$0xf] 0
      %276 = vst [vmem:[#allocation2 + $0xd4] sm:$0x1] 0
      %v277 = vld [vmem:[%s206] sm:$0xf]
      %v278 = vld [vmem:[%s206 + $0x4] sm:$0xf]
      %v279 = vld [vmem:[%s206 + $0x8] sm:$0xf]
      %v280 = vld [vmem:[%s206 + $0xc] sm:$0xf]
      %v281 = vld [vmem:[%s206 + $0x10] sm:$0xf]
      %v282 = vld [vmem:[%s206 + $0x14] sm:$0xf]
      %v283 = vld [vmem:[%s206 + $0x18] sm:$0xf]
      %v284 = vld [vmem:[%s206 + $0x1c] sm:$0xf]
      %v285 = vld [vmem:[%s206 + $0x20] sm:$0xf]
      %v286 = vld [vmem:[%s206 + $0x24] sm:$0xf]
      %v287 = vld [vmem:[%s206 + $0x28] sm:$0xf]
      %v288 = vld [vmem:[%s206 + $0x2c] sm:$0xf]
      %v289 = vld [vmem:[%s206 + $0x30] sm:$0xf]
      %v290 = vld [vmem:[%s206 + $0x34] sm:$0xf]
      %v291 = vld [vmem:[%s206 + $0x38] sm:$0xf]
      %v292 = vld [vmem:[%s206 + $0x3c] sm:$0xf]
      %v293 = vld [vmem:[%s206 + $0x40] sm:$0xf]
      %v294 = vld [vmem:[%s206 + $0x44] sm:$0xf]
      %v295 = vld [vmem:[%s206 + $0x48] sm:$0xf]
      %v296 = vld [vmem:[%s206 + $0x4c] sm:$0xf]
      %v297 = vld [vmem:[%s206 + $0x50] sm:$0xf]
      %v298 = vld [vmem:[%s206 + $0x54] sm:$0xf]
      %v299 = vld [vmem:[%s206 + $0x58] sm:$0xf]
      %v300 = vld [vmem:[%s206 + $0x5c] sm:$0xf]
      %v301 = vld [vmem:[%s206 + $0x60] sm:$0xf]
      %v302 = vld [vmem:[%s206 + $0x64] sm:$0xf]
      %v303 = vld [vmem:[%s206 + $0x68] sm:$0xf]
      %v304 = vld [vmem:[%s206 + $0x6c] sm:$0xf]
      %v305 = vld [vmem:[%s206 + $0x70] sm:$0xf]
      %v306 = vld [vmem:[%s206 + $0x74] sm:$0xf]
      %v307 = vld [vmem:[%s206 + $0x78] sm:$0xf]
      %v308 = vld [vmem:[%s206 + $0x7c] sm:$0xf]
      %vm309 = vsmask.f32 256
      %vm310 = vsmask.f32 4368
      %vm311 = vmor %vm309, %vm310
      %v313 = vshrl.u32 %v277, 16
      %v315 = vrot.slane %v313, 7
      %v316 = vshll.u32 %v277, 16
      %v318 = vor.u32 %v315, %v316
      %v319 = vrot.slane %v315, 4
      %v321 = vshrl.u32 %v278, 16
      %v323 = vrot.slane %v321, 7
      %v324 = vshll.u32 %v278, 16
      %v326 = vor.u32 %v323, %v324
      %v327 = vsel %vm311, %v319, %v326
      %v328 = vrot.slane %v323, 4
      %v330 = vshrl.u32 %v279, 16
      %v332 = vrot.slane %v330, 7
      %v333 = vshll.u32 %v279, 16
      %v335 = vor.u32 %v332, %v333
      %v336 = vrot.slane %v332, 4
      %v338 = vshrl.u32 %v280, 16
      %v340 = vrot.slane %v338, 7
      %v341 = vshll.u32 %v280, 16
      %v343 = vor.u32 %v340, %v341
      %v344 = vsel %vm311, %v336, %v343
      %v345 = vrot.slane %v340, 4
      %v347 = vshrl.u32 %v281, 16
      %v349 = vrot.slane %v347, 7
      %v350 = vshll.u32 %v281, 16
      %v352 = vor.u32 %v349, %v350
      %v353 = vrot.slane %v349, 4
      %v355 = vshrl.u32 %v282, 16
      %v357 = vrot.slane %v355, 7
      %v358 = vshll.u32 %v282, 16
      %v360 = vor.u32 %v357, %v358
      %v361 = vsel %vm311, %v353, %v360
      %v362 = vrot.slane %v357, 4
      %v364 = vshrl.u32 %v283, 16
      %v366 = vrot.slane %v364, 7
      %v367 = vshll.u32 %v283, 16
      %v369 = vor.u32 %v366, %v367
      %v370 = vrot.slane %v366, 4
      %v372 = vshrl.u32 %v284, 16
      %v374 = vrot.slane %v372, 7
      %v375 = vshll.u32 %v284, 16
      %v377 = vor.u32 %v374, %v375
      %v378 = vsel %vm311, %v370, %v377
      %v379 = vrot.slane %v374, 4
      %v381 = vshrl.u32 %v285, 16
      %v383 = vrot.slane %v381, 7
      %v384 = vshll.u32 %v285, 16
      %v386 = vor.u32 %v383, %v384
      %v387 = vrot.slane %v383, 4
      %v389 = vshrl.u32 %v286, 16
      %v391 = vrot.slane %v389, 7
      %v392 = vshll.u32 %v286, 16
      %v394 = vor.u32 %v391, %v392
      %v395 = vsel %vm311, %v387, %v394
      %v396 = vrot.slane %v391, 4
      %v398 = vshrl.u32 %v287, 16
      %v400 = vrot.slane %v398, 7
      %v401 = vshll.u32 %v287, 16
      %v403 = vor.u32 %v400, %v401
      %v404 = vrot.slane %v400, 4
      %v406 = vshrl.u32 %v288, 16
      %v408 = vrot.slane %v406, 7
      %v409 = vshll.u32 %v288, 16
      %v411 = vor.u32 %v408, %v409
      %v412 = vsel %vm311, %v404, %v411
      %v413 = vrot.slane %v408, 4
      %v415 = vshrl.u32 %v289, 16
      %v417 = vrot.slane %v415, 7
      %v418 = vshll.u32 %v289, 16
      %v420 = vor.u32 %v417, %v418
      %v421 = vrot.slane %v417, 4
      %v423 = vshrl.u32 %v290, 16
      %v425 = vrot.slane %v423, 7
      %v426 = vshll.u32 %v290, 16
      %v428 = vor.u32 %v425, %v426
      %v429 = vsel %vm311, %v421, %v428
      %v430 = vrot.slane %v425, 4
      %v432 = vshrl.u32 %v291, 16
      %v434 = vrot.slane %v432, 7
      %v435 = vshll.u32 %v291, 16
      %v437 = vor.u32 %v434, %v435
      %v438 = vrot.slane %v434, 4
      %v440 = vshrl.u32 %v292, 16
      %v442 = vrot.slane %v440, 7
      %v443 = vshll.u32 %v292, 16
      %v445 = vor.u32 %v442, %v443
      %v446 = vsel %vm311, %v438, %v445
      %v447 = vrot.slane %v442, 4
      %v449 = vshrl.u32 %v293, 16
      %v451 = vrot.slane %v449, 7
      %v452 = vshll.u32 %v293, 16
      %v454 = vor.u32 %v451, %v452
      %v455 = vrot.slane %v451, 4
      %v457 = vshrl.u32 %v294, 16
      %v459 = vrot.slane %v457, 7
      %v460 = vshll.u32 %v294, 16
      %v462 = vor.u32 %v459, %v460
      %v463 = vsel %vm311, %v455, %v462
      %v464 = vrot.slane %v459, 4
      %v466 = vshrl.u32 %v295, 16
      %v468 = vrot.slane %v466, 7
      %v469 = vshll.u32 %v295, 16
      %v471 = vor.u32 %v468, %v469
      %v472 = vrot.slane %v468, 4
      %v474 = vshrl.u32 %v296, 16
      %v476 = vrot.slane %v474, 7
      %v477 = vshll.u32 %v296, 16
      %v479 = vor.u32 %v476, %v477
      %v480 = vsel %vm311, %v472, %v479
      %v481 = vrot.slane %v476, 4
      %v483 = vshrl.u32 %v297, 16
      %v485 = vrot.slane %v483, 7
      %v486 = vshll.u32 %v297, 16
      %v488 = vor.u32 %v485, %v486
      %v489 = vrot.slane %v485, 4
      %v491 = vshrl.u32 %v298, 16
      %v493 = vrot.slane %v491, 7
      %v494 = vshll.u32 %v298, 16
      %v496 = vor.u32 %v493, %v494
      %v497 = vsel %vm311, %v489, %v496
      %v498 = vrot.slane %v493, 4
      %v500 = vshrl.u32 %v299, 16
      %v502 = vrot.slane %v500, 7
      %v503 = vshll.u32 %v299, 16
      %v505 = vor.u32 %v502, %v503
      %v506 = vrot.slane %v502, 4
      %v508 = vshrl.u32 %v300, 16
      %v510 = vrot.slane %v508, 7
      %v511 = vshll.u32 %v300, 16
      %v513 = vor.u32 %v510, %v511
      %v514 = vsel %vm311, %v506, %v513
      %v515 = vrot.slane %v510, 4
      %v517 = vshrl.u32 %v301, 16
      %v519 = vrot.slane %v517, 7
      %v520 = vshll.u32 %v301, 16
      %v522 = vor.u32 %v519, %v520
      %v523 = vrot.slane %v519, 4
      %v525 = vshrl.u32 %v302, 16
      %v527 = vrot.slane %v525, 7
      %v528 = vshll.u32 %v302, 16
      %v530 = vor.u32 %v527, %v528
      %v531 = vsel %vm311, %v523, %v530
      %v532 = vrot.slane %v527, 4
      %v534 = vshrl.u32 %v303, 16
      %v536 = vrot.slane %v534, 7
      %v537 = vshll.u32 %v303, 16
      %v539 = vor.u32 %v536, %v537
      %v540 = vrot.slane %v536, 4
      %v542 = vshrl.u32 %v304, 16
      %v544 = vrot.slane %v542, 7
      %v545 = vshll.u32 %v304, 16
      %v547 = vor.u32 %v544, %v545
      %v548 = vsel %vm311, %v540, %v547
      %v549 = vrot.slane %v544, 4
      %v551 = vshrl.u32 %v305, 16
      %v553 = vrot.slane %v551, 7
      %v554 = vshll.u32 %v305, 16
      %v556 = vor.u32 %v553, %v554
      %v557 = vrot.slane %v553, 4
      %v559 = vshrl.u32 %v306, 16
      %v561 = vrot.slane %v559, 7
      %v562 = vshll.u32 %v306, 16
      %v564 = vor.u32 %v561, %v562
      %v565 = vsel %vm311, %v557, %v564
      %v566 = vrot.slane %v561, 4
      %v568 = vshrl.u32 %v307, 16
      %v570 = vrot.slane %v568, 7
      %v571 = vshll.u32 %v307, 16
      %v573 = vor.u32 %v570, %v571
      %v574 = vrot.slane %v570, 4
      %v576 = vshrl.u32 %v308, 16
      %v578 = vrot.slane %v576, 7
      %v579 = vshll.u32 %v308, 16
      %v581 = vor.u32 %v578, %v579
      %v582 = vsel %vm311, %v574, %v581
      %v583 = vrot.slane %v578, 4
      %s632 = scalar_lea.vmem [#allocation2], 12
      %vm633 = vcmask 1043456
      %vm634 = vsmask.f32 7938
      %vm635 = vmand %vm633, %vm634
      %v636 = vld [vmem:[%s632] sm:$0xf]
      %v637 = vsel %vm635, %v318, %v636
      %638 = vst [vmem:[%s632] sm:$0xf] %v637
      %639 = vst [vmem:[%s632 + $0x4] sm:$0xf] %v327
      %vm640 = vcmask 1040384
      %vm641 = vmand %vm640, %vm309
      %v642 = vld [vmem:[%s632 + $0x8] sm:$0x1]
      %v643 = vsel %vm641, %v328, %v642
      %644 = vst [vmem:[%s632 + $0x8] sm:$0x1] %v643
      %v645 = vld [vmem:[%s632 + $0xc] sm:$0xf]
      %v646 = vsel %vm635, %v335, %v645
      %647 = vst [vmem:[%s632 + $0xc] sm:$0xf] %v646
      %648 = vst [vmem:[%s632 + $0x10] sm:$0xf] %v344
      %v649 = vld [vmem:[%s632 + $0x14] sm:$0x1]
      %v650 = vsel %vm641, %v345, %v649
      %651 = vst [vmem:[%s632 + $0x14] sm:$0x1] %v650
      %v652 = vld [vmem:[%s632 + $0x18] sm:$0xf]
      %v653 = vsel %vm635, %v352, %v652
      %654 = vst [vmem:[%s632 + $0x18] sm:$0xf] %v653
      %655 = vst [vmem:[%s632 + $0x1c] sm:$0xf] %v361
      %v656 = vld [vmem:[%s632 + $0x20] sm:$0x1]
      %v657 = vsel %vm641, %v362, %v656
      %658 = vst [vmem:[%s632 + $0x20] sm:$0x1] %v657
      %v659 = vld [vmem:[%s632 + $0x24] sm:$0xf]
      %v660 = vsel %vm635, %v369, %v659
      %661 = vst [vmem:[%s632 + $0x24] sm:$0xf] %v660
      %662 = vst [vmem:[%s632 + $0x28] sm:$0xf] %v378
      %v663 = vld [vmem:[%s632 + $0x2c] sm:$0x1]
      %v664 = vsel %vm641, %v379, %v663
      %665 = vst [vmem:[%s632 + $0x2c] sm:$0x1] %v664
      %v666 = vld [vmem:[%s632 + $0x30] sm:$0xf]
      %v667 = vsel %vm635, %v386, %v666
      %668 = vst [vmem:[%s632 + $0x30] sm:$0xf] %v667
      %669 = vst [vmem:[%s632 + $0x34] sm:$0xf] %v395
      %v670 = vld [vmem:[%s632 + $0x38] sm:$0x1]
      %v671 = vsel %vm641, %v396, %v670
      %672 = vst [vmem:[%s632 + $0x38] sm:$0x1] %v671
      %v673 = vld [vmem:[%s632 + $0x3c] sm:$0xf]
      %v674 = vsel %vm635, %v403, %v673
      %675 = vst [vmem:[%s632 + $0x3c] sm:$0xf] %v674
      %676 = vst [vmem:[%s632 + $0x40] sm:$0xf] %v412
      %v677 = vld [vmem:[%s632 + $0x44] sm:$0x1]
      %v678 = vsel %vm641, %v413, %v677
      %679 = vst [vmem:[%s632 + $0x44] sm:$0x1] %v678
      %v680 = vld [vmem:[%s632 + $0x48] sm:$0xf]
      %v681 = vsel %vm635, %v420, %v680
      %682 = vst [vmem:[%s632 + $0x48] sm:$0xf] %v681
      %683 = vst [vmem:[%s632 + $0x4c] sm:$0xf] %v429
      %v684 = vld [vmem:[%s632 + $0x50] sm:$0x1]
      %v685 = vsel %vm641, %v430, %v684
      %686 = vst [vmem:[%s632 + $0x50] sm:$0x1] %v685
      %v687 = vld [vmem:[%s632 + $0x54] sm:$0xf]
      %v688 = vsel %vm635, %v437, %v687
      %689 = vst [vmem:[%s632 + $0x54] sm:$0xf] %v688
      %690 = vst [vmem:[%s632 + $0x58] sm:$0xf] %v446
      %v691 = vld [vmem:[%s632 + $0x5c] sm:$0x1]
      %v692 = vsel %vm641, %v447, %v691
      %693 = vst [vmem:[%s632 + $0x5c] sm:$0x1] %v692
      %v694 = vld [vmem:[%s632 + $0x60] sm:$0xf]
      %v695 = vsel %vm635, %v454, %v694
      %696 = vst [vmem:[%s632 + $0x60] sm:$0xf] %v695
      %697 = vst [vmem:[%s632 + $0x64] sm:$0xf] %v463
      %v698 = vld [vmem:[%s632 + $0x68] sm:$0x1]
      %v699 = vsel %vm641, %v464, %v698
      %700 = vst [vmem:[%s632 + $0x68] sm:$0x1] %v699
      %v701 = vld [vmem:[%s632 + $0x6c] sm:$0xf]
      %v702 = vsel %vm635, %v471, %v701
      %703 = vst [vmem:[%s632 + $0x6c] sm:$0xf] %v702
      %704 = vst [vmem:[%s632 + $0x70] sm:$0xf] %v480
      %v705 = vld [vmem:[%s632 + $0x74] sm:$0x1]
      %v706 = vsel %vm641, %v481, %v705
      %707 = vst [vmem:[%s632 + $0x74] sm:$0x1] %v706
      %v708 = vld [vmem:[%s632 + $0x78] sm:$0xf]
      %v709 = vsel %vm635, %v488, %v708
      %710 = vst [vmem:[%s632 + $0x78] sm:$0xf] %v709
      %711 = vst [vmem:[%s632 + $0x7c] sm:$0xf] %v497
      %v712 = vld [vmem:[%s632 + $0x80] sm:$0x1]
      %v713 = vsel %vm641, %v498, %v712
      %714 = vst [vmem:[%s632 + $0x80] sm:$0x1] %v713
      %v715 = vld [vmem:[%s632 + $0x84] sm:$0xf]
      %v716 = vsel %vm635, %v505, %v715
      %717 = vst [vmem:[%s632 + $0x84] sm:$0xf] %v716
      %718 = vst [vmem:[%s632 + $0x88] sm:$0xf] %v514
      %v719 = vld [vmem:[%s632 + $0x8c] sm:$0x1]
      %v720 = vsel %vm641, %v515, %v719
      %721 = vst [vmem:[%s632 + $0x8c] sm:$0x1] %v720
      %v722 = vld [vmem:[%s632 + $0x90] sm:$0xf]
      %v723 = vsel %vm635, %v522, %v722
      %724 = vst [vmem:[%s632 + $0x90] sm:$0xf] %v723
      %725 = vst [vmem:[%s632 + $0x94] sm:$0xf] %v531
      %v726 = vld [vmem:[%s632 + $0x98] sm:$0x1]
      %v727 = vsel %vm641, %v532, %v726
      %728 = vst [vmem:[%s632 + $0x98] sm:$0x1] %v727
      %v729 = vld [vmem:[%s632 + $0x9c] sm:$0xf]
      %v730 = vsel %vm635, %v539, %v729
      %731 = vst [vmem:[%s632 + $0x9c] sm:$0xf] %v730
      %732 = vst [vmem:[%s632 + $0xa0] sm:$0xf] %v548
      %v733 = vld [vmem:[%s632 + $0xa4] sm:$0x1]
      %v734 = vsel %vm641, %v549, %v733
      %735 = vst [vmem:[%s632 + $0xa4] sm:$0x1] %v734
      %v736 = vld [vmem:[%s632 + $0xa8] sm:$0xf]
      %v737 = vsel %vm635, %v556, %v736
      %738 = vst [vmem:[%s632 + $0xa8] sm:$0xf] %v737
      %739 = vst [vmem:[%s632 + $0xac] sm:$0xf] %v565
      %v740 = vld [vmem:[%s632 + $0xb0] sm:$0x1]
      %v741 = vsel %vm641, %v566, %v740
      %742 = vst [vmem:[%s632 + $0xb0] sm:$0x1] %v741
      %v743 = vld [vmem:[%s632 + $0xb4] sm:$0xf]
      %v744 = vsel %vm635, %v573, %v743
      %745 = vst [vmem:[%s632 + $0xb4] sm:$0xf] %v744
      %746 = vst [vmem:[%s632 + $0xb8] sm:$0xf] %v582
      %v747 = vld [vmem:[%s632 + $0xbc] sm:$0x1]
      %v748 = vsel %vm641, %v583, %v747
      %749 = vst [vmem:[%s632 + $0xbc] sm:$0x1] %v748
      %v750 = vld [vmem:[#allocation2] sm:$0xf]
      %v751 = vld [vmem:[#allocation2 + $0x4] sm:$0xf]
      %v752 = vld [vmem:[#allocation2 + $0xc] sm:$0xf]
      %v753 = vld [vmem:[#allocation2 + $0x10] sm:$0xf]
      %v754 = vld [vmem:[#allocation2 + $0x18] sm:$0xf]
      %v755 = vld [vmem:[#allocation2 + $0x1c] sm:$0xf]
      %v756 = vld [vmem:[#allocation2 + $0x24] sm:$0xf]
      %v757 = vld [vmem:[#allocation2 + $0x28] sm:$0xf]
      %v758 = vld [vmem:[#allocation2 + $0x30] sm:$0xf]
      %v759 = vld [vmem:[#allocation2 + $0x34] sm:$0xf]
      %v760 = vld [vmem:[#allocation2 + $0x3c] sm:$0xf]
      %v761 = vld [vmem:[#allocation2 + $0x40] sm:$0xf]
      %v762 = vld [vmem:[#allocation2 + $0x48] sm:$0xf]
      %v763 = vld [vmem:[#allocation2 + $0x4c] sm:$0xf]
      %v764 = vld [vmem:[#allocation2 + $0x54] sm:$0xf]
      %v765 = vld [vmem:[#allocation2 + $0x58] sm:$0xf]
      %v766 = vld [vmem:[#allocation2 + $0x60] sm:$0xf]
      %v767 = vld [vmem:[#allocation2 + $0x64] sm:$0xf]
      %v768 = vld [vmem:[#allocation2 + $0x6c] sm:$0xf]
      %v769 = vld [vmem:[#allocation2 + $0x70] sm:$0xf]
      %v770 = vld [vmem:[#allocation2 + $0x78] sm:$0xf]
      %v771 = vld [vmem:[#allocation2 + $0x7c] sm:$0xf]
      %v772 = vld [vmem:[#allocation2 + $0x84] sm:$0xf]
      %v773 = vld [vmem:[#allocation2 + $0x88] sm:$0xf]
      %v774 = vld [vmem:[#allocation2 + $0x90] sm:$0xf]
      %v775 = vld [vmem:[#allocation2 + $0x94] sm:$0xf]
      %v776 = vld [vmem:[#allocation2 + $0x9c] sm:$0xf]
      %v777 = vld [vmem:[#allocation2 + $0xa0] sm:$0xf]
      %v778 = vld [vmem:[#allocation2 + $0xa8] sm:$0xf]
      %v779 = vld [vmem:[#allocation2 + $0xac] sm:$0xf]
      %v780 = vld [vmem:[#allocation2 + $0xb4] sm:$0xf]
      %v781 = vld [vmem:[#allocation2 + $0xb8] sm:$0xf]
      %v782 = vld [vmem:[%s210] sm:$0xf]
      %v783 = vld [vmem:[%s210 + $0x4] sm:$0xf]
      %v784 = vld [vmem:[%s210 + $0x8] sm:$0xf]
      %v785 = vld [vmem:[%s210 + $0xc] sm:$0xf]
      %v786 = vld [vmem:[%s210 + $0x10] sm:$0xf]
      %v787 = vld [vmem:[%s210 + $0x14] sm:$0xf]
      %v788 = vld [vmem:[%s210 + $0x18] sm:$0xf]
      %v789 = vld [vmem:[%s210 + $0x1c] sm:$0xf]
      %v790 = vld [vmem:[%s210 + $0x20] sm:$0xf]
      %v791 = vld [vmem:[%s210 + $0x24] sm:$0xf]
      %v792 = vld [vmem:[%s210 + $0x28] sm:$0xf]
      %v793 = vld [vmem:[%s210 + $0x2c] sm:$0xf]
      %v794 = vld [vmem:[%s210 + $0x30] sm:$0xf]
      %v795 = vld [vmem:[%s210 + $0x34] sm:$0xf]
      %v796 = vld [vmem:[%s210 + $0x38] sm:$0xf]
      %v797 = vld [vmem:[%s210 + $0x3c] sm:$0xf]
      %v798 = vld [vmem:[#allocation2 + $0x8] sm:$0x1]
      %v799 = vld [vmem:[#allocation2 + $0x14] sm:$0x1]
      %v800 = vld [vmem:[#allocation2 + $0x20] sm:$0x1]
      %v801 = vld [vmem:[#allocation2 + $0x2c] sm:$0x1]
      %v802 = vld [vmem:[#allocation2 + $0x38] sm:$0x1]
      %v803 = vld [vmem:[#allocation2 + $0x44] sm:$0x1]
      %v804 = vld [vmem:[#allocation2 + $0x50] sm:$0x1]
      %v805 = vld [vmem:[#allocation2 + $0x5c] sm:$0x1]
      %v806 = vld [vmem:[#allocation2 + $0x68] sm:$0x1]
      %v807 = vld [vmem:[#allocation2 + $0x74] sm:$0x1]
      %v808 = vld [vmem:[#allocation2 + $0x80] sm:$0x1]
      %v809 = vld [vmem:[#allocation2 + $0x8c] sm:$0x1]
      %v810 = vld [vmem:[#allocation2 + $0x98] sm:$0x1]
      %v811 = vld [vmem:[#allocation2 + $0xa4] sm:$0x1]
      %v812 = vld [vmem:[#allocation2 + $0xb0] sm:$0x1]
      %v813 = vld [vmem:[#allocation2 + $0xbc] sm:$0x1]
      %vm814 = vsmask.f32 3328
      %vm815 = vsmask.f32 7440
      %vm816 = vmor %vm814, %vm815
      %v818 = vshrl.u32 %v750, 16
      %v820 = vrot.slane %v818, 4
      %v821 = vshll.u32 %v750, 16
      %v823 = vrot.slane %v821, 5
      %v824 = vor.u32 %v820, %v823
      %v825 = vrot.slane %v824, 4
      %v827 = vshll.u32 %v751, 16
      %v829 = vrot.slane %v827, 5
      %v830 = vsel %vm816, %v825, %v829
      %v831 = vshrl.u32 %v751, 16
      %v833 = vrot.slane %v831, 4
      %v834 = vor.u32 %v833, %v829
      %v835 = vrot.slane %v834, 4
      %v837 = vshll.u32 %v798, 16
      %v839 = vrot.slane %v837, 5
      %v840 = vsel %vm816, %v835, %v839
      %v842 = vshrl.u32 %v752, 16
      %v844 = vrot.slane %v842, 4
      %v845 = vshll.u32 %v752, 16
      %v847 = vrot.slane %v845, 5
      %v848 = vor.u32 %v844, %v847
      %v849 = vrot.slane %v848, 4
      %v851 = vshll.u32 %v753, 16
      %v853 = vrot.slane %v851, 5
      %v854 = vsel %vm816, %v849, %v853
      %v855 = vshrl.u32 %v753, 16
      %v857 = vrot.slane %v855, 4
      %v858 = vor.u32 %v857, %v853
      %v859 = vrot.slane %v858, 4
      %v861 = vshll.u32 %v799, 16
      %v863 = vrot.slane %v861, 5
      %v864 = vsel %vm816, %v859, %v863
      %v866 = vshrl.u32 %v754, 16
      %v868 = vrot.slane %v866, 4
      %v869 = vshll.u32 %v754, 16
      %v871 = vrot.slane %v869, 5
      %v872 = vor.u32 %v868, %v871
      %v873 = vrot.slane %v872, 4
      %v875 = vshll.u32 %v755, 16
      %v877 = vrot.slane %v875, 5
      %v878 = vsel %vm816, %v873, %v877
      %v879 = vshrl.u32 %v755, 16
      %v881 = vrot.slane %v879, 4
      %v882 = vor.u32 %v881, %v877
      %v883 = vrot.slane %v882, 4
      %v885 = vshll.u32 %v800, 16
      %v887 = vrot.slane %v885, 5
      %v888 = vsel %vm816, %v883, %v887
      %v890 = vshrl.u32 %v756, 16
      %v892 = vrot.slane %v890, 4
      %v893 = vshll.u32 %v756, 16
      %v895 = vrot.slane %v893, 5
      %v896 = vor.u32 %v892, %v895
      %v897 = vrot.slane %v896, 4
      %v899 = vshll.u32 %v757, 16
      %v901 = vrot.slane %v899, 5
      %v902 = vsel %vm816, %v897, %v901
      %v903 = vshrl.u32 %v757, 16
      %v905 = vrot.slane %v903, 4
      %v906 = vor.u32 %v905, %v901
      %v907 = vrot.slane %v906, 4
      %v909 = vshll.u32 %v801, 16
      %v911 = vrot.slane %v909, 5
      %v912 = vsel %vm816, %v907, %v911
      %v914 = vshrl.u32 %v758, 16
      %v916 = vrot.slane %v914, 4
      %v917 = vshll.u32 %v758, 16
      %v919 = vrot.slane %v917, 5
      %v920 = vor.u32 %v916, %v919
      %v921 = vrot.slane %v920, 4
      %v923 = vshll.u32 %v759, 16
      %v925 = vrot.slane %v923, 5
      %v926 = vsel %vm816, %v921, %v925
      %v927 = vshrl.u32 %v759, 16
      %v929 = vrot.slane %v927, 4
      %v930 = vor.u32 %v929, %v925
      %v931 = vrot.slane %v930, 4
      %v933 = vshll.u32 %v802, 16
      %v935 = vrot.slane %v933, 5
      %v936 = vsel %vm816, %v931, %v935
      %v938 = vshrl.u32 %v760, 16
      %v940 = vrot.slane %v938, 4
      %v941 = vshll.u32 %v760, 16
      %v943 = vrot.slane %v941, 5
      %v944 = vor.u32 %v940, %v943
      %v945 = vrot.slane %v944, 4
      %v947 = vshll.u32 %v761, 16
      %v949 = vrot.slane %v947, 5
      %v950 = vsel %vm816, %v945, %v949
      %v951 = vshrl.u32 %v761, 16
      %v953 = vrot.slane %v951, 4
      %v954 = vor.u32 %v953, %v949
      %v955 = vrot.slane %v954, 4
      %v957 = vshll.u32 %v803, 16
      %v959 = vrot.slane %v957, 5
      %v960 = vsel %vm816, %v955, %v959
      %v962 = vshrl.u32 %v762, 16
      %v964 = vrot.slane %v962, 4
      %v965 = vshll.u32 %v762, 16
      %v967 = vrot.slane %v965, 5
      %v968 = vor.u32 %v964, %v967
      %v969 = vrot.slane %v968, 4
      %v971 = vshll.u32 %v763, 16
      %v973 = vrot.slane %v971, 5
      %v974 = vsel %vm816, %v969, %v973
      %v975 = vshrl.u32 %v763, 16
      %v977 = vrot.slane %v975, 4
      %v978 = vor.u32 %v977, %v973
      %v979 = vrot.slane %v978, 4
      %v981 = vshll.u32 %v804, 16
      %v983 = vrot.slane %v981, 5
      %v984 = vsel %vm816, %v979, %v983
      %v986 = vshrl.u32 %v764, 16
      %v988 = vrot.slane %v986, 4
      %v989 = vshll.u32 %v764, 16
      %v991 = vrot.slane %v989, 5
      %v992 = vor.u32 %v988, %v991
      %v993 = vrot.slane %v992, 4
      %v995 = vshll.u32 %v765, 16
      %v997 = vrot.slane %v995, 5
      %v998 = vsel %vm816, %v993, %v997
      %v999 = vshrl.u32 %v765, 16
      %v1001 = vrot.slane %v999, 4
      %v1002 = vor.u32 %v1001, %v997
      %v1003 = vrot.slane %v1002, 4
      %v1005 = vshll.u32 %v805, 16
      %v1007 = vrot.slane %v1005, 5
      %v1008 = vsel %vm816, %v1003, %v1007
      %v1010 = vshrl.u32 %v766, 16
      %v1012 = vrot.slane %v1010, 4
      %v1013 = vshll.u32 %v766, 16
      %v1015 = vrot.slane %v1013, 5
      %v1016 = vor.u32 %v1012, %v1015
      %v1017 = vrot.slane %v1016, 4
      %v1019 = vshll.u32 %v767, 16
      %v1021 = vrot.slane %v1019, 5
      %v1022 = vsel %vm816, %v1017, %v1021
      %v1023 = vshrl.u32 %v767, 16
      %v1025 = vrot.slane %v1023, 4
      %v1026 = vor.u32 %v1025, %v1021
      %v1027 = vrot.slane %v1026, 4
      %v1029 = vshll.u32 %v806, 16
      %v1031 = vrot.slane %v1029, 5
      %v1032 = vsel %vm816, %v1027, %v1031
      %v1034 = vshrl.u32 %v768, 16
      %v1036 = vrot.slane %v1034, 4
      %v1037 = vshll.u32 %v768, 16
      %v1039 = vrot.slane %v1037, 5
      %v1040 = vor.u32 %v1036, %v1039
      %v1041 = vrot.slane %v1040, 4
      %v1043 = vshll.u32 %v769, 16
      %v1045 = vrot.slane %v1043, 5
      %v1046 = vsel %vm816, %v1041, %v1045
      %v1047 = vshrl.u32 %v769, 16
      %v1049 = vrot.slane %v1047, 4
      %v1050 = vor.u32 %v1049, %v1045
      %v1051 = vrot.slane %v1050, 4
      %v1053 = vshll.u32 %v807, 16
      %v1055 = vrot.slane %v1053, 5
      %v1056 = vsel %vm816, %v1051, %v1055
      %v1058 = vshrl.u32 %v770, 16
      %v1060 = vrot.slane %v1058, 4
      %v1061 = vshll.u32 %v770, 16
      %v1063 = vrot.slane %v1061, 5
      %v1064 = vor.u32 %v1060, %v1063
      %v1065 = vrot.slane %v1064, 4
      %v1067 = vshll.u32 %v771, 16
      %v1069 = vrot.slane %v1067, 5
      %v1070 = vsel %vm816, %v1065, %v1069
      %v1071 = vshrl.u32 %v771, 16
      %v1073 = vrot.slane %v1071, 4
      %v1074 = vor.u32 %v1073, %v1069
      %v1075 = vrot.slane %v1074, 4
      %v1077 = vshll.u32 %v808, 16
      %v1079 = vrot.slane %v1077, 5
      %v1080 = vsel %vm816, %v1075, %v1079
      %v1082 = vshrl.u32 %v772, 16
      %v1084 = vrot.slane %v1082, 4
      %v1085 = vshll.u32 %v772, 16
      %v1087 = vrot.slane %v1085, 5
      %v1088 = vor.u32 %v1084, %v1087
      %v1089 = vrot.slane %v1088, 4
      %v1091 = vshll.u32 %v773, 16
      %v1093 = vrot.slane %v1091, 5
      %v1094 = vsel %vm816, %v1089, %v1093
      %v1095 = vshrl.u32 %v773, 16
      %v1097 = vrot.slane %v1095, 4
      %v1098 = vor.u32 %v1097, %v1093
      %v1099 = vrot.slane %v1098, 4
      %v1101 = vshll.u32 %v809, 16
      %v1103 = vrot.slane %v1101, 5
      %v1104 = vsel %vm816, %v1099, %v1103
      %v1106 = vshrl.u32 %v774, 16
      %v1108 = vrot.slane %v1106, 4
      %v1109 = vshll.u32 %v774, 16
      %v1111 = vrot.slane %v1109, 5
      %v1112 = vor.u32 %v1108, %v1111
      %v1113 = vrot.slane %v1112, 4
      %v1115 = vshll.u32 %v775, 16
      %v1117 = vrot.slane %v1115, 5
      %v1118 = vsel %vm816, %v1113, %v1117
      %v1119 = vshrl.u32 %v775, 16
      %v1121 = vrot.slane %v1119, 4
      %v1122 = vor.u32 %v1121, %v1117
      %v1123 = vrot.slane %v1122, 4
      %v1125 = vshll.u32 %v810, 16
      %v1127 = vrot.slane %v1125, 5
      %v1128 = vsel %vm816, %v1123, %v1127
      %v1130 = vshrl.u32 %v776, 16
      %v1132 = vrot.slane %v1130, 4
      %v1133 = vshll.u32 %v776, 16
      %v1135 = vrot.slane %v1133, 5
      %v1136 = vor.u32 %v1132, %v1135
      %v1137 = vrot.slane %v1136, 4
      %v1139 = vshll.u32 %v777, 16
      %v1141 = vrot.slane %v1139, 5
      %v1142 = vsel %vm816, %v1137, %v1141
      %v1143 = vshrl.u32 %v777, 16
      %v1145 = vrot.slane %v1143, 4
      %v1146 = vor.u32 %v1145, %v1141
      %v1147 = vrot.slane %v1146, 4
      %v1149 = vshll.u32 %v811, 16
      %v1151 = vrot.slane %v1149, 5
      %v1152 = vsel %vm816, %v1147, %v1151
      %v1154 = vshrl.u32 %v778, 16
      %v1156 = vrot.slane %v1154, 4
      %v1157 = vshll.u32 %v778, 16
      %v1159 = vrot.slane %v1157, 5
      %v1160 = vor.u32 %v1156, %v1159
      %v1161 = vrot.slane %v1160, 4
      %v1163 = vshll.u32 %v779, 16
      %v1165 = vrot.slane %v1163, 5
      %v1166 = vsel %vm816, %v1161, %v1165
      %v1167 = vshrl.u32 %v779, 16
      %v1169 = vrot.slane %v1167, 4
      %v1170 = vor.u32 %v1169, %v1165
      %v1171 = vrot.slane %v1170, 4
      %v1173 = vshll.u32 %v812, 16
      %v1175 = vrot.slane %v1173, 5
      %v1176 = vsel %vm816, %v1171, %v1175
      %v1178 = vshrl.u32 %v780, 16
      %v1180 = vrot.slane %v1178, 4
      %v1181 = vshll.u32 %v780, 16
      %v1183 = vrot.slane %v1181, 5
      %v1184 = vor.u32 %v1180, %v1183
      %v1185 = vrot.slane %v1184, 4
      %v1187 = vshll.u32 %v781, 16
      %v1189 = vrot.slane %v1187, 5
      %v1190 = vsel %vm816, %v1185, %v1189
      %v1191 = vshrl.u32 %v781, 16
      %v1193 = vrot.slane %v1191, 4
      %v1194 = vor.u32 %v1193, %v1189
      %v1195 = vrot.slane %v1194, 4
      %v1197 = vshll.u32 %v813, 16
      %v1199 = vrot.slane %v1197, 5
      %v1200 = vsel %vm816, %v1195, %v1199
      %s1201 = scalar_lea.vmem %s210, 64
      %v1202 = vld [vmem:[%s1201] sm:$0xf]
      %v1203 = vld [vmem:[%s1201 + $0x4] sm:$0xf]
      %v1204 = vld [vmem:[%s1201 + $0x8] sm:$0xf]
      %v1205 = vld [vmem:[%s1201 + $0xc] sm:$0xf]
      %v1206 = vld [vmem:[%s1201 + $0x10] sm:$0xf]
      %v1207 = vld [vmem:[%s1201 + $0x14] sm:$0xf]
      %v1208 = vld [vmem:[%s1201 + $0x18] sm:$0xf]
      %v1209 = vld [vmem:[%s1201 + $0x1c] sm:$0xf]
      %v1210 = vld [vmem:[%s1201 + $0x20] sm:$0xf]
      %v1211 = vld [vmem:[%s1201 + $0x24] sm:$0xf]
      %v1212 = vld [vmem:[%s1201 + $0x28] sm:$0xf]
      %v1213 = vld [vmem:[%s1201 + $0x2c] sm:$0xf]
      %v1214 = vld [vmem:[%s1201 + $0x30] sm:$0xf]
      %v1215 = vld [vmem:[%s1201 + $0x34] sm:$0xf]
      %v1216 = vld [vmem:[%s1201 + $0x38] sm:$0xf]
      %v1217 = vld [vmem:[%s1201 + $0x3c] sm:$0xf]
      %v1218 = vunpack.c.l.b16 %v830
      %v1219 = vunpack.c.l.b16 %v840
      %v1220 = vunpack.c.l.b16 %v854
      %v1221 = vunpack.c.l.b16 %v864
      %v1222 = vunpack.c.l.b16 %v878
      %v1223 = vunpack.c.l.b16 %v888
      %v1224 = vunpack.c.l.b16 %v902
      %v1225 = vunpack.c.l.b16 %v912
      %v1226 = vunpack.c.l.b16 %v926
      %v1227 = vunpack.c.l.b16 %v936
      %v1228 = vunpack.c.l.b16 %v950
      %v1229 = vunpack.c.l.b16 %v960
      %v1230 = vunpack.c.l.b16 %v974
      %v1231 = vunpack.c.l.b16 %v984
      %v1232 = vunpack.c.l.b16 %v998
      %v1233 = vunpack.c.l.b16 %v1008
      %v1234 = vunpack.c.l.b16 %v1022
      %v1235 = vunpack.c.l.b16 %v1032
      %v1236 = vunpack.c.l.b16 %v1046
      %v1237 = vunpack.c.l.b16 %v1056
      %v1238 = vunpack.c.l.b16 %v1070
      %v1239 = vunpack.c.l.b16 %v1080
      %v1240 = vunpack.c.l.b16 %v1094
      %v1241 = vunpack.c.l.b16 %v1104
      %v1242 = vunpack.c.l.b16 %v1118
      %v1243 = vunpack.c.l.b16 %v1128
      %v1244 = vunpack.c.l.b16 %v1142
      %v1245 = vunpack.c.l.b16 %v1152
      %v1246 = vunpack.c.l.b16 %v1166
      %v1247 = vunpack.c.l.b16 %v1176
      %v1248 = vunpack.c.l.b16 %v1190
      %v1249 = vunpack.c.l.b16 %v1200
      %v1250 = vpack.c.b16 %v1219, %v1218
      %v1251 = vpack.c.b16 %v1221, %v1220
      %v1252 = vpack.c.b16 %v1223, %v1222
      %v1253 = vpack.c.b16 %v1225, %v1224
      %v1254 = vpack.c.b16 %v1227, %v1226
      %v1255 = vpack.c.b16 %v1229, %v1228
      %v1256 = vpack.c.b16 %v1231, %v1230
      %v1257 = vpack.c.b16 %v1233, %v1232
      %v1258 = vpack.c.b16 %v1235, %v1234
      %v1259 = vpack.c.b16 %v1237, %v1236
      %v1260 = vpack.c.b16 %v1239, %v1238
      %v1261 = vpack.c.b16 %v1241, %v1240
      %v1262 = vpack.c.b16 %v1243, %v1242
      %v1263 = vpack.c.b16 %v1245, %v1244
      %v1264 = vpack.c.b16 %v1247, %v1246
      %v1265 = vpack.c.b16 %v1249, %v1248
      %v1298 = vunpack.c.l.b16 %v1202
      %v1299 = vunpack.c.l.b16 %v1203
      %v1300 = vunpack.c.l.b16 %v1204
      %v1301 = vunpack.c.l.b16 %v1205
      %v1302 = vunpack.c.l.b16 %v1206
      %v1303 = vunpack.c.l.b16 %v1207
      %v1304 = vunpack.c.l.b16 %v1208
      %v1305 = vunpack.c.l.b16 %v1209
      %v1306 = vunpack.c.l.b16 %v1210
      %v1307 = vunpack.c.l.b16 %v1211
      %v1308 = vunpack.c.l.b16 %v1212
      %v1309 = vunpack.c.l.b16 %v1213
      %v1310 = vunpack.c.l.b16 %v1214
      %v1311 = vunpack.c.l.b16 %v1215
      %v1312 = vunpack.c.l.b16 %v1216
      %v1313 = vunpack.c.l.b16 %v1217
      %v1314 = vpack.c.b16 %v1299, %v1298
      %v1315 = vpack.c.b16 %v1301, %v1300
      %v1316 = vpack.c.b16 %v1303, %v1302
      %v1317 = vpack.c.b16 %v1305, %v1304
      %v1318 = vpack.c.b16 %v1307, %v1306
      %v1319 = vpack.c.b16 %v1309, %v1308
      %v1320 = vpack.c.b16 %v1311, %v1310
      %v1321 = vpack.c.b16 %v1313, %v1312
      %1330 = vmatprep.subr.bf16.mxu0 0
      %1331 = vmatpush1.bf16.msra.mxu0 %v1314
      %1332 = vmatprep.subr.bf16.mxu0 0
      %1333 = vmatpush1.bf16.msra.mxu0 %v1315
      %1334 = vmatprep.subr.bf16.mxu0 0
      %1335 = vmatpush1.bf16.msra.mxu0 %v1316
      %1336 = vmatprep.subr.bf16.mxu0 0
      %1337 = vmatpush1.bf16.msra.mxu0 %v1317
      %1338 = vmatprep.subr.bf16.mxu0 0
      %1339 = vmatpush1.bf16.msra.mxu0 %v1318
      %1340 = vmatprep.subr.bf16.mxu0 0
      %1341 = vmatpush1.bf16.msra.mxu0 %v1319
      %1342 = vmatprep.subr.bf16.mxu0 0
      %1343 = vmatpush1.bf16.msra.mxu0 %v1320
      %1344 = vmatprep.subr.bf16.mxu0 0
      %1345 = vmatpush1.bf16.msra.mxu0 %v1321
      %1346 = vmatprep.subr.bf16.mxu0 0
      %1347 = vmatpush1.bf16.msra.mxu0 0
      %1348 = vmatprep.subr.bf16.mxu0 0
      %1349 = vmatpush1.bf16.msra.mxu0 0
      %1350 = vmatprep.subr.bf16.mxu0 0
      %1351 = vmatpush1.bf16.msra.mxu0 0
      %1352 = vmatprep.subr.bf16.mxu0 0
      %1353 = vmatpush1.bf16.msra.mxu0 0
      %1354 = vmatprep.subr.bf16.mxu0 0
      %1355 = vmatpush1.bf16.msra.mxu0 0
      %1356 = vmatprep.subr.bf16.mxu0 0
      %1357 = vmatpush1.bf16.msra.mxu0 0
      %1358 = vmatprep.subr.bf16.mxu0 0
      %1359 = vmatpush1.bf16.msra.mxu0 0
      %1360 = vmatprep.subr.bf16.mxu0 0
      %1361 = vmatpush1.bf16.msra.mxu0 0
      %1362 = vmatprep.mubr.bf16.mxu0 0
      %1363 = vmatmul.mubr.bf16.gmra.mrb[0].mxu0 %v1250
      %v1364 = vpop.f32.mrb[0].mxu0
      %v1365 = vadd.f32 0.0, %v1364
      %v1366 = vpop.f32.mrb[0].mxu0
      %v1367 = vpop.f32.mrb[0].mxu0
      %v1368 = vadd.f32 0.0, %v1367
      %v1369 = vpop.f32.mrb[0].mxu0
      %1370 = vmatprep.mubr.bf16.mxu0 0
      %1371 = vmatmul.mubr.bf16.gmra.mrb[0].mxu0 %v1251
      %v1372 = vpop.f32.mrb[0].mxu0
      %v1373 = vadd.f32 0.0, %v1372
      %v1374 = vpop.f32.mrb[0].mxu0
      %v1375 = vpop.f32.mrb[0].mxu0
      %v1376 = vadd.f32 0.0, %v1375
      %v1377 = vpop.f32.mrb[0].mxu0
      %1378 = vmatprep.mubr.bf16.mxu0 0
      %1379 = vmatmul.mubr.bf16.gmra.mrb[0].mxu0 %v1252
      %v1380 = vpop.f32.mrb[0].mxu0
      %v1381 = vadd.f32 0.0, %v1380
      %v1382 = vpop.f32.mrb[0].mxu0
      %v1383 = vpop.f32.mrb[0].mxu0
      %v1384 = vadd.f32 0.0, %v1383
      %v1385 = vpop.f32.mrb[0].mxu0
      %1386 = vmatprep.mubr.bf16.mxu0 0
      %1387 = vmatmul.mubr.bf16.gmra.mrb[0].mxu0 %v1253
      %v1388 = vpop.f32.mrb[0].mxu0
      %v1389 = vadd.f32 0.0, %v1388
      %v1390 = vpop.f32.mrb[0].mxu0
      %v1391 = vpop.f32.mrb[0].mxu0
      %v1392 = vadd.f32 0.0, %v1391
      %v1393 = vpop.f32.mrb[0].mxu0
      %1394 = vmatprep.mubr.bf16.mxu0 0
      %1395 = vmatmul.mubr.bf16.gmra.mrb[0].mxu0 %v1254
      %v1396 = vpop.f32.mrb[0].mxu0
      %v1397 = vadd.f32 0.0, %v1396
      %v1398 = vpop.f32.mrb[0].mxu0
      %v1399 = vpop.f32.mrb[0].mxu0
      %v1400 = vadd.f32 0.0, %v1399
      %v1401 = vpop.f32.mrb[0].mxu0
      %1402 = vmatprep.mubr.bf16.mxu0 0
      %1403 = vmatmul.mubr.bf16.gmra.mrb[0].mxu0 %v1255
      %v1404 = vpop.f32.mrb[0].mxu0
      %v1405 = vadd.f32 0.0, %v1404
      %v1406 = vpop.f32.mrb[0].mxu0
      %v1407 = vpop.f32.mrb[0].mxu0
      %v1408 = vadd.f32 0.0, %v1407
      %v1409 = vpop.f32.mrb[0].mxu0
      %1410 = vmatprep.mubr.bf16.mxu0 0
      %1411 = vmatmul.mubr.bf16.gmra.mrb[0].mxu0 %v1256
      %v1412 = vpop.f32.mrb[0].mxu0
      %v1413 = vadd.f32 0.0, %v1412
      %v1414 = vpop.f32.mrb[0].mxu0
      %v1415 = vpop.f32.mrb[0].mxu0
      %v1416 = vadd.f32 0.0, %v1415
      %v1417 = vpop.f32.mrb[0].mxu0
      %1418 = vmatprep.mubr.bf16.mxu0 0
      %1419 = vmatmul.mubr.bf16.gmra.mrb[0].mxu0 %v1257
      %v1420 = vpop.f32.mrb[0].mxu0
      %v1421 = vadd.f32 0.0, %v1420
      %v1422 = vpop.f32.mrb[0].mxu0
      %v1423 = vpop.f32.mrb[0].mxu0
      %v1424 = vadd.f32 0.0, %v1423
      %v1425 = vpop.f32.mrb[0].mxu0
      %1426 = vmatprep.mubr.bf16.mxu0 0
      %1427 = vmatmul.mubr.bf16.gmra.mrb[0].mxu0 %v1258
      %v1428 = vpop.f32.mrb[0].mxu0
      %v1429 = vadd.f32 0.0, %v1428
      %v1430 = vpop.f32.mrb[0].mxu0
      %v1431 = vpop.f32.mrb[0].mxu0
      %v1432 = vadd.f32 0.0, %v1431
      %v1433 = vpop.f32.mrb[0].mxu0
      %1434 = vmatprep.mubr.bf16.mxu0 0
      %1435 = vmatmul.mubr.bf16.gmra.mrb[0].mxu0 %v1259
      %v1436 = vpop.f32.mrb[0].mxu0
      %v1437 = vadd.f32 0.0, %v1436
      %v1438 = vpop.f32.mrb[0].mxu0
      %v1439 = vpop.f32.mrb[0].mxu0
      %v1440 = vadd.f32 0.0, %v1439
      %v1441 = vpop.f32.mrb[0].mxu0
      %1442 = vmatprep.mubr.bf16.mxu0 0
      %1443 = vmatmul.mubr.bf16.gmra.mrb[0].mxu0 %v1260
      %v1444 = vpop.f32.mrb[0].mxu0
      %v1445 = vadd.f32 0.0, %v1444
      %v1446 = vpop.f32.mrb[0].mxu0
      %v1447 = vpop.f32.mrb[0].mxu0
      %v1448 = vadd.f32 0.0, %v1447
      %v1449 = vpop.f32.mrb[0].mxu0
      %1450 = vmatprep.mubr.bf16.mxu0 0
      %1451 = vmatmul.mubr.bf16.gmra.mrb[0].mxu0 %v1261
      %v1452 = vpop.f32.mrb[0].mxu0
      %v1453 = vadd.f32 0.0, %v1452
      %v1454 = vpop.f32.mrb[0].mxu0
      %v1455 = vpop.f32.mrb[0].mxu0
      %v1456 = vadd.f32 0.0, %v1455
      %v1457 = vpop.f32.mrb[0].mxu0
      %1458 = vmatprep.mubr.bf16.mxu0 0
      %1459 = vmatmul.mubr.bf16.gmra.mrb[0].mxu0 %v1262
      %v1460 = vpop.f32.mrb[0].mxu0
      %v1461 = vadd.f32 0.0, %v1460
      %v1462 = vpop.f32.mrb[0].mxu0
      %v1463 = vpop.f32.mrb[0].mxu0
      %v1464 = vadd.f32 0.0, %v1463
      %v1465 = vpop.f32.mrb[0].mxu0
      %1466 = vmatprep.mubr.bf16.mxu0 0
      %1467 = vmatmul.mubr.bf16.gmra.mrb[0].mxu0 %v1263
      %v1468 = vpop.f32.mrb[0].mxu0
      %v1469 = vadd.f32 0.0, %v1468
      %v1470 = vpop.f32.mrb[0].mxu0
      %v1471 = vpop.f32.mrb[0].mxu0
      %v1472 = vadd.f32 0.0, %v1471
      %v1473 = vpop.f32.mrb[0].mxu0
      %1474 = vmatprep.mubr.bf16.mxu0 0
      %1475 = vmatmul.mubr.bf16.gmra.mrb[0].mxu0 %v1264
      %v1476 = vpop.f32.mrb[0].mxu0
      %v1477 = vadd.f32 0.0, %v1476
      %v1478 = vpop.f32.mrb[0].mxu0
      %v1479 = vpop.f32.mrb[0].mxu0
      %v1480 = vadd.f32 0.0, %v1479
      %v1481 = vpop.f32.mrb[0].mxu0
      %1482 = vmatprep.mubr.bf16.mxu0 0
      %1483 = vmatmul.mubr.bf16.gmra.mrb[0].mxu0 %v1265
      %v1484 = vpop.f32.mrb[0].mxu0
      %v1485 = vadd.f32 0.0, %v1484
      %v1486 = vpop.f32.mrb[0].mxu0
      %v1487 = vpop.f32.mrb[0].mxu0
      %v1488 = vadd.f32 0.0, %v1487
      %v1489 = vpop.f32.mrb[0].mxu0
      %1490 = vdwg.mxu0
      %v1523 = vunpack.c.l.b16 %v750
      %v1524 = vunpack.c.l.b16 %v751
      %v1525 = vunpack.c.l.b16 %v752
      %v1526 = vunpack.c.l.b16 %v753
      %v1527 = vunpack.c.l.b16 %v754
      %v1528 = vunpack.c.l.b16 %v755
      %v1529 = vunpack.c.l.b16 %v756
      %v1530 = vunpack.c.l.b16 %v757
      %v1531 = vunpack.c.l.b16 %v758
      %v1532 = vunpack.c.l.b16 %v759
      %v1533 = vunpack.c.l.b16 %v760
      %v1534 = vunpack.c.l.b16 %v761
      %v1535 = vunpack.c.l.b16 %v762
      %v1536 = vunpack.c.l.b16 %v763
      %v1537 = vunpack.c.l.b16 %v764
      %v1538 = vunpack.c.l.b16 %v765
      %v1539 = vunpack.c.l.b16 %v766
      %v1540 = vunpack.c.l.b16 %v767
      %v1541 = vunpack.c.l.b16 %v768
      %v1542 = vunpack.c.l.b16 %v769
      %v1543 = vunpack.c.l.b16 %v770
      %v1544 = vunpack.c.l.b16 %v771
      %v1545 = vunpack.c.l.b16 %v772
      %v1546 = vunpack.c.l.b16 %v773
      %v1547 = vunpack.c.l.b16 %v774
      %v1548 = vunpack.c.l.b16 %v775
      %v1549 = vunpack.c.l.b16 %v776
      %v1550 = vunpack.c.l.b16 %v777
      %v1551 = vunpack.c.l.b16 %v778
      %v1552 = vunpack.c.l.b16 %v779
      %v1553 = vunpack.c.l.b16 %v780
      %v1554 = vunpack.c.l.b16 %v781
      %v1555 = vpack.c.b16 %v1524, %v1523
      %v1556 = vpack.c.b16 %v1526, %v1525
      %v1557 = vpack.c.b16 %v1528, %v1527
      %v1558 = vpack.c.b16 %v1530, %v1529
      %v1559 = vpack.c.b16 %v1532, %v1531
      %v1560 = vpack.c.b16 %v1534, %v1533
      %v1561 = vpack.c.b16 %v1536, %v1535
      %v1562 = vpack.c.b16 %v1538, %v1537
      %v1563 = vpack.c.b16 %v1540, %v1539
      %v1564 = vpack.c.b16 %v1542, %v1541
      %v1565 = vpack.c.b16 %v1544, %v1543
      %v1566 = vpack.c.b16 %v1546, %v1545
      %v1567 = vpack.c.b16 %v1548, %v1547
      %v1568 = vpack.c.b16 %v1550, %v1549
      %v1569 = vpack.c.b16 %v1552, %v1551
      %v1570 = vpack.c.b16 %v1554, %v1553
      %v1603 = vunpack.c.l.b16 %v782
      %v1604 = vunpack.c.l.b16 %v783
      %v1605 = vunpack.c.l.b16 %v784
      %v1606 = vunpack.c.l.b16 %v785
      %v1607 = vunpack.c.l.b16 %v786
      %v1608 = vunpack.c.l.b16 %v787
      %v1609 = vunpack.c.l.b16 %v788
      %v1610 = vunpack.c.l.b16 %v789
      %v1611 = vunpack.c.l.b16 %v790
      %v1612 = vunpack.c.l.b16 %v791
      %v1613 = vunpack.c.l.b16 %v792
      %v1614 = vunpack.c.l.b16 %v793
      %v1615 = vunpack.c.l.b16 %v794
      %v1616 = vunpack.c.l.b16 %v795
      %v1617 = vunpack.c.l.b16 %v796
      %v1618 = vunpack.c.l.b16 %v797
      %v1619 = vpack.c.b16 %v1604, %v1603
      %v1620 = vpack.c.b16 %v1606, %v1605
      %v1621 = vpack.c.b16 %v1608, %v1607
      %v1622 = vpack.c.b16 %v1610, %v1609
      %v1623 = vpack.c.b16 %v1612, %v1611
      %v1624 = vpack.c.b16 %v1614, %v1613
      %v1625 = vpack.c.b16 %v1616, %v1615
      %v1626 = vpack.c.b16 %v1618, %v1617
      %1635 = vmatprep.subr.bf16.mxu0 0
      %1636 = vmatpush1.bf16.msra.mxu0 %v1619
      %1637 = vmatprep.subr.bf16.mxu0 0
      %1638 = vmatpush1.bf16.msra.mxu0 %v1620
      %1639 = vmatprep.subr.bf16.mxu0 0
      %1640 = vmatpush1.bf16.msra.mxu0 %v1621
      %1641 = vmatprep.subr.bf16.mxu0 0
      %1642 = vmatpush1.bf16.msra.mxu0 %v1622
      %1643 = vmatprep.subr.bf16.mxu0 0
      %1644 = vmatpush1.bf16.msra.mxu0 %v1623
      %1645 = vmatprep.subr.bf16.mxu0 0
      %1646 = vmatpush1.bf16.msra.mxu0 %v1624
      %1647 = vmatprep.subr.bf16.mxu0 0
      %1648 = vmatpush1.bf16.msra.mxu0 %v1625
      %1649 = vmatprep.subr.bf16.mxu0 0
      %1650 = vmatpush1.bf16.msra.mxu0 %v1626
      %1651 = vmatprep.subr.bf16.mxu0 0
      %1652 = vmatpush1.bf16.msra.mxu0 0
      %1653 = vmatprep.subr.bf16.mxu0 0
      %1654 = vmatpush1.bf16.msra.mxu0 0
      %1655 = vmatprep.subr.bf16.mxu0 0
      %1656 = vmatpush1.bf16.msra.mxu0 0
      %1657 = vmatprep.subr.bf16.mxu0 0
      %1658 = vmatpush1.bf16.msra.mxu0 0
      %1659 = vmatprep.subr.bf16.mxu0 0
      %1660 = vmatpush1.bf16.msra.mxu0 0
      %1661 = vmatprep.subr.bf16.mxu0 0
      %1662 = vmatpush1.bf16.msra.mxu0 0
      %1663 = vmatprep.subr.bf16.mxu0 0
      %1664 = vmatpush1.bf16.msra.mxu0 0
      %1665 = vmatprep.subr.bf16.mxu0 0
      %1666 = vmatpush1.bf16.msra.mxu0 0
      %1667 = vmatprep.mubr.bf16.mxu0 0
      %1668 = vmatmul.mubr.bf16.gmra.mrb[0].mxu0 %v1555
      %v1669 = vpop.f32.mrb[0].mxu0
      %v1670 = vadd.f32 %v1365, %v1669
      %v1671 = vpop.f32.mrb[0].mxu0
      %v1672 = vpop.f32.mrb[0].mxu0
      %v1673 = vadd.f32 %v1368, %v1672
      %v1674 = vpop.f32.mrb[0].mxu0
      %1675 = vmatprep.mubr.bf16.mxu0 0
      %1676 = vmatmul.mubr.bf16.gmra.mrb[0].mxu0 %v1556
      %v1677 = vpop.f32.mrb[0].mxu0
      %v1678 = vadd.f32 %v1373, %v1677
      %v1679 = vpop.f32.mrb[0].mxu0
      %v1680 = vpop.f32.mrb[0].mxu0
      %v1681 = vadd.f32 %v1376, %v1680
      %v1682 = vpop.f32.mrb[0].mxu0
      %1683 = vmatprep.mubr.bf16.mxu0 0
      %1684 = vmatmul.mubr.bf16.gmra.mrb[0].mxu0 %v1557
      %v1685 = vpop.f32.mrb[0].mxu0
      %v1686 = vadd.f32 %v1381, %v1685
      %v1687 = vpop.f32.mrb[0].mxu0
      %v1688 = vpop.f32.mrb[0].mxu0
      %v1689 = vadd.f32 %v1384, %v1688
      %v1690 = vpop.f32.mrb[0].mxu0
      %1691 = vmatprep.mubr.bf16.mxu0 0
      %1692 = vmatmul.mubr.bf16.gmra.mrb[0].mxu0 %v1558
      %v1693 = vpop.f32.mrb[0].mxu0
      %v1694 = vadd.f32 %v1389, %v1693
      %v1695 = vpop.f32.mrb[0].mxu0
      %v1696 = vpop.f32.mrb[0].mxu0
      %v1697 = vadd.f32 %v1392, %v1696
      %v1698 = vpop.f32.mrb[0].mxu0
      %1699 = vmatprep.mubr.bf16.mxu0 0
      %1700 = vmatmul.mubr.bf16.gmra.mrb[0].mxu0 %v1559
      %v1701 = vpop.f32.mrb[0].mxu0
      %v1702 = vadd.f32 %v1397, %v1701
      %v1703 = vpop.f32.mrb[0].mxu0
      %v1704 = vpop.f32.mrb[0].mxu0
      %v1705 = vadd.f32 %v1400, %v1704
      %v1706 = vpop.f32.mrb[0].mxu0
      %1707 = vmatprep.mubr.bf16.mxu0 0
      %1708 = vmatmul.mubr.bf16.gmra.mrb[0].mxu0 %v1560
      %v1709 = vpop.f32.mrb[0].mxu0
      %v1710 = vadd.f32 %v1405, %v1709
      %v1711 = vpop.f32.mrb[0].mxu0
      %v1712 = vpop.f32.mrb[0].mxu0
      %v1713 = vadd.f32 %v1408, %v1712
      %v1714 = vpop.f32.mrb[0].mxu0
      %1715 = vmatprep.mubr.bf16.mxu0 0
      %1716 = vmatmul.mubr.bf16.gmra.mrb[0].mxu0 %v1561
      %v1717 = vpop.f32.mrb[0].mxu0
      %v1718 = vadd.f32 %v1413, %v1717
      %v1719 = vpop.f32.mrb[0].mxu0
      %v1720 = vpop.f32.mrb[0].mxu0
      %v1721 = vadd.f32 %v1416, %v1720
      %v1722 = vpop.f32.mrb[0].mxu0
      %1723 = vmatprep.mubr.bf16.mxu0 0
      %1724 = vmatmul.mubr.bf16.gmra.mrb[0].mxu0 %v1562
      %v1725 = vpop.f32.mrb[0].mxu0
      %v1726 = vadd.f32 %v1421, %v1725
      %v1727 = vpop.f32.mrb[0].mxu0
      %v1728 = vpop.f32.mrb[0].mxu0
      %v1729 = vadd.f32 %v1424, %v1728
      %v1730 = vpop.f32.mrb[0].mxu0
      %1731 = vmatprep.mubr.bf16.mxu0 0
      %1732 = vmatmul.mubr.bf16.gmra.mrb[0].mxu0 %v1563
      %v1733 = vpop.f32.mrb[0].mxu0
      %v1734 = vadd.f32 %v1429, %v1733
      %v1735 = vpop.f32.mrb[0].mxu0
      %v1736 = vpop.f32.mrb[0].mxu0
      %v1737 = vadd.f32 %v1432, %v1736
      %v1738 = vpop.f32.mrb[0].mxu0
      %1739 = vmatprep.mubr.bf16.mxu0 0
      %1740 = vmatmul.mubr.bf16.gmra.mrb[0].mxu0 %v1564
      %v1741 = vpop.f32.mrb[0].mxu0
      %v1742 = vadd.f32 %v1437, %v1741
      %v1743 = vpop.f32.mrb[0].mxu0
      %v1744 = vpop.f32.mrb[0].mxu0
      %v1745 = vadd.f32 %v1440, %v1744
      %v1746 = vpop.f32.mrb[0].mxu0
      %1747 = vmatprep.mubr.bf16.mxu0 0
      %1748 = vmatmul.mubr.bf16.gmra.mrb[0].mxu0 %v1565
      %v1749 = vpop.f32.mrb[0].mxu0
      %v1750 = vadd.f32 %v1445, %v1749
      %v1751 = vpop.f32.mrb[0].mxu0
      %v1752 = vpop.f32.mrb[0].mxu0
      %v1753 = vadd.f32 %v1448, %v1752
      %v1754 = vpop.f32.mrb[0].mxu0
      %1755 = vmatprep.mubr.bf16.mxu0 0
      %1756 = vmatmul.mubr.bf16.gmra.mrb[0].mxu0 %v1566
      %v1757 = vpop.f32.mrb[0].mxu0
      %v1758 = vadd.f32 %v1453, %v1757
      %v1759 = vpop.f32.mrb[0].mxu0
      %v1760 = vpop.f32.mrb[0].mxu0
      %v1761 = vadd.f32 %v1456, %v1760
      %v1762 = vpop.f32.mrb[0].mxu0
      %1763 = vmatprep.mubr.bf16.mxu0 0
      %1764 = vmatmul.mubr.bf16.gmra.mrb[0].mxu0 %v1567
      %v1765 = vpop.f32.mrb[0].mxu0
      %v1766 = vadd.f32 %v1461, %v1765
      %v1767 = vpop.f32.mrb[0].mxu0
      %v1768 = vpop.f32.mrb[0].mxu0
      %v1769 = vadd.f32 %v1464, %v1768
      %v1770 = vpop.f32.mrb[0].mxu0
      %1771 = vmatprep.mubr.bf16.mxu0 0
      %1772 = vmatmul.mubr.bf16.gmra.mrb[0].mxu0 %v1568
      %v1773 = vpop.f32.mrb[0].mxu0
      %v1774 = vadd.f32 %v1469, %v1773
      %v1775 = vpop.f32.mrb[0].mxu0
      %v1776 = vpop.f32.mrb[0].mxu0
      %v1777 = vadd.f32 %v1472, %v1776
      %v1778 = vpop.f32.mrb[0].mxu0
      %1779 = vmatprep.mubr.bf16.mxu0 0
      %1780 = vmatmul.mubr.bf16.gmra.mrb[0].mxu0 %v1569
      %v1781 = vpop.f32.mrb[0].mxu0
      %v1782 = vadd.f32 %v1477, %v1781
      %v1783 = vpop.f32.mrb[0].mxu0
      %v1784 = vpop.f32.mrb[0].mxu0
      %v1785 = vadd.f32 %v1480, %v1784
      %v1786 = vpop.f32.mrb[0].mxu0
      %1787 = vmatprep.mubr.bf16.mxu0 0
      %1788 = vmatmul.mubr.bf16.gmra.mrb[0].mxu0 %v1570
      %v1789 = vpop.f32.mrb[0].mxu0
      %v1790 = vadd.f32 %v1485, %v1789
      %v1791 = vpop.f32.mrb[0].mxu0
      %v1792 = vpop.f32.mrb[0].mxu0
      %v1793 = vadd.f32 %v1488, %v1792
      %v1794 = vpop.f32.mrb[0].mxu0
      %1795 = vdwg.mxu0
      %v1796 = vld [vmem:[#allocation2] sm:$0xe]
      %v1797 = vld [vmem:[#allocation2 + $0xc] sm:$0xe]
      %v1798 = vld [vmem:[#allocation2 + $0x18] sm:$0xe]
      %v1799 = vld [vmem:[#allocation2 + $0x24] sm:$0xe]
      %v1800 = vld [vmem:[#allocation2 + $0x30] sm:$0xe]
      %v1801 = vld [vmem:[#allocation2 + $0x3c] sm:$0xe]
      %v1802 = vld [vmem:[#allocation2 + $0x48] sm:$0xe]
      %v1803 = vld [vmem:[#allocation2 + $0x54] sm:$0xe]
      %v1804 = vld [vmem:[#allocation2 + $0x60] sm:$0xe]
      %v1805 = vld [vmem:[#allocation2 + $0x6c] sm:$0xe]
      %v1806 = vld [vmem:[#allocation2 + $0x78] sm:$0xe]
      %v1807 = vld [vmem:[#allocation2 + $0x84] sm:$0xe]
      %v1808 = vld [vmem:[#allocation2 + $0x90] sm:$0xe]
      %v1809 = vld [vmem:[#allocation2 + $0x9c] sm:$0xe]
      %v1810 = vld [vmem:[#allocation2 + $0xa8] sm:$0xe]
      %v1811 = vld [vmem:[#allocation2 + $0xb4] sm:$0xe]
      %vm1844 = vcmask 1042432
      %vm1845 = vcmask 1046532
      %vm1846 = vmor %vm1844, %vm1845
      %v1847 = vrot.slane %v1796, 5
      %v1848 = vrot.slane %v1847, 4
      %v1849 = vrot.slane %v751, 5
      %v1850 = vsel %vm1846, %v1848, %v1849
      %v1851 = vrot.slane %v1849, 4
      %v1852 = vrot.slane %v798, 5
      %v1853 = vsel %vm1846, %v1851, %v1852
      %v1854 = vrot.slane %v1797, 5
      %v1855 = vrot.slane %v1854, 4
      %v1856 = vrot.slane %v753, 5
      %v1857 = vsel %vm1846, %v1855, %v1856
      %v1858 = vrot.slane %v1856, 4
      %v1859 = vrot.slane %v799, 5
      %v1860 = vsel %vm1846, %v1858, %v1859
      %v1861 = vrot.slane %v1798, 5
      %v1862 = vrot.slane %v1861, 4
      %v1863 = vrot.slane %v755, 5
      %v1864 = vsel %vm1846, %v1862, %v1863
      %v1865 = vrot.slane %v1863, 4
      %v1866 = vrot.slane %v800, 5
      %v1867 = vsel %vm1846, %v1865, %v1866
      %v1868 = vrot.slane %v1799, 5
      %v1869 = vrot.slane %v1868, 4
      %v1870 = vrot.slane %v757, 5
      %v1871 = vsel %vm1846, %v1869, %v1870
      %v1872 = vrot.slane %v1870, 4
      %v1873 = vrot.slane %v801, 5
      %v1874 = vsel %vm1846, %v1872, %v1873
      %v1875 = vrot.slane %v1800, 5
      %v1876 = vrot.slane %v1875, 4
      %v1877 = vrot.slane %v759, 5
      %v1878 = vsel %vm1846, %v1876, %v1877
      %v1879 = vrot.slane %v1877, 4
      %v1880 = vrot.slane %v802, 5
      %v1881 = vsel %vm1846, %v1879, %v1880
      %v1882 = vrot.slane %v1801, 5
      %v1883 = vrot.slane %v1882, 4
      %v1884 = vrot.slane %v761, 5
      %v1885 = vsel %vm1846, %v1883, %v1884
      %v1886 = vrot.slane %v1884, 4
      %v1887 = vrot.slane %v803, 5
      %v1888 = vsel %vm1846, %v1886, %v1887
      %v1889 = vrot.slane %v1802, 5
      %v1890 = vrot.slane %v1889, 4
      %v1891 = vrot.slane %v763, 5
      %v1892 = vsel %vm1846, %v1890, %v1891
      %v1893 = vrot.slane %v1891, 4
      %v1894 = vrot.slane %v804, 5
      %v1895 = vsel %vm1846, %v1893, %v1894
      %v1896 = vrot.slane %v1803, 5
      %v1897 = vrot.slane %v1896, 4
      %v1898 = vrot.slane %v765, 5
      %v1899 = vsel %vm1846, %v1897, %v1898
      %v1900 = vrot.slane %v1898, 4
      %v1901 = vrot.slane %v805, 5
      %v1902 = vsel %vm1846, %v1900, %v1901
      %v1903 = vrot.slane %v1804, 5
      %v1904 = vrot.slane %v1903, 4
      %v1905 = vrot.slane %v767, 5
      %v1906 = vsel %vm1846, %v1904, %v1905
      %v1907 = vrot.slane %v1905, 4
      %v1908 = vrot.slane %v806, 5
      %v1909 = vsel %vm1846, %v1907, %v1908
      %v1910 = vrot.slane %v1805, 5
      %v1911 = vrot.slane %v1910, 4
      %v1912 = vrot.slane %v769, 5
      %v1913 = vsel %vm1846, %v1911, %v1912
      %v1914 = vrot.slane %v1912, 4
      %v1915 = vrot.slane %v807, 5
      %v1916 = vsel %vm1846, %v1914, %v1915
      %v1917 = vrot.slane %v1806, 5
      %v1918 = vrot.slane %v1917, 4
      %v1919 = vrot.slane %v771, 5
      %v1920 = vsel %vm1846, %v1918, %v1919
      %v1921 = vrot.slane %v1919, 4
      %v1922 = vrot.slane %v808, 5
      %v1923 = vsel %vm1846, %v1921, %v1922
      %v1924 = vrot.slane %v1807, 5
      %v1925 = vrot.slane %v1924, 4
      %v1926 = vrot.slane %v773, 5
      %v1927 = vsel %vm1846, %v1925, %v1926
      %v1928 = vrot.slane %v1926, 4
      %v1929 = vrot.slane %v809, 5
      %v1930 = vsel %vm1846, %v1928, %v1929
      %v1931 = vrot.slane %v1808, 5
      %v1932 = vrot.slane %v1931, 4
      %v1933 = vrot.slane %v775, 5
      %v1934 = vsel %vm1846, %v1932, %v1933
      %v1935 = vrot.slane %v1933, 4
      %v1936 = vrot.slane %v810, 5
      %v1937 = vsel %vm1846, %v1935, %v1936
      %v1938 = vrot.slane %v1809, 5
      %v1939 = vrot.slane %v1938, 4
      %v1940 = vrot.slane %v777, 5
      %v1941 = vsel %vm1846, %v1939, %v1940
      %v1942 = vrot.slane %v1940, 4
      %v1943 = vrot.slane %v811, 5
      %v1944 = vsel %vm1846, %v1942, %v1943
      %v1945 = vrot.slane %v1810, 5
      %v1946 = vrot.slane %v1945, 4
      %v1947 = vrot.slane %v779, 5
      %v1948 = vsel %vm1846, %v1946, %v1947
      %v1949 = vrot.slane %v1947, 4
      %v1950 = vrot.slane %v812, 5
      %v1951 = vsel %vm1846, %v1949, %v1950
      %v1952 = vrot.slane %v1811, 5
      %v1953 = vrot.slane %v1952, 4
      %v1954 = vrot.slane %v781, 5
      %v1955 = vsel %vm1846, %v1953, %v1954
      %v1956 = vrot.slane %v1954, 4
      %v1957 = vrot.slane %v813, 5
      %v1958 = vsel %vm1846, %v1956, %v1957
      %s1959 = scalar_lea.vmem %s210, 128
      %v1960 = vld [vmem:[%s1959] sm:$0xf]
      %v1961 = vld [vmem:[%s1959 + $0x4] sm:$0xf]
      %v1962 = vld [vmem:[%s1959 + $0x8] sm:$0xf]
      %v1963 = vld [vmem:[%s1959 + $0xc] sm:$0xf]
      %v1964 = vld [vmem:[%s1959 + $0x10] sm:$0xf]
      %v1965 = vld [vmem:[%s1959 + $0x14] sm:$0xf]
      %v1966 = vld [vmem:[%s1959 + $0x18] sm:$0xf]
      %v1967 = vld [vmem:[%s1959 + $0x1c] sm:$0xf]
      %v1968 = vld [vmem:[%s1959 + $0x20] sm:$0xf]
      %v1969 = vld [vmem:[%s1959 + $0x24] sm:$0xf]
      %v1970 = vld [vmem:[%s1959 + $0x28] sm:$0xf]
      %v1971 = vld [vmem:[%s1959 + $0x2c] sm:$0xf]
      %v1972 = vld [vmem:[%s1959 + $0x30] sm:$0xf]
      %v1973 = vld [vmem:[%s1959 + $0x34] sm:$0xf]
      %v1974 = vld [vmem:[%s1959 + $0x38] sm:$0xf]
      %v1975 = vld [vmem:[%s1959 + $0x3c] sm:$0xf]
      %v1976 = vunpack.c.l.b16 %v1850
      %v1977 = vunpack.c.l.b16 %v1853
      %v1978 = vunpack.c.l.b16 %v1857
      %v1979 = vunpack.c.l.b16 %v1860
      %v1980 = vunpack.c.l.b16 %v1864
      %v1981 = vunpack.c.l.b16 %v1867
      %v1982 = vunpack.c.l.b16 %v1871
      %v1983 = vunpack.c.l.b16 %v1874
      %v1984 = vunpack.c.l.b16 %v1878
      %v1985 = vunpack.c.l.b16 %v1881
      %v1986 = vunpack.c.l.b16 %v1885
      %v1987 = vunpack.c.l.b16 %v1888
      %v1988 = vunpack.c.l.b16 %v1892
      %v1989 = vunpack.c.l.b16 %v1895
      %v1990 = vunpack.c.l.b16 %v1899
      %v1991 = vunpack.c.l.b16 %v1902
      %v1992 = vunpack.c.l.b16 %v1906
      %v1993 = vunpack.c.l.b16 %v1909
      %v1994 = vunpack.c.l.b16 %v1913
      %v1995 = vunpack.c.l.b16 %v1916
      %v1996 = vunpack.c.l.b16 %v1920
      %v1997 = vunpack.c.l.b16 %v1923
      %v1998 = vunpack.c.l.b16 %v1927
      %v1999 = vunpack.c.l.b16 %v1930
      %v2000 = vunpack.c.l.b16 %v1934
      %v2001 = vunpack.c.l.b16 %v1937
      %v2002 = vunpack.c.l.b16 %v1941
      %v2003 = vunpack.c.l.b16 %v1944
      %v2004 = vunpack.c.l.b16 %v1948
      %v2005 = vunpack.c.l.b16 %v1951
      %v2006 = vunpack.c.l.b16 %v1955
      %v2007 = vunpack.c.l.b16 %v1958
      %v2008 = vpack.c.b16 %v1977, %v1976
      %v2009 = vpack.c.b16 %v1979, %v1978
      %v2010 = vpack.c.b16 %v1981, %v1980
      %v2011 = vpack.c.b16 %v1983, %v1982
      %v2012 = vpack.c.b16 %v1985, %v1984
      %v2013 = vpack.c.b16 %v1987, %v1986
      %v2014 = vpack.c.b16 %v1989, %v1988
      %v2015 = vpack.c.b16 %v1991, %v1990
      %v2016 = vpack.c.b16 %v1993, %v1992
      %v2017 = vpack.c.b16 %v1995, %v1994
      %v2018 = vpack.c.b16 %v1997, %v1996
      %v2019 = vpack.c.b16 %v1999, %v1998
      %v2020 = vpack.c.b16 %v2001, %v2000
      %v2021 = vpack.c.b16 %v2003, %v2002
      %v2022 = vpack.c.b16 %v2005, %v2004
      %v2023 = vpack.c.b16 %v2007, %v2006
      %v2056 = vunpack.c.l.b16 %v1960
      %v2057 = vunpack.c.l.b16 %v1961
      %v2058 = vunpack.c.l.b16 %v1962
      %v2059 = vunpack.c.l.b16 %v1963
      %v2060 = vunpack.c.l.b16 %v1964
      %v2061 = vunpack.c.l.b16 %v1965
      %v2062 = vunpack.c.l.b16 %v1966
      %v2063 = vunpack.c.l.b16 %v1967
      %v2064 = vunpack.c.l.b16 %v1968
      %v2065 = vunpack.c.l.b16 %v1969
      %v2066 = vunpack.c.l.b16 %v1970
      %v2067 = vunpack.c.l.b16 %v1971
      %v2068 = vunpack.c.l.b16 %v1972
      %v2069 = vunpack.c.l.b16 %v1973
      %v2070 = vunpack.c.l.b16 %v1974
      %v2071 = vunpack.c.l.b16 %v1975
      %v2072 = vpack.c.b16 %v2057, %v2056
      %v2073 = vpack.c.b16 %v2059, %v2058
      %v2074 = vpack.c.b16 %v2061, %v2060
      %v2075 = vpack.c.b16 %v2063, %v2062
      %v2076 = vpack.c.b16 %v2065, %v2064
      %v2077 = vpack.c.b16 %v2067, %v2066
      %v2078 = vpack.c.b16 %v2069, %v2068
      %v2079 = vpack.c.b16 %v2071, %v2070
      %2088 = vmatprep.subr.bf16.mxu0 0
      %2089 = vmatpush1.bf16.msra.mxu0 %v2072
      %2090 = vmatprep.subr.bf16.mxu0 0
      %2091 = vmatpush1.bf16.msra.mxu0 %v2073
      %2092 = vmatprep.subr.bf16.mxu0 0
      %2093 = vmatpush1.bf16.msra.mxu0 %v2074
      %2094 = vmatprep.subr.bf16.mxu0 0
      %2095 = vmatpush1.bf16.msra.mxu0 %v2075
      %2096 = vmatprep.subr.bf16.mxu0 0
      %2097 = vmatpush1.bf16.msra.mxu0 %v2076
      %2098 = vmatprep.subr.bf16.mxu0 0
      %2099 = vmatpush1.bf16.msra.mxu0 %v2077
      %2100 = vmatprep.subr.bf16.mxu0 0
      %2101 = vmatpush1.bf16.msra.mxu0 %v2078
      %2102 = vmatprep.subr.bf16.mxu0 0
      %2103 = vmatpush1.bf16.msra.mxu0 %v2079
      %2104 = vmatprep.subr.bf16.mxu0 0
      %2105 = vmatpush1.bf16.msra.mxu0 0
      %2106 = vmatprep.subr.bf16.mxu0 0
      %2107 = vmatpush1.bf16.msra.mxu0 0
      %2108 = vmatprep.subr.bf16.mxu0 0
      %2109 = vmatpush1.bf16.msra.mxu0 0
      %2110 = vmatprep.subr.bf16.mxu0 0
      %2111 = vmatpush1.bf16.msra.mxu0 0
      %2112 = vmatprep.subr.bf16.mxu0 0
      %2113 = vmatpush1.bf16.msra.mxu0 0
      %2114 = vmatprep.subr.bf16.mxu0 0
      %2115 = vmatpush1.bf16.msra.mxu0 0
      %2116 = vmatprep.subr.bf16.mxu0 0
      %2117 = vmatpush1.bf16.msra.mxu0 0
      %2118 = vmatprep.subr.bf16.mxu0 0
      %2119 = vmatpush1.bf16.msra.mxu0 0
      %2120 = vmatprep.mubr.bf16.mxu0 0
      %2121 = vmatmul.mubr.bf16.gmra.mrb[0].mxu0 %v2008
      %v2122 = vpop.f32.mrb[0].mxu0
      %v2123 = vadd.f32 0.0, %v2122
      %v2124 = vpop.f32.mrb[0].mxu0
      %v2125 = vpop.f32.mrb[0].mxu0
      %v2126 = vadd.f32 0.0, %v2125
      %v2127 = vpop.f32.mrb[0].mxu0
      %2128 = vmatprep.mubr.bf16.mxu0 0
      %2129 = vmatmul.mubr.bf16.gmra.mrb[0].mxu0 %v2009
      %v2130 = vpop.f32.mrb[0].mxu0
      %v2131 = vadd.f32 0.0, %v2130
      %v2132 = vpop.f32.mrb[0].mxu0
      %v2133 = vpop.f32.mrb[0].mxu0
      %v2134 = vadd.f32 0.0, %v2133
      %v2135 = vpop.f32.mrb[0].mxu0
      %2136 = vmatprep.mubr.bf16.mxu0 0
      %2137 = vmatmul.mubr.bf16.gmra.mrb[0].mxu0 %v2010
      %v2138 = vpop.f32.mrb[0].mxu0
      %v2139 = vadd.f32 0.0, %v2138
      %v2140 = vpop.f32.mrb[0].mxu0
      %v2141 = vpop.f32.mrb[0].mxu0
      %v2142 = vadd.f32 0.0, %v2141
      %v2143 = vpop.f32.mrb[0].mxu0
      %2144 = vmatprep.mubr.bf16.mxu0 0
      %2145 = vmatmul.mubr.bf16.gmra.mrb[0].mxu0 %v2011
      %v2146 = vpop.f32.mrb[0].mxu0
      %v2147 = vadd.f32 0.0, %v2146
      %v2148 = vpop.f32.mrb[0].mxu0
      %v2149 = vpop.f32.mrb[0].mxu0
      %v2150 = vadd.f32 0.0, %v2149
      %v2151 = vpop.f32.mrb[0].mxu0
      %2152 = vmatprep.mubr.bf16.mxu0 0
      %2153 = vmatmul.mubr.bf16.gmra.mrb[0].mxu0 %v2012
      %v2154 = vpop.f32.mrb[0].mxu0
      %v2155 = vadd.f32 0.0, %v2154
      %v2156 = vpop.f32.mrb[0].mxu0
      %v2157 = vpop.f32.mrb[0].mxu0
      %v2158 = vadd.f32 0.0, %v2157
      %v2159 = vpop.f32.mrb[0].mxu0
      %2160 = vmatprep.mubr.bf16.mxu0 0
      %2161 = vmatmul.mubr.bf16.gmra.mrb[0].mxu0 %v2013
      %v2162 = vpop.f32.mrb[0].mxu0
      %v2163 = vadd.f32 0.0, %v2162
      %v2164 = vpop.f32.mrb[0].mxu0
      %v2165 = vpop.f32.mrb[0].mxu0
      %v2166 = vadd.f32 0.0, %v2165
      %v2167 = vpop.f32.mrb[0].mxu0
      %2168 = vmatprep.mubr.bf16.mxu0 0
      %2169 = vmatmul.mubr.bf16.gmra.mrb[0].mxu0 %v2014
      %v2170 = vpop.f32.mrb[0].mxu0
      %v2171 = vadd.f32 0.0, %v2170
      %v2172 = vpop.f32.mrb[0].mxu0
      %v2173 = vpop.f32.mrb[0].mxu0
      %v2174 = vadd.f32 0.0, %v2173
      %v2175 = vpop.f32.mrb[0].mxu0
      %2176 = vmatprep.mubr.bf16.mxu0 0
      %2177 = vmatmul.mubr.bf16.gmra.mrb[0].mxu0 %v2015
      %v2178 = vpop.f32.mrb[0].mxu0
      %v2179 = vadd.f32 0.0, %v2178
      %v2180 = vpop.f32.mrb[0].mxu0
      %v2181 = vpop.f32.mrb[0].mxu0
      %v2182 = vadd.f32 0.0, %v2181
      %v2183 = vpop.f32.mrb[0].mxu0
      %2184 = vmatprep.mubr.bf16.mxu0 0
      %2185 = vmatmul.mubr.bf16.gmra.mrb[0].mxu0 %v2016
      %v2186 = vpop.f32.mrb[0].mxu0
      %v2187 = vadd.f32 0.0, %v2186
      %v2188 = vpop.f32.mrb[0].mxu0
      %v2189 = vpop.f32.mrb[0].mxu0
      %v2190 = vadd.f32 0.0, %v2189
      %v2191 = vpop.f32.mrb[0].mxu0
      %2192 = vmatprep.mubr.bf16.mxu0 0
      %2193 = vmatmul.mubr.bf16.gmra.mrb[0].mxu0 %v2017
      %v2194 = vpop.f32.mrb[0].mxu0
      %v2195 = vadd.f32 0.0, %v2194
      %v2196 = vpop.f32.mrb[0].mxu0
      %v2197 = vpop.f32.mrb[0].mxu0
      %v2198 = vadd.f32 0.0, %v2197
      %v2199 = vpop.f32.mrb[0].mxu0
      %2200 = vmatprep.mubr.bf16.mxu0 0
      %2201 = vmatmul.mubr.bf16.gmra.mrb[0].mxu0 %v2018
      %v2202 = vpop.f32.mrb[0].mxu0
      %v2203 = vadd.f32 0.0, %v2202
      %v2204 = vpop.f32.mrb[0].mxu0
      %v2205 = vpop.f32.mrb[0].mxu0
      %v2206 = vadd.f32 0.0, %v2205
      %v2207 = vpop.f32.mrb[0].mxu0
      %2208 = vmatprep.mubr.bf16.mxu0 0
      %2209 = vmatmul.mubr.bf16.gmra.mrb[0].mxu0 %v2019
      %v2210 = vpop.f32.mrb[0].mxu0
      %v2211 = vadd.f32 0.0, %v2210
      %v2212 = vpop.f32.mrb[0].mxu0
      %v2213 = vpop.f32.mrb[0].mxu0
      %v2214 = vadd.f32 0.0, %v2213
      %v2215 = vpop.f32.mrb[0].mxu0
      %2216 = vmatprep.mubr.bf16.mxu0 0
      %2217 = vmatmul.mubr.bf16.gmra.mrb[0].mxu0 %v2020
      %v2218 = vpop.f32.mrb[0].mxu0
      %v2219 = vadd.f32 0.0, %v2218
      %v2220 = vpop.f32.mrb[0].mxu0
      %v2221 = vpop.f32.mrb[0].mxu0
      %v2222 = vadd.f32 0.0, %v2221
      %v2223 = vpop.f32.mrb[0].mxu0
      %2224 = vmatprep.mubr.bf16.mxu0 0
      %2225 = vmatmul.mubr.bf16.gmra.mrb[0].mxu0 %v2021
      %v2226 = vpop.f32.mrb[0].mxu0
      %v2227 = vadd.f32 0.0, %v2226
      %v2228 = vpop.f32.mrb[0].mxu0
      %v2229 = vpop.f32.mrb[0].mxu0
      %v2230 = vadd.f32 0.0, %v2229
      %v2231 = vpop.f32.mrb[0].mxu0
      %2232 = vmatprep.mubr.bf16.mxu0 0
      %2233 = vmatmul.mubr.bf16.gmra.mrb[0].mxu0 %v2022
      %v2234 = vpop.f32.mrb[0].mxu0
      %v2235 = vadd.f32 0.0, %v2234
      %v2236 = vpop.f32.mrb[0].mxu0
      %v2237 = vpop.f32.mrb[0].mxu0
      %v2238 = vadd.f32 0.0, %v2237
      %v2239 = vpop.f32.mrb[0].mxu0
      %2240 = vmatprep.mubr.bf16.mxu0 0
      %2241 = vmatmul.mubr.bf16.gmra.mrb[0].mxu0 %v2023
      %v2242 = vpop.f32.mrb[0].mxu0
      %v2243 = vadd.f32 0.0, %v2242
      %v2244 = vpop.f32.mrb[0].mxu0
      %v2245 = vpop.f32.mrb[0].mxu0
      %v2246 = vadd.f32 0.0, %v2245
      %v2247 = vpop.f32.mrb[0].mxu0
      %2248 = vdwg.mxu0
      %v2249 = vadd.f32 %v1670, %v2123
      %v2250 = vadd.f32 %v1673, %v2126
      %v2251 = vadd.f32 %v1678, %v2131
      %v2252 = vadd.f32 %v1681, %v2134
      %v2253 = vadd.f32 %v1686, %v2139
      %v2254 = vadd.f32 %v1689, %v2142
      %v2255 = vadd.f32 %v1694, %v2147
      %v2256 = vadd.f32 %v1697, %v2150
      %v2257 = vadd.f32 %v1702, %v2155
      %v2258 = vadd.f32 %v1705, %v2158
      %v2259 = vadd.f32 %v1710, %v2163
      %v2260 = vadd.f32 %v1713, %v2166
      %v2261 = vadd.f32 %v1718, %v2171
      %v2262 = vadd.f32 %v1721, %v2174
      %v2263 = vadd.f32 %v1726, %v2179
      %v2264 = vadd.f32 %v1729, %v2182
      %v2265 = vadd.f32 %v1734, %v2187
      %v2266 = vadd.f32 %v1737, %v2190
      %v2267 = vadd.f32 %v1742, %v2195
      %v2268 = vadd.f32 %v1745, %v2198
      %v2269 = vadd.f32 %v1750, %v2203
      %v2270 = vadd.f32 %v1753, %v2206
      %v2271 = vadd.f32 %v1758, %v2211
      %v2272 = vadd.f32 %v1761, %v2214
      %v2273 = vadd.f32 %v1766, %v2219
      %v2274 = vadd.f32 %v1769, %v2222
      %v2275 = vadd.f32 %v1774, %v2227
      %v2276 = vadd.f32 %v1777, %v2230
      %v2277 = vadd.f32 %v1782, %v2235
      %v2278 = vadd.f32 %v1785, %v2238
      %v2279 = vadd.f32 %v1790, %v2243
      %v2280 = vadd.f32 %v1793, %v2246
      %v2281 = vld [vmem:[%s632] sm:$0xf]
      %v2282 = vld [vmem:[%s632 + $0x4] sm:$0xf]
      %v2283 = vld [vmem:[%s632 + $0xc] sm:$0xf]
      %v2284 = vld [vmem:[%s632 + $0x10] sm:$0xf]
      %v2285 = vld [vmem:[%s632 + $0x18] sm:$0xf]
      %v2286 = vld [vmem:[%s632 + $0x1c] sm:$0xf]
      %v2287 = vld [vmem:[%s632 + $0x24] sm:$0xf]
      %v2288 = vld [vmem:[%s632 + $0x28] sm:$0xf]
      %v2289 = vld [vmem:[%s632 + $0x30] sm:$0xf]
      %v2290 = vld [vmem:[%s632 + $0x34] sm:$0xf]
      %v2291 = vld [vmem:[%s632 + $0x3c] sm:$0xf]
      %v2292 = vld [vmem:[%s632 + $0x40] sm:$0xf]
      %v2293 = vld [vmem:[%s632 + $0x48] sm:$0xf]
      %v2294 = vld [vmem:[%s632 + $0x4c] sm:$0xf]
      %v2295 = vld [vmem:[%s632 + $0x54] sm:$0xf]
      %v2296 = vld [vmem:[%s632 + $0x58] sm:$0xf]
      %v2297 = vld [vmem:[%s632 + $0x60] sm:$0xf]
      %v2298 = vld [vmem:[%s632 + $0x64] sm:$0xf]
      %v2299 = vld [vmem:[%s632 + $0x6c] sm:$0xf]
      %v2300 = vld [vmem:[%s632 + $0x70] sm:$0xf]
      %v2301 = vld [vmem:[%s632 + $0x78] sm:$0xf]
      %v2302 = vld [vmem:[%s632 + $0x7c] sm:$0xf]
      %v2303 = vld [vmem:[%s632 + $0x84] sm:$0xf]
      %v2304 = vld [vmem:[%s632 + $0x88] sm:$0xf]
      %v2305 = vld [vmem:[%s632 + $0x90] sm:$0xf]
      %v2306 = vld [vmem:[%s632 + $0x94] sm:$0xf]
      %v2307 = vld [vmem:[%s632 + $0x9c] sm:$0xf]
      %v2308 = vld [vmem:[%s632 + $0xa0] sm:$0xf]
      %v2309 = vld [vmem:[%s632 + $0xa8] sm:$0xf]
      %v2310 = vld [vmem:[%s632 + $0xac] sm:$0xf]
      %v2311 = vld [vmem:[%s632 + $0xb4] sm:$0xf]
      %v2312 = vld [vmem:[%s632 + $0xb8] sm:$0xf]
      %s2313 = scalar_lea.vmem %s210, 192
      %v2314 = vld [vmem:[%s2313] sm:$0xf]
      %v2315 = vld [vmem:[%s2313 + $0x4] sm:$0xf]
      %v2316 = vld [vmem:[%s2313 + $0x8] sm:$0xf]
      %v2317 = vld [vmem:[%s2313 + $0xc] sm:$0xf]
      %v2318 = vld [vmem:[%s2313 + $0x10] sm:$0xf]
      %v2319 = vld [vmem:[%s2313 + $0x14] sm:$0xf]
      %v2320 = vld [vmem:[%s2313 + $0x18] sm:$0xf]
      %v2321 = vld [vmem:[%s2313 + $0x1c] sm:$0xf]
      %v2322 = vld [vmem:[%s2313 + $0x20] sm:$0xf]
      %v2323 = vld [vmem:[%s2313 + $0x24] sm:$0xf]
      %v2324 = vld [vmem:[%s2313 + $0x28] sm:$0xf]
      %v2325 = vld [vmem:[%s2313 + $0x2c] sm:$0xf]
      %v2326 = vld [vmem:[%s2313 + $0x30] sm:$0xf]
      %v2327 = vld [vmem:[%s2313 + $0x34] sm:$0xf]
      %v2328 = vld [vmem:[%s2313 + $0x38] sm:$0xf]
      %v2329 = vld [vmem:[%s2313 + $0x3c] sm:$0xf]
      %v2362 = vunpack.c.l.b16 %v2281
      %v2363 = vunpack.c.l.b16 %v2282
      %v2364 = vunpack.c.l.b16 %v2283
      %v2365 = vunpack.c.l.b16 %v2284
      %v2366 = vunpack.c.l.b16 %v2285
      %v2367 = vunpack.c.l.b16 %v2286
      %v2368 = vunpack.c.l.b16 %v2287
      %v2369 = vunpack.c.l.b16 %v2288
      %v2370 = vunpack.c.l.b16 %v2289
      %v2371 = vunpack.c.l.b16 %v2290
      %v2372 = vunpack.c.l.b16 %v2291
      %v2373 = vunpack.c.l.b16 %v2292
      %v2374 = vunpack.c.l.b16 %v2293
      %v2375 = vunpack.c.l.b16 %v2294
      %v2376 = vunpack.c.l.b16 %v2295
      %v2377 = vunpack.c.l.b16 %v2296
      %v2378 = vunpack.c.l.b16 %v2297
      %v2379 = vunpack.c.l.b16 %v2298
      %v2380 = vunpack.c.l.b16 %v2299
      %v2381 = vunpack.c.l.b16 %v2300
      %v2382 = vunpack.c.l.b16 %v2301
      %v2383 = vunpack.c.l.b16 %v2302
      %v2384 = vunpack.c.l.b16 %v2303
      %v2385 = vunpack.c.l.b16 %v2304
      %v2386 = vunpack.c.l.b16 %v2305
      %v2387 = vunpack.c.l.b16 %v2306
      %v2388 = vunpack.c.l.b16 %v2307
      %v2389 = vunpack.c.l.b16 %v2308
      %v2390 = vunpack.c.l.b16 %v2309
      %v2391 = vunpack.c.l.b16 %v2310
      %v2392 = vunpack.c.l.b16 %v2311
      %v2393 = vunpack.c.l.b16 %v2312
      %v2394 = vpack.c.b16 %v2363, %v2362
      %v2395 = vpack.c.b16 %v2365, %v2364
      %v2396 = vpack.c.b16 %v2367, %v2366
      %v2397 = vpack.c.b16 %v2369, %v2368
      %v2398 = vpack.c.b16 %v2371, %v2370
      %v2399 = vpack.c.b16 %v2373, %v2372
      %v2400 = vpack.c.b16 %v2375, %v2374
      %v2401 = vpack.c.b16 %v2377, %v2376
      %v2402 = vpack.c.b16 %v2379, %v2378
      %v2403 = vpack.c.b16 %v2381, %v2380
      %v2404 = vpack.c.b16 %v2383, %v2382
      %v2405 = vpack.c.b16 %v2385, %v2384
      %v2406 = vpack.c.b16 %v2387, %v2386
      %v2407 = vpack.c.b16 %v2389, %v2388
      %v2408 = vpack.c.b16 %v2391, %v2390
      %v2409 = vpack.c.b16 %v2393, %v2392
      %v2442 = vunpack.c.l.b16 %v2314
      %v2443 = vunpack.c.l.b16 %v2315
      %v2444 = vunpack.c.l.b16 %v2316
      %v2445 = vunpack.c.l.b16 %v2317
      %v2446 = vunpack.c.l.b16 %v2318
      %v2447 = vunpack.c.l.b16 %v2319
      %v2448 = vunpack.c.l.b16 %v2320
      %v2449 = vunpack.c.l.b16 %v2321
      %v2450 = vunpack.c.l.b16 %v2322
      %v2451 = vunpack.c.l.b16 %v2323
      %v2452 = vunpack.c.l.b16 %v2324
      %v2453 = vunpack.c.l.b16 %v2325
      %v2454 = vunpack.c.l.b16 %v2326
      %v2455 = vunpack.c.l.b16 %v2327
      %v2456 = vunpack.c.l.b16 %v2328
      %v2457 = vunpack.c.l.b16 %v2329
      %v2458 = vpack.c.b16 %v2443, %v2442
      %v2459 = vpack.c.b16 %v2445, %v2444
      %v2460 = vpack.c.b16 %v2447, %v2446
      %v2461 = vpack.c.b16 %v2449, %v2448
      %v2462 = vpack.c.b16 %v2451, %v2450
      %v2463 = vpack.c.b16 %v2453, %v2452
      %v2464 = vpack.c.b16 %v2455, %v2454
      %v2465 = vpack.c.b16 %v2457, %v2456
      %2474 = vmatprep.subr.bf16.mxu0 0
      %2475 = vmatpush1.bf16.msra.mxu0 %v2458
      %2476 = vmatprep.subr.bf16.mxu0 0
      %2477 = vmatpush1.bf16.msra.mxu0 %v2459
      %2478 = vmatprep.subr.bf16.mxu0 0
      %2479 = vmatpush1.bf16.msra.mxu0 %v2460
      %2480 = vmatprep.subr.bf16.mxu0 0
      %2481 = vmatpush1.bf16.msra.mxu0 %v2461
      %2482 = vmatprep.subr.bf16.mxu0 0
      %2483 = vmatpush1.bf16.msra.mxu0 %v2462
      %2484 = vmatprep.subr.bf16.mxu0 0
      %2485 = vmatpush1.bf16.msra.mxu0 %v2463
      %2486 = vmatprep.subr.bf16.mxu0 0
      %2487 = vmatpush1.bf16.msra.mxu0 %v2464
      %2488 = vmatprep.subr.bf16.mxu0 0
      %2489 = vmatpush1.bf16.msra.mxu0 %v2465
      %2490 = vmatprep.subr.bf16.mxu0 0
      %2491 = vmatpush1.bf16.msra.mxu0 0
      %2492 = vmatprep.subr.bf16.mxu0 0
      %2493 = vmatpush1.bf16.msra.mxu0 0
      %2494 = vmatprep.subr.bf16.mxu0 0
      %2495 = vmatpush1.bf16.msra.mxu0 0
      %2496 = vmatprep.subr.bf16.mxu0 0
      %2497 = vmatpush1.bf16.msra.mxu0 0
      %2498 = vmatprep.subr.bf16.mxu0 0
      %2499 = vmatpush1.bf16.msra.mxu0 0
      %2500 = vmatprep.subr.bf16.mxu0 0
      %2501 = vmatpush1.bf16.msra.mxu0 0
      %2502 = vmatprep.subr.bf16.mxu0 0
      %2503 = vmatpush1.bf16.msra.mxu0 0
      %2504 = vmatprep.subr.bf16.mxu0 0
      %2505 = vmatpush1.bf16.msra.mxu0 0
      %2506 = vmatprep.mubr.bf16.mxu0 0
      %2507 = vmatmul.mubr.bf16.gmra.mrb[0].mxu0 %v2394
      %v2508 = vpop.f32.mrb[0].mxu0
      %v2509 = vadd.f32 0.0, %v2508
      %v2510 = vpop.f32.mrb[0].mxu0
      %v2511 = vpop.f32.mrb[0].mxu0
      %v2512 = vadd.f32 0.0, %v2511
      %v2513 = vpop.f32.mrb[0].mxu0
      %2514 = vmatprep.mubr.bf16.mxu0 0
      %2515 = vmatmul.mubr.bf16.gmra.mrb[0].mxu0 %v2395
      %v2516 = vpop.f32.mrb[0].mxu0
      %v2517 = vadd.f32 0.0, %v2516
      %v2518 = vpop.f32.mrb[0].mxu0
      %v2519 = vpop.f32.mrb[0].mxu0
      %v2520 = vadd.f32 0.0, %v2519
      %v2521 = vpop.f32.mrb[0].mxu0
      %2522 = vmatprep.mubr.bf16.mxu0 0
      %2523 = vmatmul.mubr.bf16.gmra.mrb[0].mxu0 %v2396
      %v2524 = vpop.f32.mrb[0].mxu0
      %v2525 = vadd.f32 0.0, %v2524
      %v2526 = vpop.f32.mrb[0].mxu0
      %v2527 = vpop.f32.mrb[0].mxu0
      %v2528 = vadd.f32 0.0, %v2527
      %v2529 = vpop.f32.mrb[0].mxu0
      %2530 = vmatprep.mubr.bf16.mxu0 0
      %2531 = vmatmul.mubr.bf16.gmra.mrb[0].mxu0 %v2397
      %v2532 = vpop.f32.mrb[0].mxu0
      %v2533 = vadd.f32 0.0, %v2532
      %v2534 = vpop.f32.mrb[0].mxu0
      %v2535 = vpop.f32.mrb[0].mxu0
      %v2536 = vadd.f32 0.0, %v2535
      %v2537 = vpop.f32.mrb[0].mxu0
      %2538 = vmatprep.mubr.bf16.mxu0 0
      %2539 = vmatmul.mubr.bf16.gmra.mrb[0].mxu0 %v2398
      %v2540 = vpop.f32.mrb[0].mxu0
      %v2541 = vadd.f32 0.0, %v2540
      %v2542 = vpop.f32.mrb[0].mxu0
      %v2543 = vpop.f32.mrb[0].mxu0
      %v2544 = vadd.f32 0.0, %v2543
      %v2545 = vpop.f32.mrb[0].mxu0
      %2546 = vmatprep.mubr.bf16.mxu0 0
      %2547 = vmatmul.mubr.bf16.gmra.mrb[0].mxu0 %v2399
      %v2548 = vpop.f32.mrb[0].mxu0
      %v2549 = vadd.f32 0.0, %v2548
      %v2550 = vpop.f32.mrb[0].mxu0
      %v2551 = vpop.f32.mrb[0].mxu0
      %v2552 = vadd.f32 0.0, %v2551
      %v2553 = vpop.f32.mrb[0].mxu0
      %2554 = vmatprep.mubr.bf16.mxu0 0
      %2555 = vmatmul.mubr.bf16.gmra.mrb[0].mxu0 %v2400
      %v2556 = vpop.f32.mrb[0].mxu0
      %v2557 = vadd.f32 0.0, %v2556
      %v2558 = vpop.f32.mrb[0].mxu0
      %v2559 = vpop.f32.mrb[0].mxu0
      %v2560 = vadd.f32 0.0, %v2559
      %v2561 = vpop.f32.mrb[0].mxu0
      %2562 = vmatprep.mubr.bf16.mxu0 0
      %2563 = vmatmul.mubr.bf16.gmra.mrb[0].mxu0 %v2401
      %v2564 = vpop.f32.mrb[0].mxu0
      %v2565 = vadd.f32 0.0, %v2564
      %v2566 = vpop.f32.mrb[0].mxu0
      %v2567 = vpop.f32.mrb[0].mxu0
      %v2568 = vadd.f32 0.0, %v2567
      %v2569 = vpop.f32.mrb[0].mxu0
      %2570 = vmatprep.mubr.bf16.mxu0 0
      %2571 = vmatmul.mubr.bf16.gmra.mrb[0].mxu0 %v2402
      %v2572 = vpop.f32.mrb[0].mxu0
      %v2573 = vadd.f32 0.0, %v2572
      %v2574 = vpop.f32.mrb[0].mxu0
      %v2575 = vpop.f32.mrb[0].mxu0
      %v2576 = vadd.f32 0.0, %v2575
      %v2577 = vpop.f32.mrb[0].mxu0
      %2578 = vmatprep.mubr.bf16.mxu0 0
      %2579 = vmatmul.mubr.bf16.gmra.mrb[0].mxu0 %v2403
      %v2580 = vpop.f32.mrb[0].mxu0
      %v2581 = vadd.f32 0.0, %v2580
      %v2582 = vpop.f32.mrb[0].mxu0
      %v2583 = vpop.f32.mrb[0].mxu0
      %v2584 = vadd.f32 0.0, %v2583
      %v2585 = vpop.f32.mrb[0].mxu0
      %2586 = vmatprep.mubr.bf16.mxu0 0
      %2587 = vmatmul.mubr.bf16.gmra.mrb[0].mxu0 %v2404
      %v2588 = vpop.f32.mrb[0].mxu0
      %v2589 = vadd.f32 0.0, %v2588
      %v2590 = vpop.f32.mrb[0].mxu0
      %v2591 = vpop.f32.mrb[0].mxu0
      %v2592 = vadd.f32 0.0, %v2591
      %v2593 = vpop.f32.mrb[0].mxu0
      %2594 = vmatprep.mubr.bf16.mxu0 0
      %2595 = vmatmul.mubr.bf16.gmra.mrb[0].mxu0 %v2405
      %v2596 = vpop.f32.mrb[0].mxu0
      %v2597 = vadd.f32 0.0, %v2596
      %v2598 = vpop.f32.mrb[0].mxu0
      %v2599 = vpop.f32.mrb[0].mxu0
      %v2600 = vadd.f32 0.0, %v2599
      %v2601 = vpop.f32.mrb[0].mxu0
      %2602 = vmatprep.mubr.bf16.mxu0 0
      %2603 = vmatmul.mubr.bf16.gmra.mrb[0].mxu0 %v2406
      %v2604 = vpop.f32.mrb[0].mxu0
      %v2605 = vadd.f32 0.0, %v2604
      %v2606 = vpop.f32.mrb[0].mxu0
      %v2607 = vpop.f32.mrb[0].mxu0
      %v2608 = vadd.f32 0.0, %v2607
      %v2609 = vpop.f32.mrb[0].mxu0
      %2610 = vmatprep.mubr.bf16.mxu0 0
      %2611 = vmatmul.mubr.bf16.gmra.mrb[0].mxu0 %v2407
      %v2612 = vpop.f32.mrb[0].mxu0
      %v2613 = vadd.f32 0.0, %v2612
      %v2614 = vpop.f32.mrb[0].mxu0
      %v2615 = vpop.f32.mrb[0].mxu0
      %v2616 = vadd.f32 0.0, %v2615
      %v2617 = vpop.f32.mrb[0].mxu0
      %2618 = vmatprep.mubr.bf16.mxu0 0
      %2619 = vmatmul.mubr.bf16.gmra.mrb[0].mxu0 %v2408
      %v2620 = vpop.f32.mrb[0].mxu0
      %v2621 = vadd.f32 0.0, %v2620
      %v2622 = vpop.f32.mrb[0].mxu0
      %v2623 = vpop.f32.mrb[0].mxu0
      %v2624 = vadd.f32 0.0, %v2623
      %v2625 = vpop.f32.mrb[0].mxu0
      %2626 = vmatprep.mubr.bf16.mxu0 0
      %2627 = vmatmul.mubr.bf16.gmra.mrb[0].mxu0 %v2409
      %v2628 = vpop.f32.mrb[0].mxu0
      %v2629 = vadd.f32 0.0, %v2628
      %v2630 = vpop.f32.mrb[0].mxu0
      %v2631 = vpop.f32.mrb[0].mxu0
      %v2632 = vadd.f32 0.0, %v2631
      %v2633 = vpop.f32.mrb[0].mxu0
      %2634 = vdwg.mxu0
      %v2635 = vadd.f32 %v2249, %v2509
      %v2636 = vadd.f32 %v2250, %v2512
      %v2637 = vadd.f32 %v2251, %v2517
      %v2638 = vadd.f32 %v2252, %v2520
      %v2639 = vadd.f32 %v2253, %v2525
      %v2640 = vadd.f32 %v2254, %v2528
      %v2641 = vadd.f32 %v2255, %v2533
      %v2642 = vadd.f32 %v2256, %v2536
      %v2643 = vadd.f32 %v2257, %v2541
      %v2644 = vadd.f32 %v2258, %v2544
      %v2645 = vadd.f32 %v2259, %v2549
      %v2646 = vadd.f32 %v2260, %v2552
      %v2647 = vadd.f32 %v2261, %v2557
      %v2648 = vadd.f32 %v2262, %v2560
      %v2649 = vadd.f32 %v2263, %v2565
      %v2650 = vadd.f32 %v2264, %v2568
      %v2651 = vadd.f32 %v2265, %v2573
      %v2652 = vadd.f32 %v2266, %v2576
      %v2653 = vadd.f32 %v2267, %v2581
      %v2654 = vadd.f32 %v2268, %v2584
      %v2655 = vadd.f32 %v2269, %v2589
      %v2656 = vadd.f32 %v2270, %v2592
      %v2657 = vadd.f32 %v2271, %v2597
      %v2658 = vadd.f32 %v2272, %v2600
      %v2659 = vadd.f32 %v2273, %v2605
      %v2660 = vadd.f32 %v2274, %v2608
      %v2661 = vadd.f32 %v2275, %v2613
      %v2662 = vadd.f32 %v2276, %v2616
      %v2663 = vadd.f32 %v2277, %v2621
      %v2664 = vadd.f32 %v2278, %v2624
      %v2665 = vadd.f32 %v2279, %v2629
      %v2666 = vadd.f32 %v2280, %v2632
      %v2667 = vld [vmem:[%s632] sm:$0xf]
      %v2668 = vld [vmem:[%s632 + $0x4] sm:$0xf]
      %v2669 = vld [vmem:[%s632 + $0x8] sm:$0x1]
      %v2670 = vld [vmem:[%s632 + $0xc] sm:$0xf]
      %v2671 = vld [vmem:[%s632 + $0x10] sm:$0xf]
      %v2672 = vld [vmem:[%s632 + $0x14] sm:$0x1]
      %v2673 = vld [vmem:[%s632 + $0x18] sm:$0xf]
      %v2674 = vld [vmem:[%s632 + $0x1c] sm:$0xf]
      %v2675 = vld [vmem:[%s632 + $0x20] sm:$0x1]
      %v2676 = vld [vmem:[%s632 + $0x24] sm:$0xf]
      %v2677 = vld [vmem:[%s632 + $0x28] sm:$0xf]
      %v2678 = vld [vmem:[%s632 + $0x2c] sm:$0x1]
      %v2679 = vld [vmem:[%s632 + $0x30] sm:$0xf]
      %v2680 = vld [vmem:[%s632 + $0x34] sm:$0xf]
      %v2681 = vld [vmem:[%s632 + $0x38] sm:$0x1]
      %v2682 = vld [vmem:[%s632 + $0x3c] sm:$0xf]
      %v2683 = vld [vmem:[%s632 + $0x40] sm:$0xf]
      %v2684 = vld [vmem:[%s632 + $0x44] sm:$0x1]
      %v2685 = vld [vmem:[%s632 + $0x48] sm:$0xf]
      %v2686 = vld [vmem:[%s632 + $0x4c] sm:$0xf]
      %v2687 = vld [vmem:[%s632 + $0x50] sm:$0x1]
      %v2688 = vld [vmem:[%s632 + $0x54] sm:$0xf]
      %v2689 = vld [vmem:[%s632 + $0x58] sm:$0xf]
      %v2690 = vld [vmem:[%s632 + $0x5c] sm:$0x1]
      %v2691 = vld [vmem:[%s632 + $0x60] sm:$0xf]
      %v2692 = vld [vmem:[%s632 + $0x64] sm:$0xf]
      %v2693 = vld [vmem:[%s632 + $0x68] sm:$0x1]
      %v2694 = vld [vmem:[%s632 + $0x6c] sm:$0xf]
      %v2695 = vld [vmem:[%s632 + $0x70] sm:$0xf]
      %v2696 = vld [vmem:[%s632 + $0x74] sm:$0x1]
      %v2697 = vld [vmem:[%s632 + $0x78] sm:$0xf]
      %v2698 = vld [vmem:[%s632 + $0x7c] sm:$0xf]
      %v2699 = vld [vmem:[%s632 + $0x80] sm:$0x1]
      %v2700 = vld [vmem:[%s632 + $0x84] sm:$0xf]
      %v2701 = vld [vmem:[%s632 + $0x88] sm:$0xf]
      %v2702 = vld [vmem:[%s632 + $0x8c] sm:$0x1]
      %v2703 = vld [vmem:[%s632 + $0x90] sm:$0xf]
      %v2704 = vld [vmem:[%s632 + $0x94] sm:$0xf]
      %v2705 = vld [vmem:[%s632 + $0x98] sm:$0x1]
      %v2706 = vld [vmem:[%s632 + $0x9c] sm:$0xf]
      %v2707 = vld [vmem:[%s632 + $0xa0] sm:$0xf]
      %v2708 = vld [vmem:[%s632 + $0xa4] sm:$0x1]
      %v2709 = vld [vmem:[%s632 + $0xa8] sm:$0xf]
      %v2710 = vld [vmem:[%s632 + $0xac] sm:$0xf]
      %v2711 = vld [vmem:[%s632 + $0xb0] sm:$0x1]
      %v2712 = vld [vmem:[%s632 + $0xb4] sm:$0xf]
      %v2713 = vld [vmem:[%s632 + $0xb8] sm:$0xf]
      %v2714 = vld [vmem:[%s632 + $0xbc] sm:$0x1]
      %v2716 = vshrl.u32 %v2667, 16
      %v2718 = vrot.slane %v2716, 4
      %v2719 = vshll.u32 %v2667, 16
      %v2721 = vrot.slane %v2719, 5
      %v2722 = vor.u32 %v2718, %v2721
      %v2723 = vrot.slane %v2722, 4
      %v2725 = vshll.u32 %v2668, 16
      %v2727 = vrot.slane %v2725, 5
      %v2728 = vsel %vm816, %v2723, %v2727
      %v2729 = vshrl.u32 %v2668, 16
      %v2731 = vrot.slane %v2729, 4
      %v2732 = vor.u32 %v2731, %v2727
      %v2733 = vrot.slane %v2732, 4
      %v2735 = vshll.u32 %v2669, 16
      %v2737 = vrot.slane %v2735, 5
      %v2738 = vsel %vm816, %v2733, %v2737
      %v2740 = vshrl.u32 %v2670, 16
      %v2742 = vrot.slane %v2740, 4
      %v2743 = vshll.u32 %v2670, 16
      %v2745 = vrot.slane %v2743, 5
      %v2746 = vor.u32 %v2742, %v2745
      %v2747 = vrot.slane %v2746, 4
      %v2749 = vshll.u32 %v2671, 16
      %v2751 = vrot.slane %v2749, 5
      %v2752 = vsel %vm816, %v2747, %v2751
      %v2753 = vshrl.u32 %v2671, 16
      %v2755 = vrot.slane %v2753, 4
      %v2756 = vor.u32 %v2755, %v2751
      %v2757 = vrot.slane %v2756, 4
      %v2759 = vshll.u32 %v2672, 16
      %v2761 = vrot.slane %v2759, 5
      %v2762 = vsel %vm816, %v2757, %v2761
      %v2764 = vshrl.u32 %v2673, 16
      %v2766 = vrot.slane %v2764, 4
      %v2767 = vshll.u32 %v2673, 16
      %v2769 = vrot.slane %v2767, 5
      %v2770 = vor.u32 %v2766, %v2769
      %v2771 = vrot.slane %v2770, 4
      %v2773 = vshll.u32 %v2674, 16
      %v2775 = vrot.slane %v2773, 5
      %v2776 = vsel %vm816, %v2771, %v2775
      %v2777 = vshrl.u32 %v2674, 16
      %v2779 = vrot.slane %v2777, 4
      %v2780 = vor.u32 %v2779, %v2775
      %v2781 = vrot.slane %v2780, 4
      %v2783 = vshll.u32 %v2675, 16
      %v2785 = vrot.slane %v2783, 5
      %v2786 = vsel %vm816, %v2781, %v2785
      %v2788 = vshrl.u32 %v2676, 16
      %v2790 = vrot.slane %v2788, 4
      %v2791 = vshll.u32 %v2676, 16
      %v2793 = vrot.slane %v2791, 5
      %v2794 = vor.u32 %v2790, %v2793
      %v2795 = vrot.slane %v2794, 4
      %v2797 = vshll.u32 %v2677, 16
      %v2799 = vrot.slane %v2797, 5
      %v2800 = vsel %vm816, %v2795, %v2799
      %v2801 = vshrl.u32 %v2677, 16
      %v2803 = vrot.slane %v2801, 4
      %v2804 = vor.u32 %v2803, %v2799
      %v2805 = vrot.slane %v2804, 4
      %v2807 = vshll.u32 %v2678, 16
      %v2809 = vrot.slane %v2807, 5
      %v2810 = vsel %vm816, %v2805, %v2809
      %v2812 = vshrl.u32 %v2679, 16
      %v2814 = vrot.slane %v2812, 4
      %v2815 = vshll.u32 %v2679, 16
      %v2817 = vrot.slane %v2815, 5
      %v2818 = vor.u32 %v2814, %v2817
      %v2819 = vrot.slane %v2818, 4
      %v2821 = vshll.u32 %v2680, 16
      %v2823 = vrot.slane %v2821, 5
      %v2824 = vsel %vm816, %v2819, %v2823
      %v2825 = vshrl.u32 %v2680, 16
      %v2827 = vrot.slane %v2825, 4
      %v2828 = vor.u32 %v2827, %v2823
      %v2829 = vrot.slane %v2828, 4
      %v2831 = vshll.u32 %v2681, 16
      %v2833 = vrot.slane %v2831, 5
      %v2834 = vsel %vm816, %v2829, %v2833
      %v2836 = vshrl.u32 %v2682, 16
      %v2838 = vrot.slane %v2836, 4
      %v2839 = vshll.u32 %v2682, 16
      %v2841 = vrot.slane %v2839, 5
      %v2842 = vor.u32 %v2838, %v2841
      %v2843 = vrot.slane %v2842, 4
      %v2845 = vshll.u32 %v2683, 16
      %v2847 = vrot.slane %v2845, 5
      %v2848 = vsel %vm816, %v2843, %v2847
      %v2849 = vshrl.u32 %v2683, 16
      %v2851 = vrot.slane %v2849, 4
      %v2852 = vor.u32 %v2851, %v2847
      %v2853 = vrot.slane %v2852, 4
      %v2855 = vshll.u32 %v2684, 16
      %v2857 = vrot.slane %v2855, 5
      %v2858 = vsel %vm816, %v2853, %v2857
      %v2860 = vshrl.u32 %v2685, 16
      %v2862 = vrot.slane %v2860, 4
      %v2863 = vshll.u32 %v2685, 16
      %v2865 = vrot.slane %v2863, 5
      %v2866 = vor.u32 %v2862, %v2865
      %v2867 = vrot.slane %v2866, 4
      %v2869 = vshll.u32 %v2686, 16
      %v2871 = vrot.slane %v2869, 5
      %v2872 = vsel %vm816, %v2867, %v2871
      %v2873 = vshrl.u32 %v2686, 16
      %v2875 = vrot.slane %v2873, 4
      %v2876 = vor.u32 %v2875, %v2871
      %v2877 = vrot.slane %v2876, 4
      %v2879 = vshll.u32 %v2687, 16
      %v2881 = vrot.slane %v2879, 5
      %v2882 = vsel %vm816, %v2877, %v2881
      %v2884 = vshrl.u32 %v2688, 16
      %v2886 = vrot.slane %v2884, 4
      %v2887 = vshll.u32 %v2688, 16
      %v2889 = vrot.slane %v2887, 5
      %v2890 = vor.u32 %v2886, %v2889
      %v2891 = vrot.slane %v2890, 4
      %v2893 = vshll.u32 %v2689, 16
      %v2895 = vrot.slane %v2893, 5
      %v2896 = vsel %vm816, %v2891, %v2895
      %v2897 = vshrl.u32 %v2689, 16
      %v2899 = vrot.slane %v2897, 4
      %v2900 = vor.u32 %v2899, %v2895
      %v2901 = vrot.slane %v2900, 4
      %v2903 = vshll.u32 %v2690, 16
      %v2905 = vrot.slane %v2903, 5
      %v2906 = vsel %vm816, %v2901, %v2905
      %v2908 = vshrl.u32 %v2691, 16
      %v2910 = vrot.slane %v2908, 4
      %v2911 = vshll.u32 %v2691, 16
      %v2913 = vrot.slane %v2911, 5
      %v2914 = vor.u32 %v2910, %v2913
      %v2915 = vrot.slane %v2914, 4
      %v2917 = vshll.u32 %v2692, 16
      %v2919 = vrot.slane %v2917, 5
      %v2920 = vsel %vm816, %v2915, %v2919
      %v2921 = vshrl.u32 %v2692, 16
      %v2923 = vrot.slane %v2921, 4
      %v2924 = vor.u32 %v2923, %v2919
      %v2925 = vrot.slane %v2924, 4
      %v2927 = vshll.u32 %v2693, 16
      %v2929 = vrot.slane %v2927, 5
      %v2930 = vsel %vm816, %v2925, %v2929
      %v2932 = vshrl.u32 %v2694, 16
      %v2934 = vrot.slane %v2932, 4
      %v2935 = vshll.u32 %v2694, 16
      %v2937 = vrot.slane %v2935, 5
      %v2938 = vor.u32 %v2934, %v2937
      %v2939 = vrot.slane %v2938, 4
      %v2941 = vshll.u32 %v2695, 16
      %v2943 = vrot.slane %v2941, 5
      %v2944 = vsel %vm816, %v2939, %v2943
      %v2945 = vshrl.u32 %v2695, 16
      %v2947 = vrot.slane %v2945, 4
      %v2948 = vor.u32 %v2947, %v2943
      %v2949 = vrot.slane %v2948, 4
      %v2951 = vshll.u32 %v2696, 16
      %v2953 = vrot.slane %v2951, 5
      %v2954 = vsel %vm816, %v2949, %v2953
      %v2956 = vshrl.u32 %v2697, 16
      %v2958 = vrot.slane %v2956, 4
      %v2959 = vshll.u32 %v2697, 16
      %v2961 = vrot.slane %v2959, 5
      %v2962 = vor.u32 %v2958, %v2961
      %v2963 = vrot.slane %v2962, 4
      %v2965 = vshll.u32 %v2698, 16
      %v2967 = vrot.slane %v2965, 5
      %v2968 = vsel %vm816, %v2963, %v2967
      %v2969 = vshrl.u32 %v2698, 16
      %v2971 = vrot.slane %v2969, 4
      %v2972 = vor.u32 %v2971, %v2967
      %v2973 = vrot.slane %v2972, 4
      %v2975 = vshll.u32 %v2699, 16
      %v2977 = vrot.slane %v2975, 5
      %v2978 = vsel %vm816, %v2973, %v2977
      %v2980 = vshrl.u32 %v2700, 16
      %v2982 = vrot.slane %v2980, 4
      %v2983 = vshll.u32 %v2700, 16
      %v2985 = vrot.slane %v2983, 5
      %v2986 = vor.u32 %v2982, %v2985
      %v2987 = vrot.slane %v2986, 4
      %v2989 = vshll.u32 %v2701, 16
      %v2991 = vrot.slane %v2989, 5
      %v2992 = vsel %vm816, %v2987, %v2991
      %v2993 = vshrl.u32 %v2701, 16
      %v2995 = vrot.slane %v2993, 4
      %v2996 = vor.u32 %v2995, %v2991
      %v2997 = vrot.slane %v2996, 4
      %v2999 = vshll.u32 %v2702, 16
      %v3001 = vrot.slane %v2999, 5
      %v3002 = vsel %vm816, %v2997, %v3001
      %v3004 = vshrl.u32 %v2703, 16
      %v3006 = vrot.slane %v3004, 4
      %v3007 = vshll.u32 %v2703, 16
      %v3009 = vrot.slane %v3007, 5
      %v3010 = vor.u32 %v3006, %v3009
      %v3011 = vrot.slane %v3010, 4
      %v3013 = vshll.u32 %v2704, 16
      %v3015 = vrot.slane %v3013, 5
      %v3016 = vsel %vm816, %v3011, %v3015
      %v3017 = vshrl.u32 %v2704, 16
      %v3019 = vrot.slane %v3017, 4
      %v3020 = vor.u32 %v3019, %v3015
      %v3021 = vrot.slane %v3020, 4
      %v3023 = vshll.u32 %v2705, 16
      %v3025 = vrot.slane %v3023, 5
      %v3026 = vsel %vm816, %v3021, %v3025
      %v3028 = vshrl.u32 %v2706, 16
      %v3030 = vrot.slane %v3028, 4
      %v3031 = vshll.u32 %v2706, 16
      %v3033 = vrot.slane %v3031, 5
      %v3034 = vor.u32 %v3030, %v3033
      %v3035 = vrot.slane %v3034, 4
      %v3037 = vshll.u32 %v2707, 16
      %v3039 = vrot.slane %v3037, 5
      %v3040 = vsel %vm816, %v3035, %v3039
      %v3041 = vshrl.u32 %v2707, 16
      %v3043 = vrot.slane %v3041, 4
      %v3044 = vor.u32 %v3043, %v3039
      %v3045 = vrot.slane %v3044, 4
      %v3047 = vshll.u32 %v2708, 16
      %v3049 = vrot.slane %v3047, 5
      %v3050 = vsel %vm816, %v3045, %v3049
      %v3052 = vshrl.u32 %v2709, 16
      %v3054 = vrot.slane %v3052, 4
      %v3055 = vshll.u32 %v2709, 16
      %v3057 = vrot.slane %v3055, 5
      %v3058 = vor.u32 %v3054, %v3057
      %v3059 = vrot.slane %v3058, 4
      %v3061 = vshll.u32 %v2710, 16
      %v3063 = vrot.slane %v3061, 5
      %v3064 = vsel %vm816, %v3059, %v3063
      %v3065 = vshrl.u32 %v2710, 16
      %v3067 = vrot.slane %v3065, 4
      %v3068 = vor.u32 %v3067, %v3063
      %v3069 = vrot.slane %v3068, 4
      %v3071 = vshll.u32 %v2711, 16
      %v3073 = vrot.slane %v3071, 5
      %v3074 = vsel %vm816, %v3069, %v3073
      %v3076 = vshrl.u32 %v2712, 16
      %v3078 = vrot.slane %v3076, 4
      %v3079 = vshll.u32 %v2712, 16
      %v3081 = vrot.slane %v3079, 5
      %v3082 = vor.u32 %v3078, %v3081
      %v3083 = vrot.slane %v3082, 4
      %v3085 = vshll.u32 %v2713, 16
      %v3087 = vrot.slane %v3085, 5
      %v3088 = vsel %vm816, %v3083, %v3087
      %v3089 = vshrl.u32 %v2713, 16
      %v3091 = vrot.slane %v3089, 4
      %v3092 = vor.u32 %v3091, %v3087
      %v3093 = vrot.slane %v3092, 4
      %v3095 = vshll.u32 %v2714, 16
      %v3097 = vrot.slane %v3095, 5
      %v3098 = vsel %vm816, %v3093, %v3097
      %s3099 = scalar_lea.vmem %s210, 256
      %v3100 = vld [vmem:[%s3099] sm:$0xf]
      %v3101 = vld [vmem:[%s3099 + $0x4] sm:$0xf]
      %v3102 = vld [vmem:[%s3099 + $0x8] sm:$0xf]
      %v3103 = vld [vmem:[%s3099 + $0xc] sm:$0xf]
      %v3104 = vld [vmem:[%s3099 + $0x10] sm:$0xf]
      %v3105 = vld [vmem:[%s3099 + $0x14] sm:$0xf]
      %v3106 = vld [vmem:[%s3099 + $0x18] sm:$0xf]
      %v3107 = vld [vmem:[%s3099 + $0x1c] sm:$0xf]
      %v3108 = vld [vmem:[%s3099 + $0x20] sm:$0xf]
      %v3109 = vld [vmem:[%s3099 + $0x24] sm:$0xf]
      %v3110 = vld [vmem:[%s3099 + $0x28] sm:$0xf]
      %v3111 = vld [vmem:[%s3099 + $0x2c] sm:$0xf]
      %v3112 = vld [vmem:[%s3099 + $0x30] sm:$0xf]
      %v3113 = vld [vmem:[%s3099 + $0x34] sm:$0xf]
      %v3114 = vld [vmem:[%s3099 + $0x38] sm:$0xf]
      %v3115 = vld [vmem:[%s3099 + $0x3c] sm:$0xf]
      %v3116 = vunpack.c.l.b16 %v2728
      %v3117 = vunpack.c.l.b16 %v2738
      %v3118 = vunpack.c.l.b16 %v2752
      %v3119 = vunpack.c.l.b16 %v2762
      %v3120 = vunpack.c.l.b16 %v2776
      %v3121 = vunpack.c.l.b16 %v2786
      %v3122 = vunpack.c.l.b16 %v2800
      %v3123 = vunpack.c.l.b16 %v2810
      %v3124 = vunpack.c.l.b16 %v2824
      %v3125 = vunpack.c.l.b16 %v2834
      %v3126 = vunpack.c.l.b16 %v2848
      %v3127 = vunpack.c.l.b16 %v2858
      %v3128 = vunpack.c.l.b16 %v2872
      %v3129 = vunpack.c.l.b16 %v2882
      %v3130 = vunpack.c.l.b16 %v2896
      %v3131 = vunpack.c.l.b16 %v2906
      %v3132 = vunpack.c.l.b16 %v2920
      %v3133 = vunpack.c.l.b16 %v2930
      %v3134 = vunpack.c.l.b16 %v2944
      %v3135 = vunpack.c.l.b16 %v2954
      %v3136 = vunpack.c.l.b16 %v2968
      %v3137 = vunpack.c.l.b16 %v2978
      %v3138 = vunpack.c.l.b16 %v2992
      %v3139 = vunpack.c.l.b16 %v3002
      %v3140 = vunpack.c.l.b16 %v3016
      %v3141 = vunpack.c.l.b16 %v3026
      %v3142 = vunpack.c.l.b16 %v3040
      %v3143 = vunpack.c.l.b16 %v3050
      %v3144 = vunpack.c.l.b16 %v3064
      %v3145 = vunpack.c.l.b16 %v3074
      %v3146 = vunpack.c.l.b16 %v3088
      %v3147 = vunpack.c.l.b16 %v3098
      %v3148 = vpack.c.b16 %v3117, %v3116
      %v3149 = vpack.c.b16 %v3119, %v3118
      %v3150 = vpack.c.b16 %v3121, %v3120
      %v3151 = vpack.c.b16 %v3123, %v3122
      %v3152 = vpack.c.b16 %v3125, %v3124
      %v3153 = vpack.c.b16 %v3127, %v3126
      %v3154 = vpack.c.b16 %v3129, %v3128
      %v3155 = vpack.c.b16 %v3131, %v3130
      %v3156 = vpack.c.b16 %v3133, %v3132
      %v3157 = vpack.c.b16 %v3135, %v3134
      %v3158 = vpack.c.b16 %v3137, %v3136
      %v3159 = vpack.c.b16 %v3139, %v3138
      %v3160 = vpack.c.b16 %v3141, %v3140
      %v3161 = vpack.c.b16 %v3143, %v3142
      %v3162 = vpack.c.b16 %v3145, %v3144
      %v3163 = vpack.c.b16 %v3147, %v3146
      %v3196 = vunpack.c.l.b16 %v3100
      %v3197 = vunpack.c.l.b16 %v3101
      %v3198 = vunpack.c.l.b16 %v3102
      %v3199 = vunpack.c.l.b16 %v3103
      %v3200 = vunpack.c.l.b16 %v3104
      %v3201 = vunpack.c.l.b16 %v3105
      %v3202 = vunpack.c.l.b16 %v3106
      %v3203 = vunpack.c.l.b16 %v3107
      %v3204 = vunpack.c.l.b16 %v3108
      %v3205 = vunpack.c.l.b16 %v3109
      %v3206 = vunpack.c.l.b16 %v3110
      %v3207 = vunpack.c.l.b16 %v3111
      %v3208 = vunpack.c.l.b16 %v3112
      %v3209 = vunpack.c.l.b16 %v3113
      %v3210 = vunpack.c.l.b16 %v3114
      %v3211 = vunpack.c.l.b16 %v3115
      %v3212 = vpack.c.b16 %v3197, %v3196
      %v3213 = vpack.c.b16 %v3199, %v3198
      %v3214 = vpack.c.b16 %v3201, %v3200
      %v3215 = vpack.c.b16 %v3203, %v3202
      %v3216 = vpack.c.b16 %v3205, %v3204
      %v3217 = vpack.c.b16 %v3207, %v3206
      %v3218 = vpack.c.b16 %v3209, %v3208
      %v3219 = vpack.c.b16 %v3211, %v3210
      %3228 = vmatprep.subr.bf16.mxu0 0
      %3229 = vmatpush1.bf16.msra.mxu0 %v3212
      %3230 = vmatprep.subr.bf16.mxu0 0
      %3231 = vmatpush1.bf16.msra.mxu0 %v3213
      %3232 = vmatprep.subr.bf16.mxu0 0
      %3233 = vmatpush1.bf16.msra.mxu0 %v3214
      %3234 = vmatprep.subr.bf16.mxu0 0
      %3235 = vmatpush1.bf16.msra.mxu0 %v3215
      %3236 = vmatprep.subr.bf16.mxu0 0
      %3237 = vmatpush1.bf16.msra.mxu0 %v3216
      %3238 = vmatprep.subr.bf16.mxu0 0
      %3239 = vmatpush1.bf16.msra.mxu0 %v3217
      %3240 = vmatprep.subr.bf16.mxu0 0
      %3241 = vmatpush1.bf16.msra.mxu0 %v3218
      %3242 = vmatprep.subr.bf16.mxu0 0
      %3243 = vmatpush1.bf16.msra.mxu0 %v3219
      %3244 = vmatprep.subr.bf16.mxu0 0
      %3245 = vmatpush1.bf16.msra.mxu0 0
      %3246 = vmatprep.subr.bf16.mxu0 0
      %3247 = vmatpush1.bf16.msra.mxu0 0
      %3248 = vmatprep.subr.bf16.mxu0 0
      %3249 = vmatpush1.bf16.msra.mxu0 0
      %3250 = vmatprep.subr.bf16.mxu0 0
      %3251 = vmatpush1.bf16.msra.mxu0 0
      %3252 = vmatprep.subr.bf16.mxu0 0
      %3253 = vmatpush1.bf16.msra.mxu0 0
      %3254 = vmatprep.subr.bf16.mxu0 0
      %3255 = vmatpush1.bf16.msra.mxu0 0
      %3256 = vmatprep.subr.bf16.mxu0 0
      %3257 = vmatpush1.bf16.msra.mxu0 0
      %3258 = vmatprep.subr.bf16.mxu0 0
      %3259 = vmatpush1.bf16.msra.mxu0 0
      %3260 = vmatprep.mubr.bf16.mxu0 0
      %3261 = vmatmul.mubr.bf16.gmra.mrb[0].mxu0 %v3148
      %v3262 = vpop.f32.mrb[0].mxu0
      %v3263 = vadd.f32 0.0, %v3262
      %v3264 = vpop.f32.mrb[0].mxu0
      %v3265 = vpop.f32.mrb[0].mxu0
      %v3266 = vadd.f32 0.0, %v3265
      %v3267 = vpop.f32.mrb[0].mxu0
      %3268 = vmatprep.mubr.bf16.mxu0 0
      %3269 = vmatmul.mubr.bf16.gmra.mrb[0].mxu0 %v3149
      %v3270 = vpop.f32.mrb[0].mxu0
      %v3271 = vadd.f32 0.0, %v3270
      %v3272 = vpop.f32.mrb[0].mxu0
      %v3273 = vpop.f32.mrb[0].mxu0
      %v3274 = vadd.f32 0.0, %v3273
      %v3275 = vpop.f32.mrb[0].mxu0
      %3276 = vmatprep.mubr.bf16.mxu0 0
      %3277 = vmatmul.mubr.bf16.gmra.mrb[0].mxu0 %v3150
      %v3278 = vpop.f32.mrb[0].mxu0
      %v3279 = vadd.f32 0.0, %v3278
      %v3280 = vpop.f32.mrb[0].mxu0
      %v3281 = vpop.f32.mrb[0].mxu0
      %v3282 = vadd.f32 0.0, %v3281
      %v3283 = vpop.f32.mrb[0].mxu0
      %3284 = vmatprep.mubr.bf16.mxu0 0
      %3285 = vmatmul.mubr.bf16.gmra.mrb[0].mxu0 %v3151
      %v3286 = vpop.f32.mrb[0].mxu0
      %v3287 = vadd.f32 0.0, %v3286
      %v3288 = vpop.f32.mrb[0].mxu0
      %v3289 = vpop.f32.mrb[0].mxu0
      %v3290 = vadd.f32 0.0, %v3289
      %v3291 = vpop.f32.mrb[0].mxu0
      %3292 = vmatprep.mubr.bf16.mxu0 0
      %3293 = vmatmul.mubr.bf16.gmra.mrb[0].mxu0 %v3152
      %v3294 = vpop.f32.mrb[0].mxu0
      %v3295 = vadd.f32 0.0, %v3294
      %v3296 = vpop.f32.mrb[0].mxu0
      %v3297 = vpop.f32.mrb[0].mxu0
      %v3298 = vadd.f32 0.0, %v3297
      %v3299 = vpop.f32.mrb[0].mxu0
      %3300 = vmatprep.mubr.bf16.mxu0 0
      %3301 = vmatmul.mubr.bf16.gmra.mrb[0].mxu0 %v3153
      %v3302 = vpop.f32.mrb[0].mxu0
      %v3303 = vadd.f32 0.0, %v3302
      %v3304 = vpop.f32.mrb[0].mxu0
      %v3305 = vpop.f32.mrb[0].mxu0
      %v3306 = vadd.f32 0.0, %v3305
      %v3307 = vpop.f32.mrb[0].mxu0
      %3308 = vmatprep.mubr.bf16.mxu0 0
      %3309 = vmatmul.mubr.bf16.gmra.mrb[0].mxu0 %v3154
      %v3310 = vpop.f32.mrb[0].mxu0
      %v3311 = vadd.f32 0.0, %v3310
      %v3312 = vpop.f32.mrb[0].mxu0
      %v3313 = vpop.f32.mrb[0].mxu0
      %v3314 = vadd.f32 0.0, %v3313
      %v3315 = vpop.f32.mrb[0].mxu0
      %3316 = vmatprep.mubr.bf16.mxu0 0
      %3317 = vmatmul.mubr.bf16.gmra.mrb[0].mxu0 %v3155
      %v3318 = vpop.f32.mrb[0].mxu0
      %v3319 = vadd.f32 0.0, %v3318
      %v3320 = vpop.f32.mrb[0].mxu0
      %v3321 = vpop.f32.mrb[0].mxu0
      %v3322 = vadd.f32 0.0, %v3321
      %v3323 = vpop.f32.mrb[0].mxu0
      %3324 = vmatprep.mubr.bf16.mxu0 0
      %3325 = vmatmul.mubr.bf16.gmra.mrb[0].mxu0 %v3156
      %v3326 = vpop.f32.mrb[0].mxu0
      %v3327 = vadd.f32 0.0, %v3326
      %v3328 = vpop.f32.mrb[0].mxu0
      %v3329 = vpop.f32.mrb[0].mxu0
      %v3330 = vadd.f32 0.0, %v3329
      %v3331 = vpop.f32.mrb[0].mxu0
      %3332 = vmatprep.mubr.bf16.mxu0 0
      %3333 = vmatmul.mubr.bf16.gmra.mrb[0].mxu0 %v3157
      %v3334 = vpop.f32.mrb[0].mxu0
      %v3335 = vadd.f32 0.0, %v3334
      %v3336 = vpop.f32.mrb[0].mxu0
      %v3337 = vpop.f32.mrb[0].mxu0
      %v3338 = vadd.f32 0.0, %v3337
      %v3339 = vpop.f32.mrb[0].mxu0
      %3340 = vmatprep.mubr.bf16.mxu0 0
      %3341 = vmatmul.mubr.bf16.gmra.mrb[0].mxu0 %v3158
      %v3342 = vpop.f32.mrb[0].mxu0
      %v3343 = vadd.f32 0.0, %v3342
      %v3344 = vpop.f32.mrb[0].mxu0
      %v3345 = vpop.f32.mrb[0].mxu0
      %v3346 = vadd.f32 0.0, %v3345
      %v3347 = vpop.f32.mrb[0].mxu0
      %3348 = vmatprep.mubr.bf16.mxu0 0
      %3349 = vmatmul.mubr.bf16.gmra.mrb[0].mxu0 %v3159
      %v3350 = vpop.f32.mrb[0].mxu0
      %v3351 = vadd.f32 0.0, %v3350
      %v3352 = vpop.f32.mrb[0].mxu0
      %v3353 = vpop.f32.mrb[0].mxu0
      %v3354 = vadd.f32 0.0, %v3353
      %v3355 = vpop.f32.mrb[0].mxu0
      %3356 = vmatprep.mubr.bf16.mxu0 0
      %3357 = vmatmul.mubr.bf16.gmra.mrb[0].mxu0 %v3160
      %v3358 = vpop.f32.mrb[0].mxu0
      %v3359 = vadd.f32 0.0, %v3358
      %v3360 = vpop.f32.mrb[0].mxu0
      %v3361 = vpop.f32.mrb[0].mxu0
      %v3362 = vadd.f32 0.0, %v3361
      %v3363 = vpop.f32.mrb[0].mxu0
      %3364 = vmatprep.mubr.bf16.mxu0 0
      %3365 = vmatmul.mubr.bf16.gmra.mrb[0].mxu0 %v3161
      %v3366 = vpop.f32.mrb[0].mxu0
      %v3367 = vadd.f32 0.0, %v3366
      %v3368 = vpop.f32.mrb[0].mxu0
      %v3369 = vpop.f32.mrb[0].mxu0
      %v3370 = vadd.f32 0.0, %v3369
      %v3371 = vpop.f32.mrb[0].mxu0
      %3372 = vmatprep.mubr.bf16.mxu0 0
      %3373 = vmatmul.mubr.bf16.gmra.mrb[0].mxu0 %v3162
      %v3374 = vpop.f32.mrb[0].mxu0
      %v3375 = vadd.f32 0.0, %v3374
      %v3376 = vpop.f32.mrb[0].mxu0
      %v3377 = vpop.f32.mrb[0].mxu0
      %v3378 = vadd.f32 0.0, %v3377
      %v3379 = vpop.f32.mrb[0].mxu0
      %3380 = vmatprep.mubr.bf16.mxu0 0
      %3381 = vmatmul.mubr.bf16.gmra.mrb[0].mxu0 %v3163
      %v3382 = vpop.f32.mrb[0].mxu0
      %v3383 = vadd.f32 0.0, %v3382
      %v3384 = vpop.f32.mrb[0].mxu0
      %v3385 = vpop.f32.mrb[0].mxu0
      %v3386 = vadd.f32 0.0, %v3385
      %v3387 = vpop.f32.mrb[0].mxu0
      %3388 = vdwg.mxu0
      %v3389 = vadd.f32 %v2635, %v3263
      %v3390 = vadd.f32 %v2636, %v3266
      %v3391 = vadd.f32 %v2637, %v3271
      %v3392 = vadd.f32 %v2638, %v3274
      %v3393 = vadd.f32 %v2639, %v3279
      %v3394 = vadd.f32 %v2640, %v3282
      %v3395 = vadd.f32 %v2641, %v3287
      %v3396 = vadd.f32 %v2642, %v3290
      %v3397 = vadd.f32 %v2643, %v3295
      %v3398 = vadd.f32 %v2644, %v3298
      %v3399 = vadd.f32 %v2645, %v3303
      %v3400 = vadd.f32 %v2646, %v3306
      %v3401 = vadd.f32 %v2647, %v3311
      %v3402 = vadd.f32 %v2648, %v3314
      %v3403 = vadd.f32 %v2649, %v3319
      %v3404 = vadd.f32 %v2650, %v3322
      %v3405 = vadd.f32 %v2651, %v3327
      %v3406 = vadd.f32 %v2652, %v3330
      %v3407 = vadd.f32 %v2653, %v3335
      %v3408 = vadd.f32 %v2654, %v3338
      %v3409 = vadd.f32 %v2655, %v3343
      %v3410 = vadd.f32 %v2656, %v3346
      %v3411 = vadd.f32 %v2657, %v3351
      %v3412 = vadd.f32 %v2658, %v3354
      %v3413 = vadd.f32 %v2659, %v3359
      %v3414 = vadd.f32 %v2660, %v3362
      %v3415 = vadd.f32 %v2661, %v3367
      %v3416 = vadd.f32 %v2662, %v3370
      %v3417 = vadd.f32 %v2663, %v3375
      %v3418 = vadd.f32 %v2664, %v3378
      %v3419 = vadd.f32 %v2665, %v3383
      %v3420 = vadd.f32 %v2666, %v3386
      %v3421 = vld [vmem:[%s632] sm:$0xe]
      %v3422 = vld [vmem:[%s632 + $0xc] sm:$0xe]
      %v3423 = vld [vmem:[%s632 + $0x18] sm:$0xe]
      %v3424 = vld [vmem:[%s632 + $0x24] sm:$0xe]
      %v3425 = vld [vmem:[%s632 + $0x30] sm:$0xe]
      %v3426 = vld [vmem:[%s632 + $0x3c] sm:$0xe]
      %v3427 = vld [vmem:[%s632 + $0x48] sm:$0xe]
      %v3428 = vld [vmem:[%s632 + $0x54] sm:$0xe]
      %v3429 = vld [vmem:[%s632 + $0x60] sm:$0xe]
      %v3430 = vld [vmem:[%s632 + $0x6c] sm:$0xe]
      %v3431 = vld [vmem:[%s632 + $0x78] sm:$0xe]
      %v3432 = vld [vmem:[%s632 + $0x84] sm:$0xe]
      %v3433 = vld [vmem:[%s632 + $0x90] sm:$0xe]
      %v3434 = vld [vmem:[%s632 + $0x9c] sm:$0xe]
      %v3435 = vld [vmem:[%s632 + $0xa8] sm:$0xe]
      %v3436 = vld [vmem:[%s632 + $0xb4] sm:$0xe]
      %v3485 = vrot.slane %v3421, 5
      %v3486 = vrot.slane %v3485, 4
      %v3487 = vrot.slane %v2668, 5
      %v3488 = vsel %vm1846, %v3486, %v3487
      %v3489 = vrot.slane %v3487, 4
      %v3490 = vrot.slane %v2669, 5
      %v3491 = vsel %vm1846, %v3489, %v3490
      %v3492 = vrot.slane %v3422, 5
      %v3493 = vrot.slane %v3492, 4
      %v3494 = vrot.slane %v2671, 5
      %v3495 = vsel %vm1846, %v3493, %v3494
      %v3496 = vrot.slane %v3494, 4
      %v3497 = vrot.slane %v2672, 5
      %v3498 = vsel %vm1846, %v3496, %v3497
      %v3499 = vrot.slane %v3423, 5
      %v3500 = vrot.slane %v3499, 4
      %v3501 = vrot.slane %v2674, 5
      %v3502 = vsel %vm1846, %v3500, %v3501
      %v3503 = vrot.slane %v3501, 4
      %v3504 = vrot.slane %v2675, 5
      %v3505 = vsel %vm1846, %v3503, %v3504
      %v3506 = vrot.slane %v3424, 5
      %v3507 = vrot.slane %v3506, 4
      %v3508 = vrot.slane %v2677, 5
      %v3509 = vsel %vm1846, %v3507, %v3508
      %v3510 = vrot.slane %v3508, 4
      %v3511 = vrot.slane %v2678, 5
      %v3512 = vsel %vm1846, %v3510, %v3511
      %v3513 = vrot.slane %v3425, 5
      %v3514 = vrot.slane %v3513, 4
      %v3515 = vrot.slane %v2680, 5
      %v3516 = vsel %vm1846, %v3514, %v3515
      %v3517 = vrot.slane %v3515, 4
      %v3518 = vrot.slane %v2681, 5
      %v3519 = vsel %vm1846, %v3517, %v3518
      %v3520 = vrot.slane %v3426, 5
      %v3521 = vrot.slane %v3520, 4
      %v3522 = vrot.slane %v2683, 5
      %v3523 = vsel %vm1846, %v3521, %v3522
      %v3524 = vrot.slane %v3522, 4
      %v3525 = vrot.slane %v2684, 5
      %v3526 = vsel %vm1846, %v3524, %v3525
      %v3527 = vrot.slane %v3427, 5
      %v3528 = vrot.slane %v3527, 4
      %v3529 = vrot.slane %v2686, 5
      %v3530 = vsel %vm1846, %v3528, %v3529
      %v3531 = vrot.slane %v3529, 4
      %v3532 = vrot.slane %v2687, 5
      %v3533 = vsel %vm1846, %v3531, %v3532
      %v3534 = vrot.slane %v3428, 5
      %v3535 = vrot.slane %v3534, 4
      %v3536 = vrot.slane %v2689, 5
      %v3537 = vsel %vm1846, %v3535, %v3536
      %v3538 = vrot.slane %v3536, 4
      %v3539 = vrot.slane %v2690, 5
      %v3540 = vsel %vm1846, %v3538, %v3539
      %v3541 = vrot.slane %v3429, 5
      %v3542 = vrot.slane %v3541, 4
      %v3543 = vrot.slane %v2692, 5
      %v3544 = vsel %vm1846, %v3542, %v3543
      %v3545 = vrot.slane %v3543, 4
      %v3546 = vrot.slane %v2693, 5
      %v3547 = vsel %vm1846, %v3545, %v3546
      %v3548 = vrot.slane %v3430, 5
      %v3549 = vrot.slane %v3548, 4
      %v3550 = vrot.slane %v2695, 5
      %v3551 = vsel %vm1846, %v3549, %v3550
      %v3552 = vrot.slane %v3550, 4
      %v3553 = vrot.slane %v2696, 5
      %v3554 = vsel %vm1846, %v3552, %v3553
      %v3555 = vrot.slane %v3431, 5
      %v3556 = vrot.slane %v3555, 4
      %v3557 = vrot.slane %v2698, 5
      %v3558 = vsel %vm1846, %v3556, %v3557
      %v3559 = vrot.slane %v3557, 4
      %v3560 = vrot.slane %v2699, 5
      %v3561 = vsel %vm1846, %v3559, %v3560
      %v3562 = vrot.slane %v3432, 5
      %v3563 = vrot.slane %v3562, 4
      %v3564 = vrot.slane %v2701, 5
      %v3565 = vsel %vm1846, %v3563, %v3564
      %v3566 = vrot.slane %v3564, 4
      %v3567 = vrot.slane %v2702, 5
      %v3568 = vsel %vm1846, %v3566, %v3567
      %v3569 = vrot.slane %v3433, 5
      %v3570 = vrot.slane %v3569, 4
      %v3571 = vrot.slane %v2704, 5
      %v3572 = vsel %vm1846, %v3570, %v3571
      %v3573 = vrot.slane %v3571, 4
      %v3574 = vrot.slane %v2705, 5
      %v3575 = vsel %vm1846, %v3573, %v3574
      %v3576 = vrot.slane %v3434, 5
      %v3577 = vrot.slane %v3576, 4
      %v3578 = vrot.slane %v2707, 5
      %v3579 = vsel %vm1846, %v3577, %v3578
      %v3580 = vrot.slane %v3578, 4
      %v3581 = vrot.slane %v2708, 5
      %v3582 = vsel %vm1846, %v3580, %v3581
      %v3583 = vrot.slane %v3435, 5
      %v3584 = vrot.slane %v3583, 4
      %v3585 = vrot.slane %v2710, 5
      %v3586 = vsel %vm1846, %v3584, %v3585
      %v3587 = vrot.slane %v3585, 4
      %v3588 = vrot.slane %v2711, 5
      %v3589 = vsel %vm1846, %v3587, %v3588
      %v3590 = vrot.slane %v3436, 5
      %v3591 = vrot.slane %v3590, 4
      %v3592 = vrot.slane %v2713, 5
      %v3593 = vsel %vm1846, %v3591, %v3592
      %v3594 = vrot.slane %v3592, 4
      %v3595 = vrot.slane %v2714, 5
      %v3596 = vsel %vm1846, %v3594, %v3595
      %s3597 = scalar_lea.vmem %s210, 320
      %v3598 = vld [vmem:[%s3597] sm:$0xf]
      %v3599 = vld [vmem:[%s3597 + $0x4] sm:$0xf]
      %v3600 = vld [vmem:[%s3597 + $0x8] sm:$0xf]
      %v3601 = vld [vmem:[%s3597 + $0xc] sm:$0xf]
      %v3602 = vld [vmem:[%s3597 + $0x10] sm:$0xf]
      %v3603 = vld [vmem:[%s3597 + $0x14] sm:$0xf]
      %v3604 = vld [vmem:[%s3597 + $0x18] sm:$0xf]
      %v3605 = vld [vmem:[%s3597 + $0x1c] sm:$0xf]
      %v3606 = vld [vmem:[%s3597 + $0x20] sm:$0xf]
      %v3607 = vld [vmem:[%s3597 + $0x24] sm:$0xf]
      %v3608 = vld [vmem:[%s3597 + $0x28] sm:$0xf]
      %v3609 = vld [vmem:[%s3597 + $0x2c] sm:$0xf]
      %v3610 = vld [vmem:[%s3597 + $0x30] sm:$0xf]
      %v3611 = vld [vmem:[%s3597 + $0x34] sm:$0xf]
      %v3612 = vld [vmem:[%s3597 + $0x38] sm:$0xf]
      %v3613 = vld [vmem:[%s3597 + $0x3c] sm:$0xf]
      %v3614 = vunpack.c.l.b16 %v3488
      %v3615 = vunpack.c.l.b16 %v3491
      %v3616 = vunpack.c.l.b16 %v3495
      %v3617 = vunpack.c.l.b16 %v3498
      %v3618 = vunpack.c.l.b16 %v3502
      %v3619 = vunpack.c.l.b16 %v3505
      %v3620 = vunpack.c.l.b16 %v3509
      %v3621 = vunpack.c.l.b16 %v3512
      %v3622 = vunpack.c.l.b16 %v3516
      %v3623 = vunpack.c.l.b16 %v3519
      %v3624 = vunpack.c.l.b16 %v3523
      %v3625 = vunpack.c.l.b16 %v3526
      %v3626 = vunpack.c.l.b16 %v3530
      %v3627 = vunpack.c.l.b16 %v3533
      %v3628 = vunpack.c.l.b16 %v3537
      %v3629 = vunpack.c.l.b16 %v3540
      %v3630 = vunpack.c.l.b16 %v3544
      %v3631 = vunpack.c.l.b16 %v3547
      %v3632 = vunpack.c.l.b16 %v3551
      %v3633 = vunpack.c.l.b16 %v3554
      %v3634 = vunpack.c.l.b16 %v3558
      %v3635 = vunpack.c.l.b16 %v3561
      %v3636 = vunpack.c.l.b16 %v3565
      %v3637 = vunpack.c.l.b16 %v3568
      %v3638 = vunpack.c.l.b16 %v3572
      %v3639 = vunpack.c.l.b16 %v3575
      %v3640 = vunpack.c.l.b16 %v3579
      %v3641 = vunpack.c.l.b16 %v3582
      %v3642 = vunpack.c.l.b16 %v3586
      %v3643 = vunpack.c.l.b16 %v3589
      %v3644 = vunpack.c.l.b16 %v3593
      %v3645 = vunpack.c.l.b16 %v3596
      %v3646 = vpack.c.b16 %v3615, %v3614
      %v3647 = vpack.c.b16 %v3617, %v3616
      %v3648 = vpack.c.b16 %v3619, %v3618
      %v3649 = vpack.c.b16 %v3621, %v3620
      %v3650 = vpack.c.b16 %v3623, %v3622
      %v3651 = vpack.c.b16 %v3625, %v3624
      %v3652 = vpack.c.b16 %v3627, %v3626
      %v3653 = vpack.c.b16 %v3629, %v3628
      %v3654 = vpack.c.b16 %v3631, %v3630
      %v3655 = vpack.c.b16 %v3633, %v3632
      %v3656 = vpack.c.b16 %v3635, %v3634
      %v3657 = vpack.c.b16 %v3637, %v3636
      %v3658 = vpack.c.b16 %v3639, %v3638
      %v3659 = vpack.c.b16 %v3641, %v3640
      %v3660 = vpack.c.b16 %v3643, %v3642
      %v3661 = vpack.c.b16 %v3645, %v3644
      %v3694 = vunpack.c.l.b16 %v3598
      %v3695 = vunpack.c.l.b16 %v3599
      %v3696 = vunpack.c.l.b16 %v3600
      %v3697 = vunpack.c.l.b16 %v3601
      %v3698 = vunpack.c.l.b16 %v3602
      %v3699 = vunpack.c.l.b16 %v3603
      %v3700 = vunpack.c.l.b16 %v3604
      %v3701 = vunpack.c.l.b16 %v3605
      %v3702 = vunpack.c.l.b16 %v3606
      %v3703 = vunpack.c.l.b16 %v3607
      %v3704 = vunpack.c.l.b16 %v3608
      %v3705 = vunpack.c.l.b16 %v3609
      %v3706 = vunpack.c.l.b16 %v3610
      %v3707 = vunpack.c.l.b16 %v3611
      %v3708 = vunpack.c.l.b16 %v3612
      %v3709 = vunpack.c.l.b16 %v3613
      %v3710 = vpack.c.b16 %v3695, %v3694
      %v3711 = vpack.c.b16 %v3697, %v3696
      %v3712 = vpack.c.b16 %v3699, %v3698
      %v3713 = vpack.c.b16 %v3701, %v3700
      %v3714 = vpack.c.b16 %v3703, %v3702
      %v3715 = vpack.c.b16 %v3705, %v3704
      %v3716 = vpack.c.b16 %v3707, %v3706
      %v3717 = vpack.c.b16 %v3709, %v3708
      %3726 = vmatprep.subr.bf16.mxu0 0
      %3727 = vmatpush1.bf16.msra.mxu0 %v3710
      %3728 = vmatprep.subr.bf16.mxu0 0
      %3729 = vmatpush1.bf16.msra.mxu0 %v3711
      %3730 = vmatprep.subr.bf16.mxu0 0
      %3731 = vmatpush1.bf16.msra.mxu0 %v3712
      %3732 = vmatprep.subr.bf16.mxu0 0
      %3733 = vmatpush1.bf16.msra.mxu0 %v3713
      %3734 = vmatprep.subr.bf16.mxu0 0
      %3735 = vmatpush1.bf16.msra.mxu0 %v3714
      %3736 = vmatprep.subr.bf16.mxu0 0
      %3737 = vmatpush1.bf16.msra.mxu0 %v3715
      %3738 = vmatprep.subr.bf16.mxu0 0
      %3739 = vmatpush1.bf16.msra.mxu0 %v3716
      %3740 = vmatprep.subr.bf16.mxu0 0
      %3741 = vmatpush1.bf16.msra.mxu0 %v3717
      %3742 = vmatprep.subr.bf16.mxu0 0
      %3743 = vmatpush1.bf16.msra.mxu0 0
      %3744 = vmatprep.subr.bf16.mxu0 0
      %3745 = vmatpush1.bf16.msra.mxu0 0
      %3746 = vmatprep.subr.bf16.mxu0 0
      %3747 = vmatpush1.bf16.msra.mxu0 0
      %3748 = vmatprep.subr.bf16.mxu0 0
      %3749 = vmatpush1.bf16.msra.mxu0 0
      %3750 = vmatprep.subr.bf16.mxu0 0
      %3751 = vmatpush1.bf16.msra.mxu0 0
      %3752 = vmatprep.subr.bf16.mxu0 0
      %3753 = vmatpush1.bf16.msra.mxu0 0
      %3754 = vmatprep.subr.bf16.mxu0 0
      %3755 = vmatpush1.bf16.msra.mxu0 0
      %3756 = vmatprep.subr.bf16.mxu0 0
      %3757 = vmatpush1.bf16.msra.mxu0 0
      %3758 = vmatprep.mubr.bf16.mxu0 0
      %3759 = vmatmul.mubr.bf16.gmra.mrb[0].mxu0 %v3646
      %v3760 = vpop.f32.mrb[0].mxu0
      %v3761 = vadd.f32 0.0, %v3760
      %v3762 = vpop.f32.mrb[0].mxu0
      %v3763 = vpop.f32.mrb[0].mxu0
      %v3764 = vadd.f32 0.0, %v3763
      %v3765 = vpop.f32.mrb[0].mxu0
      %3766 = vmatprep.mubr.bf16.mxu0 0
      %3767 = vmatmul.mubr.bf16.gmra.mrb[0].mxu0 %v3647
      %v3768 = vpop.f32.mrb[0].mxu0
      %v3769 = vadd.f32 0.0, %v3768
      %v3770 = vpop.f32.mrb[0].mxu0
      %v3771 = vpop.f32.mrb[0].mxu0
      %v3772 = vadd.f32 0.0, %v3771
      %v3773 = vpop.f32.mrb[0].mxu0
      %3774 = vmatprep.mubr.bf16.mxu0 0
      %3775 = vmatmul.mubr.bf16.gmra.mrb[0].mxu0 %v3648
      %v3776 = vpop.f32.mrb[0].mxu0
      %v3777 = vadd.f32 0.0, %v3776
      %v3778 = vpop.f32.mrb[0].mxu0
      %v3779 = vpop.f32.mrb[0].mxu0
      %v3780 = vadd.f32 0.0, %v3779
      %v3781 = vpop.f32.mrb[0].mxu0
      %3782 = vmatprep.mubr.bf16.mxu0 0
      %3783 = vmatmul.mubr.bf16.gmra.mrb[0].mxu0 %v3649
      %v3784 = vpop.f32.mrb[0].mxu0
      %v3785 = vadd.f32 0.0, %v3784
      %v3786 = vpop.f32.mrb[0].mxu0
      %v3787 = vpop.f32.mrb[0].mxu0
      %v3788 = vadd.f32 0.0, %v3787
      %v3789 = vpop.f32.mrb[0].mxu0
      %3790 = vmatprep.mubr.bf16.mxu0 0
      %3791 = vmatmul.mubr.bf16.gmra.mrb[0].mxu0 %v3650
      %v3792 = vpop.f32.mrb[0].mxu0
      %v3793 = vadd.f32 0.0, %v3792
      %v3794 = vpop.f32.mrb[0].mxu0
      %v3795 = vpop.f32.mrb[0].mxu0
      %v3796 = vadd.f32 0.0, %v3795
      %v3797 = vpop.f32.mrb[0].mxu0
      %3798 = vmatprep.mubr.bf16.mxu0 0
      %3799 = vmatmul.mubr.bf16.gmra.mrb[0].mxu0 %v3651
      %v3800 = vpop.f32.mrb[0].mxu0
      %v3801 = vadd.f32 0.0, %v3800
      %v3802 = vpop.f32.mrb[0].mxu0
      %v3803 = vpop.f32.mrb[0].mxu0
      %v3804 = vadd.f32 0.0, %v3803
      %v3805 = vpop.f32.mrb[0].mxu0
      %3806 = vmatprep.mubr.bf16.mxu0 0
      %3807 = vmatmul.mubr.bf16.gmra.mrb[0].mxu0 %v3652
      %v3808 = vpop.f32.mrb[0].mxu0
      %v3809 = vadd.f32 0.0, %v3808
      %v3810 = vpop.f32.mrb[0].mxu0
      %v3811 = vpop.f32.mrb[0].mxu0
      %v3812 = vadd.f32 0.0, %v3811
      %v3813 = vpop.f32.mrb[0].mxu0
      %3814 = vmatprep.mubr.bf16.mxu0 0
      %3815 = vmatmul.mubr.bf16.gmra.mrb[0].mxu0 %v3653
      %v3816 = vpop.f32.mrb[0].mxu0
      %v3817 = vadd.f32 0.0, %v3816
      %v3818 = vpop.f32.mrb[0].mxu0
      %v3819 = vpop.f32.mrb[0].mxu0
      %v3820 = vadd.f32 0.0, %v3819
      %v3821 = vpop.f32.mrb[0].mxu0
      %3822 = vmatprep.mubr.bf16.mxu0 0
      %3823 = vmatmul.mubr.bf16.gmra.mrb[0].mxu0 %v3654
      %v3824 = vpop.f32.mrb[0].mxu0
      %v3825 = vadd.f32 0.0, %v3824
      %v3826 = vpop.f32.mrb[0].mxu0
      %v3827 = vpop.f32.mrb[0].mxu0
      %v3828 = vadd.f32 0.0, %v3827
      %v3829 = vpop.f32.mrb[0].mxu0
      %3830 = vmatprep.mubr.bf16.mxu0 0
      %3831 = vmatmul.mubr.bf16.gmra.mrb[0].mxu0 %v3655
      %v3832 = vpop.f32.mrb[0].mxu0
      %v3833 = vadd.f32 0.0, %v3832
      %v3834 = vpop.f32.mrb[0].mxu0
      %v3835 = vpop.f32.mrb[0].mxu0
      %v3836 = vadd.f32 0.0, %v3835
      %v3837 = vpop.f32.mrb[0].mxu0
      %3838 = vmatprep.mubr.bf16.mxu0 0
      %3839 = vmatmul.mubr.bf16.gmra.mrb[0].mxu0 %v3656
      %v3840 = vpop.f32.mrb[0].mxu0
      %v3841 = vadd.f32 0.0, %v3840
      %v3842 = vpop.f32.mrb[0].mxu0
      %v3843 = vpop.f32.mrb[0].mxu0
      %v3844 = vadd.f32 0.0, %v3843
      %v3845 = vpop.f32.mrb[0].mxu0
      %3846 = vmatprep.mubr.bf16.mxu0 0
      %3847 = vmatmul.mubr.bf16.gmra.mrb[0].mxu0 %v3657
      %v3848 = vpop.f32.mrb[0].mxu0
      %v3849 = vadd.f32 0.0, %v3848
      %v3850 = vpop.f32.mrb[0].mxu0
      %v3851 = vpop.f32.mrb[0].mxu0
      %v3852 = vadd.f32 0.0, %v3851
      %v3853 = vpop.f32.mrb[0].mxu0
      %3854 = vmatprep.mubr.bf16.mxu0 0
      %3855 = vmatmul.mubr.bf16.gmra.mrb[0].mxu0 %v3658
      %v3856 = vpop.f32.mrb[0].mxu0
      %v3857 = vadd.f32 0.0, %v3856
      %v3858 = vpop.f32.mrb[0].mxu0
      %v3859 = vpop.f32.mrb[0].mxu0
      %v3860 = vadd.f32 0.0, %v3859
      %v3861 = vpop.f32.mrb[0].mxu0
      %3862 = vmatprep.mubr.bf16.mxu0 0
      %3863 = vmatmul.mubr.bf16.gmra.mrb[0].mxu0 %v3659
      %v3864 = vpop.f32.mrb[0].mxu0
      %v3865 = vadd.f32 0.0, %v3864
      %v3866 = vpop.f32.mrb[0].mxu0
      %v3867 = vpop.f32.mrb[0].mxu0
      %v3868 = vadd.f32 0.0, %v3867
      %v3869 = vpop.f32.mrb[0].mxu0
      %3870 = vmatprep.mubr.bf16.mxu0 0
      %3871 = vmatmul.mubr.bf16.gmra.mrb[0].mxu0 %v3660
      %v3872 = vpop.f32.mrb[0].mxu0
      %v3873 = vadd.f32 0.0, %v3872
      %v3874 = vpop.f32.mrb[0].mxu0
      %v3875 = vpop.f32.mrb[0].mxu0
      %v3876 = vadd.f32 0.0, %v3875
      %v3877 = vpop.f32.mrb[0].mxu0
      %3878 = vmatprep.mubr.bf16.mxu0 0
      %3879 = vmatmul.mubr.bf16.gmra.mrb[0].mxu0 %v3661
      %v3880 = vpop.f32.mrb[0].mxu0
      %v3881 = vadd.f32 0.0, %v3880
      %v3882 = vpop.f32.mrb[0].mxu0
      %v3883 = vpop.f32.mrb[0].mxu0
      %v3884 = vadd.f32 0.0, %v3883
      %v3885 = vpop.f32.mrb[0].mxu0
      %3886 = vdwg.mxu0
      %v3887 = vadd.f32 %v3389, %v3761
      %v3888 = vadd.f32 %v3390, %v3764
      %v3889 = vadd.f32 %v3391, %v3769
      %v3890 = vadd.f32 %v3392, %v3772
      %v3891 = vadd.f32 %v3393, %v3777
      %v3892 = vadd.f32 %v3394, %v3780
      %v3893 = vadd.f32 %v3395, %v3785
      %v3894 = vadd.f32 %v3396, %v3788
      %v3895 = vadd.f32 %v3397, %v3793
      %v3896 = vadd.f32 %v3398, %v3796
      %v3897 = vadd.f32 %v3399, %v3801
      %v3898 = vadd.f32 %v3400, %v3804
      %v3899 = vadd.f32 %v3401, %v3809
      %v3900 = vadd.f32 %v3402, %v3812
      %v3901 = vadd.f32 %v3403, %v3817
      %v3902 = vadd.f32 %v3404, %v3820
      %v3903 = vadd.f32 %v3405, %v3825
      %v3904 = vadd.f32 %v3406, %v3828
      %v3905 = vadd.f32 %v3407, %v3833
      %v3906 = vadd.f32 %v3408, %v3836
      %v3907 = vadd.f32 %v3409, %v3841
      %v3908 = vadd.f32 %v3410, %v3844
      %v3909 = vadd.f32 %v3411, %v3849
      %v3910 = vadd.f32 %v3412, %v3852
      %v3911 = vadd.f32 %v3413, %v3857
      %v3912 = vadd.f32 %v3414, %v3860
      %v3913 = vadd.f32 %v3415, %v3865
      %v3914 = vadd.f32 %v3416, %v3868
      %v3915 = vadd.f32 %v3417, %v3873
      %v3916 = vadd.f32 %v3418, %v3876
      %v3917 = vadd.f32 %v3419, %v3881
      %v3918 = vadd.f32 %v3420, %v3884
      %s3919 = scalar_lea.vmem [#allocation2], 24
      %v3920 = vld [vmem:[%s3919] sm:$0xf]
      %v3921 = vld [vmem:[%s3919 + $0x4] sm:$0xf]
      %v3922 = vld [vmem:[%s3919 + $0xc] sm:$0xf]
      %v3923 = vld [vmem:[%s3919 + $0x10] sm:$0xf]
      %v3924 = vld [vmem:[%s3919 + $0x18] sm:$0xf]
      %v3925 = vld [vmem:[%s3919 + $0x1c] sm:$0xf]
      %v3926 = vld [vmem:[%s3919 + $0x24] sm:$0xf]
      %v3927 = vld [vmem:[%s3919 + $0x28] sm:$0xf]
      %v3928 = vld [vmem:[%s3919 + $0x30] sm:$0xf]
      %v3929 = vld [vmem:[%s3919 + $0x34] sm:$0xf]
      %v3930 = vld [vmem:[%s3919 + $0x3c] sm:$0xf]
      %v3931 = vld [vmem:[%s3919 + $0x40] sm:$0xf]
      %v3932 = vld [vmem:[%s3919 + $0x48] sm:$0xf]
      %v3933 = vld [vmem:[%s3919 + $0x4c] sm:$0xf]
      %v3934 = vld [vmem:[%s3919 + $0x54] sm:$0xf]
      %v3935 = vld [vmem:[%s3919 + $0x58] sm:$0xf]
      %v3936 = vld [vmem:[%s3919 + $0x60] sm:$0xf]
      %v3937 = vld [vmem:[%s3919 + $0x64] sm:$0xf]
      %v3938 = vld [vmem:[%s3919 + $0x6c] sm:$0xf]
      %v3939 = vld [vmem:[%s3919 + $0x70] sm:$0xf]
      %v3940 = vld [vmem:[%s3919 + $0x78] sm:$0xf]
      %v3941 = vld [vmem:[%s3919 + $0x7c] sm:$0xf]
      %v3942 = vld [vmem:[%s3919 + $0x84] sm:$0xf]
      %v3943 = vld [vmem:[%s3919 + $0x88] sm:$0xf]
      %v3944 = vld [vmem:[%s3919 + $0x90] sm:$0xf]
      %v3945 = vld [vmem:[%s3919 + $0x94] sm:$0xf]
      %v3946 = vld [vmem:[%s3919 + $0x9c] sm:$0xf]
      %v3947 = vld [vmem:[%s3919 + $0xa0] sm:$0xf]
      %v3948 = vld [vmem:[%s3919 + $0xa8] sm:$0xf]
      %v3949 = vld [vmem:[%s3919 + $0xac] sm:$0xf]
      %v3950 = vld [vmem:[%s3919 + $0xb4] sm:$0xf]
      %v3951 = vld [vmem:[%s3919 + $0xb8] sm:$0xf]
      %s3952 = scalar_lea.vmem %s210, 384
      %v3953 = vld [vmem:[%s3952] sm:$0xf]
      %v3954 = vld [vmem:[%s3952 + $0x4] sm:$0xf]
      %v3955 = vld [vmem:[%s3952 + $0x8] sm:$0xf]
      %v3956 = vld [vmem:[%s3952 + $0xc] sm:$0xf]
      %v3957 = vld [vmem:[%s3952 + $0x10] sm:$0xf]
      %v3958 = vld [vmem:[%s3952 + $0x14] sm:$0xf]
      %v3959 = vld [vmem:[%s3952 + $0x18] sm:$0xf]
      %v3960 = vld [vmem:[%s3952 + $0x1c] sm:$0xf]
      %v3961 = vld [vmem:[%s3952 + $0x20] sm:$0xf]
      %v3962 = vld [vmem:[%s3952 + $0x24] sm:$0xf]
      %v3963 = vld [vmem:[%s3952 + $0x28] sm:$0xf]
      %v3964 = vld [vmem:[%s3952 + $0x2c] sm:$0xf]
      %v3965 = vld [vmem:[%s3952 + $0x30] sm:$0xf]
      %v3966 = vld [vmem:[%s3952 + $0x34] sm:$0xf]
      %v3967 = vld [vmem:[%s3952 + $0x38] sm:$0xf]
      %v3968 = vld [vmem:[%s3952 + $0x3c] sm:$0xf]
      %v4001 = vunpack.c.l.b16 %v3920
      %v4002 = vunpack.c.l.b16 %v3921
      %v4003 = vunpack.c.l.b16 %v3922
      %v4004 = vunpack.c.l.b16 %v3923
      %v4005 = vunpack.c.l.b16 %v3924
      %v4006 = vunpack.c.l.b16 %v3925
      %v4007 = vunpack.c.l.b16 %v3926
      %v4008 = vunpack.c.l.b16 %v3927
      %v4009 = vunpack.c.l.b16 %v3928
      %v4010 = vunpack.c.l.b16 %v3929
      %v4011 = vunpack.c.l.b16 %v3930
      %v4012 = vunpack.c.l.b16 %v3931
      %v4013 = vunpack.c.l.b16 %v3932
      %v4014 = vunpack.c.l.b16 %v3933
      %v4015 = vunpack.c.l.b16 %v3934
      %v4016 = vunpack.c.l.b16 %v3935
      %v4017 = vunpack.c.l.b16 %v3936
      %v4018 = vunpack.c.l.b16 %v3937
      %v4019 = vunpack.c.l.b16 %v3938
      %v4020 = vunpack.c.l.b16 %v3939
      %v4021 = vunpack.c.l.b16 %v3940
      %v4022 = vunpack.c.l.b16 %v3941
      %v4023 = vunpack.c.l.b16 %v3942
      %v4024 = vunpack.c.l.b16 %v3943
      %v4025 = vunpack.c.l.b16 %v3944
      %v4026 = vunpack.c.l.b16 %v3945
      %v4027 = vunpack.c.l.b16 %v3946
      %v4028 = vunpack.c.l.b16 %v3947
      %v4029 = vunpack.c.l.b16 %v3948
      %v4030 = vunpack.c.l.b16 %v3949
      %v4031 = vunpack.c.l.b16 %v3950
      %v4032 = vunpack.c.l.b16 %v3951
      %v4033 = vpack.c.b16 %v4002, %v4001
      %v4034 = vpack.c.b16 %v4004, %v4003
      %v4035 = vpack.c.b16 %v4006, %v4005
      %v4036 = vpack.c.b16 %v4008, %v4007
      %v4037 = vpack.c.b16 %v4010, %v4009
      %v4038 = vpack.c.b16 %v4012, %v4011
      %v4039 = vpack.c.b16 %v4014, %v4013
      %v4040 = vpack.c.b16 %v4016, %v4015
      %v4041 = vpack.c.b16 %v4018, %v4017
      %v4042 = vpack.c.b16 %v4020, %v4019
      %v4043 = vpack.c.b16 %v4022, %v4021
      %v4044 = vpack.c.b16 %v4024, %v4023
      %v4045 = vpack.c.b16 %v4026, %v4025
      %v4046 = vpack.c.b16 %v4028, %v4027
      %v4047 = vpack.c.b16 %v4030, %v4029
      %v4048 = vpack.c.b16 %v4032, %v4031
      %v4081 = vunpack.c.l.b16 %v3953
      %v4082 = vunpack.c.l.b16 %v3954
      %v4083 = vunpack.c.l.b16 %v3955
      %v4084 = vunpack.c.l.b16 %v3956
      %v4085 = vunpack.c.l.b16 %v3957
      %v4086 = vunpack.c.l.b16 %v3958
      %v4087 = vunpack.c.l.b16 %v3959
      %v4088 = vunpack.c.l.b16 %v3960
      %v4089 = vunpack.c.l.b16 %v3961
      %v4090 = vunpack.c.l.b16 %v3962
      %v4091 = vunpack.c.l.b16 %v3963
      %v4092 = vunpack.c.l.b16 %v3964
      %v4093 = vunpack.c.l.b16 %v3965
      %v4094 = vunpack.c.l.b16 %v3966
      %v4095 = vunpack.c.l.b16 %v3967
      %v4096 = vunpack.c.l.b16 %v3968
      %v4097 = vpack.c.b16 %v4082, %v4081
      %v4098 = vpack.c.b16 %v4084, %v4083
      %v4099 = vpack.c.b16 %v4086, %v4085
      %v4100 = vpack.c.b16 %v4088, %v4087
      %v4101 = vpack.c.b16 %v4090, %v4089
      %v4102 = vpack.c.b16 %v4092, %v4091
      %v4103 = vpack.c.b16 %v4094, %v4093
      %v4104 = vpack.c.b16 %v4096, %v4095
      %4113 = vmatprep.subr.bf16.mxu0 0
      %4114 = vmatpush1.bf16.msra.mxu0 %v4097
      %4115 = vmatprep.subr.bf16.mxu0 0
      %4116 = vmatpush1.bf16.msra.mxu0 %v4098
      %4117 = vmatprep.subr.bf16.mxu0 0
      %4118 = vmatpush1.bf16.msra.mxu0 %v4099
      %4119 = vmatprep.subr.bf16.mxu0 0
      %4120 = vmatpush1.bf16.msra.mxu0 %v4100
      %4121 = vmatprep.subr.bf16.mxu0 0
      %4122 = vmatpush1.bf16.msra.mxu0 %v4101
      %4123 = vmatprep.subr.bf16.mxu0 0
      %4124 = vmatpush1.bf16.msra.mxu0 %v4102
      %4125 = vmatprep.subr.bf16.mxu0 0
      %4126 = vmatpush1.bf16.msra.mxu0 %v4103
      %4127 = vmatprep.subr.bf16.mxu0 0
      %4128 = vmatpush1.bf16.msra.mxu0 %v4104
      %4129 = vmatprep.subr.bf16.mxu0 0
      %4130 = vmatpush1.bf16.msra.mxu0 0
      %4131 = vmatprep.subr.bf16.mxu0 0
      %4132 = vmatpush1.bf16.msra.mxu0 0
      %4133 = vmatprep.subr.bf16.mxu0 0
      %4134 = vmatpush1.bf16.msra.mxu0 0
      %4135 = vmatprep.subr.bf16.mxu0 0
      %4136 = vmatpush1.bf16.msra.mxu0 0
      %4137 = vmatprep.subr.bf16.mxu0 0
      %4138 = vmatpush1.bf16.msra.mxu0 0
      %4139 = vmatprep.subr.bf16.mxu0 0
      %4140 = vmatpush1.bf16.msra.mxu0 0
      %4141 = vmatprep.subr.bf16.mxu0 0
      %4142 = vmatpush1.bf16.msra.mxu0 0
      %4143 = vmatprep.subr.bf16.mxu0 0
      %4144 = vmatpush1.bf16.msra.mxu0 0
      %4145 = vmatprep.mubr.bf16.mxu0 0
      %4146 = vmatmul.mubr.bf16.gmra.mrb[0].mxu0 %v4033
      %v4147 = vpop.f32.mrb[0].mxu0
      %v4148 = vadd.f32 0.0, %v4147
      %v4149 = vpop.f32.mrb[0].mxu0
      %v4150 = vpop.f32.mrb[0].mxu0
      %v4151 = vadd.f32 0.0, %v4150
      %v4152 = vpop.f32.mrb[0].mxu0
      %4153 = vmatprep.mubr.bf16.mxu0 0
      %4154 = vmatmul.mubr.bf16.gmra.mrb[0].mxu0 %v4034
      %v4155 = vpop.f32.mrb[0].mxu0
      %v4156 = vadd.f32 0.0, %v4155
      %v4157 = vpop.f32.mrb[0].mxu0
      %v4158 = vpop.f32.mrb[0].mxu0
      %v4159 = vadd.f32 0.0, %v4158
      %v4160 = vpop.f32.mrb[0].mxu0
      %4161 = vmatprep.mubr.bf16.mxu0 0
      %4162 = vmatmul.mubr.bf16.gmra.mrb[0].mxu0 %v4035
      %v4163 = vpop.f32.mrb[0].mxu0
      %v4164 = vadd.f32 0.0, %v4163
      %v4165 = vpop.f32.mrb[0].mxu0
      %v4166 = vpop.f32.mrb[0].mxu0
      %v4167 = vadd.f32 0.0, %v4166
      %v4168 = vpop.f32.mrb[0].mxu0
      %4169 = vmatprep.mubr.bf16.mxu0 0
      %4170 = vmatmul.mubr.bf16.gmra.mrb[0].mxu0 %v4036
      %v4171 = vpop.f32.mrb[0].mxu0
      %v4172 = vadd.f32 0.0, %v4171
      %v4173 = vpop.f32.mrb[0].mxu0
      %v4174 = vpop.f32.mrb[0].mxu0
      %v4175 = vadd.f32 0.0, %v4174
      %v4176 = vpop.f32.mrb[0].mxu0
      %4177 = vmatprep.mubr.bf16.mxu0 0
      %4178 = vmatmul.mubr.bf16.gmra.mrb[0].mxu0 %v4037
      %v4179 = vpop.f32.mrb[0].mxu0
      %v4180 = vadd.f32 0.0, %v4179
      %v4181 = vpop.f32.mrb[0].mxu0
      %v4182 = vpop.f32.mrb[0].mxu0
      %v4183 = vadd.f32 0.0, %v4182
      %v4184 = vpop.f32.mrb[0].mxu0
      %4185 = vmatprep.mubr.bf16.mxu0 0
      %4186 = vmatmul.mubr.bf16.gmra.mrb[0].mxu0 %v4038
      %v4187 = vpop.f32.mrb[0].mxu0
      %v4188 = vadd.f32 0.0, %v4187
      %v4189 = vpop.f32.mrb[0].mxu0
      %v4190 = vpop.f32.mrb[0].mxu0
      %v4191 = vadd.f32 0.0, %v4190
      %v4192 = vpop.f32.mrb[0].mxu0
      %4193 = vmatprep.mubr.bf16.mxu0 0
      %4194 = vmatmul.mubr.bf16.gmra.mrb[0].mxu0 %v4039
      %v4195 = vpop.f32.mrb[0].mxu0
      %v4196 = vadd.f32 0.0, %v4195
      %v4197 = vpop.f32.mrb[0].mxu0
      %v4198 = vpop.f32.mrb[0].mxu0
      %v4199 = vadd.f32 0.0, %v4198
      %v4200 = vpop.f32.mrb[0].mxu0
      %4201 = vmatprep.mubr.bf16.mxu0 0
      %4202 = vmatmul.mubr.bf16.gmra.mrb[0].mxu0 %v4040
      %v4203 = vpop.f32.mrb[0].mxu0
      %v4204 = vadd.f32 0.0, %v4203
      %v4205 = vpop.f32.mrb[0].mxu0
      %v4206 = vpop.f32.mrb[0].mxu0
      %v4207 = vadd.f32 0.0, %v4206
      %v4208 = vpop.f32.mrb[0].mxu0
      %4209 = vmatprep.mubr.bf16.mxu0 0
      %4210 = vmatmul.mubr.bf16.gmra.mrb[0].mxu0 %v4041
      %v4211 = vpop.f32.mrb[0].mxu0
      %v4212 = vadd.f32 0.0, %v4211
      %v4213 = vpop.f32.mrb[0].mxu0
      %v4214 = vpop.f32.mrb[0].mxu0
      %v4215 = vadd.f32 0.0, %v4214
      %v4216 = vpop.f32.mrb[0].mxu0
      %4217 = vmatprep.mubr.bf16.mxu0 0
      %4218 = vmatmul.mubr.bf16.gmra.mrb[0].mxu0 %v4042
      %v4219 = vpop.f32.mrb[0].mxu0
      %v4220 = vadd.f32 0.0, %v4219
      %v4221 = vpop.f32.mrb[0].mxu0
      %v4222 = vpop.f32.mrb[0].mxu0
      %v4223 = vadd.f32 0.0, %v4222
      %v4224 = vpop.f32.mrb[0].mxu0
      %4225 = vmatprep.mubr.bf16.mxu0 0
      %4226 = vmatmul.mubr.bf16.gmra.mrb[0].mxu0 %v4043
      %v4227 = vpop.f32.mrb[0].mxu0
      %v4228 = vadd.f32 0.0, %v4227
      %v4229 = vpop.f32.mrb[0].mxu0
      %v4230 = vpop.f32.mrb[0].mxu0
      %v4231 = vadd.f32 0.0, %v4230
      %v4232 = vpop.f32.mrb[0].mxu0
      %4233 = vmatprep.mubr.bf16.mxu0 0
      %4234 = vmatmul.mubr.bf16.gmra.mrb[0].mxu0 %v4044
      %v4235 = vpop.f32.mrb[0].mxu0
      %v4236 = vadd.f32 0.0, %v4235
      %v4237 = vpop.f32.mrb[0].mxu0
      %v4238 = vpop.f32.mrb[0].mxu0
      %v4239 = vadd.f32 0.0, %v4238
      %v4240 = vpop.f32.mrb[0].mxu0
      %4241 = vmatprep.mubr.bf16.mxu0 0
      %4242 = vmatmul.mubr.bf16.gmra.mrb[0].mxu0 %v4045
      %v4243 = vpop.f32.mrb[0].mxu0
      %v4244 = vadd.f32 0.0, %v4243
      %v4245 = vpop.f32.mrb[0].mxu0
      %v4246 = vpop.f32.mrb[0].mxu0
      %v4247 = vadd.f32 0.0, %v4246
      %v4248 = vpop.f32.mrb[0].mxu0
      %4249 = vmatprep.mubr.bf16.mxu0 0
      %4250 = vmatmul.mubr.bf16.gmra.mrb[0].mxu0 %v4046
      %v4251 = vpop.f32.mrb[0].mxu0
      %v4252 = vadd.f32 0.0, %v4251
      %v4253 = vpop.f32.mrb[0].mxu0
      %v4254 = vpop.f32.mrb[0].mxu0
      %v4255 = vadd.f32 0.0, %v4254
      %v4256 = vpop.f32.mrb[0].mxu0
      %4257 = vmatprep.mubr.bf16.mxu0 0
      %4258 = vmatmul.mubr.bf16.gmra.mrb[0].mxu0 %v4047
      %v4259 = vpop.f32.mrb[0].mxu0
      %v4260 = vadd.f32 0.0, %v4259
      %v4261 = vpop.f32.mrb[0].mxu0
      %v4262 = vpop.f32.mrb[0].mxu0
      %v4263 = vadd.f32 0.0, %v4262
      %v4264 = vpop.f32.mrb[0].mxu0
      %4265 = vmatprep.mubr.bf16.mxu0 0
      %4266 = vmatmul.mubr.bf16.gmra.mrb[0].mxu0 %v4048
      %v4267 = vpop.f32.mrb[0].mxu0
      %v4268 = vadd.f32 0.0, %v4267
      %v4269 = vpop.f32.mrb[0].mxu0
      %v4270 = vpop.f32.mrb[0].mxu0
      %v4271 = vadd.f32 0.0, %v4270
      %v4272 = vpop.f32.mrb[0].mxu0
      %4273 = vdwg.mxu0
      %v4274 = vadd.f32 %v3887, %v4148
      %v4275 = vadd.f32 %v3888, %v4151
      %v4276 = vadd.f32 %v3889, %v4156
      %v4277 = vadd.f32 %v3890, %v4159
      %v4278 = vadd.f32 %v3891, %v4164
      %v4279 = vadd.f32 %v3892, %v4167
      %v4280 = vadd.f32 %v3893, %v4172
      %v4281 = vadd.f32 %v3894, %v4175
      %v4282 = vadd.f32 %v3895, %v4180
      %v4283 = vadd.f32 %v3896, %v4183
      %v4284 = vadd.f32 %v3897, %v4188
      %v4285 = vadd.f32 %v3898, %v4191
      %v4286 = vadd.f32 %v3899, %v4196
      %v4287 = vadd.f32 %v3900, %v4199
      %v4288 = vadd.f32 %v3901, %v4204
      %v4289 = vadd.f32 %v3902, %v4207
      %v4290 = vadd.f32 %v3903, %v4212
      %v4291 = vadd.f32 %v3904, %v4215
      %v4292 = vadd.f32 %v3905, %v4220
      %v4293 = vadd.f32 %v3906, %v4223
      %v4294 = vadd.f32 %v3907, %v4228
      %v4295 = vadd.f32 %v3908, %v4231
      %v4296 = vadd.f32 %v3909, %v4236
      %v4297 = vadd.f32 %v3910, %v4239
      %v4298 = vadd.f32 %v3911, %v4244
      %v4299 = vadd.f32 %v3912, %v4247
      %v4300 = vadd.f32 %v3913, %v4252
      %v4301 = vadd.f32 %v3914, %v4255
      %v4302 = vadd.f32 %v3915, %v4260
      %v4303 = vadd.f32 %v3916, %v4263
      %v4304 = vadd.f32 %v3917, %v4268
      %v4305 = vadd.f32 %v3918, %v4271
      %v4306 = vld [vmem:[%s3919] sm:$0xf]
      %v4307 = vld [vmem:[%s3919 + $0x4] sm:$0xf]
      %v4308 = vld [vmem:[%s3919 + $0x8] sm:$0x1]
      %v4309 = vld [vmem:[%s3919 + $0xc] sm:$0xf]
      %v4310 = vld [vmem:[%s3919 + $0x10] sm:$0xf]
      %v4311 = vld [vmem:[%s3919 + $0x14] sm:$0x1]
      %v4312 = vld [vmem:[%s3919 + $0x18] sm:$0xf]
      %v4313 = vld [vmem:[%s3919 + $0x1c] sm:$0xf]
      %v4314 = vld [vmem:[%s3919 + $0x20] sm:$0x1]
      %v4315 = vld [vmem:[%s3919 + $0x24] sm:$0xf]
      %v4316 = vld [vmem:[%s3919 + $0x28] sm:$0xf]
      %v4317 = vld [vmem:[%s3919 + $0x2c] sm:$0x1]
      %v4318 = vld [vmem:[%s3919 + $0x30] sm:$0xf]
      %v4319 = vld [vmem:[%s3919 + $0x34] sm:$0xf]
      %v4320 = vld [vmem:[%s3919 + $0x38] sm:$0x1]
      %v4321 = vld [vmem:[%s3919 + $0x3c] sm:$0xf]
      %v4322 = vld [vmem:[%s3919 + $0x40] sm:$0xf]
      %v4323 = vld [vmem:[%s3919 + $0x44] sm:$0x1]
      %v4324 = vld [vmem:[%s3919 + $0x48] sm:$0xf]
      %v4325 = vld [vmem:[%s3919 + $0x4c] sm:$0xf]
      %v4326 = vld [vmem:[%s3919 + $0x50] sm:$0x1]
      %v4327 = vld [vmem:[%s3919 + $0x54] sm:$0xf]
      %v4328 = vld [vmem:[%s3919 + $0x58] sm:$0xf]
      %v4329 = vld [vmem:[%s3919 + $0x5c] sm:$0x1]
      %v4330 = vld [vmem:[%s3919 + $0x60] sm:$0xf]
      %v4331 = vld [vmem:[%s3919 + $0x64] sm:$0xf]
      %v4332 = vld [vmem:[%s3919 + $0x68] sm:$0x1]
      %v4333 = vld [vmem:[%s3919 + $0x6c] sm:$0xf]
      %v4334 = vld [vmem:[%s3919 + $0x70] sm:$0xf]
      %v4335 = vld [vmem:[%s3919 + $0x74] sm:$0x1]
      %v4336 = vld [vmem:[%s3919 + $0x78] sm:$0xf]
      %v4337 = vld [vmem:[%s3919 + $0x7c] sm:$0xf]
      %v4338 = vld [vmem:[%s3919 + $0x80] sm:$0x1]
      %v4339 = vld [vmem:[%s3919 + $0x84] sm:$0xf]
      %v4340 = vld [vmem:[%s3919 + $0x88] sm:$0xf]
      %v4341 = vld [vmem:[%s3919 + $0x8c] sm:$0x1]
      %v4342 = vld [vmem:[%s3919 + $0x90] sm:$0xf]
      %v4343 = vld [vmem:[%s3919 + $0x94] sm:$0xf]
      %v4344 = vld [vmem:[%s3919 + $0x98] sm:$0x1]
      %v4345 = vld [vmem:[%s3919 + $0x9c] sm:$0xf]
      %v4346 = vld [vmem:[%s3919 + $0xa0] sm:$0xf]
      %v4347 = vld [vmem:[%s3919 + $0xa4] sm:$0x1]
      %v4348 = vld [vmem:[%s3919 + $0xa8] sm:$0xf]
      %v4349 = vld [vmem:[%s3919 + $0xac] sm:$0xf]
      %v4350 = vld [vmem:[%s3919 + $0xb0] sm:$0x1]
      %v4351 = vld [vmem:[%s3919 + $0xb4] sm:$0xf]
      %v4352 = vld [vmem:[%s3919 + $0xb8] sm:$0xf]
      %v4353 = vld [vmem:[%s3919 + $0xbc] sm:$0x1]
      %v4355 = vshrl.u32 %v4306, 16
      %v4357 = vrot.slane %v4355, 4
      %v4358 = vshll.u32 %v4306, 16
      %v4360 = vrot.slane %v4358, 5
      %v4361 = vor.u32 %v4357, %v4360
      %v4362 = vrot.slane %v4361, 4
      %v4364 = vshll.u32 %v4307, 16
      %v4366 = vrot.slane %v4364, 5
      %v4367 = vsel %vm816, %v4362, %v4366
      %v4368 = vshrl.u32 %v4307, 16
      %v4370 = vrot.slane %v4368, 4
      %v4371 = vor.u32 %v4370, %v4366
      %v4372 = vrot.slane %v4371, 4
      %v4374 = vshll.u32 %v4308, 16
      %v4376 = vrot.slane %v4374, 5
      %v4377 = vsel %vm816, %v4372, %v4376
      %v4379 = vshrl.u32 %v4309, 16
      %v4381 = vrot.slane %v4379, 4
      %v4382 = vshll.u32 %v4309, 16
      %v4384 = vrot.slane %v4382, 5
      %v4385 = vor.u32 %v4381, %v4384
      %v4386 = vrot.slane %v4385, 4
      %v4388 = vshll.u32 %v4310, 16
      %v4390 = vrot.slane %v4388, 5
      %v4391 = vsel %vm816, %v4386, %v4390
      %v4392 = vshrl.u32 %v4310, 16
      %v4394 = vrot.slane %v4392, 4
      %v4395 = vor.u32 %v4394, %v4390
      %v4396 = vrot.slane %v4395, 4
      %v4398 = vshll.u32 %v4311, 16
      %v4400 = vrot.slane %v4398, 5
      %v4401 = vsel %vm816, %v4396, %v4400
      %v4403 = vshrl.u32 %v4312, 16
      %v4405 = vrot.slane %v4403, 4
      %v4406 = vshll.u32 %v4312, 16
      %v4408 = vrot.slane %v4406, 5
      %v4409 = vor.u32 %v4405, %v4408
      %v4410 = vrot.slane %v4409, 4
      %v4412 = vshll.u32 %v4313, 16
      %v4414 = vrot.slane %v4412, 5
      %v4415 = vsel %vm816, %v4410, %v4414
      %v4416 = vshrl.u32 %v4313, 16
      %v4418 = vrot.slane %v4416, 4
      %v4419 = vor.u32 %v4418, %v4414
      %v4420 = vrot.slane %v4419, 4
      %v4422 = vshll.u32 %v4314, 16
      %v4424 = vrot.slane %v4422, 5
      %v4425 = vsel %vm816, %v4420, %v4424
      %v4427 = vshrl.u32 %v4315, 16
      %v4429 = vrot.slane %v4427, 4
      %v4430 = vshll.u32 %v4315, 16
      %v4432 = vrot.slane %v4430, 5
      %v4433 = vor.u32 %v4429, %v4432
      %v4434 = vrot.slane %v4433, 4
      %v4436 = vshll.u32 %v4316, 16
      %v4438 = vrot.slane %v4436, 5
      %v4439 = vsel %vm816, %v4434, %v4438
      %v4440 = vshrl.u32 %v4316, 16
      %v4442 = vrot.slane %v4440, 4
      %v4443 = vor.u32 %v4442, %v4438
      %v4444 = vrot.slane %v4443, 4
      %v4446 = vshll.u32 %v4317, 16
      %v4448 = vrot.slane %v4446, 5
      %v4449 = vsel %vm816, %v4444, %v4448
      %v4451 = vshrl.u32 %v4318, 16
      %v4453 = vrot.slane %v4451, 4
      %v4454 = vshll.u32 %v4318, 16
      %v4456 = vrot.slane %v4454, 5
      %v4457 = vor.u32 %v4453, %v4456
      %v4458 = vrot.slane %v4457, 4
      %v4460 = vshll.u32 %v4319, 16
      %v4462 = vrot.slane %v4460, 5
      %v4463 = vsel %vm816, %v4458, %v4462
      %v4464 = vshrl.u32 %v4319, 16
      %v4466 = vrot.slane %v4464, 4
      %v4467 = vor.u32 %v4466, %v4462
      %v4468 = vrot.slane %v4467, 4
      %v4470 = vshll.u32 %v4320, 16
      %v4472 = vrot.slane %v4470, 5
      %v4473 = vsel %vm816, %v4468, %v4472
      %v4475 = vshrl.u32 %v4321, 16
      %v4477 = vrot.slane %v4475, 4
      %v4478 = vshll.u32 %v4321, 16
      %v4480 = vrot.slane %v4478, 5
      %v4481 = vor.u32 %v4477, %v4480
      %v4482 = vrot.slane %v4481, 4
      %v4484 = vshll.u32 %v4322, 16
      %v4486 = vrot.slane %v4484, 5
      %v4487 = vsel %vm816, %v4482, %v4486
      %v4488 = vshrl.u32 %v4322, 16
      %v4490 = vrot.slane %v4488, 4
      %v4491 = vor.u32 %v4490, %v4486
      %v4492 = vrot.slane %v4491, 4
      %v4494 = vshll.u32 %v4323, 16
      %v4496 = vrot.slane %v4494, 5
      %v4497 = vsel %vm816, %v4492, %v4496
      %v4499 = vshrl.u32 %v4324, 16
      %v4501 = vrot.slane %v4499, 4
      %v4502 = vshll.u32 %v4324, 16
      %v4504 = vrot.slane %v4502, 5
      %v4505 = vor.u32 %v4501, %v4504
      %v4506 = vrot.slane %v4505, 4
      %v4508 = vshll.u32 %v4325, 16
      %v4510 = vrot.slane %v4508, 5
      %v4511 = vsel %vm816, %v4506, %v4510
      %v4512 = vshrl.u32 %v4325, 16
      %v4514 = vrot.slane %v4512, 4
      %v4515 = vor.u32 %v4514, %v4510
      %v4516 = vrot.slane %v4515, 4
      %v4518 = vshll.u32 %v4326, 16
      %v4520 = vrot.slane %v4518, 5
      %v4521 = vsel %vm816, %v4516, %v4520
      %v4523 = vshrl.u32 %v4327, 16
      %v4525 = vrot.slane %v4523, 4
      %v4526 = vshll.u32 %v4327, 16
      %v4528 = vrot.slane %v4526, 5
      %v4529 = vor.u32 %v4525, %v4528
      %v4530 = vrot.slane %v4529, 4
      %v4532 = vshll.u32 %v4328, 16
      %v4534 = vrot.slane %v4532, 5
      %v4535 = vsel %vm816, %v4530, %v4534
      %v4536 = vshrl.u32 %v4328, 16
      %v4538 = vrot.slane %v4536, 4
      %v4539 = vor.u32 %v4538, %v4534
      %v4540 = vrot.slane %v4539, 4
      %v4542 = vshll.u32 %v4329, 16
      %v4544 = vrot.slane %v4542, 5
      %v4545 = vsel %vm816, %v4540, %v4544
      %v4547 = vshrl.u32 %v4330, 16
      %v4549 = vrot.slane %v4547, 4
      %v4550 = vshll.u32 %v4330, 16
      %v4552 = vrot.slane %v4550, 5
      %v4553 = vor.u32 %v4549, %v4552
      %v4554 = vrot.slane %v4553, 4
      %v4556 = vshll.u32 %v4331, 16
      %v4558 = vrot.slane %v4556, 5
      %v4559 = vsel %vm816, %v4554, %v4558
      %v4560 = vshrl.u32 %v4331, 16
      %v4562 = vrot.slane %v4560, 4
      %v4563 = vor.u32 %v4562, %v4558
      %v4564 = vrot.slane %v4563, 4
      %v4566 = vshll.u32 %v4332, 16
      %v4568 = vrot.slane %v4566, 5
      %v4569 = vsel %vm816, %v4564, %v4568
      %v4571 = vshrl.u32 %v4333, 16
      %v4573 = vrot.slane %v4571, 4
      %v4574 = vshll.u32 %v4333, 16
      %v4576 = vrot.slane %v4574, 5
      %v4577 = vor.u32 %v4573, %v4576
      %v4578 = vrot.slane %v4577, 4
      %v4580 = vshll.u32 %v4334, 16
      %v4582 = vrot.slane %v4580, 5
      %v4583 = vsel %vm816, %v4578, %v4582
      %v4584 = vshrl.u32 %v4334, 16
      %v4586 = vrot.slane %v4584, 4
      %v4587 = vor.u32 %v4586, %v4582
      %v4588 = vrot.slane %v4587, 4
      %v4590 = vshll.u32 %v4335, 16
      %v4592 = vrot.slane %v4590, 5
      %v4593 = vsel %vm816, %v4588, %v4592
      %v4595 = vshrl.u32 %v4336, 16
      %v4597 = vrot.slane %v4595, 4
      %v4598 = vshll.u32 %v4336, 16
      %v4600 = vrot.slane %v4598, 5
      %v4601 = vor.u32 %v4597, %v4600
      %v4602 = vrot.slane %v4601, 4
      %v4604 = vshll.u32 %v4337, 16
      %v4606 = vrot.slane %v4604, 5
      %v4607 = vsel %vm816, %v4602, %v4606
      %v4608 = vshrl.u32 %v4337, 16
      %v4610 = vrot.slane %v4608, 4
      %v4611 = vor.u32 %v4610, %v4606
      %v4612 = vrot.slane %v4611, 4
      %v4614 = vshll.u32 %v4338, 16
      %v4616 = vrot.slane %v4614, 5
      %v4617 = vsel %vm816, %v4612, %v4616
      %v4619 = vshrl.u32 %v4339, 16
      %v4621 = vrot.slane %v4619, 4
      %v4622 = vshll.u32 %v4339, 16
      %v4624 = vrot.slane %v4622, 5
      %v4625 = vor.u32 %v4621, %v4624
      %v4626 = vrot.slane %v4625, 4
      %v4628 = vshll.u32 %v4340, 16
      %v4630 = vrot.slane %v4628, 5
      %v4631 = vsel %vm816, %v4626, %v4630
      %v4632 = vshrl.u32 %v4340, 16
      %v4634 = vrot.slane %v4632, 4
      %v4635 = vor.u32 %v4634, %v4630
      %v4636 = vrot.slane %v4635, 4
      %v4638 = vshll.u32 %v4341, 16
      %v4640 = vrot.slane %v4638, 5
      %v4641 = vsel %vm816, %v4636, %v4640
      %v4643 = vshrl.u32 %v4342, 16
      %v4645 = vrot.slane %v4643, 4
      %v4646 = vshll.u32 %v4342, 16
      %v4648 = vrot.slane %v4646, 5
      %v4649 = vor.u32 %v4645, %v4648
      %v4650 = vrot.slane %v4649, 4
      %v4652 = vshll.u32 %v4343, 16
      %v4654 = vrot.slane %v4652, 5
      %v4655 = vsel %vm816, %v4650, %v4654
      %v4656 = vshrl.u32 %v4343, 16
      %v4658 = vrot.slane %v4656, 4
      %v4659 = vor.u32 %v4658, %v4654
      %v4660 = vrot.slane %v4659, 4
      %v4662 = vshll.u32 %v4344, 16
      %v4664 = vrot.slane %v4662, 5
      %v4665 = vsel %vm816, %v4660, %v4664
      %v4667 = vshrl.u32 %v4345, 16
      %v4669 = vrot.slane %v4667, 4
      %v4670 = vshll.u32 %v4345, 16
      %v4672 = vrot.slane %v4670, 5
      %v4673 = vor.u32 %v4669, %v4672
      %v4674 = vrot.slane %v4673, 4
      %v4676 = vshll.u32 %v4346, 16
      %v4678 = vrot.slane %v4676, 5
      %v4679 = vsel %vm816, %v4674, %v4678
      %v4680 = vshrl.u32 %v4346, 16
      %v4682 = vrot.slane %v4680, 4
      %v4683 = vor.u32 %v4682, %v4678
      %v4684 = vrot.slane %v4683, 4
      %v4686 = vshll.u32 %v4347, 16
      %v4688 = vrot.slane %v4686, 5
      %v4689 = vsel %vm816, %v4684, %v4688
      %v4691 = vshrl.u32 %v4348, 16
      %v4693 = vrot.slane %v4691, 4
      %v4694 = vshll.u32 %v4348, 16
      %v4696 = vrot.slane %v4694, 5
      %v4697 = vor.u32 %v4693, %v4696
      %v4698 = vrot.slane %v4697, 4
      %v4700 = vshll.u32 %v4349, 16
      %v4702 = vrot.slane %v4700, 5
      %v4703 = vsel %vm816, %v4698, %v4702
      %v4704 = vshrl.u32 %v4349, 16
      %v4706 = vrot.slane %v4704, 4
      %v4707 = vor.u32 %v4706, %v4702
      %v4708 = vrot.slane %v4707, 4
      %v4710 = vshll.u32 %v4350, 16
      %v4712 = vrot.slane %v4710, 5
      %v4713 = vsel %vm816, %v4708, %v4712
      %v4715 = vshrl.u32 %v4351, 16
      %v4717 = vrot.slane %v4715, 4
      %v4718 = vshll.u32 %v4351, 16
      %v4720 = vrot.slane %v4718, 5
      %v4721 = vor.u32 %v4717, %v4720
      %v4722 = vrot.slane %v4721, 4
      %v4724 = vshll.u32 %v4352, 16
      %v4726 = vrot.slane %v4724, 5
      %v4727 = vsel %vm816, %v4722, %v4726
      %v4728 = vshrl.u32 %v4352, 16
      %v4730 = vrot.slane %v4728, 4
      %v4731 = vor.u32 %v4730, %v4726
      %v4732 = vrot.slane %v4731, 4
      %v4734 = vshll.u32 %v4353, 16
      %v4736 = vrot.slane %v4734, 5
      %v4737 = vsel %vm816, %v4732, %v4736
      %s4738 = scalar_lea.vmem %s210, 448
      %v4739 = vld [vmem:[%s4738] sm:$0xf]
      %v4740 = vld [vmem:[%s4738 + $0x4] sm:$0xf]
      %v4741 = vld [vmem:[%s4738 + $0x8] sm:$0xf]
      %v4742 = vld [vmem:[%s4738 + $0xc] sm:$0xf]
      %v4743 = vld [vmem:[%s4738 + $0x10] sm:$0xf]
      %v4744 = vld [vmem:[%s4738 + $0x14] sm:$0xf]
      %v4745 = vld [vmem:[%s4738 + $0x18] sm:$0xf]
      %v4746 = vld [vmem:[%s4738 + $0x1c] sm:$0xf]
      %v4747 = vld [vmem:[%s4738 + $0x20] sm:$0xf]
      %v4748 = vld [vmem:[%s4738 + $0x24] sm:$0xf]
      %v4749 = vld [vmem:[%s4738 + $0x28] sm:$0xf]
      %v4750 = vld [vmem:[%s4738 + $0x2c] sm:$0xf]
      %v4751 = vld [vmem:[%s4738 + $0x30] sm:$0xf]
      %v4752 = vld [vmem:[%s4738 + $0x34] sm:$0xf]
      %v4753 = vld [vmem:[%s4738 + $0x38] sm:$0xf]
      %v4754 = vld [vmem:[%s4738 + $0x3c] sm:$0xf]
      %v4755 = vunpack.c.l.b16 %v4367
      %v4756 = vunpack.c.l.b16 %v4377
      %v4757 = vunpack.c.l.b16 %v4391
      %v4758 = vunpack.c.l.b16 %v4401
      %v4759 = vunpack.c.l.b16 %v4415
      %v4760 = vunpack.c.l.b16 %v4425
      %v4761 = vunpack.c.l.b16 %v4439
      %v4762 = vunpack.c.l.b16 %v4449
      %v4763 = vunpack.c.l.b16 %v4463
      %v4764 = vunpack.c.l.b16 %v4473
      %v4765 = vunpack.c.l.b16 %v4487
      %v4766 = vunpack.c.l.b16 %v4497
      %v4767 = vunpack.c.l.b16 %v4511
      %v4768 = vunpack.c.l.b16 %v4521
      %v4769 = vunpack.c.l.b16 %v4535
      %v4770 = vunpack.c.l.b16 %v4545
      %v4771 = vunpack.c.l.b16 %v4559
      %v4772 = vunpack.c.l.b16 %v4569
      %v4773 = vunpack.c.l.b16 %v4583
      %v4774 = vunpack.c.l.b16 %v4593
      %v4775 = vunpack.c.l.b16 %v4607
      %v4776 = vunpack.c.l.b16 %v4617
      %v4777 = vunpack.c.l.b16 %v4631
      %v4778 = vunpack.c.l.b16 %v4641
      %v4779 = vunpack.c.l.b16 %v4655
      %v4780 = vunpack.c.l.b16 %v4665
      %v4781 = vunpack.c.l.b16 %v4679
      %v4782 = vunpack.c.l.b16 %v4689
      %v4783 = vunpack.c.l.b16 %v4703
      %v4784 = vunpack.c.l.b16 %v4713
      %v4785 = vunpack.c.l.b16 %v4727
      %v4786 = vunpack.c.l.b16 %v4737
      %v4787 = vpack.c.b16 %v4756, %v4755
      %v4788 = vpack.c.b16 %v4758, %v4757
      %v4789 = vpack.c.b16 %v4760, %v4759
      %v4790 = vpack.c.b16 %v4762, %v4761
      %v4791 = vpack.c.b16 %v4764, %v4763
      %v4792 = vpack.c.b16 %v4766, %v4765
      %v4793 = vpack.c.b16 %v4768, %v4767
      %v4794 = vpack.c.b16 %v4770, %v4769
      %v4795 = vpack.c.b16 %v4772, %v4771
      %v4796 = vpack.c.b16 %v4774, %v4773
      %v4797 = vpack.c.b16 %v4776, %v4775
      %v4798 = vpack.c.b16 %v4778, %v4777
      %v4799 = vpack.c.b16 %v4780, %v4779
      %v4800 = vpack.c.b16 %v4782, %v4781
      %v4801 = vpack.c.b16 %v4784, %v4783
      %v4802 = vpack.c.b16 %v4786, %v4785
      %v4835 = vunpack.c.l.b16 %v4739
      %v4836 = vunpack.c.l.b16 %v4740
      %v4837 = vunpack.c.l.b16 %v4741
      %v4838 = vunpack.c.l.b16 %v4742
      %v4839 = vunpack.c.l.b16 %v4743
      %v4840 = vunpack.c.l.b16 %v4744
      %v4841 = vunpack.c.l.b16 %v4745
      %v4842 = vunpack.c.l.b16 %v4746
      %v4843 = vunpack.c.l.b16 %v4747
      %v4844 = vunpack.c.l.b16 %v4748
      %v4845 = vunpack.c.l.b16 %v4749
      %v4846 = vunpack.c.l.b16 %v4750
      %v4847 = vunpack.c.l.b16 %v4751
      %v4848 = vunpack.c.l.b16 %v4752
      %v4849 = vunpack.c.l.b16 %v4753
      %v4850 = vunpack.c.l.b16 %v4754
      %v4851 = vpack.c.b16 %v4836, %v4835
      %v4852 = vpack.c.b16 %v4838, %v4837
      %v4853 = vpack.c.b16 %v4840, %v4839
      %v4854 = vpack.c.b16 %v4842, %v4841
      %v4855 = vpack.c.b16 %v4844, %v4843
      %v4856 = vpack.c.b16 %v4846, %v4845
      %v4857 = vpack.c.b16 %v4848, %v4847
      %v4858 = vpack.c.b16 %v4850, %v4849
      %4867 = vmatprep.subr.bf16.mxu0 0
      %4868 = vmatpush1.bf16.msra.mxu0 %v4851
      %4869 = vmatprep.subr.bf16.mxu0 0
      %4870 = vmatpush1.bf16.msra.mxu0 %v4852
      %4871 = vmatprep.subr.bf16.mxu0 0
      %4872 = vmatpush1.bf16.msra.mxu0 %v4853
      %4873 = vmatprep.subr.bf16.mxu0 0
      %4874 = vmatpush1.bf16.msra.mxu0 %v4854
      %4875 = vmatprep.subr.bf16.mxu0 0
      %4876 = vmatpush1.bf16.msra.mxu0 %v4855
      %4877 = vmatprep.subr.bf16.mxu0 0
      %4878 = vmatpush1.bf16.msra.mxu0 %v4856
      %4879 = vmatprep.subr.bf16.mxu0 0
      %4880 = vmatpush1.bf16.msra.mxu0 %v4857
      %4881 = vmatprep.subr.bf16.mxu0 0
      %4882 = vmatpush1.bf16.msra.mxu0 %v4858
      %4883 = vmatprep.subr.bf16.mxu0 0
      %4884 = vmatpush1.bf16.msra.mxu0 0
      %4885 = vmatprep.subr.bf16.mxu0 0
      %4886 = vmatpush1.bf16.msra.mxu0 0
      %4887 = vmatprep.subr.bf16.mxu0 0
      %4888 = vmatpush1.bf16.msra.mxu0 0
      %4889 = vmatprep.subr.bf16.mxu0 0
      %4890 = vmatpush1.bf16.msra.mxu0 0
      %4891 = vmatprep.subr.bf16.mxu0 0
      %4892 = vmatpush1.bf16.msra.mxu0 0
      %4893 = vmatprep.subr.bf16.mxu0 0
      %4894 = vmatpush1.bf16.msra.mxu0 0
      %4895 = vmatprep.subr.bf16.mxu0 0
      %4896 = vmatpush1.bf16.msra.mxu0 0
      %4897 = vmatprep.subr.bf16.mxu0 0
      %4898 = vmatpush1.bf16.msra.mxu0 0
      %4899 = vmatprep.mubr.bf16.mxu0 0
      %4900 = vmatmul.mubr.bf16.gmra.mrb[0].mxu0 %v4787
      %v4901 = vpop.f32.mrb[0].mxu0
      %v4902 = vadd.f32 0.0, %v4901
      %v4903 = vpop.f32.mrb[0].mxu0
      %v4904 = vpop.f32.mrb[0].mxu0
      %v4905 = vadd.f32 0.0, %v4904
      %v4906 = vpop.f32.mrb[0].mxu0
      %4907 = vmatprep.mubr.bf16.mxu0 0
      %4908 = vmatmul.mubr.bf16.gmra.mrb[0].mxu0 %v4788
      %v4909 = vpop.f32.mrb[0].mxu0
      %v4910 = vadd.f32 0.0, %v4909
      %v4911 = vpop.f32.mrb[0].mxu0
      %v4912 = vpop.f32.mrb[0].mxu0
      %v4913 = vadd.f32 0.0, %v4912
      %v4914 = vpop.f32.mrb[0].mxu0
      %4915 = vmatprep.mubr.bf16.mxu0 0
      %4916 = vmatmul.mubr.bf16.gmra.mrb[0].mxu0 %v4789
      %v4917 = vpop.f32.mrb[0].mxu0
      %v4918 = vadd.f32 0.0, %v4917
      %v4919 = vpop.f32.mrb[0].mxu0
      %v4920 = vpop.f32.mrb[0].mxu0
      %v4921 = vadd.f32 0.0, %v4920
      %v4922 = vpop.f32.mrb[0].mxu0
      %4923 = vmatprep.mubr.bf16.mxu0 0
      %4924 = vmatmul.mubr.bf16.gmra.mrb[0].mxu0 %v4790
      %v4925 = vpop.f32.mrb[0].mxu0
      %v4926 = vadd.f32 0.0, %v4925
      %v4927 = vpop.f32.mrb[0].mxu0
      %v4928 = vpop.f32.mrb[0].mxu0
      %v4929 = vadd.f32 0.0, %v4928
      %v4930 = vpop.f32.mrb[0].mxu0
      %4931 = vmatprep.mubr.bf16.mxu0 0
      %4932 = vmatmul.mubr.bf16.gmra.mrb[0].mxu0 %v4791
      %v4933 = vpop.f32.mrb[0].mxu0
      %v4934 = vadd.f32 0.0, %v4933
      %v4935 = vpop.f32.mrb[0].mxu0
      %v4936 = vpop.f32.mrb[0].mxu0
      %v4937 = vadd.f32 0.0, %v4936
      %v4938 = vpop.f32.mrb[0].mxu0
      %4939 = vmatprep.mubr.bf16.mxu0 0
      %4940 = vmatmul.mubr.bf16.gmra.mrb[0].mxu0 %v4792
      %v4941 = vpop.f32.mrb[0].mxu0
      %v4942 = vadd.f32 0.0, %v4941
      %v4943 = vpop.f32.mrb[0].mxu0
      %v4944 = vpop.f32.mrb[0].mxu0
      %v4945 = vadd.f32 0.0, %v4944
      %v4946 = vpop.f32.mrb[0].mxu0
      %4947 = vmatprep.mubr.bf16.mxu0 0
      %4948 = vmatmul.mubr.bf16.gmra.mrb[0].mxu0 %v4793
      %v4949 = vpop.f32.mrb[0].mxu0
      %v4950 = vadd.f32 0.0, %v4949
      %v4951 = vpop.f32.mrb[0].mxu0
      %v4952 = vpop.f32.mrb[0].mxu0
      %v4953 = vadd.f32 0.0, %v4952
      %v4954 = vpop.f32.mrb[0].mxu0
      %4955 = vmatprep.mubr.bf16.mxu0 0
      %4956 = vmatmul.mubr.bf16.gmra.mrb[0].mxu0 %v4794
      %v4957 = vpop.f32.mrb[0].mxu0
      %v4958 = vadd.f32 0.0, %v4957
      %v4959 = vpop.f32.mrb[0].mxu0
      %v4960 = vpop.f32.mrb[0].mxu0
      %v4961 = vadd.f32 0.0, %v4960
      %v4962 = vpop.f32.mrb[0].mxu0
      %4963 = vmatprep.mubr.bf16.mxu0 0
      %4964 = vmatmul.mubr.bf16.gmra.mrb[0].mxu0 %v4795
      %v4965 = vpop.f32.mrb[0].mxu0
      %v4966 = vadd.f32 0.0, %v4965
      %v4967 = vpop.f32.mrb[0].mxu0
      %v4968 = vpop.f32.mrb[0].mxu0
      %v4969 = vadd.f32 0.0, %v4968
      %v4970 = vpop.f32.mrb[0].mxu0
      %4971 = vmatprep.mubr.bf16.mxu0 0
      %4972 = vmatmul.mubr.bf16.gmra.mrb[0].mxu0 %v4796
      %v4973 = vpop.f32.mrb[0].mxu0
      %v4974 = vadd.f32 0.0, %v4973
      %v4975 = vpop.f32.mrb[0].mxu0
      %v4976 = vpop.f32.mrb[0].mxu0
      %v4977 = vadd.f32 0.0, %v4976
      %v4978 = vpop.f32.mrb[0].mxu0
      %4979 = vmatprep.mubr.bf16.mxu0 0
      %4980 = vmatmul.mubr.bf16.gmra.mrb[0].mxu0 %v4797
      %v4981 = vpop.f32.mrb[0].mxu0
      %v4982 = vadd.f32 0.0, %v4981
      %v4983 = vpop.f32.mrb[0].mxu0
      %v4984 = vpop.f32.mrb[0].mxu0
      %v4985 = vadd.f32 0.0, %v4984
      %v4986 = vpop.f32.mrb[0].mxu0
      %4987 = vmatprep.mubr.bf16.mxu0 0
      %4988 = vmatmul.mubr.bf16.gmra.mrb[0].mxu0 %v4798
      %v4989 = vpop.f32.mrb[0].mxu0
      %v4990 = vadd.f32 0.0, %v4989
      %v4991 = vpop.f32.mrb[0].mxu0
      %v4992 = vpop.f32.mrb[0].mxu0
      %v4993 = vadd.f32 0.0, %v4992
      %v4994 = vpop.f32.mrb[0].mxu0
      %4995 = vmatprep.mubr.bf16.mxu0 0
      %4996 = vmatmul.mubr.bf16.gmra.mrb[0].mxu0 %v4799
      %v4997 = vpop.f32.mrb[0].mxu0
      %v4998 = vadd.f32 0.0, %v4997
      %v4999 = vpop.f32.mrb[0].mxu0
      %v5000 = vpop.f32.mrb[0].mxu0
      %v5001 = vadd.f32 0.0, %v5000
      %v5002 = vpop.f32.mrb[0].mxu0
      %5003 = vmatprep.mubr.bf16.mxu0 0
      %5004 = vmatmul.mubr.bf16.gmra.mrb[0].mxu0 %v4800
      %v5005 = vpop.f32.mrb[0].mxu0
      %v5006 = vadd.f32 0.0, %v5005
      %v5007 = vpop.f32.mrb[0].mxu0
      %v5008 = vpop.f32.mrb[0].mxu0
      %v5009 = vadd.f32 0.0, %v5008
      %v5010 = vpop.f32.mrb[0].mxu0
      %5011 = vmatprep.mubr.bf16.mxu0 0
      %5012 = vmatmul.mubr.bf16.gmra.mrb[0].mxu0 %v4801
      %v5013 = vpop.f32.mrb[0].mxu0
      %v5014 = vadd.f32 0.0, %v5013
      %v5015 = vpop.f32.mrb[0].mxu0
      %v5016 = vpop.f32.mrb[0].mxu0
      %v5017 = vadd.f32 0.0, %v5016
      %v5018 = vpop.f32.mrb[0].mxu0
      %5019 = vmatprep.mubr.bf16.mxu0 0
      %5020 = vmatmul.mubr.bf16.gmra.mrb[0].mxu0 %v4802
      %v5021 = vpop.f32.mrb[0].mxu0
      %v5022 = vadd.f32 0.0, %v5021
      %v5023 = vpop.f32.mrb[0].mxu0
      %v5024 = vpop.f32.mrb[0].mxu0
      %v5025 = vadd.f32 0.0, %v5024
      %v5026 = vpop.f32.mrb[0].mxu0
      %5027 = vdwg.mxu0
      %v5028 = vadd.f32 %v4274, %v4902
      %v5029 = vadd.f32 %v4275, %v4905
      %v5030 = vadd.f32 %v4276, %v4910
      %v5031 = vadd.f32 %v4277, %v4913
      %v5032 = vadd.f32 %v4278, %v4918
      %v5033 = vadd.f32 %v4279, %v4921
      %v5034 = vadd.f32 %v4280, %v4926
      %v5035 = vadd.f32 %v4281, %v4929
      %v5036 = vadd.f32 %v4282, %v4934
      %v5037 = vadd.f32 %v4283, %v4937
      %v5038 = vadd.f32 %v4284, %v4942
      %v5039 = vadd.f32 %v4285, %v4945
      %v5040 = vadd.f32 %v4286, %v4950
      %v5041 = vadd.f32 %v4287, %v4953
      %v5042 = vadd.f32 %v4288, %v4958
      %v5043 = vadd.f32 %v4289, %v4961
      %v5044 = vadd.f32 %v4290, %v4966
      %v5045 = vadd.f32 %v4291, %v4969
      %v5046 = vadd.f32 %v4292, %v4974
      %v5047 = vadd.f32 %v4293, %v4977
      %v5048 = vadd.f32 %v4294, %v4982
      %v5049 = vadd.f32 %v4295, %v4985
      %v5050 = vadd.f32 %v4296, %v4990
      %v5051 = vadd.f32 %v4297, %v4993
      %v5052 = vadd.f32 %v4298, %v4998
      %v5053 = vadd.f32 %v4299, %v5001
      %v5054 = vadd.f32 %v4300, %v5006
      %v5055 = vadd.f32 %v4301, %v5009
      %v5056 = vadd.f32 %v4302, %v5014
      %v5057 = vadd.f32 %v4303, %v5017
      %v5058 = vadd.f32 %v4304, %v5022
      %v5059 = vadd.f32 %v4305, %v5025
      %v5060 = vld [vmem:[%s3919] sm:$0xe]
      %v5061 = vld [vmem:[%s3919 + $0xc] sm:$0xe]
      %v5062 = vld [vmem:[%s3919 + $0x18] sm:$0xe]
      %v5063 = vld [vmem:[%s3919 + $0x24] sm:$0xe]
      %v5064 = vld [vmem:[%s3919 + $0x30] sm:$0xe]
      %v5065 = vld [vmem:[%s3919 + $0x3c] sm:$0xe]
      %v5066 = vld [vmem:[%s3919 + $0x48] sm:$0xe]
      %v5067 = vld [vmem:[%s3919 + $0x54] sm:$0xe]
      %v5068 = vld [vmem:[%s3919 + $0x60] sm:$0xe]
      %v5069 = vld [vmem:[%s3919 + $0x6c] sm:$0xe]
      %v5070 = vld [vmem:[%s3919 + $0x78] sm:$0xe]
      %v5071 = vld [vmem:[%s3919 + $0x84] sm:$0xe]
      %v5072 = vld [vmem:[%s3919 + $0x90] sm:$0xe]
      %v5073 = vld [vmem:[%s3919 + $0x9c] sm:$0xe]
      %v5074 = vld [vmem:[%s3919 + $0xa8] sm:$0xe]
      %v5075 = vld [vmem:[%s3919 + $0xb4] sm:$0xe]
      %v5124 = vrot.slane %v5060, 5
      %v5125 = vrot.slane %v5124, 4
      %v5126 = vrot.slane %v4307, 5
      %v5127 = vsel %vm1846, %v5125, %v5126
      %v5128 = vrot.slane %v5126, 4
      %v5129 = vrot.slane %v4308, 5
      %v5130 = vsel %vm1846, %v5128, %v5129
      %v5131 = vrot.slane %v5061, 5
      %v5132 = vrot.slane %v5131, 4
      %v5133 = vrot.slane %v4310, 5
      %v5134 = vsel %vm1846, %v5132, %v5133
      %v5135 = vrot.slane %v5133, 4
      %v5136 = vrot.slane %v4311, 5
      %v5137 = vsel %vm1846, %v5135, %v5136
      %v5138 = vrot.slane %v5062, 5
      %v5139 = vrot.slane %v5138, 4
      %v5140 = vrot.slane %v4313, 5
      %v5141 = vsel %vm1846, %v5139, %v5140
      %v5142 = vrot.slane %v5140, 4
      %v5143 = vrot.slane %v4314, 5
      %v5144 = vsel %vm1846, %v5142, %v5143
      %v5145 = vrot.slane %v5063, 5
      %v5146 = vrot.slane %v5145, 4
      %v5147 = vrot.slane %v4316, 5
      %v5148 = vsel %vm1846, %v5146, %v5147
      %v5149 = vrot.slane %v5147, 4
      %v5150 = vrot.slane %v4317, 5
      %v5151 = vsel %vm1846, %v5149, %v5150
      %v5152 = vrot.slane %v5064, 5
      %v5153 = vrot.slane %v5152, 4
      %v5154 = vrot.slane %v4319, 5
      %v5155 = vsel %vm1846, %v5153, %v5154
      %v5156 = vrot.slane %v5154, 4
      %v5157 = vrot.slane %v4320, 5
      %v5158 = vsel %vm1846, %v5156, %v5157
      %v5159 = vrot.slane %v5065, 5
      %v5160 = vrot.slane %v5159, 4
      %v5161 = vrot.slane %v4322, 5
      %v5162 = vsel %vm1846, %v5160, %v5161
      %v5163 = vrot.slane %v5161, 4
      %v5164 = vrot.slane %v4323, 5
      %v5165 = vsel %vm1846, %v5163, %v5164
      %v5166 = vrot.slane %v5066, 5
      %v5167 = vrot.slane %v5166, 4
      %v5168 = vrot.slane %v4325, 5
      %v5169 = vsel %vm1846, %v5167, %v5168
      %v5170 = vrot.slane %v5168, 4
      %v5171 = vrot.slane %v4326, 5
      %v5172 = vsel %vm1846, %v5170, %v5171
      %v5173 = vrot.slane %v5067, 5
      %v5174 = vrot.slane %v5173, 4
      %v5175 = vrot.slane %v4328, 5
      %v5176 = vsel %vm1846, %v5174, %v5175
      %v5177 = vrot.slane %v5175, 4
      %v5178 = vrot.slane %v4329, 5
      %v5179 = vsel %vm1846, %v5177, %v5178
      %v5180 = vrot.slane %v5068, 5
      %v5181 = vrot.slane %v5180, 4
      %v5182 = vrot.slane %v4331, 5
      %v5183 = vsel %vm1846, %v5181, %v5182
      %v5184 = vrot.slane %v5182, 4
      %v5185 = vrot.slane %v4332, 5
      %v5186 = vsel %vm1846, %v5184, %v5185
      %v5187 = vrot.slane %v5069, 5
      %v5188 = vrot.slane %v5187, 4
      %v5189 = vrot.slane %v4334, 5
      %v5190 = vsel %vm1846, %v5188, %v5189
      %v5191 = vrot.slane %v5189, 4
      %v5192 = vrot.slane %v4335, 5
      %v5193 = vsel %vm1846, %v5191, %v5192
      %v5194 = vrot.slane %v5070, 5
      %v5195 = vrot.slane %v5194, 4
      %v5196 = vrot.slane %v4337, 5
      %v5197 = vsel %vm1846, %v5195, %v5196
      %v5198 = vrot.slane %v5196, 4
      %v5199 = vrot.slane %v4338, 5
      %v5200 = vsel %vm1846, %v5198, %v5199
      %v5201 = vrot.slane %v5071, 5
      %v5202 = vrot.slane %v5201, 4
      %v5203 = vrot.slane %v4340, 5
      %v5204 = vsel %vm1846, %v5202, %v5203
      %v5205 = vrot.slane %v5203, 4
      %v5206 = vrot.slane %v4341, 5
      %v5207 = vsel %vm1846, %v5205, %v5206
      %v5208 = vrot.slane %v5072, 5
      %v5209 = vrot.slane %v5208, 4
      %v5210 = vrot.slane %v4343, 5
      %v5211 = vsel %vm1846, %v5209, %v5210
      %v5212 = vrot.slane %v5210, 4
      %v5213 = vrot.slane %v4344, 5
      %v5214 = vsel %vm1846, %v5212, %v5213
      %v5215 = vrot.slane %v5073, 5
      %v5216 = vrot.slane %v5215, 4
      %v5217 = vrot.slane %v4346, 5
      %v5218 = vsel %vm1846, %v5216, %v5217
      %v5219 = vrot.slane %v5217, 4
      %v5220 = vrot.slane %v4347, 5
      %v5221 = vsel %vm1846, %v5219, %v5220
      %v5222 = vrot.slane %v5074, 5
      %v5223 = vrot.slane %v5222, 4
      %v5224 = vrot.slane %v4349, 5
      %v5225 = vsel %vm1846, %v5223, %v5224
      %v5226 = vrot.slane %v5224, 4
      %v5227 = vrot.slane %v4350, 5
      %v5228 = vsel %vm1846, %v5226, %v5227
      %v5229 = vrot.slane %v5075, 5
      %v5230 = vrot.slane %v5229, 4
      %v5231 = vrot.slane %v4352, 5
      %v5232 = vsel %vm1846, %v5230, %v5231
      %v5233 = vrot.slane %v5231, 4
      %v5234 = vrot.slane %v4353, 5
      %v5235 = vsel %vm1846, %v5233, %v5234
      %s5236 = scalar_lea.vmem %s210, 512
      %v5237 = vld [vmem:[%s5236] sm:$0xf]
      %v5238 = vld [vmem:[%s5236 + $0x4] sm:$0xf]
      %v5239 = vld [vmem:[%s5236 + $0x8] sm:$0xf]
      %v5240 = vld [vmem:[%s5236 + $0xc] sm:$0xf]
      %v5241 = vld [vmem:[%s5236 + $0x10] sm:$0xf]
      %v5242 = vld [vmem:[%s5236 + $0x14] sm:$0xf]
      %v5243 = vld [vmem:[%s5236 + $0x18] sm:$0xf]
      %v5244 = vld [vmem:[%s5236 + $0x1c] sm:$0xf]
      %v5245 = vld [vmem:[%s5236 + $0x20] sm:$0xf]
      %v5246 = vld [vmem:[%s5236 + $0x24] sm:$0xf]
      %v5247 = vld [vmem:[%s5236 + $0x28] sm:$0xf]
      %v5248 = vld [vmem:[%s5236 + $0x2c] sm:$0xf]
      %v5249 = vld [vmem:[%s5236 + $0x30] sm:$0xf]
      %v5250 = vld [vmem:[%s5236 + $0x34] sm:$0xf]
      %v5251 = vld [vmem:[%s5236 + $0x38] sm:$0xf]
      %v5252 = vld [vmem:[%s5236 + $0x3c] sm:$0xf]
      %v5253 = vunpack.c.l.b16 %v5127
      %v5254 = vunpack.c.l.b16 %v5130
      %v5255 = vunpack.c.l.b16 %v5134
      %v5256 = vunpack.c.l.b16 %v5137
      %v5257 = vunpack.c.l.b16 %v5141
      %v5258 = vunpack.c.l.b16 %v5144
      %v5259 = vunpack.c.l.b16 %v5148
      %v5260 = vunpack.c.l.b16 %v5151
      %v5261 = vunpack.c.l.b16 %v5155
      %v5262 = vunpack.c.l.b16 %v5158
      %v5263 = vunpack.c.l.b16 %v5162
      %v5264 = vunpack.c.l.b16 %v5165
      %v5265 = vunpack.c.l.b16 %v5169
      %v5266 = vunpack.c.l.b16 %v5172
      %v5267 = vunpack.c.l.b16 %v5176
      %v5268 = vunpack.c.l.b16 %v5179
      %v5269 = vunpack.c.l.b16 %v5183
      %v5270 = vunpack.c.l.b16 %v5186
      %v5271 = vunpack.c.l.b16 %v5190
      %v5272 = vunpack.c.l.b16 %v5193
      %v5273 = vunpack.c.l.b16 %v5197
      %v5274 = vunpack.c.l.b16 %v5200
      %v5275 = vunpack.c.l.b16 %v5204
      %v5276 = vunpack.c.l.b16 %v5207
      %v5277 = vunpack.c.l.b16 %v5211
      %v5278 = vunpack.c.l.b16 %v5214
      %v5279 = vunpack.c.l.b16 %v5218
      %v5280 = vunpack.c.l.b16 %v5221
      %v5281 = vunpack.c.l.b16 %v5225
      %v5282 = vunpack.c.l.b16 %v5228
      %v5283 = vunpack.c.l.b16 %v5232
      %v5284 = vunpack.c.l.b16 %v5235
      %v5285 = vpack.c.b16 %v5254, %v5253
      %v5286 = vpack.c.b16 %v5256, %v5255
      %v5287 = vpack.c.b16 %v5258, %v5257
      %v5288 = vpack.c.b16 %v5260, %v5259
      %v5289 = vpack.c.b16 %v5262, %v5261
      %v5290 = vpack.c.b16 %v5264, %v5263
      %v5291 = vpack.c.b16 %v5266, %v5265
      %v5292 = vpack.c.b16 %v5268, %v5267
      %v5293 = vpack.c.b16 %v5270, %v5269
      %v5294 = vpack.c.b16 %v5272, %v5271
      %v5295 = vpack.c.b16 %v5274, %v5273
      %v5296 = vpack.c.b16 %v5276, %v5275
      %v5297 = vpack.c.b16 %v5278, %v5277
      %v5298 = vpack.c.b16 %v5280, %v5279
      %v5299 = vpack.c.b16 %v5282, %v5281
      %v5300 = vpack.c.b16 %v5284, %v5283
      %v5333 = vunpack.c.l.b16 %v5237
      %v5334 = vunpack.c.l.b16 %v5238
      %v5335 = vunpack.c.l.b16 %v5239
      %v5336 = vunpack.c.l.b16 %v5240
      %v5337 = vunpack.c.l.b16 %v5241
      %v5338 = vunpack.c.l.b16 %v5242
      %v5339 = vunpack.c.l.b16 %v5243
      %v5340 = vunpack.c.l.b16 %v5244
      %v5341 = vunpack.c.l.b16 %v5245
      %v5342 = vunpack.c.l.b16 %v5246
      %v5343 = vunpack.c.l.b16 %v5247
      %v5344 = vunpack.c.l.b16 %v5248
      %v5345 = vunpack.c.l.b16 %v5249
      %v5346 = vunpack.c.l.b16 %v5250
      %v5347 = vunpack.c.l.b16 %v5251
      %v5348 = vunpack.c.l.b16 %v5252
      %v5349 = vpack.c.b16 %v5334, %v5333
      %v5350 = vpack.c.b16 %v5336, %v5335
      %v5351 = vpack.c.b16 %v5338, %v5337
      %v5352 = vpack.c.b16 %v5340, %v5339
      %v5353 = vpack.c.b16 %v5342, %v5341
      %v5354 = vpack.c.b16 %v5344, %v5343
      %v5355 = vpack.c.b16 %v5346, %v5345
      %v5356 = vpack.c.b16 %v5348, %v5347
      %5365 = vmatprep.subr.bf16.mxu0 0
      %5366 = vmatpush1.bf16.msra.mxu0 %v5349
      %5367 = vmatprep.subr.bf16.mxu0 0
      %5368 = vmatpush1.bf16.msra.mxu0 %v5350
      %5369 = vmatprep.subr.bf16.mxu0 0
      %5370 = vmatpush1.bf16.msra.mxu0 %v5351
      %5371 = vmatprep.subr.bf16.mxu0 0
      %5372 = vmatpush1.bf16.msra.mxu0 %v5352
      %5373 = vmatprep.subr.bf16.mxu0 0
      %5374 = vmatpush1.bf16.msra.mxu0 %v5353
      %5375 = vmatprep.subr.bf16.mxu0 0
      %5376 = vmatpush1.bf16.msra.mxu0 %v5354
      %5377 = vmatprep.subr.bf16.mxu0 0
      %5378 = vmatpush1.bf16.msra.mxu0 %v5355
      %5379 = vmatprep.subr.bf16.mxu0 0
      %5380 = vmatpush1.bf16.msra.mxu0 %v5356
      %5381 = vmatprep.subr.bf16.mxu0 0
      %5382 = vmatpush1.bf16.msra.mxu0 0
      %5383 = vmatprep.subr.bf16.mxu0 0
      %5384 = vmatpush1.bf16.msra.mxu0 0
      %5385 = vmatprep.subr.bf16.mxu0 0
      %5386 = vmatpush1.bf16.msra.mxu0 0
      %5387 = vmatprep.subr.bf16.mxu0 0
      %5388 = vmatpush1.bf16.msra.mxu0 0
      %5389 = vmatprep.subr.bf16.mxu0 0
      %5390 = vmatpush1.bf16.msra.mxu0 0
      %5391 = vmatprep.subr.bf16.mxu0 0
      %5392 = vmatpush1.bf16.msra.mxu0 0
      %5393 = vmatprep.subr.bf16.mxu0 0
      %5394 = vmatpush1.bf16.msra.mxu0 0
      %5395 = vmatprep.subr.bf16.mxu0 0
      %5396 = vmatpush1.bf16.msra.mxu0 0
      %5397 = vmatprep.mubr.bf16.mxu0 0
      %5398 = vmatmul.mubr.bf16.gmra.mrb[0].mxu0 %v5285
      %v5399 = vpop.f32.mrb[0].mxu0
      %v5400 = vadd.f32 0.0, %v5399
      %v5401 = vpop.f32.mrb[0].mxu0
      %v5402 = vpop.f32.mrb[0].mxu0
      %v5403 = vadd.f32 0.0, %v5402
      %v5404 = vpop.f32.mrb[0].mxu0
      %5405 = vmatprep.mubr.bf16.mxu0 0
      %5406 = vmatmul.mubr.bf16.gmra.mrb[0].mxu0 %v5286
      %v5407 = vpop.f32.mrb[0].mxu0
      %v5408 = vadd.f32 0.0, %v5407
      %v5409 = vpop.f32.mrb[0].mxu0
      %v5410 = vpop.f32.mrb[0].mxu0
      %v5411 = vadd.f32 0.0, %v5410
      %v5412 = vpop.f32.mrb[0].mxu0
      %5413 = vmatprep.mubr.bf16.mxu0 0
      %5414 = vmatmul.mubr.bf16.gmra.mrb[0].mxu0 %v5287
      %v5415 = vpop.f32.mrb[0].mxu0
      %v5416 = vadd.f32 0.0, %v5415
      %v5417 = vpop.f32.mrb[0].mxu0
      %v5418 = vpop.f32.mrb[0].mxu0
      %v5419 = vadd.f32 0.0, %v5418
      %v5420 = vpop.f32.mrb[0].mxu0
      %5421 = vmatprep.mubr.bf16.mxu0 0
      %5422 = vmatmul.mubr.bf16.gmra.mrb[0].mxu0 %v5288
      %v5423 = vpop.f32.mrb[0].mxu0
      %v5424 = vadd.f32 0.0, %v5423
      %v5425 = vpop.f32.mrb[0].mxu0
      %v5426 = vpop.f32.mrb[0].mxu0
      %v5427 = vadd.f32 0.0, %v5426
      %v5428 = vpop.f32.mrb[0].mxu0
      %5429 = vmatprep.mubr.bf16.mxu0 0
      %5430 = vmatmul.mubr.bf16.gmra.mrb[0].mxu0 %v5289
      %v5431 = vpop.f32.mrb[0].mxu0
      %v5432 = vadd.f32 0.0, %v5431
      %v5433 = vpop.f32.mrb[0].mxu0
      %v5434 = vpop.f32.mrb[0].mxu0
      %v5435 = vadd.f32 0.0, %v5434
      %v5436 = vpop.f32.mrb[0].mxu0
      %5437 = vmatprep.mubr.bf16.mxu0 0
      %5438 = vmatmul.mubr.bf16.gmra.mrb[0].mxu0 %v5290
      %v5439 = vpop.f32.mrb[0].mxu0
      %v5440 = vadd.f32 0.0, %v5439
      %v5441 = vpop.f32.mrb[0].mxu0
      %v5442 = vpop.f32.mrb[0].mxu0
      %v5443 = vadd.f32 0.0, %v5442
      %v5444 = vpop.f32.mrb[0].mxu0
      %5445 = vmatprep.mubr.bf16.mxu0 0
      %5446 = vmatmul.mubr.bf16.gmra.mrb[0].mxu0 %v5291
      %v5447 = vpop.f32.mrb[0].mxu0
      %v5448 = vadd.f32 0.0, %v5447
      %v5449 = vpop.f32.mrb[0].mxu0
      %v5450 = vpop.f32.mrb[0].mxu0
      %v5451 = vadd.f32 0.0, %v5450
      %v5452 = vpop.f32.mrb[0].mxu0
      %5453 = vmatprep.mubr.bf16.mxu0 0
      %5454 = vmatmul.mubr.bf16.gmra.mrb[0].mxu0 %v5292
      %v5455 = vpop.f32.mrb[0].mxu0
      %v5456 = vadd.f32 0.0, %v5455
      %v5457 = vpop.f32.mrb[0].mxu0
      %v5458 = vpop.f32.mrb[0].mxu0
      %v5459 = vadd.f32 0.0, %v5458
      %v5460 = vpop.f32.mrb[0].mxu0
      %5461 = vmatprep.mubr.bf16.mxu0 0
      %5462 = vmatmul.mubr.bf16.gmra.mrb[0].mxu0 %v5293
      %v5463 = vpop.f32.mrb[0].mxu0
      %v5464 = vadd.f32 0.0, %v5463
      %v5465 = vpop.f32.mrb[0].mxu0
      %v5466 = vpop.f32.mrb[0].mxu0
      %v5467 = vadd.f32 0.0, %v5466
      %v5468 = vpop.f32.mrb[0].mxu0
      %5469 = vmatprep.mubr.bf16.mxu0 0
      %5470 = vmatmul.mubr.bf16.gmra.mrb[0].mxu0 %v5294
      %v5471 = vpop.f32.mrb[0].mxu0
      %v5472 = vadd.f32 0.0, %v5471
      %v5473 = vpop.f32.mrb[0].mxu0
      %v5474 = vpop.f32.mrb[0].mxu0
      %v5475 = vadd.f32 0.0, %v5474
      %v5476 = vpop.f32.mrb[0].mxu0
      %5477 = vmatprep.mubr.bf16.mxu0 0
      %5478 = vmatmul.mubr.bf16.gmra.mrb[0].mxu0 %v5295
      %v5479 = vpop.f32.mrb[0].mxu0
      %v5480 = vadd.f32 0.0, %v5479
      %v5481 = vpop.f32.mrb[0].mxu0
      %v5482 = vpop.f32.mrb[0].mxu0
      %v5483 = vadd.f32 0.0, %v5482
      %v5484 = vpop.f32.mrb[0].mxu0
      %5485 = vmatprep.mubr.bf16.mxu0 0
      %5486 = vmatmul.mubr.bf16.gmra.mrb[0].mxu0 %v5296
      %v5487 = vpop.f32.mrb[0].mxu0
      %v5488 = vadd.f32 0.0, %v5487
      %v5489 = vpop.f32.mrb[0].mxu0
      %v5490 = vpop.f32.mrb[0].mxu0
      %v5491 = vadd.f32 0.0, %v5490
      %v5492 = vpop.f32.mrb[0].mxu0
      %5493 = vmatprep.mubr.bf16.mxu0 0
      %5494 = vmatmul.mubr.bf16.gmra.mrb[0].mxu0 %v5297
      %v5495 = vpop.f32.mrb[0].mxu0
      %v5496 = vadd.f32 0.0, %v5495
      %v5497 = vpop.f32.mrb[0].mxu0
      %v5498 = vpop.f32.mrb[0].mxu0
      %v5499 = vadd.f32 0.0, %v5498
      %v5500 = vpop.f32.mrb[0].mxu0
      %5501 = vmatprep.mubr.bf16.mxu0 0
      %5502 = vmatmul.mubr.bf16.gmra.mrb[0].mxu0 %v5298
      %v5503 = vpop.f32.mrb[0].mxu0
      %v5504 = vadd.f32 0.0, %v5503
      %v5505 = vpop.f32.mrb[0].mxu0
      %v5506 = vpop.f32.mrb[0].mxu0
      %v5507 = vadd.f32 0.0, %v5506
      %v5508 = vpop.f32.mrb[0].mxu0
      %5509 = vmatprep.mubr.bf16.mxu0 0
      %5510 = vmatmul.mubr.bf16.gmra.mrb[0].mxu0 %v5299
      %v5511 = vpop.f32.mrb[0].mxu0
      %v5512 = vadd.f32 0.0, %v5511
      %v5513 = vpop.f32.mrb[0].mxu0
      %v5514 = vpop.f32.mrb[0].mxu0
      %v5515 = vadd.f32 0.0, %v5514
      %v5516 = vpop.f32.mrb[0].mxu0
      %5517 = vmatprep.mubr.bf16.mxu0 0
      %5518 = vmatmul.mubr.bf16.gmra.mrb[0].mxu0 %v5300
      %v5519 = vpop.f32.mrb[0].mxu0
      %v5520 = vadd.f32 0.0, %v5519
      %v5521 = vpop.f32.mrb[0].mxu0
      %v5522 = vpop.f32.mrb[0].mxu0
      %v5523 = vadd.f32 0.0, %v5522
      %v5524 = vpop.f32.mrb[0].mxu0
      %5525 = vdwg.mxu0
      %v5526 = vadd.f32 %v5028, %v5400
      %v5527 = vadd.f32 %v5029, %v5403
      %v5528 = vadd.f32 %v5030, %v5408
      %v5529 = vadd.f32 %v5031, %v5411
      %v5530 = vadd.f32 %v5032, %v5416
      %v5531 = vadd.f32 %v5033, %v5419
      %v5532 = vadd.f32 %v5034, %v5424
      %v5533 = vadd.f32 %v5035, %v5427
      %v5534 = vadd.f32 %v5036, %v5432
      %v5535 = vadd.f32 %v5037, %v5435
      %v5536 = vadd.f32 %v5038, %v5440
      %v5537 = vadd.f32 %v5039, %v5443
      %v5538 = vadd.f32 %v5040, %v5448
      %v5539 = vadd.f32 %v5041, %v5451
      %v5540 = vadd.f32 %v5042, %v5456
      %v5541 = vadd.f32 %v5043, %v5459
      %v5542 = vadd.f32 %v5044, %v5464
      %v5543 = vadd.f32 %v5045, %v5467
      %v5544 = vadd.f32 %v5046, %v5472
      %v5545 = vadd.f32 %v5047, %v5475
      %v5546 = vadd.f32 %v5048, %v5480
      %v5547 = vadd.f32 %v5049, %v5483
      %v5548 = vadd.f32 %v5050, %v5488
      %v5549 = vadd.f32 %v5051, %v5491
      %v5550 = vadd.f32 %v5052, %v5496
      %v5551 = vadd.f32 %v5053, %v5499
      %v5552 = vadd.f32 %v5054, %v5504
      %v5553 = vadd.f32 %v5055, %v5507
      %v5554 = vadd.f32 %v5056, %v5512
      %v5555 = vadd.f32 %v5057, %v5515
      %v5556 = vadd.f32 %v5058, %v5520
      %v5557 = vadd.f32 %v5059, %v5523
      %v5558 = vld [vmem:[%s213] sm:$0x1]
      %v5560 = vlaneseq
      %v5561 = vshrl.u32 %v5560, 7
      %v5562 = vsub.s32 0, %v5561
      %v5563 = vrot.slane %v5558, %v5562
      %v5565 = vadd.f32 %v5526, %v5563
      %v5566 = vadd.f32 %v5527, %v5563
      %v5567 = vadd.f32 %v5528, %v5563
      %v5568 = vadd.f32 %v5529, %v5563
      %v5569 = vadd.f32 %v5530, %v5563
      %v5570 = vadd.f32 %v5531, %v5563
      %v5571 = vadd.f32 %v5532, %v5563
      %v5572 = vadd.f32 %v5533, %v5563
      %v5573 = vadd.f32 %v5534, %v5563
      %v5574 = vadd.f32 %v5535, %v5563
      %v5575 = vadd.f32 %v5536, %v5563
      %v5576 = vadd.f32 %v5537, %v5563
      %v5577 = vadd.f32 %v5538, %v5563
      %v5578 = vadd.f32 %v5539, %v5563
      %v5579 = vadd.f32 %v5540, %v5563
      %v5580 = vadd.f32 %v5541, %v5563
      %v5581 = vadd.f32 %v5542, %v5563
      %v5582 = vadd.f32 %v5543, %v5563
      %v5583 = vadd.f32 %v5544, %v5563
      %v5584 = vadd.f32 %v5545, %v5563
      %v5585 = vadd.f32 %v5546, %v5563
      %v5586 = vadd.f32 %v5547, %v5563
      %v5587 = vadd.f32 %v5548, %v5563
      %v5588 = vadd.f32 %v5549, %v5563
      %v5589 = vadd.f32 %v5550, %v5563
      %v5590 = vadd.f32 %v5551, %v5563
      %v5591 = vadd.f32 %v5552, %v5563
      %v5592 = vadd.f32 %v5553, %v5563
      %v5593 = vadd.f32 %v5554, %v5563
      %v5594 = vadd.f32 %v5555, %v5563
      %v5595 = vadd.f32 %v5556, %v5563
      %v5596 = vadd.f32 %v5557, %v5563
      %v5597 = vmax.f32 %v5565, 0.0
      %v5598 = vmax.f32 %v5566, 0.0
      %v5599 = vmax.f32 %v5567, 0.0
      %v5600 = vmax.f32 %v5568, 0.0
      %v5601 = vmax.f32 %v5569, 0.0
      %v5602 = vmax.f32 %v5570, 0.0
      %v5603 = vmax.f32 %v5571, 0.0
      %v5604 = vmax.f32 %v5572, 0.0
      %v5605 = vmax.f32 %v5573, 0.0
      %v5606 = vmax.f32 %v5574, 0.0
      %v5607 = vmax.f32 %v5575, 0.0
      %v5608 = vmax.f32 %v5576, 0.0
      %v5609 = vmax.f32 %v5577, 0.0
      %v5610 = vmax.f32 %v5578, 0.0
      %v5611 = vmax.f32 %v5579, 0.0
      %v5612 = vmax.f32 %v5580, 0.0
      %v5613 = vmax.f32 %v5581, 0.0
      %v5614 = vmax.f32 %v5582, 0.0
      %v5615 = vmax.f32 %v5583, 0.0
      %v5616 = vmax.f32 %v5584, 0.0
      %v5617 = vmax.f32 %v5585, 0.0
      %v5618 = vmax.f32 %v5586, 0.0
      %v5619 = vmax.f32 %v5587, 0.0
      %v5620 = vmax.f32 %v5588, 0.0
      %v5621 = vmax.f32 %v5589, 0.0
      %v5622 = vmax.f32 %v5590, 0.0
      %v5623 = vmax.f32 %v5591, 0.0
      %v5624 = vmax.f32 %v5592, 0.0
      %v5625 = vmax.f32 %v5593, 0.0
      %v5626 = vmax.f32 %v5594, 0.0
      %v5627 = vmax.f32 %v5595, 0.0
      %v5628 = vmax.f32 %v5596, 0.0
      %v5629 = vpack.c.bf16 %v5598, %v5597
      %v5630 = vpack.c.bf16 %v5600, %v5599
      %v5631 = vpack.c.bf16 %v5602, %v5601
      %v5632 = vpack.c.bf16 %v5604, %v5603
      %v5633 = vpack.c.bf16 %v5606, %v5605
      %v5634 = vpack.c.bf16 %v5608, %v5607
      %v5635 = vpack.c.bf16 %v5610, %v5609
      %v5636 = vpack.c.bf16 %v5612, %v5611
      %v5637 = vpack.c.bf16 %v5614, %v5613
      %v5638 = vpack.c.bf16 %v5616, %v5615
      %v5639 = vpack.c.bf16 %v5618, %v5617
      %v5640 = vpack.c.bf16 %v5620, %v5619
      %v5641 = vpack.c.bf16 %v5622, %v5621
      %v5642 = vpack.c.bf16 %v5624, %v5623
      %v5643 = vpack.c.bf16 %v5626, %v5625
      %v5644 = vpack.c.bf16 %v5628, %v5627
      %v5661 = vunpack.c.l.b16 %v5629
      %v5662 = vunpack.c.h.b16 %v5629
      %v5663 = vunpack.c.l.b16 %v5630
      %v5664 = vunpack.c.h.b16 %v5630
      %v5665 = vunpack.c.l.b16 %v5631
      %v5666 = vunpack.c.h.b16 %v5631
      %v5667 = vunpack.c.l.b16 %v5632
      %v5668 = vunpack.c.h.b16 %v5632
      %v5669 = vunpack.c.l.b16 %v5633
      %v5670 = vunpack.c.h.b16 %v5633
      %v5671 = vunpack.c.l.b16 %v5634
      %v5672 = vunpack.c.h.b16 %v5634
      %v5673 = vunpack.c.l.b16 %v5635
      %v5674 = vunpack.c.h.b16 %v5635
      %v5675 = vunpack.c.l.b16 %v5636
      %v5676 = vunpack.c.h.b16 %v5636
      %v5677 = vunpack.c.l.b16 %v5637
      %v5678 = vunpack.c.h.b16 %v5637
      %v5679 = vunpack.c.l.b16 %v5638
      %v5680 = vunpack.c.h.b16 %v5638
      %v5681 = vunpack.c.l.b16 %v5639
      %v5682 = vunpack.c.h.b16 %v5639
      %v5683 = vunpack.c.l.b16 %v5640
      %v5684 = vunpack.c.h.b16 %v5640
      %v5685 = vunpack.c.l.b16 %v5641
      %v5686 = vunpack.c.h.b16 %v5641
      %v5687 = vunpack.c.l.b16 %v5642
      %v5688 = vunpack.c.h.b16 %v5642
      %v5689 = vunpack.c.l.b16 %v5643
      %v5690 = vunpack.c.h.b16 %v5643
      %v5691 = vunpack.c.l.b16 %v5644
      %v5692 = vunpack.c.h.b16 %v5644
      %v5693 = vpack.c.b16 %v5661, %v5661
      %v5694 = vpack.c.b16 %v5662, %v5662
      %v5695 = vpack.c.b16 %v5663, %v5663
      %v5696 = vpack.c.b16 %v5664, %v5664
      %v5697 = vpack.c.b16 %v5665, %v5665
      %v5698 = vpack.c.b16 %v5666, %v5666
      %v5699 = vpack.c.b16 %v5667, %v5667
      %v5700 = vpack.c.b16 %v5668, %v5668
      %v5701 = vpack.c.b16 %v5669, %v5669
      %v5702 = vpack.c.b16 %v5670, %v5670
      %v5703 = vpack.c.b16 %v5671, %v5671
      %v5704 = vpack.c.b16 %v5672, %v5672
      %v5705 = vpack.c.b16 %v5673, %v5673
      %v5706 = vpack.c.b16 %v5674, %v5674
      %v5707 = vpack.c.b16 %v5675, %v5675
      %v5708 = vpack.c.b16 %v5676, %v5676
      %v5709 = vpack.c.b16 %v5677, %v5677
      %v5710 = vpack.c.b16 %v5678, %v5678
      %v5711 = vpack.c.b16 %v5679, %v5679
      %v5712 = vpack.c.b16 %v5680, %v5680
      %v5713 = vpack.c.b16 %v5681, %v5681
      %v5714 = vpack.c.b16 %v5682, %v5682
      %v5715 = vpack.c.b16 %v5683, %v5683
      %v5716 = vpack.c.b16 %v5684, %v5684
      %v5717 = vpack.c.b16 %v5685, %v5685
      %v5718 = vpack.c.b16 %v5686, %v5686
      %v5719 = vpack.c.b16 %v5687, %v5687
      %v5720 = vpack.c.b16 %v5688, %v5688
      %v5721 = vpack.c.b16 %v5689, %v5689
      %v5722 = vpack.c.b16 %v5690, %v5690
      %v5723 = vpack.c.b16 %v5691, %v5691
      %v5724 = vpack.c.b16 %v5692, %v5692
      %5757 = vst [vmem:[%s221] sm:$0xf] %v5693
      %5758 = vst [vmem:[%s221 + $0x4] sm:$0xf] %v5694
      %5759 = vst [vmem:[%s221 + $0x8] sm:$0xf] %v5695
      %5760 = vst [vmem:[%s221 + $0xc] sm:$0xf] %v5696
      %5761 = vst [vmem:[%s221 + $0x10] sm:$0xf] %v5697
      %5762 = vst [vmem:[%s221 + $0x14] sm:$0xf] %v5698
      %5763 = vst [vmem:[%s221 + $0x18] sm:$0xf] %v5699
      %5764 = vst [vmem:[%s221 + $0x1c] sm:$0xf] %v5700
      %5765 = vst [vmem:[%s221 + $0x20] sm:$0xf] %v5701
      %5766 = vst [vmem:[%s221 + $0x24] sm:$0xf] %v5702
      %5767 = vst [vmem:[%s221 + $0x28] sm:$0xf] %v5703
      %5768 = vst [vmem:[%s221 + $0x2c] sm:$0xf] %v5704
      %5769 = vst [vmem:[%s221 + $0x30] sm:$0xf] %v5705
      %5770 = vst [vmem:[%s221 + $0x34] sm:$0xf] %v5706
      %5771 = vst [vmem:[%s221 + $0x38] sm:$0xf] %v5707
      %5772 = vst [vmem:[%s221 + $0x3c] sm:$0xf] %v5708
      %5773 = vst [vmem:[%s221 + $0x40] sm:$0xf] %v5709
      %5774 = vst [vmem:[%s221 + $0x44] sm:$0xf] %v5710
      %5775 = vst [vmem:[%s221 + $0x48] sm:$0xf] %v5711
      %5776 = vst [vmem:[%s221 + $0x4c] sm:$0xf] %v5712
      %5777 = vst [vmem:[%s221 + $0x50] sm:$0xf] %v5713
      %5778 = vst [vmem:[%s221 + $0x54] sm:$0xf] %v5714
      %5779 = vst [vmem:[%s221 + $0x58] sm:$0xf] %v5715
      %5780 = vst [vmem:[%s221 + $0x5c] sm:$0xf] %v5716
      %5781 = vst [vmem:[%s221 + $0x60] sm:$0xf] %v5717
      %5782 = vst [vmem:[%s221 + $0x64] sm:$0xf] %v5718
      %5783 = vst [vmem:[%s221 + $0x68] sm:$0xf] %v5719
      %5784 = vst [vmem:[%s221 + $0x6c] sm:$0xf] %v5720
      %5785 = vst [vmem:[%s221 + $0x70] sm:$0xf] %v5721
      %5786 = vst [vmem:[%s221 + $0x74] sm:$0xf] %v5722
      %5787 = vst [vmem:[%s221 + $0x78] sm:$0xf] %v5723
      %5788 = vst [vmem:[%s221 + $0x7c] sm:$0xf] %v5724
      %p5789 = scmp.lt.s32.totalorder %s18, 1
      %s5790 = scalar_select %p5789, %s18, 1
      %p5791 = scmp.lt.s32.totalorder %s19, 0
      %s5792 = scalar_select %p5791, %s19, 0
      %s5793 = smul.addr %s5790, 32
      %s5794 = sadd.s32 %s5792, %s5793
      %s5795 = smul.addr %s5794, 4
      %s5796 = scalar_lea.vmem %s3, %s5795
      // Predicated region
      $region33: #{model_forward.8} parent=31 // pred_check
        %p5797 = pneg %p124
      $region34: #{model_forward.8} parent=31 // pred_check_branch
        %5799 = sbr.rel (%p5797) target = $region36
      $region35: #{model_forward.8} parent=31 // pred_region
        _
      $region36: #{model_forward.8} parent=31 // pred_fallthru
        _
    $region32: #{model_forward.8} parent=5 // pred_fallthru
      _
    %p5800 = scmp.le.s32.totalorder 2, %s9
    // Predicated region
    $region37: #{model_forward.8} parent=5 // pred_check
      %p5801 = pneg %p5800
    $region38: #{model_forward.8} parent=5 // pred_check_branch
      %5803 = sbr.rel (%p5801) target = $region40
    $region39: #{model_forward.8} parent=5 // pred_region
      %s5804 = ssub.s32 %s9, 2
      // Predicated region
      $region41: #{model_forward.8} parent=39 // pred_check
        %p5805 = pneg %p130
      $region42: #{model_forward.8} parent=39 // pred_check_branch
        %5807 = sbr.rel (%p5805) target = $region44
      $region43: #{model_forward.8} parent=39 // pred_region
        %p5808 = scmp.lt.s32.totalorder %s20, 1
        %s5809 = scalar_select %p5808, %s20, 1
        %p5810 = scmp.lt.s32.totalorder %s21, 0
        %s5811 = scalar_select %p5810, %s21, 0
        %s5812 = smul.addr %s5809, 32
        %s5813 = sadd.s32 %s5811, %s5812
        %s5814 = smul.addr %s5813, 4
        %s5815 = scalar_lea.vmem %s3, %s5814
      $region44: #{model_forward.8} parent=39 // pred_fallthru
        _
    $region40: #{model_forward.8} parent=5 // pred_fallthru
      _
  $region6: #{model_forward.8} parent=0 // loop_footer
    %s13 = sadd.s32 1, %s9
  $region7: #{model_forward.8} parent=0 // loop_footer_branch
    %8 = sbr.rel target = $region3
  $region8: #{model_forward.8} parent=0 // loop_exit
    _

</llo_original>
